<compile_context>
chip_gen: v7x
topology: tpu7x:2x2x1
jax: 0.10.0
libtpu: 0.0.40
codegen_flags: <defaults>
</compile_context>

<pallas_src>
import numpy as np
import jax
import jax.numpy as jnp
from jax.experimental import pallas as pl
from jax.experimental.pallas import tpu as pltpu


def _round_up(x, m):
    return ((x + m - 1) // m) * m


def make_pos_encoding_params(dim, base=10000, bias=0.0):
    """Mirror PosEncoding.__init__, returning (1/base, sft) as (1, dim) f32."""
    i = np.arange(dim, dtype=np.float64)
    b = (i - (i % 2)) / dim
    base_vals = np.power(float(base), -b)              # torch's self.base (f64 -> f32)
    inv_base = (1.0 / base_vals).astype(np.float32)    # precomputed reciprocal (perf)
    sft = np.where((np.arange(dim) % 2) == 1,
                   np.pi / 2.0 + bias, float(bias)).astype(np.float32)
    return (jnp.asarray(inv_base).reshape(1, -1),
            jnp.asarray(sft).reshape(1, -1))


def pos_encoding_kernel(pos_ref, expand_ref, inv_base_ref, sft_ref, o_ref):
    # pos_ref:      (tile_rows, pack)   `pack` positions per packed output row
    # expand_ref:   (pack, 128)         0/1 lane-expansion matrix (E[j, j*dim:(j+1)*dim]=1)
    # inv_base_ref: (1, 128)            1/base tiled `pack` times along lanes
    # sft_ref:      (1, 128)            phase shift tiled `pack` times along lanes
    # o_ref:        (tile_rows, 128)    lane-dense packed output
    pos_rep = jnp.dot(pos_ref[...], expand_ref[...],
                      precision=jax.lax.Precision.HIGHEST,   # exact: 0/1 weights
                      preferred_element_type=jnp.float32)     # (tile_rows, 128)
    o_ref[...] = jnp.sin(pos_rep * inv_base_ref[...] + sft_ref[...])


def pos_encoding(pos, inv_base, sft, *, tile_rows=512):
    """PosEncoding forward.  `pos` may be any shape / a list; flattened to (-1,)."""
    pos = jnp.asarray(pos, dtype=jnp.float32).reshape(-1)      # (N,)
    n = int(pos.shape[0])
    dim = int(inv_base.shape[-1])

    if 128 % dim != 0:
        # TODO(synk): fall back to an unpacked (tile_n, dim) kernel for dims
        # that do not divide 128; the model uses dim that divides 128.
        raise NotImplementedError("pos_encoding packed kernel requires 128 % dim == 0")

    pack = 128 // dim          # positions packed per 128-lane output row
    lanes = pack * dim         # == 128

    rows = -(-n // pack)                                        # packed rows needed
    # Big tiles to amortize per-step overhead, but keep >= 2 grid steps when
    # possible so v7x can shard the "parallel" axis across its 2 TensorCores.
    tile_rows = max(8, min(tile_rows, _round_up(-(-rows // 2), 8)))
    rows_pad = _round_up(rows, tile_rows)
    n_pad = rows_pad * pack

    pos_p = jnp.pad(pos, (0, n_pad - n)).reshape(rows_pad, pack)

    # Constant lane-expansion matrix and lane-tiled parameters (tiny, host-built).
    expand = jnp.asarray(np.kron(np.eye(pack, dtype=np.float32),
                                 np.ones((1, dim), dtype=np.float32)))  # (pack, 128)
    inv_base_t = jnp.tile(inv_base.reshape(1, dim).astype(jnp.float32), (1, pack))
    sft_t = jnp.tile(sft.reshape(1, dim).astype(jnp.float32), (1, pack))

    out_packed = pl.pallas_call(
        pos_encoding_kernel,
        out_shape=jax.ShapeDtypeStruct((rows_pad, lanes), jnp.float32),
        grid=(rows_pad // tile_rows,),
        in_specs=[
            pl.BlockSpec((tile_rows, pack), lambda i: (i, 0)),
            pl.BlockSpec((pack, lanes), lambda i: (0, 0)),
            pl.BlockSpec((1, lanes), lambda i: (0, 0)),
            pl.BlockSpec((1, lanes), lambda i: (0, 0)),
        ],
        out_specs=pl.BlockSpec((tile_rows, lanes), lambda i: (i, 0)),
        compiler_params=pltpu.CompilerParams(
            dimension_semantics=("parallel",),
        ),
    )(pos_p, expand, inv_base_t, sft_t)

    # Row-major (rows_pad, pack*dim) -> (n_pad, dim) is a free reshape.
    return out_packed.reshape(n_pad, dim)[:n]


def pos_encoding_ref_f64(pos, dim, base=10000, bias=0.0):
    """Float64 reference of the original PyTorch forward."""
    pos64 = np.asarray(jax.device_get(pos), dtype=np.float64).reshape(-1, 1)
    i = np.arange(dim, dtype=np.float64)
    b = (i - (i % 2)) / dim
    base_vals = np.power(float(base), -b)
    sft = np.where(np.arange(dim) % 2 == 1, np.pi / 2.0 + bias, float(bias))
    return np.sin(pos64 / base_vals + sft)


if __name__ == "__main__":
    dim = 32       # positional-encoding feature dim
    seq = 4096     # number of positions (enough rows to exercise the tiling)

    inv_base, sft = make_pos_encoding_params(dim, base=10000, bias=0.0)

    key = jax.random.PRNGKey(0)
    # Modest position values: for args ~1e5 the f32 ulp of the sin argument is
    # already ~1e-2, so an elementwise accuracy check would be vacuous there.
    pos = jax.random.uniform(key, (seq,), dtype=jnp.float32, minval=0.0, maxval=1.0)

    out = pos_encoding(pos, inv_base, sft)
    out = jax.block_until_ready(out)

    ref = pos_encoding_ref_f64(pos, dim)
    assert out.shape == (seq, dim), out.shape
    assert out.dtype == jnp.float32
    out_np = np.asarray(out)

    # Loose check over all columns: high-frequency columns have sin arguments up
    # to ~5.6e3, where one f32 ulp of the argument already moves sin by ~5e-4.
    np.testing.assert_allclose(out_np, ref, rtol=1e-5, atol=5e-3)
    # Tight check on the low-frequency half (arguments <= ~60).
    np.testing.assert_allclose(out_np[:, :dim // 2], ref[:, :dim // 2],
                               rtol=1e-5, atol=1e-3)

    print("KERNEL_OK")
</pallas_src>

<mosaic_0001>
module attributes {stable_mosaic.version = 11 : i64} {
  func.func @pos_encoding_kernel(%arg0: i32, %arg1: memref<512x4xf32, #tpu.memory_space<vmem>>, %arg2: memref<4x128xf32, #tpu.memory_space<vmem>>, %arg3: memref<1x128xf32, #tpu.memory_space<vmem>>, %arg4: memref<1x128xf32, #tpu.memory_space<vmem>>, %arg5: memref<512x128xf32, #tpu.memory_space<vmem>>) attributes {dimension_semantics = [#tpu.dimension_semantics<parallel>], iteration_bounds = array<i64: 2>, scalar_prefetch = 0 : i64, scratch_operands = 0 : i64, tpu.core_type = #tpu.core_type<tc>, window_params = [{transform_indices = @transform_0, window_bounds = array<i64: 512, 4>}, {pipeline_mode = #tpu.pipeline_mode<synchronous>, transform_indices = @transform_1, window_bounds = array<i64: 4, 128>}, {pipeline_mode = #tpu.pipeline_mode<synchronous>, transform_indices = @transform_2, window_bounds = array<i64: 1, 128>}, {pipeline_mode = #tpu.pipeline_mode<synchronous>, transform_indices = @transform_3, window_bounds = array<i64: 1, 128>}, {transform_indices = @transform_4, window_bounds = array<i64: 512, 128>}]} {
    %c0 = arith.constant 0 : index
    %c0_0 = arith.constant 0 : index
    %0 = vector.load %arg1[%c0, %c0_0] : memref<512x4xf32, #tpu.memory_space<vmem>>, vector<512x4xf32>
    %c0_1 = arith.constant 0 : index
    %c0_2 = arith.constant 0 : index
    %1 = vector.load %arg2[%c0_1, %c0_2] : memref<4x128xf32, #tpu.memory_space<vmem>>, vector<4x128xf32>
    %cst = arith.constant dense<0.000000e+00> : vector<512x128xf32>
    %2 = tpu.matmul %0, %1, %cst {dimension_numbers = #tpu.dot_dimension_numbers<[1], [0], [0], [1], [0, 0, 1, 1], [], []>, precision = #tpu.contract_precision<fp32>} : vector<512x4xf32>, vector<4x128xf32>, vector<512x128xf32> -> vector<512x128xf32>
    %c0_3 = arith.constant 0 : index
    %c0_4 = arith.constant 0 : index
    %3 = vector.load %arg3[%c0_3, %c0_4] : memref<1x128xf32, #tpu.memory_space<vmem>>, vector<1x128xf32>
    %4 = vector.broadcast %3 : vector<1x128xf32> to vector<512x128xf32>
    %5 = arith.mulf %2, %4 : vector<512x128xf32>
    %c0_5 = arith.constant 0 : index
    %c0_6 = arith.constant 0 : index
    %6 = vector.load %arg4[%c0_5, %c0_6] : memref<1x128xf32, #tpu.memory_space<vmem>>, vector<1x128xf32>
    %7 = vector.broadcast %6 : vector<1x128xf32> to vector<512x128xf32>
    %8 = arith.addf %5, %7 : vector<512x128xf32>
    %9 = math.sin %8 : vector<512x128xf32>
    %c0_7 = arith.constant 0 : index
    %c0_8 = arith.constant 0 : index
    %10 = vector.load %arg5[%c0_7, %c0_8] : memref<512x128xf32, #tpu.memory_space<vmem>>, vector<512x128xf32>
    tpu.vector_store %arg5[%c0_7, %c0_8], %9 {strides = array<i32>} : memref<512x128xf32, #tpu.memory_space<vmem>>, vector<512x128xf32>,
    return
  }
  func.func @transform_0(%arg0: i32) -> (i32, i32) {
    %c0_i32 = arith.constant 0 : i32
    %c0_i32_0 = arith.constant 0 : i32
    return %arg0, %c0_i32 : i32, i32
  }
  func.func @transform_1(%arg0: i32) -> (i32, i32) {
    %c0_i32 = arith.constant 0 : i32
    %c0_i32_0 = arith.constant 0 : i32
    %c0_i32_1 = arith.constant 0 : i32
    return %c0_i32, %c0_i32_0 : i32, i32
  }
  func.func @transform_2(%arg0: i32) -> (i32, i32) {
    %c0_i32 = arith.constant 0 : i32
    %c0_i32_0 = arith.constant 0 : i32
    %c0_i32_1 = arith.constant 0 : i32
    return %c0_i32, %c0_i32_0 : i32, i32
  }
  func.func @transform_3(%arg0: i32) -> (i32, i32) {
    %c0_i32 = arith.constant 0 : i32
    %c0_i32_0 = arith.constant 0 : i32
    %c0_i32_1 = arith.constant 0 : i32
    return %c0_i32, %c0_i32_0 : i32, i32
  }
  func.func @transform_4(%arg0: i32) -> (i32, i32) {
    %c0_i32 = arith.constant 0 : i32
    %c0_i32_0 = arith.constant 0 : i32
    return %arg0, %c0_i32 : i32, i32
  }
}

</mosaic_0001>

<llo_original>
// kernel: tpu_custom_call.1
$region0: #{tpu_custom_call.1}
  #allocation0 [shape = 'u32[]', space=smem, size = 0x4, offset = 0x4, fixed_abs, tag = 'smem constant byte address 0x4 - core index']
  #allocation1 [shape = 'u32[144,128]{1,0:T(1,128)}', space=vmem, size = 0x12000, scoped, tag = 'internal scratch']
  %s0 = inlined_call_operand.vmem [shape: f32[1024,4], index: 0, kind: input, shape index: {}]
  %s1 = inlined_call_operand.vmem [shape: f32[4,128], index: 1, kind: input, shape index: {}]
  %s2 = inlined_call_operand.vmem [shape: f32[1,128], index: 2, kind: input, shape index: {}]
  %s3 = inlined_call_operand.vmem [shape: f32[1,128], index: 3, kind: input, shape index: {}]
  %s4 = inlined_call_operand.hbm [shape: f32[1024,128], index: 4, kind: output, shape index: {}]
  %s5 = sld [smem:[#allocation0]]
  $region49: #{tpu_custom_call.1} parent=0
    _
  %s7 = ssub.s32 1, %s5
  %s8 = scalar_select 0, %s7, %s5
  $region1: #{tpu_custom_call.1} parent=0
    #allocation2 [shape = 'u8[524288]{0}', space=vmem, size = 0x80000, scoped, tag = 'output window, operand 0']
    #allocation3 [shape = 's32[2]{0}', space=sflag, size = 0x8, scoped, tag = 'scoped memory for tpu_custom_call.1']
    %9 = vsyncpa [#allocation3], 0
    %s10 = scalar_lea.sflag [#allocation3], 1
    %11 = vsyncpa %s10, 0
    loop: start=0, step=1, limit=4
    $region2: #{tpu_custom_call.1} parent=1 // loop_pre_header
      _
    $region3: #{tpu_custom_call.1} parent=1 // loop_header
      %s13 = sphi 0, %s17
      %p14 = scmp.ge.s32.totalorder %s13, 4
      %s23 = sphi 0, %s25
      %s26 = sphi 0, %s23
      %s27 = sphi 0, %s26
      %s43 = sphi 0, %s27
      %s47 = sphi 0, %s47
      %s49 = sphi 0, %s47
      %s50 = sphi 0, %s49
      %s64 = sphi 0, %s50
      %s68 = sphi 0, %s68
      %s70 = sphi 0, %s68
      %s71 = sphi 0, %s70
      %s85 = sphi 0, %s71
      %s89 = sphi 0, %s89
      %s91 = sphi 0, %s89
      %s92 = sphi 0, %s91
      %s106 = sphi 0, %s92
      %s112 = sphi 0, %s114
      %s115 = sphi 0, %s112
      %s116 = sphi 0, %s115
      %s132 = sphi 0, %s116
    $region4: #{tpu_custom_call.1} parent=1 // loop_header_branch
      %16 = sbr.rel (%p14) target = $region8
    $region5: #{tpu_custom_call.1} parent=1 // loop_body
      %s18 = ssub.s32 %s13, 1
      %s19 = ssub.s32 %s13, 2
      %s20 = sadd.s32 %s13, 1
      %s21 = ssub.s32 %s13, %s20
      %p22 = scmp.eq.s32.totalorder %s21, 0
      %s24 = sadd.s32 %s23, 1
      %s25 = scalar_select %p22, %s23, %s24
      %p28 = pneg %p22
      %p29 = scmp.eq.s32.totalorder %s13, 1
      %p30 = por %p28, %p29
      %p31 = scmp.ne.s32.totalorder %s23, %s26
      %p32 = scmp.eq.s32.totalorder %s13, 0
      %p33 = por %p31, %p32
      %p34 = scmp.ne.s32.totalorder %s23, %s26
      %p35 = scmp.eq.s32.totalorder %s18, 1
      %p36 = por %p34, %p35
      %p37 = scmp.ne.s32.totalorder %s26, %s27
      %p38 = scmp.eq.s32.totalorder %s18, 0
      %p39 = por %p37, %p38
      %p40 = scmp.ne.s32.totalorder %s26, %s27
      %p41 = scmp.eq.s32.totalorder %s19, 1
      %p42 = por %p40, %p41
      %p44 = scmp.ne.s32.totalorder %s27, %s43
      %p45 = scmp.eq.s32.totalorder %s19, 0
      %p46 = por %p44, %p45
      %s48 = sadd.s32 %s47, 1
      %p51 = scmp.eq.s32.totalorder %s13, 1
      %p52 = scmp.ne.s32.totalorder %s47, %s49
      %p53 = scmp.eq.s32.totalorder %s13, 0
      %p54 = por %p52, %p53
      %p55 = scmp.ne.s32.totalorder %s47, %s49
      %p56 = scmp.eq.s32.totalorder %s18, 1
      %p57 = por %p55, %p56
      %p58 = scmp.ne.s32.totalorder %s49, %s50
      %p59 = scmp.eq.s32.totalorder %s18, 0
      %p60 = por %p58, %p59
      %p61 = scmp.ne.s32.totalorder %s49, %s50
      %p62 = scmp.eq.s32.totalorder %s19, 1
      %p63 = por %p61, %p62
      %p65 = scmp.ne.s32.totalorder %s50, %s64
      %p66 = scmp.eq.s32.totalorder %s19, 0
      %p67 = por %p65, %p66
      %s69 = sadd.s32 %s68, 1
      %p72 = scmp.eq.s32.totalorder %s13, 1
      %p73 = scmp.ne.s32.totalorder %s68, %s70
      %p74 = scmp.eq.s32.totalorder %s13, 0
      %p75 = por %p73, %p74
      %p76 = scmp.ne.s32.totalorder %s68, %s70
      %p77 = scmp.eq.s32.totalorder %s18, 1
      %p78 = por %p76, %p77
      %p79 = scmp.ne.s32.totalorder %s70, %s71
      %p80 = scmp.eq.s32.totalorder %s18, 0
      %p81 = por %p79, %p80
      %p82 = scmp.ne.s32.totalorder %s70, %s71
      %p83 = scmp.eq.s32.totalorder %s19, 1
      %p84 = por %p82, %p83
      %p86 = scmp.ne.s32.totalorder %s71, %s85
      %p87 = scmp.eq.s32.totalorder %s19, 0
      %p88 = por %p86, %p87
      %s90 = sadd.s32 %s89, 1
      %p93 = scmp.eq.s32.totalorder %s13, 1
      %p94 = scmp.ne.s32.totalorder %s89, %s91
      %p95 = scmp.eq.s32.totalorder %s13, 0
      %p96 = por %p94, %p95
      %p97 = scmp.ne.s32.totalorder %s89, %s91
      %p98 = scmp.eq.s32.totalorder %s18, 1
      %p99 = por %p97, %p98
      %p100 = scmp.ne.s32.totalorder %s91, %s92
      %p101 = scmp.eq.s32.totalorder %s18, 0
      %p102 = por %p100, %p101
      %p103 = scmp.ne.s32.totalorder %s91, %s92
      %p104 = scmp.eq.s32.totalorder %s19, 1
      %p105 = por %p103, %p104
      %p107 = scmp.ne.s32.totalorder %s92, %s106
      %p108 = scmp.eq.s32.totalorder %s19, 0
      %p109 = por %p107, %p108
      %s110 = ssub.s32 %s13, %s20
      %p111 = scmp.eq.s32.totalorder %s110, 0
      %s113 = sadd.s32 %s112, 1
      %s114 = scalar_select %p111, %s112, %s113
      %p117 = pneg %p111
      %p118 = scmp.eq.s32.totalorder %s13, 1
      %p119 = por %p117, %p118
      %p120 = scmp.ne.s32.totalorder %s112, %s115
      %p121 = scmp.eq.s32.totalorder %s13, 0
      %p122 = por %p120, %p121
      %p123 = scmp.ne.s32.totalorder %s112, %s115
      %p124 = scmp.eq.s32.totalorder %s18, 1
      %p125 = por %p123, %p124
      %p126 = scmp.ne.s32.totalorder %s115, %s116
      %p127 = scmp.eq.s32.totalorder %s18, 0
      %p128 = por %p126, %p127
      %p129 = scmp.ne.s32.totalorder %s115, %s116
      %p130 = scmp.eq.s32.totalorder %s19, 1
      %p131 = por %p129, %p130
      %p133 = scmp.ne.s32.totalorder %s116, %s132
      %p134 = scmp.eq.s32.totalorder %s19, 0
      %p135 = por %p133, %p134
      %p136 = scmp.le.s32.totalorder 1, %s13
      %p137 = scmp.lt.s32.totalorder %s13, 3
      %p138 = pnand %p136, %p137
      %p139 = pneg %p138
      // Predicated region
      $region9: #{tpu_custom_call.1} parent=5 // pred_check
        _
      $region10: #{tpu_custom_call.1} parent=5 // pred_check_branch
        %141 = sbr.rel (%p138) target = $region12
      $region11: #{tpu_custom_call.1} parent=5 // pred_region
        %s142 = ssub.s32 %s13, 1
        // Predicated region
        $region13: #{tpu_custom_call.1} parent=11 // pred_check
          %p143 = pneg %p60
        $region14: #{tpu_custom_call.1} parent=11 // pred_check_branch
          %145 = sbr.rel (%p143) target = $region16
        $region15: #{tpu_custom_call.1} parent=11 // pred_region
          _
        $region16: #{tpu_custom_call.1} parent=11 // pred_fallthru
          _
        // Predicated region
        $region17: #{tpu_custom_call.1} parent=11 // pred_check
          %p146 = pneg %p81
        $region18: #{tpu_custom_call.1} parent=11 // pred_check_branch
          %148 = sbr.rel (%p146) target = $region20
        $region19: #{tpu_custom_call.1} parent=11 // pred_region
          _
        $region20: #{tpu_custom_call.1} parent=11 // pred_fallthru
          _
        // Predicated region
        $region21: #{tpu_custom_call.1} parent=11 // pred_check
          %p149 = pneg %p102
        $region22: #{tpu_custom_call.1} parent=11 // pred_check_branch
          %151 = sbr.rel (%p149) target = $region24
        $region23: #{tpu_custom_call.1} parent=11 // pred_region
          _
        $region24: #{tpu_custom_call.1} parent=11 // pred_fallthru
          _
      $region12: #{tpu_custom_call.1} parent=5 // pred_fallthru
        _
      %p152 = scmp.lt.s32.totalorder %s13, 2
      // Predicated region
      $region25: #{tpu_custom_call.1} parent=5 // pred_check
        %p153 = pneg %p152
      $region26: #{tpu_custom_call.1} parent=5 // pred_check_branch
        %155 = sbr.rel (%p153) target = $region28
      $region27: #{tpu_custom_call.1} parent=5 // pred_region
        // Predicated region
        $region29: #{tpu_custom_call.1} parent=27 // pred_check
          %p156 = pneg %p33
        $region30: #{tpu_custom_call.1} parent=27 // pred_check_branch
          %158 = sbr.rel (%p156) target = $region32
        $region31: #{tpu_custom_call.1} parent=27 // pred_region
          %s159 = smul.u32 64, %s13
          %p160 = scmp.lt.s32.totalorder %s159, 127
          %s161 = scalar_select %p160, %s159, 127
          %s162 = smul.addr %s161, 8
          %s163 = scalar_lea.vmem %s0, %s162
          %s164 = smul.u32 64, %s13
        $region32: #{tpu_custom_call.1} parent=27 // pred_fallthru
          _
      $region28: #{tpu_custom_call.1} parent=5 // pred_fallthru
        _
      %p165 = scmp.le.s32.totalorder 1, %s13
      %p166 = scmp.lt.s32.totalorder %s13, 3
      %p167 = pnand %p165, %p166
      %p168 = pneg %p167
      // Predicated region
      $region33: #{tpu_custom_call.1} parent=5 // pred_check
        _
      $region34: #{tpu_custom_call.1} parent=5 // pred_check_branch
        %170 = sbr.rel (%p167) target = $region36
      $region35: #{tpu_custom_call.1} parent=5 // pred_region
        %s171 = ssub.s32 %s13, 1
        %s172 = smul.u32 64, %s18
        %p173 = scmp.lt.s32.totalorder %s172, 127
        %s174 = scalar_select %p173, %s172, 127
        %s175 = smul.addr %s174, 8
        %s176 = scalar_lea.vmem %s0, %s175
        %p177 = pneg %p39
        %p178 = pneg %p36
        %p179 = pneg %p60
        %p180 = pneg %p57
        %p181 = pneg %p81
        %p182 = pneg %p78
        %p183 = pneg %p102
        %p184 = pneg %p99
        %p185 = pneg %p128
        %p186 = pneg %p125
        %s187 = sand.u32 %s115, 1
        %s188 = scalar_lea.sflag [#allocation3], %s187
        %s189 = sand.u32 %s115, 1
        %s190 = smul.addr %s189, 512
        %s191 = scalar_lea.vmem [#allocation2], %s190
        %s192 = smul.u32 64, %s18
        %p193 = scmp.lt.s32.totalorder %s192, 127
        %s194 = scalar_select %p193, %s192, 127
        %s195 = smul.addr %s194, 8
        %s196 = scalar_lea.vmem %s0, %s195
        %s197 = smul.u32 64, %s18
        %s198 = smul.u32 64, %s18
        %v199 = vld [vmem:[%s196] sm:$0xff]
        %v200 = vld [vmem:[%s196 + $0x8] sm:$0xff]
        %v201 = vld [vmem:[%s196 + $0x10] sm:$0xff]
        %v202 = vld [vmem:[%s196 + $0x18] sm:$0xff]
        %v203 = vld [vmem:[%s196 + $0x20] sm:$0xff]
        %v204 = vld [vmem:[%s196 + $0x28] sm:$0xff]
        %v205 = vld [vmem:[%s196 + $0x30] sm:$0xff]
        %v206 = vld [vmem:[%s196 + $0x38] sm:$0xff]
        %v207 = vld [vmem:[%s196 + $0x40] sm:$0xff]
        %v208 = vld [vmem:[%s196 + $0x48] sm:$0xff]
        %v209 = vld [vmem:[%s196 + $0x50] sm:$0xff]
        %v210 = vld [vmem:[%s196 + $0x58] sm:$0xff]
        %v211 = vld [vmem:[%s196 + $0x60] sm:$0xff]
        %v212 = vld [vmem:[%s196 + $0x68] sm:$0xff]
        %v213 = vld [vmem:[%s196 + $0x70] sm:$0xff]
        %v214 = vld [vmem:[%s196 + $0x78] sm:$0xff]
        %v215 = vld [vmem:[%s196 + $0x80] sm:$0xff]
        %v216 = vld [vmem:[%s196 + $0x88] sm:$0xff]
        %v217 = vld [vmem:[%s196 + $0x90] sm:$0xff]
        %v218 = vld [vmem:[%s196 + $0x98] sm:$0xff]
        %v219 = vld [vmem:[%s196 + $0xa0] sm:$0xff]
        %v220 = vld [vmem:[%s196 + $0xa8] sm:$0xff]
        %v221 = vld [vmem:[%s196 + $0xb0] sm:$0xff]
        %v222 = vld [vmem:[%s196 + $0xb8] sm:$0xff]
        %v223 = vld [vmem:[%s196 + $0xc0] sm:$0xff]
        %v224 = vld [vmem:[%s196 + $0xc8] sm:$0xff]
        %v225 = vld [vmem:[%s196 + $0xd0] sm:$0xff]
        %v226 = vld [vmem:[%s196 + $0xd8] sm:$0xff]
        %v227 = vld [vmem:[%s196 + $0xe0] sm:$0xff]
        %v228 = vld [vmem:[%s196 + $0xe8] sm:$0xff]
        %v229 = vld [vmem:[%s196 + $0xf0] sm:$0xff]
        %v230 = vld [vmem:[%s196 + $0xf8] sm:$0xff]
        %v231 = vld [vmem:[%s196 + $0x100] sm:$0xff]
        %v232 = vld [vmem:[%s196 + $0x108] sm:$0xff]
        %v233 = vld [vmem:[%s196 + $0x110] sm:$0xff]
        %v234 = vld [vmem:[%s196 + $0x118] sm:$0xff]
        %v235 = vld [vmem:[%s196 + $0x120] sm:$0xff]
        %v236 = vld [vmem:[%s196 + $0x128] sm:$0xff]
        %v237 = vld [vmem:[%s196 + $0x130] sm:$0xff]
        %v238 = vld [vmem:[%s196 + $0x138] sm:$0xff]
        %v239 = vld [vmem:[%s196 + $0x140] sm:$0xff]
        %v240 = vld [vmem:[%s196 + $0x148] sm:$0xff]
        %v241 = vld [vmem:[%s196 + $0x150] sm:$0xff]
        %v242 = vld [vmem:[%s196 + $0x158] sm:$0xff]
        %v243 = vld [vmem:[%s196 + $0x160] sm:$0xff]
        %v244 = vld [vmem:[%s196 + $0x168] sm:$0xff]
        %v245 = vld [vmem:[%s196 + $0x170] sm:$0xff]
        %v246 = vld [vmem:[%s196 + $0x178] sm:$0xff]
        %v247 = vld [vmem:[%s196 + $0x180] sm:$0xff]
        %v248 = vld [vmem:[%s196 + $0x188] sm:$0xff]
        %v249 = vld [vmem:[%s196 + $0x190] sm:$0xff]
        %v250 = vld [vmem:[%s196 + $0x198] sm:$0xff]
        %v251 = vld [vmem:[%s196 + $0x1a0] sm:$0xff]
        %v252 = vld [vmem:[%s196 + $0x1a8] sm:$0xff]
        %v253 = vld [vmem:[%s196 + $0x1b0] sm:$0xff]
        %v254 = vld [vmem:[%s196 + $0x1b8] sm:$0xff]
        %v255 = vld [vmem:[%s196 + $0x1c0] sm:$0xff]
        %v256 = vld [vmem:[%s196 + $0x1c8] sm:$0xff]
        %v257 = vld [vmem:[%s196 + $0x1d0] sm:$0xff]
        %v258 = vld [vmem:[%s196 + $0x1d8] sm:$0xff]
        %v259 = vld [vmem:[%s196 + $0x1e0] sm:$0xff]
        %v260 = vld [vmem:[%s196 + $0x1e8] sm:$0xff]
        %v261 = vld [vmem:[%s196 + $0x1f0] sm:$0xff]
        %v262 = vld [vmem:[%s196 + $0x1f8] sm:$0xff]
        %v263 = vld [vmem:[%s1] sm:$0xf]
        %vm264 = vcmask 31744
        %v266 = vsel %vm264, %v199, 0
        %v269 = vsel %vm264, %v200, 0
        %v272 = vsel %vm264, %v201, 0
        %v275 = vsel %vm264, %v202, 0
        %v278 = vsel %vm264, %v203, 0
        %v281 = vsel %vm264, %v204, 0
        %v284 = vsel %vm264, %v205, 0
        %v287 = vsel %vm264, %v206, 0
        %v290 = vsel %vm264, %v207, 0
        %v293 = vsel %vm264, %v208, 0
        %v296 = vsel %vm264, %v209, 0
        %v299 = vsel %vm264, %v210, 0
        %v302 = vsel %vm264, %v211, 0
        %v305 = vsel %vm264, %v212, 0
        %v308 = vsel %vm264, %v213, 0
        %v311 = vsel %vm264, %v214, 0
        %v314 = vsel %vm264, %v215, 0
        %v317 = vsel %vm264, %v216, 0
        %v320 = vsel %vm264, %v217, 0
        %v323 = vsel %vm264, %v218, 0
        %v326 = vsel %vm264, %v219, 0
        %v329 = vsel %vm264, %v220, 0
        %v332 = vsel %vm264, %v221, 0
        %v335 = vsel %vm264, %v222, 0
        %v338 = vsel %vm264, %v223, 0
        %v341 = vsel %vm264, %v224, 0
        %v344 = vsel %vm264, %v225, 0
        %v347 = vsel %vm264, %v226, 0
        %v350 = vsel %vm264, %v227, 0
        %v353 = vsel %vm264, %v228, 0
        %v356 = vsel %vm264, %v229, 0
        %v359 = vsel %vm264, %v230, 0
        %v362 = vsel %vm264, %v231, 0
        %v365 = vsel %vm264, %v232, 0
        %v368 = vsel %vm264, %v233, 0
        %v371 = vsel %vm264, %v234, 0
        %v374 = vsel %vm264, %v235, 0
        %v377 = vsel %vm264, %v236, 0
        %v380 = vsel %vm264, %v237, 0
        %v383 = vsel %vm264, %v238, 0
        %v386 = vsel %vm264, %v239, 0
        %v389 = vsel %vm264, %v240, 0
        %v392 = vsel %vm264, %v241, 0
        %v395 = vsel %vm264, %v242, 0
        %v398 = vsel %vm264, %v243, 0
        %v401 = vsel %vm264, %v244, 0
        %v404 = vsel %vm264, %v245, 0
        %v407 = vsel %vm264, %v246, 0
        %v410 = vsel %vm264, %v247, 0
        %v413 = vsel %vm264, %v248, 0
        %v416 = vsel %vm264, %v249, 0
        %v419 = vsel %vm264, %v250, 0
        %v422 = vsel %vm264, %v251, 0
        %v425 = vsel %vm264, %v252, 0
        %v428 = vsel %vm264, %v253, 0
        %v431 = vsel %vm264, %v254, 0
        %v434 = vsel %vm264, %v255, 0
        %v437 = vsel %vm264, %v256, 0
        %v440 = vsel %vm264, %v257, 0
        %v443 = vsel %vm264, %v258, 0
        %v446 = vsel %vm264, %v259, 0
        %v449 = vsel %vm264, %v260, 0
        %v452 = vsel %vm264, %v261, 0
        %v455 = vsel %vm264, %v262, 0
        %vm457 = vcmask 1043456
        %v459 = vsel %vm457, %v263, 0
        %461 = vmatprep.subr.mxu0 0.0
        %v462 = vand.u32 %v459, 4294901760
        %463 = vmatpush1.msra.mxu0 %v462
        %464 = vmatprep.subr.mxu0 0.0
        %465 = vmatpush1.msra.mxu0 0.0
        %466 = vmatprep.subr.mxu0 0.0
        %467 = vmatpush1.msra.mxu0 0.0
        %468 = vmatprep.subr.mxu0 0.0
        %469 = vmatpush1.msra.mxu0 0.0
        %470 = vmatprep.subr.mxu0 0.0
        %471 = vmatpush1.msra.mxu0 0.0
        %472 = vmatprep.subr.mxu0 0.0
        %473 = vmatpush1.msra.mxu0 0.0
        %474 = vmatprep.subr.mxu0 0.0
        %475 = vmatpush1.msra.mxu0 0.0
        %476 = vmatprep.subr.mxu0 0.0
        %477 = vmatpush1.msra.mxu0 0.0
        %478 = vmatprep.subr.mxu0 0.0
        %479 = vmatpush1.msra.mxu0 0.0
        %480 = vmatprep.subr.mxu0 0.0
        %481 = vmatpush1.msra.mxu0 0.0
        %482 = vmatprep.subr.mxu0 0.0
        %483 = vmatpush1.msra.mxu0 0.0
        %484 = vmatprep.subr.mxu0 0.0
        %485 = vmatpush1.msra.mxu0 0.0
        %486 = vmatprep.subr.mxu0 0.0
        %487 = vmatpush1.msra.mxu0 0.0
        %488 = vmatprep.subr.mxu0 0.0
        %489 = vmatpush1.msra.mxu0 0.0
        %490 = vmatprep.subr.mxu0 0.0
        %491 = vmatpush1.msra.mxu0 0.0
        %492 = vmatprep.subr.mxu0 0.0
        %493 = vmatpush1.msra.mxu0 0.0
        %494 = vmatprep.subr.mxu0 0.0
        %495 = vmatpush1.msra.mxu0 0.0
        %496 = vmatprep.subr.mxu0 0.0
        %497 = vmatpush1.msra.mxu0 0.0
        %498 = vmatprep.subr.mxu0 0.0
        %499 = vmatpush1.msra.mxu0 0.0
        %500 = vmatprep.subr.mxu0 0.0
        %501 = vmatpush1.msra.mxu0 0.0
        %502 = vmatprep.subr.mxu0 0.0
        %503 = vmatpush1.msra.mxu0 0.0
        %504 = vmatprep.subr.mxu0 0.0
        %505 = vmatpush1.msra.mxu0 0.0
        %506 = vmatprep.subr.mxu0 0.0
        %507 = vmatpush1.msra.mxu0 0.0
        %508 = vmatprep.subr.mxu0 0.0
        %509 = vmatpush1.msra.mxu0 0.0
        %510 = vmatprep.subr.mxu0 0.0
        %511 = vmatpush1.msra.mxu0 0.0
        %512 = vmatprep.subr.mxu0 0.0
        %513 = vmatpush1.msra.mxu0 0.0
        %514 = vmatprep.subr.mxu0 0.0
        %515 = vmatpush1.msra.mxu0 0.0
        %516 = vmatprep.subr.mxu0 0.0
        %517 = vmatpush1.msra.mxu0 0.0
        %518 = vmatprep.subr.mxu0 0.0
        %519 = vmatpush1.msra.mxu0 0.0
        %520 = vmatprep.subr.mxu0 0.0
        %521 = vmatpush1.msra.mxu0 0.0
        %522 = vmatprep.subr.mxu0 0.0
        %523 = vmatpush1.msra.mxu0 0.0
        %524 = vmatprep.subr.mxu0 0.0
        %525 = vmatpush1.msra.mxu0 0.0
        %526 = vmatprep.mubr.f32.mxu0 0.0
        %v527 = vand.u32 %v266, 4294901760
        %v528 = vsub.f32 %v266, %v527
        %v529 = vand.u32 %v528, 4294901760
        %v530 = vsub.f32 %v528, %v529
        %v531 = vand.u32 %v530, 4294901760
        %532 = vmatmul.mubr.f32.gmra.mrb[0].mxu0 %v531
        %v533 = vpop.f32.mrb[0].mxu0
        %v534 = vadd.f32 0.0, %v533
        %v535 = vpop.f32.mrb[0].mxu0
        %536 = vmatprep.mubr.f32.mxu0 0.0
        %v537 = vand.u32 %v269, 4294901760
        %v538 = vsub.f32 %v269, %v537
        %v539 = vand.u32 %v538, 4294901760
        %v540 = vsub.f32 %v538, %v539
        %v541 = vand.u32 %v540, 4294901760
        %542 = vmatmul.mubr.f32.gmra.mrb[0].mxu0 %v541
        %v543 = vpop.f32.mrb[0].mxu0
        %v544 = vadd.f32 0.0, %v543
        %v545 = vpop.f32.mrb[0].mxu0
        %546 = vmatprep.mubr.f32.mxu0 0.0
        %v547 = vand.u32 %v272, 4294901760
        %v548 = vsub.f32 %v272, %v547
        %v549 = vand.u32 %v548, 4294901760
        %v550 = vsub.f32 %v548, %v549
        %v551 = vand.u32 %v550, 4294901760
        %552 = vmatmul.mubr.f32.gmra.mrb[0].mxu0 %v551
        %v553 = vpop.f32.mrb[0].mxu0
        %v554 = vadd.f32 0.0, %v553
        %v555 = vpop.f32.mrb[0].mxu0
        %556 = vmatprep.mubr.f32.mxu0 0.0
        %v557 = vand.u32 %v275, 4294901760
        %v558 = vsub.f32 %v275, %v557
        %v559 = vand.u32 %v558, 4294901760
        %v560 = vsub.f32 %v558, %v559
        %v561 = vand.u32 %v560, 4294901760
        %562 = vmatmul.mubr.f32.gmra.mrb[0].mxu0 %v561
        %v563 = vpop.f32.mrb[0].mxu0
        %v564 = vadd.f32 0.0, %v563
        %v565 = vpop.f32.mrb[0].mxu0
        %566 = vmatprep.mubr.f32.mxu0 0.0
        %v567 = vand.u32 %v278, 4294901760
        %v568 = vsub.f32 %v278, %v567
        %v569 = vand.u32 %v568, 4294901760
        %v570 = vsub.f32 %v568, %v569
        %v571 = vand.u32 %v570, 4294901760
        %572 = vmatmul.mubr.f32.gmra.mrb[0].mxu0 %v571
        %v573 = vpop.f32.mrb[0].mxu0
        %v574 = vadd.f32 0.0, %v573
        %v575 = vpop.f32.mrb[0].mxu0
        %576 = vmatprep.mubr.f32.mxu0 0.0
        %v577 = vand.u32 %v281, 4294901760
        %v578 = vsub.f32 %v281, %v577
        %v579 = vand.u32 %v578, 4294901760
        %v580 = vsub.f32 %v578, %v579
        %v581 = vand.u32 %v580, 4294901760
        %582 = vmatmul.mubr.f32.gmra.mrb[0].mxu0 %v581
        %v583 = vpop.f32.mrb[0].mxu0
        %v584 = vadd.f32 0.0, %v583
        %v585 = vpop.f32.mrb[0].mxu0
        %586 = vmatprep.mubr.f32.mxu0 0.0
        %v587 = vand.u32 %v284, 4294901760
        %v588 = vsub.f32 %v284, %v587
        %v589 = vand.u32 %v588, 4294901760
        %v590 = vsub.f32 %v588, %v589
        %v591 = vand.u32 %v590, 4294901760
        %592 = vmatmul.mubr.f32.gmra.mrb[0].mxu0 %v591
        %v593 = vpop.f32.mrb[0].mxu0
        %v594 = vadd.f32 0.0, %v593
        %v595 = vpop.f32.mrb[0].mxu0
        %596 = vmatprep.mubr.f32.mxu0 0.0
        %v597 = vand.u32 %v287, 4294901760
        %v598 = vsub.f32 %v287, %v597
        %v599 = vand.u32 %v598, 4294901760
        %v600 = vsub.f32 %v598, %v599
        %v601 = vand.u32 %v600, 4294901760
        %602 = vmatmul.mubr.f32.gmra.mrb[0].mxu0 %v601
        %v603 = vpop.f32.mrb[0].mxu0
        %v604 = vadd.f32 0.0, %v603
        %v605 = vpop.f32.mrb[0].mxu0
        %606 = vmatprep.mubr.f32.mxu0 0.0
        %v607 = vand.u32 %v290, 4294901760
        %v608 = vsub.f32 %v290, %v607
        %v609 = vand.u32 %v608, 4294901760
        %v610 = vsub.f32 %v608, %v609
        %v611 = vand.u32 %v610, 4294901760
        %612 = vmatmul.mubr.f32.gmra.mrb[0].mxu0 %v611
        %v613 = vpop.f32.mrb[0].mxu0
        %v614 = vadd.f32 0.0, %v613
        %v615 = vpop.f32.mrb[0].mxu0
        %616 = vmatprep.mubr.f32.mxu0 0.0
        %v617 = vand.u32 %v293, 4294901760
        %v618 = vsub.f32 %v293, %v617
        %v619 = vand.u32 %v618, 4294901760
        %v620 = vsub.f32 %v618, %v619
        %v621 = vand.u32 %v620, 4294901760
        %622 = vmatmul.mubr.f32.gmra.mrb[0].mxu0 %v621
        %v623 = vpop.f32.mrb[0].mxu0
        %v624 = vadd.f32 0.0, %v623
        %v625 = vpop.f32.mrb[0].mxu0
        %626 = vmatprep.mubr.f32.mxu0 0.0
        %v627 = vand.u32 %v296, 4294901760
        %v628 = vsub.f32 %v296, %v627
        %v629 = vand.u32 %v628, 4294901760
        %v630 = vsub.f32 %v628, %v629
        %v631 = vand.u32 %v630, 4294901760
        %632 = vmatmul.mubr.f32.gmra.mrb[0].mxu0 %v631
        %v633 = vpop.f32.mrb[0].mxu0
        %v634 = vadd.f32 0.0, %v633
        %v635 = vpop.f32.mrb[0].mxu0
        %636 = vmatprep.mubr.f32.mxu0 0.0
        %v637 = vand.u32 %v299, 4294901760
        %v638 = vsub.f32 %v299, %v637
        %v639 = vand.u32 %v638, 4294901760
        %v640 = vsub.f32 %v638, %v639
        %v641 = vand.u32 %v640, 4294901760
        %642 = vmatmul.mubr.f32.gmra.mrb[0].mxu0 %v641
        %v643 = vpop.f32.mrb[0].mxu0
        %v644 = vadd.f32 0.0, %v643
        %v645 = vpop.f32.mrb[0].mxu0
        %646 = vmatprep.mubr.f32.mxu0 0.0
        %v647 = vand.u32 %v302, 4294901760
        %v648 = vsub.f32 %v302, %v647
        %v649 = vand.u32 %v648, 4294901760
        %v650 = vsub.f32 %v648, %v649
        %v651 = vand.u32 %v650, 4294901760
        %652 = vmatmul.mubr.f32.gmra.mrb[0].mxu0 %v651
        %v653 = vpop.f32.mrb[0].mxu0
        %v654 = vadd.f32 0.0, %v653
        %v655 = vpop.f32.mrb[0].mxu0
        %656 = vmatprep.mubr.f32.mxu0 0.0
        %v657 = vand.u32 %v305, 4294901760
        %v658 = vsub.f32 %v305, %v657
        %v659 = vand.u32 %v658, 4294901760
        %v660 = vsub.f32 %v658, %v659
        %v661 = vand.u32 %v660, 4294901760
        %662 = vmatmul.mubr.f32.gmra.mrb[0].mxu0 %v661
        %v663 = vpop.f32.mrb[0].mxu0
        %v664 = vadd.f32 0.0, %v663
        %v665 = vpop.f32.mrb[0].mxu0
        %666 = vmatprep.mubr.f32.mxu0 0.0
        %v667 = vand.u32 %v308, 4294901760
        %v668 = vsub.f32 %v308, %v667
        %v669 = vand.u32 %v668, 4294901760
        %v670 = vsub.f32 %v668, %v669
        %v671 = vand.u32 %v670, 4294901760
        %672 = vmatmul.mubr.f32.gmra.mrb[0].mxu0 %v671
        %v673 = vpop.f32.mrb[0].mxu0
        %v674 = vadd.f32 0.0, %v673
        %v675 = vpop.f32.mrb[0].mxu0
        %676 = vmatprep.mubr.f32.mxu0 0.0
        %v677 = vand.u32 %v311, 4294901760
        %v678 = vsub.f32 %v311, %v677
        %v679 = vand.u32 %v678, 4294901760
        %v680 = vsub.f32 %v678, %v679
        %v681 = vand.u32 %v680, 4294901760
        %682 = vmatmul.mubr.f32.gmra.mrb[0].mxu0 %v681
        %v683 = vpop.f32.mrb[0].mxu0
        %v684 = vadd.f32 0.0, %v683
        %v685 = vpop.f32.mrb[0].mxu0
        %686 = vmatprep.mubr.f32.mxu0 0.0
        %v687 = vand.u32 %v314, 4294901760
        %v688 = vsub.f32 %v314, %v687
        %v689 = vand.u32 %v688, 4294901760
        %v690 = vsub.f32 %v688, %v689
        %v691 = vand.u32 %v690, 4294901760
        %692 = vmatmul.mubr.f32.gmra.mrb[0].mxu0 %v691
        %v693 = vpop.f32.mrb[0].mxu0
        %v694 = vadd.f32 0.0, %v693
        %v695 = vpop.f32.mrb[0].mxu0
        %696 = vmatprep.mubr.f32.mxu0 0.0
        %v697 = vand.u32 %v317, 4294901760
        %v698 = vsub.f32 %v317, %v697
        %v699 = vand.u32 %v698, 4294901760
        %v700 = vsub.f32 %v698, %v699
        %v701 = vand.u32 %v700, 4294901760
        %702 = vmatmul.mubr.f32.gmra.mrb[0].mxu0 %v701
        %v703 = vpop.f32.mrb[0].mxu0
        %v704 = vadd.f32 0.0, %v703
        %v705 = vpop.f32.mrb[0].mxu0
        %706 = vmatprep.mubr.f32.mxu0 0.0
        %v707 = vand.u32 %v320, 4294901760
        %v708 = vsub.f32 %v320, %v707
        %v709 = vand.u32 %v708, 4294901760
        %v710 = vsub.f32 %v708, %v709
        %v711 = vand.u32 %v710, 4294901760
        %712 = vmatmul.mubr.f32.gmra.mrb[0].mxu0 %v711
        %v713 = vpop.f32.mrb[0].mxu0
        %v714 = vadd.f32 0.0, %v713
        %v715 = vpop.f32.mrb[0].mxu0
        %716 = vmatprep.mubr.f32.mxu0 0.0
        %v717 = vand.u32 %v323, 4294901760
        %v718 = vsub.f32 %v323, %v717
        %v719 = vand.u32 %v718, 4294901760
        %v720 = vsub.f32 %v718, %v719
        %v721 = vand.u32 %v720, 4294901760
        %722 = vmatmul.mubr.f32.gmra.mrb[0].mxu0 %v721
        %v723 = vpop.f32.mrb[0].mxu0
        %v724 = vadd.f32 0.0, %v723
        %v725 = vpop.f32.mrb[0].mxu0
        %726 = vmatprep.mubr.f32.mxu0 0.0
        %v727 = vand.u32 %v326, 4294901760
        %v728 = vsub.f32 %v326, %v727
        %v729 = vand.u32 %v728, 4294901760
        %v730 = vsub.f32 %v728, %v729
        %v731 = vand.u32 %v730, 4294901760
        %732 = vmatmul.mubr.f32.gmra.mrb[0].mxu0 %v731
        %v733 = vpop.f32.mrb[0].mxu0
        %v734 = vadd.f32 0.0, %v733
        %v735 = vpop.f32.mrb[0].mxu0
        %736 = vmatprep.mubr.f32.mxu0 0.0
        %v737 = vand.u32 %v329, 4294901760
        %v738 = vsub.f32 %v329, %v737
        %v739 = vand.u32 %v738, 4294901760
        %v740 = vsub.f32 %v738, %v739
        %v741 = vand.u32 %v740, 4294901760
        %742 = vmatmul.mubr.f32.gmra.mrb[0].mxu0 %v741
        %v743 = vpop.f32.mrb[0].mxu0
        %v744 = vadd.f32 0.0, %v743
        %v745 = vpop.f32.mrb[0].mxu0
        %746 = vmatprep.mubr.f32.mxu0 0.0
        %v747 = vand.u32 %v332, 4294901760
        %v748 = vsub.f32 %v332, %v747
        %v749 = vand.u32 %v748, 4294901760
        %v750 = vsub.f32 %v748, %v749
        %v751 = vand.u32 %v750, 4294901760
        %752 = vmatmul.mubr.f32.gmra.mrb[0].mxu0 %v751
        %v753 = vpop.f32.mrb[0].mxu0
        %v754 = vadd.f32 0.0, %v753
        %v755 = vpop.f32.mrb[0].mxu0
        %756 = vmatprep.mubr.f32.mxu0 0.0
        %v757 = vand.u32 %v335, 4294901760
        %v758 = vsub.f32 %v335, %v757
        %v759 = vand.u32 %v758, 4294901760
        %v760 = vsub.f32 %v758, %v759
        %v761 = vand.u32 %v760, 4294901760
        %762 = vmatmul.mubr.f32.gmra.mrb[0].mxu0 %v761
        %v763 = vpop.f32.mrb[0].mxu0
        %v764 = vadd.f32 0.0, %v763
        %v765 = vpop.f32.mrb[0].mxu0
        %766 = vmatprep.mubr.f32.mxu0 0.0
        %v767 = vand.u32 %v338, 4294901760
        %v768 = vsub.f32 %v338, %v767
        %v769 = vand.u32 %v768, 4294901760
        %v770 = vsub.f32 %v768, %v769
        %v771 = vand.u32 %v770, 4294901760
        %772 = vmatmul.mubr.f32.gmra.mrb[0].mxu0 %v771
        %v773 = vpop.f32.mrb[0].mxu0
        %v774 = vadd.f32 0.0, %v773
        %v775 = vpop.f32.mrb[0].mxu0
        %776 = vmatprep.mubr.f32.mxu0 0.0
        %v777 = vand.u32 %v341, 4294901760
        %v778 = vsub.f32 %v341, %v777
        %v779 = vand.u32 %v778, 4294901760
        %v780 = vsub.f32 %v778, %v779
        %v781 = vand.u32 %v780, 4294901760
        %782 = vmatmul.mubr.f32.gmra.mrb[0].mxu0 %v781
        %v783 = vpop.f32.mrb[0].mxu0
        %v784 = vadd.f32 0.0, %v783
        %v785 = vpop.f32.mrb[0].mxu0
        %786 = vmatprep.mubr.f32.mxu0 0.0
        %v787 = vand.u32 %v344, 4294901760
        %v788 = vsub.f32 %v344, %v787
        %v789 = vand.u32 %v788, 4294901760
        %v790 = vsub.f32 %v788, %v789
        %v791 = vand.u32 %v790, 4294901760
        %792 = vmatmul.mubr.f32.gmra.mrb[0].mxu0 %v791
        %v793 = vpop.f32.mrb[0].mxu0
        %v794 = vadd.f32 0.0, %v793
        %v795 = vpop.f32.mrb[0].mxu0
        %796 = vmatprep.mubr.f32.mxu0 0.0
        %v797 = vand.u32 %v347, 4294901760
        %v798 = vsub.f32 %v347, %v797
        %v799 = vand.u32 %v798, 4294901760
        %v800 = vsub.f32 %v798, %v799
        %v801 = vand.u32 %v800, 4294901760
        %802 = vmatmul.mubr.f32.gmra.mrb[0].mxu0 %v801
        %v803 = vpop.f32.mrb[0].mxu0
        %v804 = vadd.f32 0.0, %v803
        %v805 = vpop.f32.mrb[0].mxu0
        %806 = vmatprep.mubr.f32.mxu0 0.0
        %v807 = vand.u32 %v350, 4294901760
        %v808 = vsub.f32 %v350, %v807
        %v809 = vand.u32 %v808, 4294901760
        %v810 = vsub.f32 %v808, %v809
        %v811 = vand.u32 %v810, 4294901760
        %812 = vmatmul.mubr.f32.gmra.mrb[0].mxu0 %v811
        %v813 = vpop.f32.mrb[0].mxu0
        %v814 = vadd.f32 0.0, %v813
        %v815 = vpop.f32.mrb[0].mxu0
        %816 = vmatprep.mubr.f32.mxu0 0.0
        %v817 = vand.u32 %v353, 4294901760
        %v818 = vsub.f32 %v353, %v817
        %v819 = vand.u32 %v818, 4294901760
        %v820 = vsub.f32 %v818, %v819
        %v821 = vand.u32 %v820, 4294901760
        %822 = vmatmul.mubr.f32.gmra.mrb[0].mxu0 %v821
        %v823 = vpop.f32.mrb[0].mxu0
        %v824 = vadd.f32 0.0, %v823
        %v825 = vpop.f32.mrb[0].mxu0
        %826 = vmatprep.mubr.f32.mxu0 0.0
        %v827 = vand.u32 %v356, 4294901760
        %v828 = vsub.f32 %v356, %v827
        %v829 = vand.u32 %v828, 4294901760
        %v830 = vsub.f32 %v828, %v829
        %v831 = vand.u32 %v830, 4294901760
        %832 = vmatmul.mubr.f32.gmra.mrb[0].mxu0 %v831
        %v833 = vpop.f32.mrb[0].mxu0
        %v834 = vadd.f32 0.0, %v833
        %v835 = vpop.f32.mrb[0].mxu0
        %836 = vmatprep.mubr.f32.mxu0 0.0
        %v837 = vand.u32 %v359, 4294901760
        %v838 = vsub.f32 %v359, %v837
        %v839 = vand.u32 %v838, 4294901760
        %v840 = vsub.f32 %v838, %v839
        %v841 = vand.u32 %v840, 4294901760
        %842 = vmatmul.mubr.f32.gmra.mrb[0].mxu0 %v841
        %v843 = vpop.f32.mrb[0].mxu0
        %v844 = vadd.f32 0.0, %v843
        %v845 = vpop.f32.mrb[0].mxu0
        %846 = vmatprep.mubr.f32.mxu0 0.0
        %v847 = vand.u32 %v362, 4294901760
        %v848 = vsub.f32 %v362, %v847
        %v849 = vand.u32 %v848, 4294901760
        %v850 = vsub.f32 %v848, %v849
        %v851 = vand.u32 %v850, 4294901760
        %852 = vmatmul.mubr.f32.gmra.mrb[0].mxu0 %v851
        %v853 = vpop.f32.mrb[0].mxu0
        %v854 = vadd.f32 0.0, %v853
        %v855 = vpop.f32.mrb[0].mxu0
        %856 = vmatprep.mubr.f32.mxu0 0.0
        %v857 = vand.u32 %v365, 4294901760
        %v858 = vsub.f32 %v365, %v857
        %v859 = vand.u32 %v858, 4294901760
        %v860 = vsub.f32 %v858, %v859
        %v861 = vand.u32 %v860, 4294901760
        %862 = vmatmul.mubr.f32.gmra.mrb[0].mxu0 %v861
        %v863 = vpop.f32.mrb[0].mxu0
        %v864 = vadd.f32 0.0, %v863
        %v865 = vpop.f32.mrb[0].mxu0
        %866 = vmatprep.mubr.f32.mxu0 0.0
        %v867 = vand.u32 %v368, 4294901760
        %v868 = vsub.f32 %v368, %v867
        %v869 = vand.u32 %v868, 4294901760
        %v870 = vsub.f32 %v868, %v869
        %v871 = vand.u32 %v870, 4294901760
        %872 = vmatmul.mubr.f32.gmra.mrb[0].mxu0 %v871
        %v873 = vpop.f32.mrb[0].mxu0
        %v874 = vadd.f32 0.0, %v873
        %v875 = vpop.f32.mrb[0].mxu0
        %876 = vmatprep.mubr.f32.mxu0 0.0
        %v877 = vand.u32 %v371, 4294901760
        %v878 = vsub.f32 %v371, %v877
        %v879 = vand.u32 %v878, 4294901760
        %v880 = vsub.f32 %v878, %v879
        %v881 = vand.u32 %v880, 4294901760
        %882 = vmatmul.mubr.f32.gmra.mrb[0].mxu0 %v881
        %v883 = vpop.f32.mrb[0].mxu0
        %v884 = vadd.f32 0.0, %v883
        %v885 = vpop.f32.mrb[0].mxu0
        %886 = vmatprep.mubr.f32.mxu0 0.0
        %v887 = vand.u32 %v374, 4294901760
        %v888 = vsub.f32 %v374, %v887
        %v889 = vand.u32 %v888, 4294901760
        %v890 = vsub.f32 %v888, %v889
        %v891 = vand.u32 %v890, 4294901760
        %892 = vmatmul.mubr.f32.gmra.mrb[0].mxu0 %v891
        %v893 = vpop.f32.mrb[0].mxu0
        %v894 = vadd.f32 0.0, %v893
        %v895 = vpop.f32.mrb[0].mxu0
        %896 = vmatprep.mubr.f32.mxu0 0.0
        %v897 = vand.u32 %v377, 4294901760
        %v898 = vsub.f32 %v377, %v897
        %v899 = vand.u32 %v898, 4294901760
        %v900 = vsub.f32 %v898, %v899
        %v901 = vand.u32 %v900, 4294901760
        %902 = vmatmul.mubr.f32.gmra.mrb[0].mxu0 %v901
        %v903 = vpop.f32.mrb[0].mxu0
        %v904 = vadd.f32 0.0, %v903
        %v905 = vpop.f32.mrb[0].mxu0
        %906 = vmatprep.mubr.f32.mxu0 0.0
        %v907 = vand.u32 %v380, 4294901760
        %v908 = vsub.f32 %v380, %v907
        %v909 = vand.u32 %v908, 4294901760
        %v910 = vsub.f32 %v908, %v909
        %v911 = vand.u32 %v910, 4294901760
        %912 = vmatmul.mubr.f32.gmra.mrb[0].mxu0 %v911
        %v913 = vpop.f32.mrb[0].mxu0
        %v914 = vadd.f32 0.0, %v913
        %v915 = vpop.f32.mrb[0].mxu0
        %916 = vmatprep.mubr.f32.mxu0 0.0
        %v917 = vand.u32 %v383, 4294901760
        %v918 = vsub.f32 %v383, %v917
        %v919 = vand.u32 %v918, 4294901760
        %v920 = vsub.f32 %v918, %v919
        %v921 = vand.u32 %v920, 4294901760
        %922 = vmatmul.mubr.f32.gmra.mrb[0].mxu0 %v921
        %v923 = vpop.f32.mrb[0].mxu0
        %v924 = vadd.f32 0.0, %v923
        %v925 = vpop.f32.mrb[0].mxu0
        %926 = vmatprep.mubr.f32.mxu0 0.0
        %v927 = vand.u32 %v386, 4294901760
        %v928 = vsub.f32 %v386, %v927
        %v929 = vand.u32 %v928, 4294901760
        %v930 = vsub.f32 %v928, %v929
        %v931 = vand.u32 %v930, 4294901760
        %932 = vmatmul.mubr.f32.gmra.mrb[0].mxu0 %v931
        %v933 = vpop.f32.mrb[0].mxu0
        %v934 = vadd.f32 0.0, %v933
        %v935 = vpop.f32.mrb[0].mxu0
        %936 = vmatprep.mubr.f32.mxu0 0.0
        %v937 = vand.u32 %v389, 4294901760
        %v938 = vsub.f32 %v389, %v937
        %v939 = vand.u32 %v938, 4294901760
        %v940 = vsub.f32 %v938, %v939
        %v941 = vand.u32 %v940, 4294901760
        %942 = vmatmul.mubr.f32.gmra.mrb[0].mxu0 %v941
        %v943 = vpop.f32.mrb[0].mxu0
        %v944 = vadd.f32 0.0, %v943
        %v945 = vpop.f32.mrb[0].mxu0
        %946 = vmatprep.mubr.f32.mxu0 0.0
        %v947 = vand.u32 %v392, 4294901760
        %v948 = vsub.f32 %v392, %v947
        %v949 = vand.u32 %v948, 4294901760
        %v950 = vsub.f32 %v948, %v949
        %v951 = vand.u32 %v950, 4294901760
        %952 = vmatmul.mubr.f32.gmra.mrb[0].mxu0 %v951
        %v953 = vpop.f32.mrb[0].mxu0
        %v954 = vadd.f32 0.0, %v953
        %v955 = vpop.f32.mrb[0].mxu0
        %956 = vmatprep.mubr.f32.mxu0 0.0
        %v957 = vand.u32 %v395, 4294901760
        %v958 = vsub.f32 %v395, %v957
        %v959 = vand.u32 %v958, 4294901760
        %v960 = vsub.f32 %v958, %v959
        %v961 = vand.u32 %v960, 4294901760
        %962 = vmatmul.mubr.f32.gmra.mrb[0].mxu0 %v961
        %v963 = vpop.f32.mrb[0].mxu0
        %v964 = vadd.f32 0.0, %v963
        %v965 = vpop.f32.mrb[0].mxu0
        %966 = vmatprep.mubr.f32.mxu0 0.0
        %v967 = vand.u32 %v398, 4294901760
        %v968 = vsub.f32 %v398, %v967
        %v969 = vand.u32 %v968, 4294901760
        %v970 = vsub.f32 %v968, %v969
        %v971 = vand.u32 %v970, 4294901760
        %972 = vmatmul.mubr.f32.gmra.mrb[0].mxu0 %v971
        %v973 = vpop.f32.mrb[0].mxu0
        %v974 = vadd.f32 0.0, %v973
        %v975 = vpop.f32.mrb[0].mxu0
        %976 = vmatprep.mubr.f32.mxu0 0.0
        %v977 = vand.u32 %v401, 4294901760
        %v978 = vsub.f32 %v401, %v977
        %v979 = vand.u32 %v978, 4294901760
        %v980 = vsub.f32 %v978, %v979
        %v981 = vand.u32 %v980, 4294901760
        %982 = vmatmul.mubr.f32.gmra.mrb[0].mxu0 %v981
        %v983 = vpop.f32.mrb[0].mxu0
        %v984 = vadd.f32 0.0, %v983
        %v985 = vpop.f32.mrb[0].mxu0
        %986 = vmatprep.mubr.f32.mxu0 0.0
        %v987 = vand.u32 %v404, 4294901760
        %v988 = vsub.f32 %v404, %v987
        %v989 = vand.u32 %v988, 4294901760
        %v990 = vsub.f32 %v988, %v989
        %v991 = vand.u32 %v990, 4294901760
        %992 = vmatmul.mubr.f32.gmra.mrb[0].mxu0 %v991
        %v993 = vpop.f32.mrb[0].mxu0
        %v994 = vadd.f32 0.0, %v993
        %v995 = vpop.f32.mrb[0].mxu0
        %996 = vmatprep.mubr.f32.mxu0 0.0
        %v997 = vand.u32 %v407, 4294901760
        %v998 = vsub.f32 %v407, %v997
        %v999 = vand.u32 %v998, 4294901760
        %v1000 = vsub.f32 %v998, %v999
        %v1001 = vand.u32 %v1000, 4294901760
        %1002 = vmatmul.mubr.f32.gmra.mrb[0].mxu0 %v1001
        %v1003 = vpop.f32.mrb[0].mxu0
        %v1004 = vadd.f32 0.0, %v1003
        %v1005 = vpop.f32.mrb[0].mxu0
        %1006 = vmatprep.mubr.f32.mxu0 0.0
        %v1007 = vand.u32 %v410, 4294901760
        %v1008 = vsub.f32 %v410, %v1007
        %v1009 = vand.u32 %v1008, 4294901760
        %v1010 = vsub.f32 %v1008, %v1009
        %v1011 = vand.u32 %v1010, 4294901760
        %1012 = vmatmul.mubr.f32.gmra.mrb[0].mxu0 %v1011
        %v1013 = vpop.f32.mrb[0].mxu0
        %v1014 = vadd.f32 0.0, %v1013
        %v1015 = vpop.f32.mrb[0].mxu0
        %1016 = vmatprep.mubr.f32.mxu0 0.0
        %v1017 = vand.u32 %v413, 4294901760
        %v1018 = vsub.f32 %v413, %v1017
        %v1019 = vand.u32 %v1018, 4294901760
        %v1020 = vsub.f32 %v1018, %v1019
        %v1021 = vand.u32 %v1020, 4294901760
        %1022 = vmatmul.mubr.f32.gmra.mrb[0].mxu0 %v1021
        %v1023 = vpop.f32.mrb[0].mxu0
        %v1024 = vadd.f32 0.0, %v1023
        %v1025 = vpop.f32.mrb[0].mxu0
        %1026 = vmatprep.mubr.f32.mxu0 0.0
        %v1027 = vand.u32 %v416, 4294901760
        %v1028 = vsub.f32 %v416, %v1027
        %v1029 = vand.u32 %v1028, 4294901760
        %v1030 = vsub.f32 %v1028, %v1029
        %v1031 = vand.u32 %v1030, 4294901760
        %1032 = vmatmul.mubr.f32.gmra.mrb[0].mxu0 %v1031
        %v1033 = vpop.f32.mrb[0].mxu0
        %v1034 = vadd.f32 0.0, %v1033
        %v1035 = vpop.f32.mrb[0].mxu0
        %1036 = vmatprep.mubr.f32.mxu0 0.0
        %v1037 = vand.u32 %v419, 4294901760
        %v1038 = vsub.f32 %v419, %v1037
        %v1039 = vand.u32 %v1038, 4294901760
        %v1040 = vsub.f32 %v1038, %v1039
        %v1041 = vand.u32 %v1040, 4294901760
        %1042 = vmatmul.mubr.f32.gmra.mrb[0].mxu0 %v1041
        %v1043 = vpop.f32.mrb[0].mxu0
        %v1044 = vadd.f32 0.0, %v1043
        %v1045 = vpop.f32.mrb[0].mxu0
        %1046 = vmatprep.mubr.f32.mxu0 0.0
        %v1047 = vand.u32 %v422, 4294901760
        %v1048 = vsub.f32 %v422, %v1047
        %v1049 = vand.u32 %v1048, 4294901760
        %v1050 = vsub.f32 %v1048, %v1049
        %v1051 = vand.u32 %v1050, 4294901760
        %1052 = vmatmul.mubr.f32.gmra.mrb[0].mxu0 %v1051
        %v1053 = vpop.f32.mrb[0].mxu0
        %v1054 = vadd.f32 0.0, %v1053
        %v1055 = vpop.f32.mrb[0].mxu0
        %1056 = vmatprep.mubr.f32.mxu0 0.0
        %v1057 = vand.u32 %v425, 4294901760
        %v1058 = vsub.f32 %v425, %v1057
        %v1059 = vand.u32 %v1058, 4294901760
        %v1060 = vsub.f32 %v1058, %v1059
        %v1061 = vand.u32 %v1060, 4294901760
        %1062 = vmatmul.mubr.f32.gmra.mrb[0].mxu0 %v1061
        %v1063 = vpop.f32.mrb[0].mxu0
        %v1064 = vadd.f32 0.0, %v1063
        %v1065 = vpop.f32.mrb[0].mxu0
        %1066 = vmatprep.mubr.f32.mxu0 0.0
        %v1067 = vand.u32 %v428, 4294901760
        %v1068 = vsub.f32 %v428, %v1067
        %v1069 = vand.u32 %v1068, 4294901760
        %v1070 = vsub.f32 %v1068, %v1069
        %v1071 = vand.u32 %v1070, 4294901760
        %1072 = vmatmul.mubr.f32.gmra.mrb[0].mxu0 %v1071
        %v1073 = vpop.f32.mrb[0].mxu0
        %v1074 = vadd.f32 0.0, %v1073
        %v1075 = vpop.f32.mrb[0].mxu0
        %1076 = vmatprep.mubr.f32.mxu0 0.0
        %v1077 = vand.u32 %v431, 4294901760
        %v1078 = vsub.f32 %v431, %v1077
        %v1079 = vand.u32 %v1078, 4294901760
        %v1080 = vsub.f32 %v1078, %v1079
        %v1081 = vand.u32 %v1080, 4294901760
        %1082 = vmatmul.mubr.f32.gmra.mrb[0].mxu0 %v1081
        %v1083 = vpop.f32.mrb[0].mxu0
        %v1084 = vadd.f32 0.0, %v1083
        %v1085 = vpop.f32.mrb[0].mxu0
        %1086 = vmatprep.mubr.f32.mxu0 0.0
        %v1087 = vand.u32 %v434, 4294901760
        %v1088 = vsub.f32 %v434, %v1087
        %v1089 = vand.u32 %v1088, 4294901760
        %v1090 = vsub.f32 %v1088, %v1089
        %v1091 = vand.u32 %v1090, 4294901760
        %1092 = vmatmul.mubr.f32.gmra.mrb[0].mxu0 %v1091
        %v1093 = vpop.f32.mrb[0].mxu0
        %v1094 = vadd.f32 0.0, %v1093
        %v1095 = vpop.f32.mrb[0].mxu0
        %1096 = vmatprep.mubr.f32.mxu0 0.0
        %v1097 = vand.u32 %v437, 4294901760
        %v1098 = vsub.f32 %v437, %v1097
        %v1099 = vand.u32 %v1098, 4294901760
        %v1100 = vsub.f32 %v1098, %v1099
        %v1101 = vand.u32 %v1100, 4294901760
        %1102 = vmatmul.mubr.f32.gmra.mrb[0].mxu0 %v1101
        %v1103 = vpop.f32.mrb[0].mxu0
        %v1104 = vadd.f32 0.0, %v1103
        %v1105 = vpop.f32.mrb[0].mxu0
        %1106 = vmatprep.mubr.f32.mxu0 0.0
        %v1107 = vand.u32 %v440, 4294901760
        %v1108 = vsub.f32 %v440, %v1107
        %v1109 = vand.u32 %v1108, 4294901760
        %v1110 = vsub.f32 %v1108, %v1109
        %v1111 = vand.u32 %v1110, 4294901760
        %1112 = vmatmul.mubr.f32.gmra.mrb[0].mxu0 %v1111
        %v1113 = vpop.f32.mrb[0].mxu0
        %v1114 = vadd.f32 0.0, %v1113
        %v1115 = vpop.f32.mrb[0].mxu0
        %1116 = vmatprep.mubr.f32.mxu0 0.0
        %v1117 = vand.u32 %v443, 4294901760
        %v1118 = vsub.f32 %v443, %v1117
        %v1119 = vand.u32 %v1118, 4294901760
        %v1120 = vsub.f32 %v1118, %v1119
        %v1121 = vand.u32 %v1120, 4294901760
        %1122 = vmatmul.mubr.f32.gmra.mrb[0].mxu0 %v1121
        %v1123 = vpop.f32.mrb[0].mxu0
        %v1124 = vadd.f32 0.0, %v1123
        %v1125 = vpop.f32.mrb[0].mxu0
        %1126 = vmatprep.mubr.f32.mxu0 0.0
        %v1127 = vand.u32 %v446, 4294901760
        %v1128 = vsub.f32 %v446, %v1127
        %v1129 = vand.u32 %v1128, 4294901760
        %v1130 = vsub.f32 %v1128, %v1129
        %v1131 = vand.u32 %v1130, 4294901760
        %1132 = vmatmul.mubr.f32.gmra.mrb[0].mxu0 %v1131
        %v1133 = vpop.f32.mrb[0].mxu0
        %v1134 = vadd.f32 0.0, %v1133
        %v1135 = vpop.f32.mrb[0].mxu0
        %1136 = vmatprep.mubr.f32.mxu0 0.0
        %v1137 = vand.u32 %v449, 4294901760
        %v1138 = vsub.f32 %v449, %v1137
        %v1139 = vand.u32 %v1138, 4294901760
        %v1140 = vsub.f32 %v1138, %v1139
        %v1141 = vand.u32 %v1140, 4294901760
        %1142 = vmatmul.mubr.f32.gmra.mrb[0].mxu0 %v1141
        %v1143 = vpop.f32.mrb[0].mxu0
        %v1144 = vadd.f32 0.0, %v1143
        %v1145 = vpop.f32.mrb[0].mxu0
        %1146 = vmatprep.mubr.f32.mxu0 0.0
        %v1147 = vand.u32 %v452, 4294901760
        %v1148 = vsub.f32 %v452, %v1147
        %v1149 = vand.u32 %v1148, 4294901760
        %v1150 = vsub.f32 %v1148, %v1149
        %v1151 = vand.u32 %v1150, 4294901760
        %1152 = vmatmul.mubr.f32.gmra.mrb[0].mxu0 %v1151
        %v1153 = vpop.f32.mrb[0].mxu0
        %v1154 = vadd.f32 0.0, %v1153
        %v1155 = vpop.f32.mrb[0].mxu0
        %1156 = vmatprep.mubr.f32.mxu0 0.0
        %v1157 = vand.u32 %v455, 4294901760
        %v1158 = vsub.f32 %v455, %v1157
        %v1159 = vand.u32 %v1158, 4294901760
        %v1160 = vsub.f32 %v1158, %v1159
        %v1161 = vand.u32 %v1160, 4294901760
        %1162 = vmatmul.mubr.f32.gmra.mrb[0].mxu0 %v1161
        %v1163 = vpop.f32.mrb[0].mxu0
        %v1164 = vadd.f32 0.0, %v1163
        %v1165 = vpop.f32.mrb[0].mxu0
        %1166 = vdwg.mxu0
        %1167 = vmatprep.subr.mxu0 0.0
        %v1168 = vand.u32 %v459, 4294901760
        %v1169 = vsub.f32 %v459, %v1168
        %v1170 = vand.u32 %v1169, 4294901760
        %v1171 = vsub.f32 %v1169, %v1170
        %v1172 = vand.u32 %v1171, 4294901760
        %1173 = vmatpush1.msra.mxu0 %v1172
        %1174 = vmatprep.subr.mxu0 0.0
        %1175 = vmatpush1.msra.mxu0 0.0
        %1176 = vmatprep.subr.mxu0 0.0
        %1177 = vmatpush1.msra.mxu0 0.0
        %1178 = vmatprep.subr.mxu0 0.0
        %1179 = vmatpush1.msra.mxu0 0.0
        %1180 = vmatprep.subr.mxu0 0.0
        %1181 = vmatpush1.msra.mxu0 0.0
        %1182 = vmatprep.subr.mxu0 0.0
        %1183 = vmatpush1.msra.mxu0 0.0
        %1184 = vmatprep.subr.mxu0 0.0
        %1185 = vmatpush1.msra.mxu0 0.0
        %1186 = vmatprep.subr.mxu0 0.0
        %1187 = vmatpush1.msra.mxu0 0.0
        %1188 = vmatprep.subr.mxu0 0.0
        %1189 = vmatpush1.msra.mxu0 0.0
        %1190 = vmatprep.subr.mxu0 0.0
        %1191 = vmatpush1.msra.mxu0 0.0
        %1192 = vmatprep.subr.mxu0 0.0
        %1193 = vmatpush1.msra.mxu0 0.0
        %1194 = vmatprep.subr.mxu0 0.0
        %1195 = vmatpush1.msra.mxu0 0.0
        %1196 = vmatprep.subr.mxu0 0.0
        %1197 = vmatpush1.msra.mxu0 0.0
        %1198 = vmatprep.subr.mxu0 0.0
        %1199 = vmatpush1.msra.mxu0 0.0
        %1200 = vmatprep.subr.mxu0 0.0
        %1201 = vmatpush1.msra.mxu0 0.0
        %1202 = vmatprep.subr.mxu0 0.0
        %1203 = vmatpush1.msra.mxu0 0.0
        %1204 = vmatprep.subr.mxu0 0.0
        %1205 = vmatpush1.msra.mxu0 0.0
        %1206 = vmatprep.subr.mxu0 0.0
        %1207 = vmatpush1.msra.mxu0 0.0
        %1208 = vmatprep.subr.mxu0 0.0
        %1209 = vmatpush1.msra.mxu0 0.0
        %1210 = vmatprep.subr.mxu0 0.0
        %1211 = vmatpush1.msra.mxu0 0.0
        %1212 = vmatprep.subr.mxu0 0.0
        %1213 = vmatpush1.msra.mxu0 0.0
        %1214 = vmatprep.subr.mxu0 0.0
        %1215 = vmatpush1.msra.mxu0 0.0
        %1216 = vmatprep.subr.mxu0 0.0
        %1217 = vmatpush1.msra.mxu0 0.0
        %1218 = vmatprep.subr.mxu0 0.0
        %1219 = vmatpush1.msra.mxu0 0.0
        %1220 = vmatprep.subr.mxu0 0.0
        %1221 = vmatpush1.msra.mxu0 0.0
        %1222 = vmatprep.subr.mxu0 0.0
        %1223 = vmatpush1.msra.mxu0 0.0
        %1224 = vmatprep.subr.mxu0 0.0
        %1225 = vmatpush1.msra.mxu0 0.0
        %1226 = vmatprep.subr.mxu0 0.0
        %1227 = vmatpush1.msra.mxu0 0.0
        %1228 = vmatprep.subr.mxu0 0.0
        %1229 = vmatpush1.msra.mxu0 0.0
        %1230 = vmatprep.subr.mxu0 0.0
        %1231 = vmatpush1.msra.mxu0 0.0
        %1232 = vmatprep.subr.mxu0 0.0
        %1233 = vmatpush1.msra.mxu0 0.0
        %1234 = vmatprep.subr.mxu0 0.0
        %1235 = vmatpush1.msra.mxu0 0.0
        %1236 = vmatprep.mubr.f32.mxu0 0.0
        %v1237 = vand.u32 %v266, 4294901760
        %1238 = vmatmul.mubr.f32.gmra.mrb[0].mxu0 %v1237
        %v1239 = vpop.f32.mrb[0].mxu0
        %v1240 = vadd.f32 %v534, %v1239
        %v1241 = vpop.f32.mrb[0].mxu0
        %1242 = vmatprep.mubr.f32.mxu0 0.0
        %v1243 = vand.u32 %v269, 4294901760
        %1244 = vmatmul.mubr.f32.gmra.mrb[0].mxu0 %v1243
        %v1245 = vpop.f32.mrb[0].mxu0
        %v1246 = vadd.f32 %v544, %v1245
        %v1247 = vpop.f32.mrb[0].mxu0
        %1248 = vmatprep.mubr.f32.mxu0 0.0
        %v1249 = vand.u32 %v272, 4294901760
        %1250 = vmatmul.mubr.f32.gmra.mrb[0].mxu0 %v1249
        %v1251 = vpop.f32.mrb[0].mxu0
        %v1252 = vadd.f32 %v554, %v1251
        %v1253 = vpop.f32.mrb[0].mxu0
        %1254 = vmatprep.mubr.f32.mxu0 0.0
        %v1255 = vand.u32 %v275, 4294901760
        %1256 = vmatmul.mubr.f32.gmra.mrb[0].mxu0 %v1255
        %v1257 = vpop.f32.mrb[0].mxu0
        %v1258 = vadd.f32 %v564, %v1257
        %v1259 = vpop.f32.mrb[0].mxu0
        %1260 = vmatprep.mubr.f32.mxu0 0.0
        %v1261 = vand.u32 %v278, 4294901760
        %1262 = vmatmul.mubr.f32.gmra.mrb[0].mxu0 %v1261
        %v1263 = vpop.f32.mrb[0].mxu0
        %v1264 = vadd.f32 %v574, %v1263
        %v1265 = vpop.f32.mrb[0].mxu0
        %1266 = vmatprep.mubr.f32.mxu0 0.0
        %v1267 = vand.u32 %v281, 4294901760
        %1268 = vmatmul.mubr.f32.gmra.mrb[0].mxu0 %v1267
        %v1269 = vpop.f32.mrb[0].mxu0
        %v1270 = vadd.f32 %v584, %v1269
        %v1271 = vpop.f32.mrb[0].mxu0
        %1272 = vmatprep.mubr.f32.mxu0 0.0
        %v1273 = vand.u32 %v284, 4294901760
        %1274 = vmatmul.mubr.f32.gmra.mrb[0].mxu0 %v1273
        %v1275 = vpop.f32.mrb[0].mxu0
        %v1276 = vadd.f32 %v594, %v1275
        %v1277 = vpop.f32.mrb[0].mxu0
        %1278 = vmatprep.mubr.f32.mxu0 0.0
        %v1279 = vand.u32 %v287, 4294901760
        %1280 = vmatmul.mubr.f32.gmra.mrb[0].mxu0 %v1279
        %v1281 = vpop.f32.mrb[0].mxu0
        %v1282 = vadd.f32 %v604, %v1281
        %v1283 = vpop.f32.mrb[0].mxu0
        %1284 = vmatprep.mubr.f32.mxu0 0.0
        %v1285 = vand.u32 %v290, 4294901760
        %1286 = vmatmul.mubr.f32.gmra.mrb[0].mxu0 %v1285
        %v1287 = vpop.f32.mrb[0].mxu0
        %v1288 = vadd.f32 %v614, %v1287
        %v1289 = vpop.f32.mrb[0].mxu0
        %1290 = vmatprep.mubr.f32.mxu0 0.0
        %v1291 = vand.u32 %v293, 4294901760
        %1292 = vmatmul.mubr.f32.gmra.mrb[0].mxu0 %v1291
        %v1293 = vpop.f32.mrb[0].mxu0
        %v1294 = vadd.f32 %v624, %v1293
        %v1295 = vpop.f32.mrb[0].mxu0
        %1296 = vmatprep.mubr.f32.mxu0 0.0
        %v1297 = vand.u32 %v296, 4294901760
        %1298 = vmatmul.mubr.f32.gmra.mrb[0].mxu0 %v1297
        %v1299 = vpop.f32.mrb[0].mxu0
        %v1300 = vadd.f32 %v634, %v1299
        %v1301 = vpop.f32.mrb[0].mxu0
        %1302 = vmatprep.mubr.f32.mxu0 0.0
        %v1303 = vand.u32 %v299, 4294901760
        %1304 = vmatmul.mubr.f32.gmra.mrb[0].mxu0 %v1303
        %v1305 = vpop.f32.mrb[0].mxu0
        %v1306 = vadd.f32 %v644, %v1305
        %v1307 = vpop.f32.mrb[0].mxu0
        %1308 = vmatprep.mubr.f32.mxu0 0.0
        %v1309 = vand.u32 %v302, 4294901760
        %1310 = vmatmul.mubr.f32.gmra.mrb[0].mxu0 %v1309
        %v1311 = vpop.f32.mrb[0].mxu0
        %v1312 = vadd.f32 %v654, %v1311
        %v1313 = vpop.f32.mrb[0].mxu0
        %1314 = vmatprep.mubr.f32.mxu0 0.0
        %v1315 = vand.u32 %v305, 4294901760
        %1316 = vmatmul.mubr.f32.gmra.mrb[0].mxu0 %v1315
        %v1317 = vpop.f32.mrb[0].mxu0
        %v1318 = vadd.f32 %v664, %v1317
        %v1319 = vpop.f32.mrb[0].mxu0
        %1320 = vmatprep.mubr.f32.mxu0 0.0
        %v1321 = vand.u32 %v308, 4294901760
        %1322 = vmatmul.mubr.f32.gmra.mrb[0].mxu0 %v1321
        %v1323 = vpop.f32.mrb[0].mxu0
        %v1324 = vadd.f32 %v674, %v1323
        %v1325 = vpop.f32.mrb[0].mxu0
        %1326 = vmatprep.mubr.f32.mxu0 0.0
        %v1327 = vand.u32 %v311, 4294901760
        %1328 = vmatmul.mubr.f32.gmra.mrb[0].mxu0 %v1327
        %v1329 = vpop.f32.mrb[0].mxu0
        %v1330 = vadd.f32 %v684, %v1329
        %v1331 = vpop.f32.mrb[0].mxu0
        %1332 = vmatprep.mubr.f32.mxu0 0.0
        %v1333 = vand.u32 %v314, 4294901760
        %1334 = vmatmul.mubr.f32.gmra.mrb[0].mxu0 %v1333
        %v1335 = vpop.f32.mrb[0].mxu0
        %v1336 = vadd.f32 %v694, %v1335
        %v1337 = vpop.f32.mrb[0].mxu0
        %1338 = vmatprep.mubr.f32.mxu0 0.0
        %v1339 = vand.u32 %v317, 4294901760
        %1340 = vmatmul.mubr.f32.gmra.mrb[0].mxu0 %v1339
        %v1341 = vpop.f32.mrb[0].mxu0
        %v1342 = vadd.f32 %v704, %v1341
        %v1343 = vpop.f32.mrb[0].mxu0
        %1344 = vmatprep.mubr.f32.mxu0 0.0
        %v1345 = vand.u32 %v320, 4294901760
        %1346 = vmatmul.mubr.f32.gmra.mrb[0].mxu0 %v1345
        %v1347 = vpop.f32.mrb[0].mxu0
        %v1348 = vadd.f32 %v714, %v1347
        %v1349 = vpop.f32.mrb[0].mxu0
        %1350 = vmatprep.mubr.f32.mxu0 0.0
        %v1351 = vand.u32 %v323, 4294901760
        %1352 = vmatmul.mubr.f32.gmra.mrb[0].mxu0 %v1351
        %v1353 = vpop.f32.mrb[0].mxu0
        %v1354 = vadd.f32 %v724, %v1353
        %v1355 = vpop.f32.mrb[0].mxu0
        %1356 = vmatprep.mubr.f32.mxu0 0.0
        %v1357 = vand.u32 %v326, 4294901760
        %1358 = vmatmul.mubr.f32.gmra.mrb[0].mxu0 %v1357
        %v1359 = vpop.f32.mrb[0].mxu0
        %v1360 = vadd.f32 %v734, %v1359
        %v1361 = vpop.f32.mrb[0].mxu0
        %1362 = vmatprep.mubr.f32.mxu0 0.0
        %v1363 = vand.u32 %v329, 4294901760
        %1364 = vmatmul.mubr.f32.gmra.mrb[0].mxu0 %v1363
        %v1365 = vpop.f32.mrb[0].mxu0
        %v1366 = vadd.f32 %v744, %v1365
        %v1367 = vpop.f32.mrb[0].mxu0
        %1368 = vmatprep.mubr.f32.mxu0 0.0
        %v1369 = vand.u32 %v332, 4294901760
        %1370 = vmatmul.mubr.f32.gmra.mrb[0].mxu0 %v1369
        %v1371 = vpop.f32.mrb[0].mxu0
        %v1372 = vadd.f32 %v754, %v1371
        %v1373 = vpop.f32.mrb[0].mxu0
        %1374 = vmatprep.mubr.f32.mxu0 0.0
        %v1375 = vand.u32 %v335, 4294901760
        %1376 = vmatmul.mubr.f32.gmra.mrb[0].mxu0 %v1375
        %v1377 = vpop.f32.mrb[0].mxu0
        %v1378 = vadd.f32 %v764, %v1377
        %v1379 = vpop.f32.mrb[0].mxu0
        %1380 = vmatprep.mubr.f32.mxu0 0.0
        %v1381 = vand.u32 %v338, 4294901760
        %1382 = vmatmul.mubr.f32.gmra.mrb[0].mxu0 %v1381
        %v1383 = vpop.f32.mrb[0].mxu0
        %v1384 = vadd.f32 %v774, %v1383
        %v1385 = vpop.f32.mrb[0].mxu0
        %1386 = vmatprep.mubr.f32.mxu0 0.0
        %v1387 = vand.u32 %v341, 4294901760
        %1388 = vmatmul.mubr.f32.gmra.mrb[0].mxu0 %v1387
        %v1389 = vpop.f32.mrb[0].mxu0
        %v1390 = vadd.f32 %v784, %v1389
        %v1391 = vpop.f32.mrb[0].mxu0
        %1392 = vmatprep.mubr.f32.mxu0 0.0
        %v1393 = vand.u32 %v344, 4294901760
        %1394 = vmatmul.mubr.f32.gmra.mrb[0].mxu0 %v1393
        %v1395 = vpop.f32.mrb[0].mxu0
        %v1396 = vadd.f32 %v794, %v1395
        %v1397 = vpop.f32.mrb[0].mxu0
        %1398 = vmatprep.mubr.f32.mxu0 0.0
        %v1399 = vand.u32 %v347, 4294901760
        %1400 = vmatmul.mubr.f32.gmra.mrb[0].mxu0 %v1399
        %v1401 = vpop.f32.mrb[0].mxu0
        %v1402 = vadd.f32 %v804, %v1401
        %v1403 = vpop.f32.mrb[0].mxu0
        %1404 = vmatprep.mubr.f32.mxu0 0.0
        %v1405 = vand.u32 %v350, 4294901760
        %1406 = vmatmul.mubr.f32.gmra.mrb[0].mxu0 %v1405
        %v1407 = vpop.f32.mrb[0].mxu0
        %v1408 = vadd.f32 %v814, %v1407
        %v1409 = vpop.f32.mrb[0].mxu0
        %1410 = vmatprep.mubr.f32.mxu0 0.0
        %v1411 = vand.u32 %v353, 4294901760
        %1412 = vmatmul.mubr.f32.gmra.mrb[0].mxu0 %v1411
        %v1413 = vpop.f32.mrb[0].mxu0
        %v1414 = vadd.f32 %v824, %v1413
        %v1415 = vpop.f32.mrb[0].mxu0
        %1416 = vmatprep.mubr.f32.mxu0 0.0
        %v1417 = vand.u32 %v356, 4294901760
        %1418 = vmatmul.mubr.f32.gmra.mrb[0].mxu0 %v1417
        %v1419 = vpop.f32.mrb[0].mxu0
        %v1420 = vadd.f32 %v834, %v1419
        %v1421 = vpop.f32.mrb[0].mxu0
        %1422 = vmatprep.mubr.f32.mxu0 0.0
        %v1423 = vand.u32 %v359, 4294901760
        %1424 = vmatmul.mubr.f32.gmra.mrb[0].mxu0 %v1423
        %v1425 = vpop.f32.mrb[0].mxu0
        %v1426 = vadd.f32 %v844, %v1425
        %v1427 = vpop.f32.mrb[0].mxu0
        %1428 = vmatprep.mubr.f32.mxu0 0.0
        %v1429 = vand.u32 %v362, 4294901760
        %1430 = vmatmul.mubr.f32.gmra.mrb[0].mxu0 %v1429
        %v1431 = vpop.f32.mrb[0].mxu0
        %v1432 = vadd.f32 %v854, %v1431
        %v1433 = vpop.f32.mrb[0].mxu0
        %1434 = vmatprep.mubr.f32.mxu0 0.0
        %v1435 = vand.u32 %v365, 4294901760
        %1436 = vmatmul.mubr.f32.gmra.mrb[0].mxu0 %v1435
        %v1437 = vpop.f32.mrb[0].mxu0
        %v1438 = vadd.f32 %v864, %v1437
        %v1439 = vpop.f32.mrb[0].mxu0
        %1440 = vmatprep.mubr.f32.mxu0 0.0
        %v1441 = vand.u32 %v368, 4294901760
        %1442 = vmatmul.mubr.f32.gmra.mrb[0].mxu0 %v1441
        %v1443 = vpop.f32.mrb[0].mxu0
        %v1444 = vadd.f32 %v874, %v1443
        %v1445 = vpop.f32.mrb[0].mxu0
        %1446 = vmatprep.mubr.f32.mxu0 0.0
        %v1447 = vand.u32 %v371, 4294901760
        %1448 = vmatmul.mubr.f32.gmra.mrb[0].mxu0 %v1447
        %v1449 = vpop.f32.mrb[0].mxu0
        %v1450 = vadd.f32 %v884, %v1449
        %v1451 = vpop.f32.mrb[0].mxu0
        %1452 = vmatprep.mubr.f32.mxu0 0.0
        %v1453 = vand.u32 %v374, 4294901760
        %1454 = vmatmul.mubr.f32.gmra.mrb[0].mxu0 %v1453
        %v1455 = vpop.f32.mrb[0].mxu0
        %v1456 = vadd.f32 %v894, %v1455
        %v1457 = vpop.f32.mrb[0].mxu0
        %1458 = vmatprep.mubr.f32.mxu0 0.0
        %v1459 = vand.u32 %v377, 4294901760
        %1460 = vmatmul.mubr.f32.gmra.mrb[0].mxu0 %v1459
        %v1461 = vpop.f32.mrb[0].mxu0
        %v1462 = vadd.f32 %v904, %v1461
        %v1463 = vpop.f32.mrb[0].mxu0
        %1464 = vmatprep.mubr.f32.mxu0 0.0
        %v1465 = vand.u32 %v380, 4294901760
        %1466 = vmatmul.mubr.f32.gmra.mrb[0].mxu0 %v1465
        %v1467 = vpop.f32.mrb[0].mxu0
        %v1468 = vadd.f32 %v914, %v1467
        %v1469 = vpop.f32.mrb[0].mxu0
        %1470 = vmatprep.mubr.f32.mxu0 0.0
        %v1471 = vand.u32 %v383, 4294901760
        %1472 = vmatmul.mubr.f32.gmra.mrb[0].mxu0 %v1471
        %v1473 = vpop.f32.mrb[0].mxu0
        %v1474 = vadd.f32 %v924, %v1473
        %v1475 = vpop.f32.mrb[0].mxu0
        %1476 = vmatprep.mubr.f32.mxu0 0.0
        %v1477 = vand.u32 %v386, 4294901760
        %1478 = vmatmul.mubr.f32.gmra.mrb[0].mxu0 %v1477
        %v1479 = vpop.f32.mrb[0].mxu0
        %v1480 = vadd.f32 %v934, %v1479
        %v1481 = vpop.f32.mrb[0].mxu0
        %1482 = vmatprep.mubr.f32.mxu0 0.0
        %v1483 = vand.u32 %v389, 4294901760
        %1484 = vmatmul.mubr.f32.gmra.mrb[0].mxu0 %v1483
        %v1485 = vpop.f32.mrb[0].mxu0
        %v1486 = vadd.f32 %v944, %v1485
        %v1487 = vpop.f32.mrb[0].mxu0
        %1488 = vmatprep.mubr.f32.mxu0 0.0
        %v1489 = vand.u32 %v392, 4294901760
        %1490 = vmatmul.mubr.f32.gmra.mrb[0].mxu0 %v1489
        %v1491 = vpop.f32.mrb[0].mxu0
        %v1492 = vadd.f32 %v954, %v1491
        %v1493 = vpop.f32.mrb[0].mxu0
        %1494 = vmatprep.mubr.f32.mxu0 0.0
        %v1495 = vand.u32 %v395, 4294901760
        %1496 = vmatmul.mubr.f32.gmra.mrb[0].mxu0 %v1495
        %v1497 = vpop.f32.mrb[0].mxu0
        %v1498 = vadd.f32 %v964, %v1497
        %v1499 = vpop.f32.mrb[0].mxu0
        %1500 = vmatprep.mubr.f32.mxu0 0.0
        %v1501 = vand.u32 %v398, 4294901760
        %1502 = vmatmul.mubr.f32.gmra.mrb[0].mxu0 %v1501
        %v1503 = vpop.f32.mrb[0].mxu0
        %v1504 = vadd.f32 %v974, %v1503
        %v1505 = vpop.f32.mrb[0].mxu0
        %1506 = vmatprep.mubr.f32.mxu0 0.0
        %v1507 = vand.u32 %v401, 4294901760
        %1508 = vmatmul.mubr.f32.gmra.mrb[0].mxu0 %v1507
        %v1509 = vpop.f32.mrb[0].mxu0
        %v1510 = vadd.f32 %v984, %v1509
        %v1511 = vpop.f32.mrb[0].mxu0
        %1512 = vmatprep.mubr.f32.mxu0 0.0
        %v1513 = vand.u32 %v404, 4294901760
        %1514 = vmatmul.mubr.f32.gmra.mrb[0].mxu0 %v1513
        %v1515 = vpop.f32.mrb[0].mxu0
        %v1516 = vadd.f32 %v994, %v1515
        %v1517 = vpop.f32.mrb[0].mxu0
        %1518 = vmatprep.mubr.f32.mxu0 0.0
        %v1519 = vand.u32 %v407, 4294901760
        %1520 = vmatmul.mubr.f32.gmra.mrb[0].mxu0 %v1519
        %v1521 = vpop.f32.mrb[0].mxu0
        %v1522 = vadd.f32 %v1004, %v1521
        %v1523 = vpop.f32.mrb[0].mxu0
        %1524 = vmatprep.mubr.f32.mxu0 0.0
        %v1525 = vand.u32 %v410, 4294901760
        %1526 = vmatmul.mubr.f32.gmra.mrb[0].mxu0 %v1525
        %v1527 = vpop.f32.mrb[0].mxu0
        %v1528 = vadd.f32 %v1014, %v1527
        %v1529 = vpop.f32.mrb[0].mxu0
        %1530 = vmatprep.mubr.f32.mxu0 0.0
        %v1531 = vand.u32 %v413, 4294901760
        %1532 = vmatmul.mubr.f32.gmra.mrb[0].mxu0 %v1531
        %v1533 = vpop.f32.mrb[0].mxu0
        %v1534 = vadd.f32 %v1024, %v1533
        %v1535 = vpop.f32.mrb[0].mxu0
        %1536 = vmatprep.mubr.f32.mxu0 0.0
        %v1537 = vand.u32 %v416, 4294901760
        %1538 = vmatmul.mubr.f32.gmra.mrb[0].mxu0 %v1537
        %v1539 = vpop.f32.mrb[0].mxu0
        %v1540 = vadd.f32 %v1034, %v1539
        %v1541 = vpop.f32.mrb[0].mxu0
        %1542 = vmatprep.mubr.f32.mxu0 0.0
        %v1543 = vand.u32 %v419, 4294901760
        %1544 = vmatmul.mubr.f32.gmra.mrb[0].mxu0 %v1543
        %v1545 = vpop.f32.mrb[0].mxu0
        %v1546 = vadd.f32 %v1044, %v1545
        %v1547 = vpop.f32.mrb[0].mxu0
        %1548 = vmatprep.mubr.f32.mxu0 0.0
        %v1549 = vand.u32 %v422, 4294901760
        %1550 = vmatmul.mubr.f32.gmra.mrb[0].mxu0 %v1549
        %v1551 = vpop.f32.mrb[0].mxu0
        %v1552 = vadd.f32 %v1054, %v1551
        %v1553 = vpop.f32.mrb[0].mxu0
        %1554 = vmatprep.mubr.f32.mxu0 0.0
        %v1555 = vand.u32 %v425, 4294901760
        %1556 = vmatmul.mubr.f32.gmra.mrb[0].mxu0 %v1555
        %v1557 = vpop.f32.mrb[0].mxu0
        %v1558 = vadd.f32 %v1064, %v1557
        %v1559 = vpop.f32.mrb[0].mxu0
        %1560 = vmatprep.mubr.f32.mxu0 0.0
        %v1561 = vand.u32 %v428, 4294901760
        %1562 = vmatmul.mubr.f32.gmra.mrb[0].mxu0 %v1561
        %v1563 = vpop.f32.mrb[0].mxu0
        %v1564 = vadd.f32 %v1074, %v1563
        %v1565 = vpop.f32.mrb[0].mxu0
        %1566 = vmatprep.mubr.f32.mxu0 0.0
        %v1567 = vand.u32 %v431, 4294901760
        %1568 = vmatmul.mubr.f32.gmra.mrb[0].mxu0 %v1567
        %v1569 = vpop.f32.mrb[0].mxu0
        %v1570 = vadd.f32 %v1084, %v1569
        %v1571 = vpop.f32.mrb[0].mxu0
        %1572 = vmatprep.mubr.f32.mxu0 0.0
        %v1573 = vand.u32 %v434, 4294901760
        %1574 = vmatmul.mubr.f32.gmra.mrb[0].mxu0 %v1573
        %v1575 = vpop.f32.mrb[0].mxu0
        %v1576 = vadd.f32 %v1094, %v1575
        %v1577 = vpop.f32.mrb[0].mxu0
        %1578 = vmatprep.mubr.f32.mxu0 0.0
        %v1579 = vand.u32 %v437, 4294901760
        %1580 = vmatmul.mubr.f32.gmra.mrb[0].mxu0 %v1579
        %v1581 = vpop.f32.mrb[0].mxu0
        %v1582 = vadd.f32 %v1104, %v1581
        %v1583 = vpop.f32.mrb[0].mxu0
        %1584 = vmatprep.mubr.f32.mxu0 0.0
        %v1585 = vand.u32 %v440, 4294901760
        %1586 = vmatmul.mubr.f32.gmra.mrb[0].mxu0 %v1585
        %v1587 = vpop.f32.mrb[0].mxu0
        %v1588 = vadd.f32 %v1114, %v1587
        %v1589 = vpop.f32.mrb[0].mxu0
        %1590 = vmatprep.mubr.f32.mxu0 0.0
        %v1591 = vand.u32 %v443, 4294901760
        %1592 = vmatmul.mubr.f32.gmra.mrb[0].mxu0 %v1591
        %v1593 = vpop.f32.mrb[0].mxu0
        %v1594 = vadd.f32 %v1124, %v1593
        %v1595 = vpop.f32.mrb[0].mxu0
        %1596 = vmatprep.mubr.f32.mxu0 0.0
        %v1597 = vand.u32 %v446, 4294901760
        %1598 = vmatmul.mubr.f32.gmra.mrb[0].mxu0 %v1597
        %v1599 = vpop.f32.mrb[0].mxu0
        %v1600 = vadd.f32 %v1134, %v1599
        %v1601 = vpop.f32.mrb[0].mxu0
        %1602 = vmatprep.mubr.f32.mxu0 0.0
        %v1603 = vand.u32 %v449, 4294901760
        %1604 = vmatmul.mubr.f32.gmra.mrb[0].mxu0 %v1603
        %v1605 = vpop.f32.mrb[0].mxu0
        %v1606 = vadd.f32 %v1144, %v1605
        %v1607 = vpop.f32.mrb[0].mxu0
        %1608 = vmatprep.mubr.f32.mxu0 0.0
        %v1609 = vand.u32 %v452, 4294901760
        %1610 = vmatmul.mubr.f32.gmra.mrb[0].mxu0 %v1609
        %v1611 = vpop.f32.mrb[0].mxu0
        %v1612 = vadd.f32 %v1154, %v1611
        %v1613 = vpop.f32.mrb[0].mxu0
        %1614 = vmatprep.mubr.f32.mxu0 0.0
        %v1615 = vand.u32 %v455, 4294901760
        %1616 = vmatmul.mubr.f32.gmra.mrb[0].mxu0 %v1615
        %v1617 = vpop.f32.mrb[0].mxu0
        %v1618 = vadd.f32 %v1164, %v1617
        %v1619 = vpop.f32.mrb[0].mxu0
        %1620 = vdwg.mxu0
        %1621 = vmatprep.subr.mxu0 0.0
        %v1622 = vand.u32 %v459, 4294901760
        %v1623 = vsub.f32 %v459, %v1622
        %1624 = vmatpush1.msra.mxu0 %v1623
        %1625 = vmatprep.subr.mxu0 0.0
        %1626 = vmatpush1.msra.mxu0 0.0
        %1627 = vmatprep.subr.mxu0 0.0
        %1628 = vmatpush1.msra.mxu0 0.0
        %1629 = vmatprep.subr.mxu0 0.0
        %1630 = vmatpush1.msra.mxu0 0.0
        %1631 = vmatprep.subr.mxu0 0.0
        %1632 = vmatpush1.msra.mxu0 0.0
        %1633 = vmatprep.subr.mxu0 0.0
        %1634 = vmatpush1.msra.mxu0 0.0
        %1635 = vmatprep.subr.mxu0 0.0
        %1636 = vmatpush1.msra.mxu0 0.0
        %1637 = vmatprep.subr.mxu0 0.0
        %1638 = vmatpush1.msra.mxu0 0.0
        %1639 = vmatprep.subr.mxu0 0.0
        %1640 = vmatpush1.msra.mxu0 0.0
        %1641 = vmatprep.subr.mxu0 0.0
        %1642 = vmatpush1.msra.mxu0 0.0
        %1643 = vmatprep.subr.mxu0 0.0
        %1644 = vmatpush1.msra.mxu0 0.0
        %1645 = vmatprep.subr.mxu0 0.0
        %1646 = vmatpush1.msra.mxu0 0.0
        %1647 = vmatprep.subr.mxu0 0.0
        %1648 = vmatpush1.msra.mxu0 0.0
        %1649 = vmatprep.subr.mxu0 0.0
        %1650 = vmatpush1.msra.mxu0 0.0
        %1651 = vmatprep.subr.mxu0 0.0
        %1652 = vmatpush1.msra.mxu0 0.0
        %1653 = vmatprep.subr.mxu0 0.0
        %1654 = vmatpush1.msra.mxu0 0.0
        %1655 = vmatprep.subr.mxu0 0.0
        %1656 = vmatpush1.msra.mxu0 0.0
        %1657 = vmatprep.subr.mxu0 0.0
        %1658 = vmatpush1.msra.mxu0 0.0
        %1659 = vmatprep.subr.mxu0 0.0
        %1660 = vmatpush1.msra.mxu0 0.0
        %1661 = vmatprep.subr.mxu0 0.0
        %1662 = vmatpush1.msra.mxu0 0.0
        %1663 = vmatprep.subr.mxu0 0.0
        %1664 = vmatpush1.msra.mxu0 0.0
        %1665 = vmatprep.subr.mxu0 0.0
        %1666 = vmatpush1.msra.mxu0 0.0
        %1667 = vmatprep.subr.mxu0 0.0
        %1668 = vmatpush1.msra.mxu0 0.0
        %1669 = vmatprep.subr.mxu0 0.0
        %1670 = vmatpush1.msra.mxu0 0.0
        %1671 = vmatprep.subr.mxu0 0.0
        %1672 = vmatpush1.msra.mxu0 0.0
        %1673 = vmatprep.subr.mxu0 0.0
        %1674 = vmatpush1.msra.mxu0 0.0
        %1675 = vmatprep.subr.mxu0 0.0
        %1676 = vmatpush1.msra.mxu0 0.0
        %1677 = vmatprep.subr.mxu0 0.0
        %1678 = vmatpush1.msra.mxu0 0.0
        %1679 = vmatprep.subr.mxu0 0.0
        %1680 = vmatpush1.msra.mxu0 0.0
        %1681 = vmatprep.subr.mxu0 0.0
        %1682 = vmatpush1.msra.mxu0 0.0
        %1683 = vmatprep.subr.mxu0 0.0
        %1684 = vmatpush1.msra.mxu0 0.0
        %1685 = vmatprep.subr.mxu0 0.0
        %1686 = vmatpush1.msra.mxu0 0.0
        %1687 = vmatprep.mubr.f32.mxu0 0.0
        %v1688 = vand.u32 %v266, 4294901760
        %v1689 = vsub.f32 %v266, %v1688
        %1690 = vmatmul.mubr.f32.gmra.mrb[0].mxu0 %v1689
        %v1691 = vpop.f32.mrb[0].mxu0
        %v1692 = vadd.f32 %v1240, %v1691
        %v1693 = vpop.f32.mrb[0].mxu0
        %1694 = vmatprep.mubr.f32.mxu0 0.0
        %v1695 = vand.u32 %v269, 4294901760
        %v1696 = vsub.f32 %v269, %v1695
        %1697 = vmatmul.mubr.f32.gmra.mrb[0].mxu0 %v1696
        %v1698 = vpop.f32.mrb[0].mxu0
        %v1699 = vadd.f32 %v1246, %v1698
        %v1700 = vpop.f32.mrb[0].mxu0
        %1701 = vmatprep.mubr.f32.mxu0 0.0
        %v1702 = vand.u32 %v272, 4294901760
        %v1703 = vsub.f32 %v272, %v1702
        %1704 = vmatmul.mubr.f32.gmra.mrb[0].mxu0 %v1703
        %v1705 = vpop.f32.mrb[0].mxu0
        %v1706 = vadd.f32 %v1252, %v1705
        %v1707 = vpop.f32.mrb[0].mxu0
        %1708 = vmatprep.mubr.f32.mxu0 0.0
        %v1709 = vand.u32 %v275, 4294901760
        %v1710 = vsub.f32 %v275, %v1709
        %1711 = vmatmul.mubr.f32.gmra.mrb[0].mxu0 %v1710
        %v1712 = vpop.f32.mrb[0].mxu0
        %v1713 = vadd.f32 %v1258, %v1712
        %v1714 = vpop.f32.mrb[0].mxu0
        %1715 = vmatprep.mubr.f32.mxu0 0.0
        %v1716 = vand.u32 %v278, 4294901760
        %v1717 = vsub.f32 %v278, %v1716
        %1718 = vmatmul.mubr.f32.gmra.mrb[0].mxu0 %v1717
        %v1719 = vpop.f32.mrb[0].mxu0
        %v1720 = vadd.f32 %v1264, %v1719
        %v1721 = vpop.f32.mrb[0].mxu0
        %1722 = vmatprep.mubr.f32.mxu0 0.0
        %v1723 = vand.u32 %v281, 4294901760
        %v1724 = vsub.f32 %v281, %v1723
        %1725 = vmatmul.mubr.f32.gmra.mrb[0].mxu0 %v1724
        %v1726 = vpop.f32.mrb[0].mxu0
        %v1727 = vadd.f32 %v1270, %v1726
        %v1728 = vpop.f32.mrb[0].mxu0
        %1729 = vmatprep.mubr.f32.mxu0 0.0
        %v1730 = vand.u32 %v284, 4294901760
        %v1731 = vsub.f32 %v284, %v1730
        %1732 = vmatmul.mubr.f32.gmra.mrb[0].mxu0 %v1731
        %v1733 = vpop.f32.mrb[0].mxu0
        %v1734 = vadd.f32 %v1276, %v1733
        %v1735 = vpop.f32.mrb[0].mxu0
        %1736 = vmatprep.mubr.f32.mxu0 0.0
        %v1737 = vand.u32 %v287, 4294901760
        %v1738 = vsub.f32 %v287, %v1737
        %1739 = vmatmul.mubr.f32.gmra.mrb[0].mxu0 %v1738
        %v1740 = vpop.f32.mrb[0].mxu0
        %v1741 = vadd.f32 %v1282, %v1740
        %v1742 = vpop.f32.mrb[0].mxu0
        %1743 = vmatprep.mubr.f32.mxu0 0.0
        %v1744 = vand.u32 %v290, 4294901760
        %v1745 = vsub.f32 %v290, %v1744
        %1746 = vmatmul.mubr.f32.gmra.mrb[0].mxu0 %v1745
        %v1747 = vpop.f32.mrb[0].mxu0
        %v1748 = vadd.f32 %v1288, %v1747
        %v1749 = vpop.f32.mrb[0].mxu0
        %1750 = vmatprep.mubr.f32.mxu0 0.0
        %v1751 = vand.u32 %v293, 4294901760
        %v1752 = vsub.f32 %v293, %v1751
        %1753 = vmatmul.mubr.f32.gmra.mrb[0].mxu0 %v1752
        %v1754 = vpop.f32.mrb[0].mxu0
        %v1755 = vadd.f32 %v1294, %v1754
        %v1756 = vpop.f32.mrb[0].mxu0
        %1757 = vmatprep.mubr.f32.mxu0 0.0
        %v1758 = vand.u32 %v296, 4294901760
        %v1759 = vsub.f32 %v296, %v1758
        %1760 = vmatmul.mubr.f32.gmra.mrb[0].mxu0 %v1759
        %v1761 = vpop.f32.mrb[0].mxu0
        %v1762 = vadd.f32 %v1300, %v1761
        %v1763 = vpop.f32.mrb[0].mxu0
        %1764 = vmatprep.mubr.f32.mxu0 0.0
        %v1765 = vand.u32 %v299, 4294901760
        %v1766 = vsub.f32 %v299, %v1765
        %1767 = vmatmul.mubr.f32.gmra.mrb[0].mxu0 %v1766
        %v1768 = vpop.f32.mrb[0].mxu0
        %v1769 = vadd.f32 %v1306, %v1768
        %v1770 = vpop.f32.mrb[0].mxu0
        %1771 = vmatprep.mubr.f32.mxu0 0.0
        %v1772 = vand.u32 %v302, 4294901760
        %v1773 = vsub.f32 %v302, %v1772
        %1774 = vmatmul.mubr.f32.gmra.mrb[0].mxu0 %v1773
        %v1775 = vpop.f32.mrb[0].mxu0
        %v1776 = vadd.f32 %v1312, %v1775
        %v1777 = vpop.f32.mrb[0].mxu0
        %1778 = vmatprep.mubr.f32.mxu0 0.0
        %v1779 = vand.u32 %v305, 4294901760
        %v1780 = vsub.f32 %v305, %v1779
        %1781 = vmatmul.mubr.f32.gmra.mrb[0].mxu0 %v1780
        %v1782 = vpop.f32.mrb[0].mxu0
        %v1783 = vadd.f32 %v1318, %v1782
        %v1784 = vpop.f32.mrb[0].mxu0
        %1785 = vmatprep.mubr.f32.mxu0 0.0
        %v1786 = vand.u32 %v308, 4294901760
        %v1787 = vsub.f32 %v308, %v1786
        %1788 = vmatmul.mubr.f32.gmra.mrb[0].mxu0 %v1787
        %v1789 = vpop.f32.mrb[0].mxu0
        %v1790 = vadd.f32 %v1324, %v1789
        %v1791 = vpop.f32.mrb[0].mxu0
        %1792 = vmatprep.mubr.f32.mxu0 0.0
        %v1793 = vand.u32 %v311, 4294901760
        %v1794 = vsub.f32 %v311, %v1793
        %1795 = vmatmul.mubr.f32.gmra.mrb[0].mxu0 %v1794
        %v1796 = vpop.f32.mrb[0].mxu0
        %v1797 = vadd.f32 %v1330, %v1796
        %v1798 = vpop.f32.mrb[0].mxu0
        %1799 = vmatprep.mubr.f32.mxu0 0.0
        %v1800 = vand.u32 %v314, 4294901760
        %v1801 = vsub.f32 %v314, %v1800
        %1802 = vmatmul.mubr.f32.gmra.mrb[0].mxu0 %v1801
        %v1803 = vpop.f32.mrb[0].mxu0
        %v1804 = vadd.f32 %v1336, %v1803
        %v1805 = vpop.f32.mrb[0].mxu0
        %1806 = vmatprep.mubr.f32.mxu0 0.0
        %v1807 = vand.u32 %v317, 4294901760
        %v1808 = vsub.f32 %v317, %v1807
        %1809 = vmatmul.mubr.f32.gmra.mrb[0].mxu0 %v1808
        %v1810 = vpop.f32.mrb[0].mxu0
        %v1811 = vadd.f32 %v1342, %v1810
        %v1812 = vpop.f32.mrb[0].mxu0
        %1813 = vmatprep.mubr.f32.mxu0 0.0
        %v1814 = vand.u32 %v320, 4294901760
        %v1815 = vsub.f32 %v320, %v1814
        %1816 = vmatmul.mubr.f32.gmra.mrb[0].mxu0 %v1815
        %v1817 = vpop.f32.mrb[0].mxu0
        %v1818 = vadd.f32 %v1348, %v1817
        %v1819 = vpop.f32.mrb[0].mxu0
        %1820 = vmatprep.mubr.f32.mxu0 0.0
        %v1821 = vand.u32 %v323, 4294901760
        %v1822 = vsub.f32 %v323, %v1821
        %1823 = vmatmul.mubr.f32.gmra.mrb[0].mxu0 %v1822
        %v1824 = vpop.f32.mrb[0].mxu0
        %v1825 = vadd.f32 %v1354, %v1824
        %v1826 = vpop.f32.mrb[0].mxu0
        %1827 = vmatprep.mubr.f32.mxu0 0.0
        %v1828 = vand.u32 %v326, 4294901760
        %v1829 = vsub.f32 %v326, %v1828
        %1830 = vmatmul.mubr.f32.gmra.mrb[0].mxu0 %v1829
        %v1831 = vpop.f32.mrb[0].mxu0
        %v1832 = vadd.f32 %v1360, %v1831
        %v1833 = vpop.f32.mrb[0].mxu0
        %1834 = vmatprep.mubr.f32.mxu0 0.0
        %v1835 = vand.u32 %v329, 4294901760
        %v1836 = vsub.f32 %v329, %v1835
        %1837 = vmatmul.mubr.f32.gmra.mrb[0].mxu0 %v1836
        %v1838 = vpop.f32.mrb[0].mxu0
        %v1839 = vadd.f32 %v1366, %v1838
        %v1840 = vpop.f32.mrb[0].mxu0
        %1841 = vmatprep.mubr.f32.mxu0 0.0
        %v1842 = vand.u32 %v332, 4294901760
        %v1843 = vsub.f32 %v332, %v1842
        %1844 = vmatmul.mubr.f32.gmra.mrb[0].mxu0 %v1843
        %v1845 = vpop.f32.mrb[0].mxu0
        %v1846 = vadd.f32 %v1372, %v1845
        %v1847 = vpop.f32.mrb[0].mxu0
        %1848 = vmatprep.mubr.f32.mxu0 0.0
        %v1849 = vand.u32 %v335, 4294901760
        %v1850 = vsub.f32 %v335, %v1849
        %1851 = vmatmul.mubr.f32.gmra.mrb[0].mxu0 %v1850
        %v1852 = vpop.f32.mrb[0].mxu0
        %v1853 = vadd.f32 %v1378, %v1852
        %v1854 = vpop.f32.mrb[0].mxu0
        %1855 = vmatprep.mubr.f32.mxu0 0.0
        %v1856 = vand.u32 %v338, 4294901760
        %v1857 = vsub.f32 %v338, %v1856
        %1858 = vmatmul.mubr.f32.gmra.mrb[0].mxu0 %v1857
        %v1859 = vpop.f32.mrb[0].mxu0
        %v1860 = vadd.f32 %v1384, %v1859
        %v1861 = vpop.f32.mrb[0].mxu0
        %1862 = vmatprep.mubr.f32.mxu0 0.0
        %v1863 = vand.u32 %v341, 4294901760
        %v1864 = vsub.f32 %v341, %v1863
        %1865 = vmatmul.mubr.f32.gmra.mrb[0].mxu0 %v1864
        %v1866 = vpop.f32.mrb[0].mxu0
        %v1867 = vadd.f32 %v1390, %v1866
        %v1868 = vpop.f32.mrb[0].mxu0
        %1869 = vmatprep.mubr.f32.mxu0 0.0
        %v1870 = vand.u32 %v344, 4294901760
        %v1871 = vsub.f32 %v344, %v1870
        %1872 = vmatmul.mubr.f32.gmra.mrb[0].mxu0 %v1871
        %v1873 = vpop.f32.mrb[0].mxu0
        %v1874 = vadd.f32 %v1396, %v1873
        %v1875 = vpop.f32.mrb[0].mxu0
        %1876 = vmatprep.mubr.f32.mxu0 0.0
        %v1877 = vand.u32 %v347, 4294901760
        %v1878 = vsub.f32 %v347, %v1877
        %1879 = vmatmul.mubr.f32.gmra.mrb[0].mxu0 %v1878
        %v1880 = vpop.f32.mrb[0].mxu0
        %v1881 = vadd.f32 %v1402, %v1880
        %v1882 = vpop.f32.mrb[0].mxu0
        %1883 = vmatprep.mubr.f32.mxu0 0.0
        %v1884 = vand.u32 %v350, 4294901760
        %v1885 = vsub.f32 %v350, %v1884
        %1886 = vmatmul.mubr.f32.gmra.mrb[0].mxu0 %v1885
        %v1887 = vpop.f32.mrb[0].mxu0
        %v1888 = vadd.f32 %v1408, %v1887
        %v1889 = vpop.f32.mrb[0].mxu0
        %1890 = vmatprep.mubr.f32.mxu0 0.0
        %v1891 = vand.u32 %v353, 4294901760
        %v1892 = vsub.f32 %v353, %v1891
        %1893 = vmatmul.mubr.f32.gmra.mrb[0].mxu0 %v1892
        %v1894 = vpop.f32.mrb[0].mxu0
        %v1895 = vadd.f32 %v1414, %v1894
        %v1896 = vpop.f32.mrb[0].mxu0
        %1897 = vmatprep.mubr.f32.mxu0 0.0
        %v1898 = vand.u32 %v356, 4294901760
        %v1899 = vsub.f32 %v356, %v1898
        %1900 = vmatmul.mubr.f32.gmra.mrb[0].mxu0 %v1899
        %v1901 = vpop.f32.mrb[0].mxu0
        %v1902 = vadd.f32 %v1420, %v1901
        %v1903 = vpop.f32.mrb[0].mxu0
        %1904 = vmatprep.mubr.f32.mxu0 0.0
        %v1905 = vand.u32 %v359, 4294901760
        %v1906 = vsub.f32 %v359, %v1905
        %1907 = vmatmul.mubr.f32.gmra.mrb[0].mxu0 %v1906
        %v1908 = vpop.f32.mrb[0].mxu0
        %v1909 = vadd.f32 %v1426, %v1908
        %v1910 = vpop.f32.mrb[0].mxu0
        %1911 = vmatprep.mubr.f32.mxu0 0.0
        %v1912 = vand.u32 %v362, 4294901760
        %v1913 = vsub.f32 %v362, %v1912
        %1914 = vmatmul.mubr.f32.gmra.mrb[0].mxu0 %v1913
        %v1915 = vpop.f32.mrb[0].mxu0
        %v1916 = vadd.f32 %v1432, %v1915
        %v1917 = vpop.f32.mrb[0].mxu0
        %1918 = vmatprep.mubr.f32.mxu0 0.0
        %v1919 = vand.u32 %v365, 4294901760
        %v1920 = vsub.f32 %v365, %v1919
        %1921 = vmatmul.mubr.f32.gmra.mrb[0].mxu0 %v1920
        %v1922 = vpop.f32.mrb[0].mxu0
        %v1923 = vadd.f32 %v1438, %v1922
        %v1924 = vpop.f32.mrb[0].mxu0
        %1925 = vmatprep.mubr.f32.mxu0 0.0
        %v1926 = vand.u32 %v368, 4294901760
        %v1927 = vsub.f32 %v368, %v1926
        %1928 = vmatmul.mubr.f32.gmra.mrb[0].mxu0 %v1927
        %v1929 = vpop.f32.mrb[0].mxu0
        %v1930 = vadd.f32 %v1444, %v1929
        %v1931 = vpop.f32.mrb[0].mxu0
        %1932 = vmatprep.mubr.f32.mxu0 0.0
        %v1933 = vand.u32 %v371, 4294901760
        %v1934 = vsub.f32 %v371, %v1933
        %1935 = vmatmul.mubr.f32.gmra.mrb[0].mxu0 %v1934
        %v1936 = vpop.f32.mrb[0].mxu0
        %v1937 = vadd.f32 %v1450, %v1936
        %v1938 = vpop.f32.mrb[0].mxu0
        %1939 = vmatprep.mubr.f32.mxu0 0.0
        %v1940 = vand.u32 %v374, 4294901760
        %v1941 = vsub.f32 %v374, %v1940
        %1942 = vmatmul.mubr.f32.gmra.mrb[0].mxu0 %v1941
        %v1943 = vpop.f32.mrb[0].mxu0
        %v1944 = vadd.f32 %v1456, %v1943
        %v1945 = vpop.f32.mrb[0].mxu0
        %1946 = vmatprep.mubr.f32.mxu0 0.0
        %v1947 = vand.u32 %v377, 4294901760
        %v1948 = vsub.f32 %v377, %v1947
        %1949 = vmatmul.mubr.f32.gmra.mrb[0].mxu0 %v1948
        %v1950 = vpop.f32.mrb[0].mxu0
        %v1951 = vadd.f32 %v1462, %v1950
        %v1952 = vpop.f32.mrb[0].mxu0
        %1953 = vmatprep.mubr.f32.mxu0 0.0
        %v1954 = vand.u32 %v380, 4294901760
        %v1955 = vsub.f32 %v380, %v1954
        %1956 = vmatmul.mubr.f32.gmra.mrb[0].mxu0 %v1955
        %v1957 = vpop.f32.mrb[0].mxu0
        %v1958 = vadd.f32 %v1468, %v1957
        %v1959 = vpop.f32.mrb[0].mxu0
        %1960 = vmatprep.mubr.f32.mxu0 0.0
        %v1961 = vand.u32 %v383, 4294901760
        %v1962 = vsub.f32 %v383, %v1961
        %1963 = vmatmul.mubr.f32.gmra.mrb[0].mxu0 %v1962
        %v1964 = vpop.f32.mrb[0].mxu0
        %v1965 = vadd.f32 %v1474, %v1964
        %v1966 = vpop.f32.mrb[0].mxu0
        %1967 = vmatprep.mubr.f32.mxu0 0.0
        %v1968 = vand.u32 %v386, 4294901760
        %v1969 = vsub.f32 %v386, %v1968
        %1970 = vmatmul.mubr.f32.gmra.mrb[0].mxu0 %v1969
        %v1971 = vpop.f32.mrb[0].mxu0
        %v1972 = vadd.f32 %v1480, %v1971
        %v1973 = vpop.f32.mrb[0].mxu0
        %1974 = vmatprep.mubr.f32.mxu0 0.0
        %v1975 = vand.u32 %v389, 4294901760
        %v1976 = vsub.f32 %v389, %v1975
        %1977 = vmatmul.mubr.f32.gmra.mrb[0].mxu0 %v1976
        %v1978 = vpop.f32.mrb[0].mxu0
        %v1979 = vadd.f32 %v1486, %v1978
        %v1980 = vpop.f32.mrb[0].mxu0
        %1981 = vmatprep.mubr.f32.mxu0 0.0
        %v1982 = vand.u32 %v392, 4294901760
        %v1983 = vsub.f32 %v392, %v1982
        %1984 = vmatmul.mubr.f32.gmra.mrb[0].mxu0 %v1983
        %v1985 = vpop.f32.mrb[0].mxu0
        %v1986 = vadd.f32 %v1492, %v1985
        %v1987 = vpop.f32.mrb[0].mxu0
        %1988 = vmatprep.mubr.f32.mxu0 0.0
        %v1989 = vand.u32 %v395, 4294901760
        %v1990 = vsub.f32 %v395, %v1989
        %1991 = vmatmul.mubr.f32.gmra.mrb[0].mxu0 %v1990
        %v1992 = vpop.f32.mrb[0].mxu0
        %v1993 = vadd.f32 %v1498, %v1992
        %v1994 = vpop.f32.mrb[0].mxu0
        %1995 = vmatprep.mubr.f32.mxu0 0.0
        %v1996 = vand.u32 %v398, 4294901760
        %v1997 = vsub.f32 %v398, %v1996
        %1998 = vmatmul.mubr.f32.gmra.mrb[0].mxu0 %v1997
        %v1999 = vpop.f32.mrb[0].mxu0
        %v2000 = vadd.f32 %v1504, %v1999
        %v2001 = vpop.f32.mrb[0].mxu0
        %2002 = vmatprep.mubr.f32.mxu0 0.0
        %v2003 = vand.u32 %v401, 4294901760
        %v2004 = vsub.f32 %v401, %v2003
        %2005 = vmatmul.mubr.f32.gmra.mrb[0].mxu0 %v2004
        %v2006 = vpop.f32.mrb[0].mxu0
        %v2007 = vadd.f32 %v1510, %v2006
        %v2008 = vpop.f32.mrb[0].mxu0
        %2009 = vmatprep.mubr.f32.mxu0 0.0
        %v2010 = vand.u32 %v404, 4294901760
        %v2011 = vsub.f32 %v404, %v2010
        %2012 = vmatmul.mubr.f32.gmra.mrb[0].mxu0 %v2011
        %v2013 = vpop.f32.mrb[0].mxu0
        %v2014 = vadd.f32 %v1516, %v2013
        %v2015 = vpop.f32.mrb[0].mxu0
        %2016 = vmatprep.mubr.f32.mxu0 0.0
        %v2017 = vand.u32 %v407, 4294901760
        %v2018 = vsub.f32 %v407, %v2017
        %2019 = vmatmul.mubr.f32.gmra.mrb[0].mxu0 %v2018
        %v2020 = vpop.f32.mrb[0].mxu0
        %v2021 = vadd.f32 %v1522, %v2020
        %v2022 = vpop.f32.mrb[0].mxu0
        %2023 = vmatprep.mubr.f32.mxu0 0.0
        %v2024 = vand.u32 %v410, 4294901760
        %v2025 = vsub.f32 %v410, %v2024
        %2026 = vmatmul.mubr.f32.gmra.mrb[0].mxu0 %v2025
        %v2027 = vpop.f32.mrb[0].mxu0
        %v2028 = vadd.f32 %v1528, %v2027
        %v2029 = vpop.f32.mrb[0].mxu0
        %2030 = vmatprep.mubr.f32.mxu0 0.0
        %v2031 = vand.u32 %v413, 4294901760
        %v2032 = vsub.f32 %v413, %v2031
        %2033 = vmatmul.mubr.f32.gmra.mrb[0].mxu0 %v2032
        %v2034 = vpop.f32.mrb[0].mxu0
        %v2035 = vadd.f32 %v1534, %v2034
        %v2036 = vpop.f32.mrb[0].mxu0
        %2037 = vmatprep.mubr.f32.mxu0 0.0
        %v2038 = vand.u32 %v416, 4294901760
        %v2039 = vsub.f32 %v416, %v2038
        %2040 = vmatmul.mubr.f32.gmra.mrb[0].mxu0 %v2039
        %v2041 = vpop.f32.mrb[0].mxu0
        %v2042 = vadd.f32 %v1540, %v2041
        %v2043 = vpop.f32.mrb[0].mxu0
        %2044 = vmatprep.mubr.f32.mxu0 0.0
        %v2045 = vand.u32 %v419, 4294901760
        %v2046 = vsub.f32 %v419, %v2045
        %2047 = vmatmul.mubr.f32.gmra.mrb[0].mxu0 %v2046
        %v2048 = vpop.f32.mrb[0].mxu0
        %v2049 = vadd.f32 %v1546, %v2048
        %v2050 = vpop.f32.mrb[0].mxu0
        %2051 = vmatprep.mubr.f32.mxu0 0.0
        %v2052 = vand.u32 %v422, 4294901760
        %v2053 = vsub.f32 %v422, %v2052
        %2054 = vmatmul.mubr.f32.gmra.mrb[0].mxu0 %v2053
        %v2055 = vpop.f32.mrb[0].mxu0
        %v2056 = vadd.f32 %v1552, %v2055
        %v2057 = vpop.f32.mrb[0].mxu0
        %2058 = vmatprep.mubr.f32.mxu0 0.0
        %v2059 = vand.u32 %v425, 4294901760
        %v2060 = vsub.f32 %v425, %v2059
        %2061 = vmatmul.mubr.f32.gmra.mrb[0].mxu0 %v2060
        %v2062 = vpop.f32.mrb[0].mxu0
        %v2063 = vadd.f32 %v1558, %v2062
        %v2064 = vpop.f32.mrb[0].mxu0
        %2065 = vmatprep.mubr.f32.mxu0 0.0
        %v2066 = vand.u32 %v428, 4294901760
        %v2067 = vsub.f32 %v428, %v2066
        %2068 = vmatmul.mubr.f32.gmra.mrb[0].mxu0 %v2067
        %v2069 = vpop.f32.mrb[0].mxu0
        %v2070 = vadd.f32 %v1564, %v2069
        %v2071 = vpop.f32.mrb[0].mxu0
        %2072 = vmatprep.mubr.f32.mxu0 0.0
        %v2073 = vand.u32 %v431, 4294901760
        %v2074 = vsub.f32 %v431, %v2073
        %2075 = vmatmul.mubr.f32.gmra.mrb[0].mxu0 %v2074
        %v2076 = vpop.f32.mrb[0].mxu0
        %v2077 = vadd.f32 %v1570, %v2076
        %v2078 = vpop.f32.mrb[0].mxu0
        %2079 = vmatprep.mubr.f32.mxu0 0.0
        %v2080 = vand.u32 %v434, 4294901760
        %v2081 = vsub.f32 %v434, %v2080
        %2082 = vmatmul.mubr.f32.gmra.mrb[0].mxu0 %v2081
        %v2083 = vpop.f32.mrb[0].mxu0
        %v2084 = vadd.f32 %v1576, %v2083
        %v2085 = vpop.f32.mrb[0].mxu0
        %2086 = vmatprep.mubr.f32.mxu0 0.0
        %v2087 = vand.u32 %v437, 4294901760
        %v2088 = vsub.f32 %v437, %v2087
        %2089 = vmatmul.mubr.f32.gmra.mrb[0].mxu0 %v2088
        %v2090 = vpop.f32.mrb[0].mxu0
        %v2091 = vadd.f32 %v1582, %v2090
        %v2092 = vpop.f32.mrb[0].mxu0
        %2093 = vmatprep.mubr.f32.mxu0 0.0
        %v2094 = vand.u32 %v440, 4294901760
        %v2095 = vsub.f32 %v440, %v2094
        %2096 = vmatmul.mubr.f32.gmra.mrb[0].mxu0 %v2095
        %v2097 = vpop.f32.mrb[0].mxu0
        %v2098 = vadd.f32 %v1588, %v2097
        %v2099 = vpop.f32.mrb[0].mxu0
        %2100 = vmatprep.mubr.f32.mxu0 0.0
        %v2101 = vand.u32 %v443, 4294901760
        %v2102 = vsub.f32 %v443, %v2101
        %2103 = vmatmul.mubr.f32.gmra.mrb[0].mxu0 %v2102
        %v2104 = vpop.f32.mrb[0].mxu0
        %v2105 = vadd.f32 %v1594, %v2104
        %v2106 = vpop.f32.mrb[0].mxu0
        %2107 = vmatprep.mubr.f32.mxu0 0.0
        %v2108 = vand.u32 %v446, 4294901760
        %v2109 = vsub.f32 %v446, %v2108
        %2110 = vmatmul.mubr.f32.gmra.mrb[0].mxu0 %v2109
        %v2111 = vpop.f32.mrb[0].mxu0
        %v2112 = vadd.f32 %v1600, %v2111
        %v2113 = vpop.f32.mrb[0].mxu0
        %2114 = vmatprep.mubr.f32.mxu0 0.0
        %v2115 = vand.u32 %v449, 4294901760
        %v2116 = vsub.f32 %v449, %v2115
        %2117 = vmatmul.mubr.f32.gmra.mrb[0].mxu0 %v2116
        %v2118 = vpop.f32.mrb[0].mxu0
        %v2119 = vadd.f32 %v1606, %v2118
        %v2120 = vpop.f32.mrb[0].mxu0
        %2121 = vmatprep.mubr.f32.mxu0 0.0
        %v2122 = vand.u32 %v452, 4294901760
        %v2123 = vsub.f32 %v452, %v2122
        %2124 = vmatmul.mubr.f32.gmra.mrb[0].mxu0 %v2123
        %v2125 = vpop.f32.mrb[0].mxu0
        %v2126 = vadd.f32 %v1612, %v2125
        %v2127 = vpop.f32.mrb[0].mxu0
        %2128 = vmatprep.mubr.f32.mxu0 0.0
        %v2129 = vand.u32 %v455, 4294901760
        %v2130 = vsub.f32 %v455, %v2129
        %2131 = vmatmul.mubr.f32.gmra.mrb[0].mxu0 %v2130
        %v2132 = vpop.f32.mrb[0].mxu0
        %v2133 = vadd.f32 %v1618, %v2132
        %v2134 = vpop.f32.mrb[0].mxu0
        %2135 = vdwg.mxu0
        %2136 = vmatprep.subr.mxu0 0.0
        %v2137 = vand.u32 %v459, 4294901760
        %2138 = vmatpush1.msra.mxu0 %v2137
        %2139 = vmatprep.subr.mxu0 0.0
        %2140 = vmatpush1.msra.mxu0 0.0
        %2141 = vmatprep.subr.mxu0 0.0
        %2142 = vmatpush1.msra.mxu0 0.0
        %2143 = vmatprep.subr.mxu0 0.0
        %2144 = vmatpush1.msra.mxu0 0.0
        %2145 = vmatprep.subr.mxu0 0.0
        %2146 = vmatpush1.msra.mxu0 0.0
        %2147 = vmatprep.subr.mxu0 0.0
        %2148 = vmatpush1.msra.mxu0 0.0
        %2149 = vmatprep.subr.mxu0 0.0
        %2150 = vmatpush1.msra.mxu0 0.0
        %2151 = vmatprep.subr.mxu0 0.0
        %2152 = vmatpush1.msra.mxu0 0.0
        %2153 = vmatprep.subr.mxu0 0.0
        %2154 = vmatpush1.msra.mxu0 0.0
        %2155 = vmatprep.subr.mxu0 0.0
        %2156 = vmatpush1.msra.mxu0 0.0
        %2157 = vmatprep.subr.mxu0 0.0
        %2158 = vmatpush1.msra.mxu0 0.0
        %2159 = vmatprep.subr.mxu0 0.0
        %2160 = vmatpush1.msra.mxu0 0.0
        %2161 = vmatprep.subr.mxu0 0.0
        %2162 = vmatpush1.msra.mxu0 0.0
        %2163 = vmatprep.subr.mxu0 0.0
        %2164 = vmatpush1.msra.mxu0 0.0
        %2165 = vmatprep.subr.mxu0 0.0
        %2166 = vmatpush1.msra.mxu0 0.0
        %2167 = vmatprep.subr.mxu0 0.0
        %2168 = vmatpush1.msra.mxu0 0.0
        %2169 = vmatprep.subr.mxu0 0.0
        %2170 = vmatpush1.msra.mxu0 0.0
        %2171 = vmatprep.subr.mxu0 0.0
        %2172 = vmatpush1.msra.mxu0 0.0
        %2173 = vmatprep.subr.mxu0 0.0
        %2174 = vmatpush1.msra.mxu0 0.0
        %2175 = vmatprep.subr.mxu0 0.0
        %2176 = vmatpush1.msra.mxu0 0.0
        %2177 = vmatprep.subr.mxu0 0.0
        %2178 = vmatpush1.msra.mxu0 0.0
        %2179 = vmatprep.subr.mxu0 0.0
        %2180 = vmatpush1.msra.mxu0 0.0
        %2181 = vmatprep.subr.mxu0 0.0
        %2182 = vmatpush1.msra.mxu0 0.0
        %2183 = vmatprep.subr.mxu0 0.0
        %2184 = vmatpush1.msra.mxu0 0.0
        %2185 = vmatprep.subr.mxu0 0.0
        %2186 = vmatpush1.msra.mxu0 0.0
        %2187 = vmatprep.subr.mxu0 0.0
        %2188 = vmatpush1.msra.mxu0 0.0
        %2189 = vmatprep.subr.mxu0 0.0
        %2190 = vmatpush1.msra.mxu0 0.0
        %2191 = vmatprep.subr.mxu0 0.0
        %2192 = vmatpush1.msra.mxu0 0.0
        %2193 = vmatprep.subr.mxu0 0.0
        %2194 = vmatpush1.msra.mxu0 0.0
        %2195 = vmatprep.subr.mxu0 0.0
        %2196 = vmatpush1.msra.mxu0 0.0
        %2197 = vmatprep.subr.mxu0 0.0
        %2198 = vmatpush1.msra.mxu0 0.0
        %2199 = vmatprep.subr.mxu0 0.0
        %2200 = vmatpush1.msra.mxu0 0.0
        %2201 = vmatprep.mubr.f32.mxu0 0.0
        %v2202 = vand.u32 %v266, 4294901760
        %v2203 = vsub.f32 %v266, %v2202
        %v2204 = vand.u32 %v2203, 4294901760
        %2205 = vmatmul.mubr.f32.gmra.mrb[0].mxu0 %v2204
        %v2206 = vpop.f32.mrb[0].mxu0
        %v2207 = vadd.f32 %v1692, %v2206
        %v2208 = vpop.f32.mrb[0].mxu0
        %2209 = vmatprep.mubr.f32.mxu0 0.0
        %v2210 = vand.u32 %v269, 4294901760
        %v2211 = vsub.f32 %v269, %v2210
        %v2212 = vand.u32 %v2211, 4294901760
        %2213 = vmatmul.mubr.f32.gmra.mrb[0].mxu0 %v2212
        %v2214 = vpop.f32.mrb[0].mxu0
        %v2215 = vadd.f32 %v1699, %v2214
        %v2216 = vpop.f32.mrb[0].mxu0
        %2217 = vmatprep.mubr.f32.mxu0 0.0
        %v2218 = vand.u32 %v272, 4294901760
        %v2219 = vsub.f32 %v272, %v2218
        %v2220 = vand.u32 %v2219, 4294901760
        %2221 = vmatmul.mubr.f32.gmra.mrb[0].mxu0 %v2220
        %v2222 = vpop.f32.mrb[0].mxu0
        %v2223 = vadd.f32 %v1706, %v2222
        %v2224 = vpop.f32.mrb[0].mxu0
        %2225 = vmatprep.mubr.f32.mxu0 0.0
        %v2226 = vand.u32 %v275, 4294901760
        %v2227 = vsub.f32 %v275, %v2226
        %v2228 = vand.u32 %v2227, 4294901760
        %2229 = vmatmul.mubr.f32.gmra.mrb[0].mxu0 %v2228
        %v2230 = vpop.f32.mrb[0].mxu0
        %v2231 = vadd.f32 %v1713, %v2230
        %v2232 = vpop.f32.mrb[0].mxu0
        %2233 = vmatprep.mubr.f32.mxu0 0.0
        %v2234 = vand.u32 %v278, 4294901760
        %v2235 = vsub.f32 %v278, %v2234
        %v2236 = vand.u32 %v2235, 4294901760
        %2237 = vmatmul.mubr.f32.gmra.mrb[0].mxu0 %v2236
        %v2238 = vpop.f32.mrb[0].mxu0
        %v2239 = vadd.f32 %v1720, %v2238
        %v2240 = vpop.f32.mrb[0].mxu0
        %2241 = vmatprep.mubr.f32.mxu0 0.0
        %v2242 = vand.u32 %v281, 4294901760
        %v2243 = vsub.f32 %v281, %v2242
        %v2244 = vand.u32 %v2243, 4294901760
        %2245 = vmatmul.mubr.f32.gmra.mrb[0].mxu0 %v2244
        %v2246 = vpop.f32.mrb[0].mxu0
        %v2247 = vadd.f32 %v1727, %v2246
        %v2248 = vpop.f32.mrb[0].mxu0
        %2249 = vmatprep.mubr.f32.mxu0 0.0
        %v2250 = vand.u32 %v284, 4294901760
        %v2251 = vsub.f32 %v284, %v2250
        %v2252 = vand.u32 %v2251, 4294901760
        %2253 = vmatmul.mubr.f32.gmra.mrb[0].mxu0 %v2252
        %v2254 = vpop.f32.mrb[0].mxu0
        %v2255 = vadd.f32 %v1734, %v2254
        %v2256 = vpop.f32.mrb[0].mxu0
        %2257 = vmatprep.mubr.f32.mxu0 0.0
        %v2258 = vand.u32 %v287, 4294901760
        %v2259 = vsub.f32 %v287, %v2258
        %v2260 = vand.u32 %v2259, 4294901760
        %2261 = vmatmul.mubr.f32.gmra.mrb[0].mxu0 %v2260
        %v2262 = vpop.f32.mrb[0].mxu0
        %v2263 = vadd.f32 %v1741, %v2262
        %v2264 = vpop.f32.mrb[0].mxu0
        %2265 = vmatprep.mubr.f32.mxu0 0.0
        %v2266 = vand.u32 %v290, 4294901760
        %v2267 = vsub.f32 %v290, %v2266
        %v2268 = vand.u32 %v2267, 4294901760
        %2269 = vmatmul.mubr.f32.gmra.mrb[0].mxu0 %v2268
        %v2270 = vpop.f32.mrb[0].mxu0
        %v2271 = vadd.f32 %v1748, %v2270
        %v2272 = vpop.f32.mrb[0].mxu0
        %2273 = vmatprep.mubr.f32.mxu0 0.0
        %v2274 = vand.u32 %v293, 4294901760
        %v2275 = vsub.f32 %v293, %v2274
        %v2276 = vand.u32 %v2275, 4294901760
        %2277 = vmatmul.mubr.f32.gmra.mrb[0].mxu0 %v2276
        %v2278 = vpop.f32.mrb[0].mxu0
        %v2279 = vadd.f32 %v1755, %v2278
        %v2280 = vpop.f32.mrb[0].mxu0
        %2281 = vmatprep.mubr.f32.mxu0 0.0
        %v2282 = vand.u32 %v296, 4294901760
        %v2283 = vsub.f32 %v296, %v2282
        %v2284 = vand.u32 %v2283, 4294901760
        %2285 = vmatmul.mubr.f32.gmra.mrb[0].mxu0 %v2284
        %v2286 = vpop.f32.mrb[0].mxu0
        %v2287 = vadd.f32 %v1762, %v2286
        %v2288 = vpop.f32.mrb[0].mxu0
        %2289 = vmatprep.mubr.f32.mxu0 0.0
        %v2290 = vand.u32 %v299, 4294901760
        %v2291 = vsub.f32 %v299, %v2290
        %v2292 = vand.u32 %v2291, 4294901760
        %2293 = vmatmul.mubr.f32.gmra.mrb[0].mxu0 %v2292
        %v2294 = vpop.f32.mrb[0].mxu0
        %v2295 = vadd.f32 %v1769, %v2294
        %v2296 = vpop.f32.mrb[0].mxu0
        %2297 = vmatprep.mubr.f32.mxu0 0.0
        %v2298 = vand.u32 %v302, 4294901760
        %v2299 = vsub.f32 %v302, %v2298
        %v2300 = vand.u32 %v2299, 4294901760
        %2301 = vmatmul.mubr.f32.gmra.mrb[0].mxu0 %v2300
        %v2302 = vpop.f32.mrb[0].mxu0
        %v2303 = vadd.f32 %v1776, %v2302
        %v2304 = vpop.f32.mrb[0].mxu0
        %2305 = vmatprep.mubr.f32.mxu0 0.0
        %v2306 = vand.u32 %v305, 4294901760
        %v2307 = vsub.f32 %v305, %v2306
        %v2308 = vand.u32 %v2307, 4294901760
        %2309 = vmatmul.mubr.f32.gmra.mrb[0].mxu0 %v2308
        %v2310 = vpop.f32.mrb[0].mxu0
        %v2311 = vadd.f32 %v1783, %v2310
        %v2312 = vpop.f32.mrb[0].mxu0
        %2313 = vmatprep.mubr.f32.mxu0 0.0
        %v2314 = vand.u32 %v308, 4294901760
        %v2315 = vsub.f32 %v308, %v2314
        %v2316 = vand.u32 %v2315, 4294901760
        %2317 = vmatmul.mubr.f32.gmra.mrb[0].mxu0 %v2316
        %v2318 = vpop.f32.mrb[0].mxu0
        %v2319 = vadd.f32 %v1790, %v2318
        %v2320 = vpop.f32.mrb[0].mxu0
        %2321 = vmatprep.mubr.f32.mxu0 0.0
        %v2322 = vand.u32 %v311, 4294901760
        %v2323 = vsub.f32 %v311, %v2322
        %v2324 = vand.u32 %v2323, 4294901760
        %2325 = vmatmul.mubr.f32.gmra.mrb[0].mxu0 %v2324
        %v2326 = vpop.f32.mrb[0].mxu0
        %v2327 = vadd.f32 %v1797, %v2326
        %v2328 = vpop.f32.mrb[0].mxu0
        %2329 = vmatprep.mubr.f32.mxu0 0.0
        %v2330 = vand.u32 %v314, 4294901760
        %v2331 = vsub.f32 %v314, %v2330
        %v2332 = vand.u32 %v2331, 4294901760
        %2333 = vmatmul.mubr.f32.gmra.mrb[0].mxu0 %v2332
        %v2334 = vpop.f32.mrb[0].mxu0
        %v2335 = vadd.f32 %v1804, %v2334
        %v2336 = vpop.f32.mrb[0].mxu0
        %2337 = vmatprep.mubr.f32.mxu0 0.0
        %v2338 = vand.u32 %v317, 4294901760
        %v2339 = vsub.f32 %v317, %v2338
        %v2340 = vand.u32 %v2339, 4294901760
        %2341 = vmatmul.mubr.f32.gmra.mrb[0].mxu0 %v2340
        %v2342 = vpop.f32.mrb[0].mxu0
        %v2343 = vadd.f32 %v1811, %v2342
        %v2344 = vpop.f32.mrb[0].mxu0
        %2345 = vmatprep.mubr.f32.mxu0 0.0
        %v2346 = vand.u32 %v320, 4294901760
        %v2347 = vsub.f32 %v320, %v2346
        %v2348 = vand.u32 %v2347, 4294901760
        %2349 = vmatmul.mubr.f32.gmra.mrb[0].mxu0 %v2348
        %v2350 = vpop.f32.mrb[0].mxu0
        %v2351 = vadd.f32 %v1818, %v2350
        %v2352 = vpop.f32.mrb[0].mxu0
        %2353 = vmatprep.mubr.f32.mxu0 0.0
        %v2354 = vand.u32 %v323, 4294901760
        %v2355 = vsub.f32 %v323, %v2354
        %v2356 = vand.u32 %v2355, 4294901760
        %2357 = vmatmul.mubr.f32.gmra.mrb[0].mxu0 %v2356
        %v2358 = vpop.f32.mrb[0].mxu0
        %v2359 = vadd.f32 %v1825, %v2358
        %v2360 = vpop.f32.mrb[0].mxu0
        %2361 = vmatprep.mubr.f32.mxu0 0.0
        %v2362 = vand.u32 %v326, 4294901760
        %v2363 = vsub.f32 %v326, %v2362
        %v2364 = vand.u32 %v2363, 4294901760
        %2365 = vmatmul.mubr.f32.gmra.mrb[0].mxu0 %v2364
        %v2366 = vpop.f32.mrb[0].mxu0
        %v2367 = vadd.f32 %v1832, %v2366
        %v2368 = vpop.f32.mrb[0].mxu0
        %2369 = vmatprep.mubr.f32.mxu0 0.0
        %v2370 = vand.u32 %v329, 4294901760
        %v2371 = vsub.f32 %v329, %v2370
        %v2372 = vand.u32 %v2371, 4294901760
        %2373 = vmatmul.mubr.f32.gmra.mrb[0].mxu0 %v2372
        %v2374 = vpop.f32.mrb[0].mxu0
        %v2375 = vadd.f32 %v1839, %v2374
        %v2376 = vpop.f32.mrb[0].mxu0
        %2377 = vmatprep.mubr.f32.mxu0 0.0
        %v2378 = vand.u32 %v332, 4294901760
        %v2379 = vsub.f32 %v332, %v2378
        %v2380 = vand.u32 %v2379, 4294901760
        %2381 = vmatmul.mubr.f32.gmra.mrb[0].mxu0 %v2380
        %v2382 = vpop.f32.mrb[0].mxu0
        %v2383 = vadd.f32 %v1846, %v2382
        %v2384 = vpop.f32.mrb[0].mxu0
        %2385 = vmatprep.mubr.f32.mxu0 0.0
        %v2386 = vand.u32 %v335, 4294901760
        %v2387 = vsub.f32 %v335, %v2386
        %v2388 = vand.u32 %v2387, 4294901760
        %2389 = vmatmul.mubr.f32.gmra.mrb[0].mxu0 %v2388
        %v2390 = vpop.f32.mrb[0].mxu0
        %v2391 = vadd.f32 %v1853, %v2390
        %v2392 = vpop.f32.mrb[0].mxu0
        %2393 = vmatprep.mubr.f32.mxu0 0.0
        %v2394 = vand.u32 %v338, 4294901760
        %v2395 = vsub.f32 %v338, %v2394
        %v2396 = vand.u32 %v2395, 4294901760
        %2397 = vmatmul.mubr.f32.gmra.mrb[0].mxu0 %v2396
        %v2398 = vpop.f32.mrb[0].mxu0
        %v2399 = vadd.f32 %v1860, %v2398
        %v2400 = vpop.f32.mrb[0].mxu0
        %2401 = vmatprep.mubr.f32.mxu0 0.0
        %v2402 = vand.u32 %v341, 4294901760
        %v2403 = vsub.f32 %v341, %v2402
        %v2404 = vand.u32 %v2403, 4294901760
        %2405 = vmatmul.mubr.f32.gmra.mrb[0].mxu0 %v2404
        %v2406 = vpop.f32.mrb[0].mxu0
        %v2407 = vadd.f32 %v1867, %v2406
        %v2408 = vpop.f32.mrb[0].mxu0
        %2409 = vmatprep.mubr.f32.mxu0 0.0
        %v2410 = vand.u32 %v344, 4294901760
        %v2411 = vsub.f32 %v344, %v2410
        %v2412 = vand.u32 %v2411, 4294901760
        %2413 = vmatmul.mubr.f32.gmra.mrb[0].mxu0 %v2412
        %v2414 = vpop.f32.mrb[0].mxu0
        %v2415 = vadd.f32 %v1874, %v2414
        %v2416 = vpop.f32.mrb[0].mxu0
        %2417 = vmatprep.mubr.f32.mxu0 0.0
        %v2418 = vand.u32 %v347, 4294901760
        %v2419 = vsub.f32 %v347, %v2418
        %v2420 = vand.u32 %v2419, 4294901760
        %2421 = vmatmul.mubr.f32.gmra.mrb[0].mxu0 %v2420
        %v2422 = vpop.f32.mrb[0].mxu0
        %v2423 = vadd.f32 %v1881, %v2422
        %v2424 = vpop.f32.mrb[0].mxu0
        %2425 = vmatprep.mubr.f32.mxu0 0.0
        %v2426 = vand.u32 %v350, 4294901760
        %v2427 = vsub.f32 %v350, %v2426
        %v2428 = vand.u32 %v2427, 4294901760
        %2429 = vmatmul.mubr.f32.gmra.mrb[0].mxu0 %v2428
        %v2430 = vpop.f32.mrb[0].mxu0
        %v2431 = vadd.f32 %v1888, %v2430
        %v2432 = vpop.f32.mrb[0].mxu0
        %2433 = vmatprep.mubr.f32.mxu0 0.0
        %v2434 = vand.u32 %v353, 4294901760
        %v2435 = vsub.f32 %v353, %v2434
        %v2436 = vand.u32 %v2435, 4294901760
        %2437 = vmatmul.mubr.f32.gmra.mrb[0].mxu0 %v2436
        %v2438 = vpop.f32.mrb[0].mxu0
        %v2439 = vadd.f32 %v1895, %v2438
        %v2440 = vpop.f32.mrb[0].mxu0
        %2441 = vmatprep.mubr.f32.mxu0 0.0
        %v2442 = vand.u32 %v356, 4294901760
        %v2443 = vsub.f32 %v356, %v2442
        %v2444 = vand.u32 %v2443, 4294901760
        %2445 = vmatmul.mubr.f32.gmra.mrb[0].mxu0 %v2444
        %v2446 = vpop.f32.mrb[0].mxu0
        %v2447 = vadd.f32 %v1902, %v2446
        %v2448 = vpop.f32.mrb[0].mxu0
        %2449 = vmatprep.mubr.f32.mxu0 0.0
        %v2450 = vand.u32 %v359, 4294901760
        %v2451 = vsub.f32 %v359, %v2450
        %v2452 = vand.u32 %v2451, 4294901760
        %2453 = vmatmul.mubr.f32.gmra.mrb[0].mxu0 %v2452
        %v2454 = vpop.f32.mrb[0].mxu0
        %v2455 = vadd.f32 %v1909, %v2454
        %v2456 = vpop.f32.mrb[0].mxu0
        %2457 = vmatprep.mubr.f32.mxu0 0.0
        %v2458 = vand.u32 %v362, 4294901760
        %v2459 = vsub.f32 %v362, %v2458
        %v2460 = vand.u32 %v2459, 4294901760
        %2461 = vmatmul.mubr.f32.gmra.mrb[0].mxu0 %v2460
        %v2462 = vpop.f32.mrb[0].mxu0
        %v2463 = vadd.f32 %v1916, %v2462
        %v2464 = vpop.f32.mrb[0].mxu0
        %2465 = vmatprep.mubr.f32.mxu0 0.0
        %v2466 = vand.u32 %v365, 4294901760
        %v2467 = vsub.f32 %v365, %v2466
        %v2468 = vand.u32 %v2467, 4294901760
        %2469 = vmatmul.mubr.f32.gmra.mrb[0].mxu0 %v2468
        %v2470 = vpop.f32.mrb[0].mxu0
        %v2471 = vadd.f32 %v1923, %v2470
        %v2472 = vpop.f32.mrb[0].mxu0
        %2473 = vmatprep.mubr.f32.mxu0 0.0
        %v2474 = vand.u32 %v368, 4294901760
        %v2475 = vsub.f32 %v368, %v2474
        %v2476 = vand.u32 %v2475, 4294901760
        %2477 = vmatmul.mubr.f32.gmra.mrb[0].mxu0 %v2476
        %v2478 = vpop.f32.mrb[0].mxu0
        %v2479 = vadd.f32 %v1930, %v2478
        %v2480 = vpop.f32.mrb[0].mxu0
        %2481 = vmatprep.mubr.f32.mxu0 0.0
        %v2482 = vand.u32 %v371, 4294901760
        %v2483 = vsub.f32 %v371, %v2482
        %v2484 = vand.u32 %v2483, 4294901760
        %2485 = vmatmul.mubr.f32.gmra.mrb[0].mxu0 %v2484
        %v2486 = vpop.f32.mrb[0].mxu0
        %v2487 = vadd.f32 %v1937, %v2486
        %v2488 = vpop.f32.mrb[0].mxu0
        %2489 = vmatprep.mubr.f32.mxu0 0.0
        %v2490 = vand.u32 %v374, 4294901760
        %v2491 = vsub.f32 %v374, %v2490
        %v2492 = vand.u32 %v2491, 4294901760
        %2493 = vmatmul.mubr.f32.gmra.mrb[0].mxu0 %v2492
        %v2494 = vpop.f32.mrb[0].mxu0
        %v2495 = vadd.f32 %v1944, %v2494
        %v2496 = vpop.f32.mrb[0].mxu0
        %2497 = vmatprep.mubr.f32.mxu0 0.0
        %v2498 = vand.u32 %v377, 4294901760
        %v2499 = vsub.f32 %v377, %v2498
        %v2500 = vand.u32 %v2499, 4294901760
        %2501 = vmatmul.mubr.f32.gmra.mrb[0].mxu0 %v2500
        %v2502 = vpop.f32.mrb[0].mxu0
        %v2503 = vadd.f32 %v1951, %v2502
        %v2504 = vpop.f32.mrb[0].mxu0
        %2505 = vmatprep.mubr.f32.mxu0 0.0
        %v2506 = vand.u32 %v380, 4294901760
        %v2507 = vsub.f32 %v380, %v2506
        %v2508 = vand.u32 %v2507, 4294901760
        %2509 = vmatmul.mubr.f32.gmra.mrb[0].mxu0 %v2508
        %v2510 = vpop.f32.mrb[0].mxu0
        %v2511 = vadd.f32 %v1958, %v2510
        %v2512 = vpop.f32.mrb[0].mxu0
        %2513 = vmatprep.mubr.f32.mxu0 0.0
        %v2514 = vand.u32 %v383, 4294901760
        %v2515 = vsub.f32 %v383, %v2514
        %v2516 = vand.u32 %v2515, 4294901760
        %2517 = vmatmul.mubr.f32.gmra.mrb[0].mxu0 %v2516
        %v2518 = vpop.f32.mrb[0].mxu0
        %v2519 = vadd.f32 %v1965, %v2518
        %v2520 = vpop.f32.mrb[0].mxu0
        %2521 = vmatprep.mubr.f32.mxu0 0.0
        %v2522 = vand.u32 %v386, 4294901760
        %v2523 = vsub.f32 %v386, %v2522
        %v2524 = vand.u32 %v2523, 4294901760
        %2525 = vmatmul.mubr.f32.gmra.mrb[0].mxu0 %v2524
        %v2526 = vpop.f32.mrb[0].mxu0
        %v2527 = vadd.f32 %v1972, %v2526
        %v2528 = vpop.f32.mrb[0].mxu0
        %2529 = vmatprep.mubr.f32.mxu0 0.0
        %v2530 = vand.u32 %v389, 4294901760
        %v2531 = vsub.f32 %v389, %v2530
        %v2532 = vand.u32 %v2531, 4294901760
        %2533 = vmatmul.mubr.f32.gmra.mrb[0].mxu0 %v2532
        %v2534 = vpop.f32.mrb[0].mxu0
        %v2535 = vadd.f32 %v1979, %v2534
        %v2536 = vpop.f32.mrb[0].mxu0
        %2537 = vmatprep.mubr.f32.mxu0 0.0
        %v2538 = vand.u32 %v392, 4294901760
        %v2539 = vsub.f32 %v392, %v2538
        %v2540 = vand.u32 %v2539, 4294901760
        %2541 = vmatmul.mubr.f32.gmra.mrb[0].mxu0 %v2540
        %v2542 = vpop.f32.mrb[0].mxu0
        %v2543 = vadd.f32 %v1986, %v2542
        %v2544 = vpop.f32.mrb[0].mxu0
        %2545 = vmatprep.mubr.f32.mxu0 0.0
        %v2546 = vand.u32 %v395, 4294901760
        %v2547 = vsub.f32 %v395, %v2546
        %v2548 = vand.u32 %v2547, 4294901760
        %2549 = vmatmul.mubr.f32.gmra.mrb[0].mxu0 %v2548
        %v2550 = vpop.f32.mrb[0].mxu0
        %v2551 = vadd.f32 %v1993, %v2550
        %v2552 = vpop.f32.mrb[0].mxu0
        %2553 = vmatprep.mubr.f32.mxu0 0.0
        %v2554 = vand.u32 %v398, 4294901760
        %v2555 = vsub.f32 %v398, %v2554
        %v2556 = vand.u32 %v2555, 4294901760
        %2557 = vmatmul.mubr.f32.gmra.mrb[0].mxu0 %v2556
        %v2558 = vpop.f32.mrb[0].mxu0
        %v2559 = vadd.f32 %v2000, %v2558
        %v2560 = vpop.f32.mrb[0].mxu0
        %2561 = vmatprep.mubr.f32.mxu0 0.0
        %v2562 = vand.u32 %v401, 4294901760
        %v2563 = vsub.f32 %v401, %v2562
        %v2564 = vand.u32 %v2563, 4294901760
        %2565 = vmatmul.mubr.f32.gmra.mrb[0].mxu0 %v2564
        %v2566 = vpop.f32.mrb[0].mxu0
        %v2567 = vadd.f32 %v2007, %v2566
        %v2568 = vpop.f32.mrb[0].mxu0
        %2569 = vmatprep.mubr.f32.mxu0 0.0
        %v2570 = vand.u32 %v404, 4294901760
        %v2571 = vsub.f32 %v404, %v2570
        %v2572 = vand.u32 %v2571, 4294901760
        %2573 = vmatmul.mubr.f32.gmra.mrb[0].mxu0 %v2572
        %v2574 = vpop.f32.mrb[0].mxu0
        %v2575 = vadd.f32 %v2014, %v2574
        %v2576 = vpop.f32.mrb[0].mxu0
        %2577 = vmatprep.mubr.f32.mxu0 0.0
        %v2578 = vand.u32 %v407, 4294901760
        %v2579 = vsub.f32 %v407, %v2578
        %v2580 = vand.u32 %v2579, 4294901760
        %2581 = vmatmul.mubr.f32.gmra.mrb[0].mxu0 %v2580
        %v2582 = vpop.f32.mrb[0].mxu0
        %v2583 = vadd.f32 %v2021, %v2582
        %v2584 = vpop.f32.mrb[0].mxu0
        %2585 = vmatprep.mubr.f32.mxu0 0.0
        %v2586 = vand.u32 %v410, 4294901760
        %v2587 = vsub.f32 %v410, %v2586
        %v2588 = vand.u32 %v2587, 4294901760
        %2589 = vmatmul.mubr.f32.gmra.mrb[0].mxu0 %v2588
        %v2590 = vpop.f32.mrb[0].mxu0
        %v2591 = vadd.f32 %v2028, %v2590
        %v2592 = vpop.f32.mrb[0].mxu0
        %2593 = vmatprep.mubr.f32.mxu0 0.0
        %v2594 = vand.u32 %v413, 4294901760
        %v2595 = vsub.f32 %v413, %v2594
        %v2596 = vand.u32 %v2595, 4294901760
        %2597 = vmatmul.mubr.f32.gmra.mrb[0].mxu0 %v2596
        %v2598 = vpop.f32.mrb[0].mxu0
        %v2599 = vadd.f32 %v2035, %v2598
        %v2600 = vpop.f32.mrb[0].mxu0
        %2601 = vmatprep.mubr.f32.mxu0 0.0
        %v2602 = vand.u32 %v416, 4294901760
        %v2603 = vsub.f32 %v416, %v2602
        %v2604 = vand.u32 %v2603, 4294901760
        %2605 = vmatmul.mubr.f32.gmra.mrb[0].mxu0 %v2604
        %v2606 = vpop.f32.mrb[0].mxu0
        %v2607 = vadd.f32 %v2042, %v2606
        %v2608 = vpop.f32.mrb[0].mxu0
        %2609 = vmatprep.mubr.f32.mxu0 0.0
        %v2610 = vand.u32 %v419, 4294901760
        %v2611 = vsub.f32 %v419, %v2610
        %v2612 = vand.u32 %v2611, 4294901760
        %2613 = vmatmul.mubr.f32.gmra.mrb[0].mxu0 %v2612
        %v2614 = vpop.f32.mrb[0].mxu0
        %v2615 = vadd.f32 %v2049, %v2614
        %v2616 = vpop.f32.mrb[0].mxu0
        %2617 = vmatprep.mubr.f32.mxu0 0.0
        %v2618 = vand.u32 %v422, 4294901760
        %v2619 = vsub.f32 %v422, %v2618
        %v2620 = vand.u32 %v2619, 4294901760
        %2621 = vmatmul.mubr.f32.gmra.mrb[0].mxu0 %v2620
        %v2622 = vpop.f32.mrb[0].mxu0
        %v2623 = vadd.f32 %v2056, %v2622
        %v2624 = vpop.f32.mrb[0].mxu0
        %2625 = vmatprep.mubr.f32.mxu0 0.0
        %v2626 = vand.u32 %v425, 4294901760
        %v2627 = vsub.f32 %v425, %v2626
        %v2628 = vand.u32 %v2627, 4294901760
        %2629 = vmatmul.mubr.f32.gmra.mrb[0].mxu0 %v2628
        %v2630 = vpop.f32.mrb[0].mxu0
        %v2631 = vadd.f32 %v2063, %v2630
        %v2632 = vpop.f32.mrb[0].mxu0
        %2633 = vmatprep.mubr.f32.mxu0 0.0
        %v2634 = vand.u32 %v428, 4294901760
        %v2635 = vsub.f32 %v428, %v2634
        %v2636 = vand.u32 %v2635, 4294901760
        %2637 = vmatmul.mubr.f32.gmra.mrb[0].mxu0 %v2636
        %v2638 = vpop.f32.mrb[0].mxu0
        %v2639 = vadd.f32 %v2070, %v2638
        %v2640 = vpop.f32.mrb[0].mxu0
        %2641 = vmatprep.mubr.f32.mxu0 0.0
        %v2642 = vand.u32 %v431, 4294901760
        %v2643 = vsub.f32 %v431, %v2642
        %v2644 = vand.u32 %v2643, 4294901760
        %2645 = vmatmul.mubr.f32.gmra.mrb[0].mxu0 %v2644
        %v2646 = vpop.f32.mrb[0].mxu0
        %v2647 = vadd.f32 %v2077, %v2646
        %v2648 = vpop.f32.mrb[0].mxu0
        %2649 = vmatprep.mubr.f32.mxu0 0.0
        %v2650 = vand.u32 %v434, 4294901760
        %v2651 = vsub.f32 %v434, %v2650
        %v2652 = vand.u32 %v2651, 4294901760
        %2653 = vmatmul.mubr.f32.gmra.mrb[0].mxu0 %v2652
        %v2654 = vpop.f32.mrb[0].mxu0
        %v2655 = vadd.f32 %v2084, %v2654
        %v2656 = vpop.f32.mrb[0].mxu0
        %2657 = vmatprep.mubr.f32.mxu0 0.0
        %v2658 = vand.u32 %v437, 4294901760
        %v2659 = vsub.f32 %v437, %v2658
        %v2660 = vand.u32 %v2659, 4294901760
        %2661 = vmatmul.mubr.f32.gmra.mrb[0].mxu0 %v2660
        %v2662 = vpop.f32.mrb[0].mxu0
        %v2663 = vadd.f32 %v2091, %v2662
        %v2664 = vpop.f32.mrb[0].mxu0
        %2665 = vmatprep.mubr.f32.mxu0 0.0
        %v2666 = vand.u32 %v440, 4294901760
        %v2667 = vsub.f32 %v440, %v2666
        %v2668 = vand.u32 %v2667, 4294901760
        %2669 = vmatmul.mubr.f32.gmra.mrb[0].mxu0 %v2668
        %v2670 = vpop.f32.mrb[0].mxu0
        %v2671 = vadd.f32 %v2098, %v2670
        %v2672 = vpop.f32.mrb[0].mxu0
        %2673 = vmatprep.mubr.f32.mxu0 0.0
        %v2674 = vand.u32 %v443, 4294901760
        %v2675 = vsub.f32 %v443, %v2674
        %v2676 = vand.u32 %v2675, 4294901760
        %2677 = vmatmul.mubr.f32.gmra.mrb[0].mxu0 %v2676
        %v2678 = vpop.f32.mrb[0].mxu0
        %v2679 = vadd.f32 %v2105, %v2678
        %v2680 = vpop.f32.mrb[0].mxu0
        %2681 = vmatprep.mubr.f32.mxu0 0.0
        %v2682 = vand.u32 %v446, 4294901760
        %v2683 = vsub.f32 %v446, %v2682
        %v2684 = vand.u32 %v2683, 4294901760
        %2685 = vmatmul.mubr.f32.gmra.mrb[0].mxu0 %v2684
        %v2686 = vpop.f32.mrb[0].mxu0
        %v2687 = vadd.f32 %v2112, %v2686
        %v2688 = vpop.f32.mrb[0].mxu0
        %2689 = vmatprep.mubr.f32.mxu0 0.0
        %v2690 = vand.u32 %v449, 4294901760
        %v2691 = vsub.f32 %v449, %v2690
        %v2692 = vand.u32 %v2691, 4294901760
        %2693 = vmatmul.mubr.f32.gmra.mrb[0].mxu0 %v2692
        %v2694 = vpop.f32.mrb[0].mxu0
        %v2695 = vadd.f32 %v2119, %v2694
        %v2696 = vpop.f32.mrb[0].mxu0
        %2697 = vmatprep.mubr.f32.mxu0 0.0
        %v2698 = vand.u32 %v452, 4294901760
        %v2699 = vsub.f32 %v452, %v2698
        %v2700 = vand.u32 %v2699, 4294901760
        %2701 = vmatmul.mubr.f32.gmra.mrb[0].mxu0 %v2700
        %v2702 = vpop.f32.mrb[0].mxu0
        %v2703 = vadd.f32 %v2126, %v2702
        %v2704 = vpop.f32.mrb[0].mxu0
        %2705 = vmatprep.mubr.f32.mxu0 0.0
        %v2706 = vand.u32 %v455, 4294901760
        %v2707 = vsub.f32 %v455, %v2706
        %v2708 = vand.u32 %v2707, 4294901760
        %2709 = vmatmul.mubr.f32.gmra.mrb[0].mxu0 %v2708
        %v2710 = vpop.f32.mrb[0].mxu0
        %v2711 = vadd.f32 %v2133, %v2710
        %v2712 = vpop.f32.mrb[0].mxu0
        %2713 = vdwg.mxu0
        %2714 = vmatprep.subr.mxu0 0.0
        %v2715 = vand.u32 %v459, 4294901760
        %v2716 = vsub.f32 %v459, %v2715
        %v2717 = vand.u32 %v2716, 4294901760
        %2718 = vmatpush1.msra.mxu0 %v2717
        %2719 = vmatprep.subr.mxu0 0.0
        %2720 = vmatpush1.msra.mxu0 0.0
        %2721 = vmatprep.subr.mxu0 0.0
        %2722 = vmatpush1.msra.mxu0 0.0
        %2723 = vmatprep.subr.mxu0 0.0
        %2724 = vmatpush1.msra.mxu0 0.0
        %2725 = vmatprep.subr.mxu0 0.0
        %2726 = vmatpush1.msra.mxu0 0.0
        %2727 = vmatprep.subr.mxu0 0.0
        %2728 = vmatpush1.msra.mxu0 0.0
        %2729 = vmatprep.subr.mxu0 0.0
        %2730 = vmatpush1.msra.mxu0 0.0
        %2731 = vmatprep.subr.mxu0 0.0
        %2732 = vmatpush1.msra.mxu0 0.0
        %2733 = vmatprep.subr.mxu0 0.0
        %2734 = vmatpush1.msra.mxu0 0.0
        %2735 = vmatprep.subr.mxu0 0.0
        %2736 = vmatpush1.msra.mxu0 0.0
        %2737 = vmatprep.subr.mxu0 0.0
        %2738 = vmatpush1.msra.mxu0 0.0
        %2739 = vmatprep.subr.mxu0 0.0
        %2740 = vmatpush1.msra.mxu0 0.0
        %2741 = vmatprep.subr.mxu0 0.0
        %2742 = vmatpush1.msra.mxu0 0.0
        %2743 = vmatprep.subr.mxu0 0.0
        %2744 = vmatpush1.msra.mxu0 0.0
        %2745 = vmatprep.subr.mxu0 0.0
        %2746 = vmatpush1.msra.mxu0 0.0
        %2747 = vmatprep.subr.mxu0 0.0
        %2748 = vmatpush1.msra.mxu0 0.0
        %2749 = vmatprep.subr.mxu0 0.0
        %2750 = vmatpush1.msra.mxu0 0.0
        %2751 = vmatprep.subr.mxu0 0.0
        %2752 = vmatpush1.msra.mxu0 0.0
        %2753 = vmatprep.subr.mxu0 0.0
        %2754 = vmatpush1.msra.mxu0 0.0
        %2755 = vmatprep.subr.mxu0 0.0
        %2756 = vmatpush1.msra.mxu0 0.0
        %2757 = vmatprep.subr.mxu0 0.0
        %2758 = vmatpush1.msra.mxu0 0.0
        %2759 = vmatprep.subr.mxu0 0.0
        %2760 = vmatpush1.msra.mxu0 0.0
        %2761 = vmatprep.subr.mxu0 0.0
        %2762 = vmatpush1.msra.mxu0 0.0
        %2763 = vmatprep.subr.mxu0 0.0
        %2764 = vmatpush1.msra.mxu0 0.0
        %2765 = vmatprep.subr.mxu0 0.0
        %2766 = vmatpush1.msra.mxu0 0.0
        %2767 = vmatprep.subr.mxu0 0.0
        %2768 = vmatpush1.msra.mxu0 0.0
        %2769 = vmatprep.subr.mxu0 0.0
        %2770 = vmatpush1.msra.mxu0 0.0
        %2771 = vmatprep.subr.mxu0 0.0
        %2772 = vmatpush1.msra.mxu0 0.0
        %2773 = vmatprep.subr.mxu0 0.0
        %2774 = vmatpush1.msra.mxu0 0.0
        %2775 = vmatprep.subr.mxu0 0.0
        %2776 = vmatpush1.msra.mxu0 0.0
        %2777 = vmatprep.subr.mxu0 0.0
        %2778 = vmatpush1.msra.mxu0 0.0
        %2779 = vmatprep.subr.mxu0 0.0
        %2780 = vmatpush1.msra.mxu0 0.0
        %2781 = vmatprep.mubr.f32.mxu0 0.0
        %v2782 = vand.u32 %v266, 4294901760
        %2783 = vmatmul.mubr.f32.gmra.mrb[0].mxu0 %v2782
        %v2784 = vpop.f32.mrb[0].mxu0
        %v2785 = vadd.f32 %v2207, %v2784
        %v2786 = vpop.f32.mrb[0].mxu0
        %2787 = vmatprep.mubr.f32.mxu0 0.0
        %v2788 = vand.u32 %v269, 4294901760
        %2789 = vmatmul.mubr.f32.gmra.mrb[0].mxu0 %v2788
        %v2790 = vpop.f32.mrb[0].mxu0
        %v2791 = vadd.f32 %v2215, %v2790
        %v2792 = vpop.f32.mrb[0].mxu0
        %2793 = vmatprep.mubr.f32.mxu0 0.0
        %v2794 = vand.u32 %v272, 4294901760
        %2795 = vmatmul.mubr.f32.gmra.mrb[0].mxu0 %v2794
        %v2796 = vpop.f32.mrb[0].mxu0
        %v2797 = vadd.f32 %v2223, %v2796
        %v2798 = vpop.f32.mrb[0].mxu0
        %2799 = vmatprep.mubr.f32.mxu0 0.0
        %v2800 = vand.u32 %v275, 4294901760
        %2801 = vmatmul.mubr.f32.gmra.mrb[0].mxu0 %v2800
        %v2802 = vpop.f32.mrb[0].mxu0
        %v2803 = vadd.f32 %v2231, %v2802
        %v2804 = vpop.f32.mrb[0].mxu0
        %2805 = vmatprep.mubr.f32.mxu0 0.0
        %v2806 = vand.u32 %v278, 4294901760
        %2807 = vmatmul.mubr.f32.gmra.mrb[0].mxu0 %v2806
        %v2808 = vpop.f32.mrb[0].mxu0
        %v2809 = vadd.f32 %v2239, %v2808
        %v2810 = vpop.f32.mrb[0].mxu0
        %2811 = vmatprep.mubr.f32.mxu0 0.0
        %v2812 = vand.u32 %v281, 4294901760
        %2813 = vmatmul.mubr.f32.gmra.mrb[0].mxu0 %v2812
        %v2814 = vpop.f32.mrb[0].mxu0
        %v2815 = vadd.f32 %v2247, %v2814
        %v2816 = vpop.f32.mrb[0].mxu0
        %2817 = vmatprep.mubr.f32.mxu0 0.0
        %v2818 = vand.u32 %v284, 4294901760
        %2819 = vmatmul.mubr.f32.gmra.mrb[0].mxu0 %v2818
        %v2820 = vpop.f32.mrb[0].mxu0
        %v2821 = vadd.f32 %v2255, %v2820
        %v2822 = vpop.f32.mrb[0].mxu0
        %2823 = vmatprep.mubr.f32.mxu0 0.0
        %v2824 = vand.u32 %v287, 4294901760
        %2825 = vmatmul.mubr.f32.gmra.mrb[0].mxu0 %v2824
        %v2826 = vpop.f32.mrb[0].mxu0
        %v2827 = vadd.f32 %v2263, %v2826
        %v2828 = vpop.f32.mrb[0].mxu0
        %2829 = vmatprep.mubr.f32.mxu0 0.0
        %v2830 = vand.u32 %v290, 4294901760
        %2831 = vmatmul.mubr.f32.gmra.mrb[0].mxu0 %v2830
        %v2832 = vpop.f32.mrb[0].mxu0
        %v2833 = vadd.f32 %v2271, %v2832
        %v2834 = vpop.f32.mrb[0].mxu0
        %2835 = vmatprep.mubr.f32.mxu0 0.0
        %v2836 = vand.u32 %v293, 4294901760
        %2837 = vmatmul.mubr.f32.gmra.mrb[0].mxu0 %v2836
        %v2838 = vpop.f32.mrb[0].mxu0
        %v2839 = vadd.f32 %v2279, %v2838
        %v2840 = vpop.f32.mrb[0].mxu0
        %2841 = vmatprep.mubr.f32.mxu0 0.0
        %v2842 = vand.u32 %v296, 4294901760
        %2843 = vmatmul.mubr.f32.gmra.mrb[0].mxu0 %v2842
        %v2844 = vpop.f32.mrb[0].mxu0
        %v2845 = vadd.f32 %v2287, %v2844
        %v2846 = vpop.f32.mrb[0].mxu0
        %2847 = vmatprep.mubr.f32.mxu0 0.0
        %v2848 = vand.u32 %v299, 4294901760
        %2849 = vmatmul.mubr.f32.gmra.mrb[0].mxu0 %v2848
        %v2850 = vpop.f32.mrb[0].mxu0
        %v2851 = vadd.f32 %v2295, %v2850
        %v2852 = vpop.f32.mrb[0].mxu0
        %2853 = vmatprep.mubr.f32.mxu0 0.0
        %v2854 = vand.u32 %v302, 4294901760
        %2855 = vmatmul.mubr.f32.gmra.mrb[0].mxu0 %v2854
        %v2856 = vpop.f32.mrb[0].mxu0
        %v2857 = vadd.f32 %v2303, %v2856
        %v2858 = vpop.f32.mrb[0].mxu0
        %2859 = vmatprep.mubr.f32.mxu0 0.0
        %v2860 = vand.u32 %v305, 4294901760
        %2861 = vmatmul.mubr.f32.gmra.mrb[0].mxu0 %v2860
        %v2862 = vpop.f32.mrb[0].mxu0
        %v2863 = vadd.f32 %v2311, %v2862
        %v2864 = vpop.f32.mrb[0].mxu0
        %2865 = vmatprep.mubr.f32.mxu0 0.0
        %v2866 = vand.u32 %v308, 4294901760
        %2867 = vmatmul.mubr.f32.gmra.mrb[0].mxu0 %v2866
        %v2868 = vpop.f32.mrb[0].mxu0
        %v2869 = vadd.f32 %v2319, %v2868
        %v2870 = vpop.f32.mrb[0].mxu0
        %2871 = vmatprep.mubr.f32.mxu0 0.0
        %v2872 = vand.u32 %v311, 4294901760
        %2873 = vmatmul.mubr.f32.gmra.mrb[0].mxu0 %v2872
        %v2874 = vpop.f32.mrb[0].mxu0
        %v2875 = vadd.f32 %v2327, %v2874
        %v2876 = vpop.f32.mrb[0].mxu0
        %2877 = vmatprep.mubr.f32.mxu0 0.0
        %v2878 = vand.u32 %v314, 4294901760
        %2879 = vmatmul.mubr.f32.gmra.mrb[0].mxu0 %v2878
        %v2880 = vpop.f32.mrb[0].mxu0
        %v2881 = vadd.f32 %v2335, %v2880
        %v2882 = vpop.f32.mrb[0].mxu0
        %2883 = vmatprep.mubr.f32.mxu0 0.0
        %v2884 = vand.u32 %v317, 4294901760
        %2885 = vmatmul.mubr.f32.gmra.mrb[0].mxu0 %v2884
        %v2886 = vpop.f32.mrb[0].mxu0
        %v2887 = vadd.f32 %v2343, %v2886
        %v2888 = vpop.f32.mrb[0].mxu0
        %2889 = vmatprep.mubr.f32.mxu0 0.0
        %v2890 = vand.u32 %v320, 4294901760
        %2891 = vmatmul.mubr.f32.gmra.mrb[0].mxu0 %v2890
        %v2892 = vpop.f32.mrb[0].mxu0
        %v2893 = vadd.f32 %v2351, %v2892
        %v2894 = vpop.f32.mrb[0].mxu0
        %2895 = vmatprep.mubr.f32.mxu0 0.0
        %v2896 = vand.u32 %v323, 4294901760
        %2897 = vmatmul.mubr.f32.gmra.mrb[0].mxu0 %v2896
        %v2898 = vpop.f32.mrb[0].mxu0
        %v2899 = vadd.f32 %v2359, %v2898
        %v2900 = vpop.f32.mrb[0].mxu0
        %2901 = vmatprep.mubr.f32.mxu0 0.0
        %v2902 = vand.u32 %v326, 4294901760
        %2903 = vmatmul.mubr.f32.gmra.mrb[0].mxu0 %v2902
        %v2904 = vpop.f32.mrb[0].mxu0
        %v2905 = vadd.f32 %v2367, %v2904
        %v2906 = vpop.f32.mrb[0].mxu0
        %2907 = vmatprep.mubr.f32.mxu0 0.0
        %v2908 = vand.u32 %v329, 4294901760
        %2909 = vmatmul.mubr.f32.gmra.mrb[0].mxu0 %v2908
        %v2910 = vpop.f32.mrb[0].mxu0
        %v2911 = vadd.f32 %v2375, %v2910
        %v2912 = vpop.f32.mrb[0].mxu0
        %2913 = vmatprep.mubr.f32.mxu0 0.0
        %v2914 = vand.u32 %v332, 4294901760
        %2915 = vmatmul.mubr.f32.gmra.mrb[0].mxu0 %v2914
        %v2916 = vpop.f32.mrb[0].mxu0
        %v2917 = vadd.f32 %v2383, %v2916
        %v2918 = vpop.f32.mrb[0].mxu0
        %2919 = vmatprep.mubr.f32.mxu0 0.0
        %v2920 = vand.u32 %v335, 4294901760
        %2921 = vmatmul.mubr.f32.gmra.mrb[0].mxu0 %v2920
        %v2922 = vpop.f32.mrb[0].mxu0
        %v2923 = vadd.f32 %v2391, %v2922
        %v2924 = vpop.f32.mrb[0].mxu0
        %2925 = vmatprep.mubr.f32.mxu0 0.0
        %v2926 = vand.u32 %v338, 4294901760
        %2927 = vmatmul.mubr.f32.gmra.mrb[0].mxu0 %v2926
        %v2928 = vpop.f32.mrb[0].mxu0
        %v2929 = vadd.f32 %v2399, %v2928
        %v2930 = vpop.f32.mrb[0].mxu0
        %2931 = vmatprep.mubr.f32.mxu0 0.0
        %v2932 = vand.u32 %v341, 4294901760
        %2933 = vmatmul.mubr.f32.gmra.mrb[0].mxu0 %v2932
        %v2934 = vpop.f32.mrb[0].mxu0
        %v2935 = vadd.f32 %v2407, %v2934
        %v2936 = vpop.f32.mrb[0].mxu0
        %2937 = vmatprep.mubr.f32.mxu0 0.0
        %v2938 = vand.u32 %v344, 4294901760
        %2939 = vmatmul.mubr.f32.gmra.mrb[0].mxu0 %v2938
        %v2940 = vpop.f32.mrb[0].mxu0
        %v2941 = vadd.f32 %v2415, %v2940
        %v2942 = vpop.f32.mrb[0].mxu0
        %2943 = vmatprep.mubr.f32.mxu0 0.0
        %v2944 = vand.u32 %v347, 4294901760
        %2945 = vmatmul.mubr.f32.gmra.mrb[0].mxu0 %v2944
        %v2946 = vpop.f32.mrb[0].mxu0
        %v2947 = vadd.f32 %v2423, %v2946
        %v2948 = vpop.f32.mrb[0].mxu0
        %2949 = vmatprep.mubr.f32.mxu0 0.0
        %v2950 = vand.u32 %v350, 4294901760
        %2951 = vmatmul.mubr.f32.gmra.mrb[0].mxu0 %v2950
        %v2952 = vpop.f32.mrb[0].mxu0
        %v2953 = vadd.f32 %v2431, %v2952
        %v2954 = vpop.f32.mrb[0].mxu0
        %2955 = vmatprep.mubr.f32.mxu0 0.0
        %v2956 = vand.u32 %v353, 4294901760
        %2957 = vmatmul.mubr.f32.gmra.mrb[0].mxu0 %v2956
        %v2958 = vpop.f32.mrb[0].mxu0
        %v2959 = vadd.f32 %v2439, %v2958
        %v2960 = vpop.f32.mrb[0].mxu0
        %2961 = vmatprep.mubr.f32.mxu0 0.0
        %v2962 = vand.u32 %v356, 4294901760
        %2963 = vmatmul.mubr.f32.gmra.mrb[0].mxu0 %v2962
        %v2964 = vpop.f32.mrb[0].mxu0
        %v2965 = vadd.f32 %v2447, %v2964
        %v2966 = vpop.f32.mrb[0].mxu0
        %2967 = vmatprep.mubr.f32.mxu0 0.0
        %v2968 = vand.u32 %v359, 4294901760
        %2969 = vmatmul.mubr.f32.gmra.mrb[0].mxu0 %v2968
        %v2970 = vpop.f32.mrb[0].mxu0
        %v2971 = vadd.f32 %v2455, %v2970
        %v2972 = vpop.f32.mrb[0].mxu0
        %2973 = vmatprep.mubr.f32.mxu0 0.0
        %v2974 = vand.u32 %v362, 4294901760
        %2975 = vmatmul.mubr.f32.gmra.mrb[0].mxu0 %v2974
        %v2976 = vpop.f32.mrb[0].mxu0
        %v2977 = vadd.f32 %v2463, %v2976
        %v2978 = vpop.f32.mrb[0].mxu0
        %2979 = vmatprep.mubr.f32.mxu0 0.0
        %v2980 = vand.u32 %v365, 4294901760
        %2981 = vmatmul.mubr.f32.gmra.mrb[0].mxu0 %v2980
        %v2982 = vpop.f32.mrb[0].mxu0
        %v2983 = vadd.f32 %v2471, %v2982
        %v2984 = vpop.f32.mrb[0].mxu0
        %2985 = vmatprep.mubr.f32.mxu0 0.0
        %v2986 = vand.u32 %v368, 4294901760
        %2987 = vmatmul.mubr.f32.gmra.mrb[0].mxu0 %v2986
        %v2988 = vpop.f32.mrb[0].mxu0
        %v2989 = vadd.f32 %v2479, %v2988
        %v2990 = vpop.f32.mrb[0].mxu0
        %2991 = vmatprep.mubr.f32.mxu0 0.0
        %v2992 = vand.u32 %v371, 4294901760
        %2993 = vmatmul.mubr.f32.gmra.mrb[0].mxu0 %v2992
        %v2994 = vpop.f32.mrb[0].mxu0
        %v2995 = vadd.f32 %v2487, %v2994
        %v2996 = vpop.f32.mrb[0].mxu0
        %2997 = vmatprep.mubr.f32.mxu0 0.0
        %v2998 = vand.u32 %v374, 4294901760
        %2999 = vmatmul.mubr.f32.gmra.mrb[0].mxu0 %v2998
        %v3000 = vpop.f32.mrb[0].mxu0
        %v3001 = vadd.f32 %v2495, %v3000
        %v3002 = vpop.f32.mrb[0].mxu0
        %3003 = vmatprep.mubr.f32.mxu0 0.0
        %v3004 = vand.u32 %v377, 4294901760
        %3005 = vmatmul.mubr.f32.gmra.mrb[0].mxu0 %v3004
        %v3006 = vpop.f32.mrb[0].mxu0
        %v3007 = vadd.f32 %v2503, %v3006
        %v3008 = vpop.f32.mrb[0].mxu0
        %3009 = vmatprep.mubr.f32.mxu0 0.0
        %v3010 = vand.u32 %v380, 4294901760
        %3011 = vmatmul.mubr.f32.gmra.mrb[0].mxu0 %v3010
        %v3012 = vpop.f32.mrb[0].mxu0
        %v3013 = vadd.f32 %v2511, %v3012
        %v3014 = vpop.f32.mrb[0].mxu0
        %3015 = vmatprep.mubr.f32.mxu0 0.0
        %v3016 = vand.u32 %v383, 4294901760
        %3017 = vmatmul.mubr.f32.gmra.mrb[0].mxu0 %v3016
        %v3018 = vpop.f32.mrb[0].mxu0
        %v3019 = vadd.f32 %v2519, %v3018
        %v3020 = vpop.f32.mrb[0].mxu0
        %3021 = vmatprep.mubr.f32.mxu0 0.0
        %v3022 = vand.u32 %v386, 4294901760
        %3023 = vmatmul.mubr.f32.gmra.mrb[0].mxu0 %v3022
        %v3024 = vpop.f32.mrb[0].mxu0
        %v3025 = vadd.f32 %v2527, %v3024
        %v3026 = vpop.f32.mrb[0].mxu0
        %3027 = vmatprep.mubr.f32.mxu0 0.0
        %v3028 = vand.u32 %v389, 4294901760
        %3029 = vmatmul.mubr.f32.gmra.mrb[0].mxu0 %v3028
        %v3030 = vpop.f32.mrb[0].mxu0
        %v3031 = vadd.f32 %v2535, %v3030
        %v3032 = vpop.f32.mrb[0].mxu0
        %3033 = vmatprep.mubr.f32.mxu0 0.0
        %v3034 = vand.u32 %v392, 4294901760
        %3035 = vmatmul.mubr.f32.gmra.mrb[0].mxu0 %v3034
        %v3036 = vpop.f32.mrb[0].mxu0
        %v3037 = vadd.f32 %v2543, %v3036
        %v3038 = vpop.f32.mrb[0].mxu0
        %3039 = vmatprep.mubr.f32.mxu0 0.0
        %v3040 = vand.u32 %v395, 4294901760
        %3041 = vmatmul.mubr.f32.gmra.mrb[0].mxu0 %v3040
        %v3042 = vpop.f32.mrb[0].mxu0
        %v3043 = vadd.f32 %v2551, %v3042
        %v3044 = vpop.f32.mrb[0].mxu0
        %3045 = vmatprep.mubr.f32.mxu0 0.0
        %v3046 = vand.u32 %v398, 4294901760
        %3047 = vmatmul.mubr.f32.gmra.mrb[0].mxu0 %v3046
        %v3048 = vpop.f32.mrb[0].mxu0
        %v3049 = vadd.f32 %v2559, %v3048
        %v3050 = vpop.f32.mrb[0].mxu0
        %3051 = vmatprep.mubr.f32.mxu0 0.0
        %v3052 = vand.u32 %v401, 4294901760
        %3053 = vmatmul.mubr.f32.gmra.mrb[0].mxu0 %v3052
        %v3054 = vpop.f32.mrb[0].mxu0
        %v3055 = vadd.f32 %v2567, %v3054
        %v3056 = vpop.f32.mrb[0].mxu0
        %3057 = vmatprep.mubr.f32.mxu0 0.0
        %v3058 = vand.u32 %v404, 4294901760
        %3059 = vmatmul.mubr.f32.gmra.mrb[0].mxu0 %v3058
        %v3060 = vpop.f32.mrb[0].mxu0
        %v3061 = vadd.f32 %v2575, %v3060
        %v3062 = vpop.f32.mrb[0].mxu0
        %3063 = vmatprep.mubr.f32.mxu0 0.0
        %v3064 = vand.u32 %v407, 4294901760
        %3065 = vmatmul.mubr.f32.gmra.mrb[0].mxu0 %v3064
        %v3066 = vpop.f32.mrb[0].mxu0
        %v3067 = vadd.f32 %v2583, %v3066
        %v3068 = vpop.f32.mrb[0].mxu0
        %3069 = vmatprep.mubr.f32.mxu0 0.0
        %v3070 = vand.u32 %v410, 4294901760
        %3071 = vmatmul.mubr.f32.gmra.mrb[0].mxu0 %v3070
        %v3072 = vpop.f32.mrb[0].mxu0
        %v3073 = vadd.f32 %v2591, %v3072
        %v3074 = vpop.f32.mrb[0].mxu0
        %3075 = vmatprep.mubr.f32.mxu0 0.0
        %v3076 = vand.u32 %v413, 4294901760
        %3077 = vmatmul.mubr.f32.gmra.mrb[0].mxu0 %v3076
        %v3078 = vpop.f32.mrb[0].mxu0
        %v3079 = vadd.f32 %v2599, %v3078
        %v3080 = vpop.f32.mrb[0].mxu0
        %3081 = vmatprep.mubr.f32.mxu0 0.0
        %v3082 = vand.u32 %v416, 4294901760
        %3083 = vmatmul.mubr.f32.gmra.mrb[0].mxu0 %v3082
        %v3084 = vpop.f32.mrb[0].mxu0
        %v3085 = vadd.f32 %v2607, %v3084
        %v3086 = vpop.f32.mrb[0].mxu0
        %3087 = vmatprep.mubr.f32.mxu0 0.0
        %v3088 = vand.u32 %v419, 4294901760
        %3089 = vmatmul.mubr.f32.gmra.mrb[0].mxu0 %v3088
        %v3090 = vpop.f32.mrb[0].mxu0
        %v3091 = vadd.f32 %v2615, %v3090
        %v3092 = vpop.f32.mrb[0].mxu0
        %3093 = vmatprep.mubr.f32.mxu0 0.0
        %v3094 = vand.u32 %v422, 4294901760
        %3095 = vmatmul.mubr.f32.gmra.mrb[0].mxu0 %v3094
        %v3096 = vpop.f32.mrb[0].mxu0
        %v3097 = vadd.f32 %v2623, %v3096
        %v3098 = vpop.f32.mrb[0].mxu0
        %3099 = vmatprep.mubr.f32.mxu0 0.0
        %v3100 = vand.u32 %v425, 4294901760
        %3101 = vmatmul.mubr.f32.gmra.mrb[0].mxu0 %v3100
        %v3102 = vpop.f32.mrb[0].mxu0
        %v3103 = vadd.f32 %v2631, %v3102
        %v3104 = vpop.f32.mrb[0].mxu0
        %3105 = vmatprep.mubr.f32.mxu0 0.0
        %v3106 = vand.u32 %v428, 4294901760
        %3107 = vmatmul.mubr.f32.gmra.mrb[0].mxu0 %v3106
        %v3108 = vpop.f32.mrb[0].mxu0
        %v3109 = vadd.f32 %v2639, %v3108
        %v3110 = vpop.f32.mrb[0].mxu0
        %3111 = vmatprep.mubr.f32.mxu0 0.0
        %v3112 = vand.u32 %v431, 4294901760
        %3113 = vmatmul.mubr.f32.gmra.mrb[0].mxu0 %v3112
        %v3114 = vpop.f32.mrb[0].mxu0
        %v3115 = vadd.f32 %v2647, %v3114
        %v3116 = vpop.f32.mrb[0].mxu0
        %3117 = vmatprep.mubr.f32.mxu0 0.0
        %v3118 = vand.u32 %v434, 4294901760
        %3119 = vmatmul.mubr.f32.gmra.mrb[0].mxu0 %v3118
        %v3120 = vpop.f32.mrb[0].mxu0
        %v3121 = vadd.f32 %v2655, %v3120
        %v3122 = vpop.f32.mrb[0].mxu0
        %3123 = vmatprep.mubr.f32.mxu0 0.0
        %v3124 = vand.u32 %v437, 4294901760
        %3125 = vmatmul.mubr.f32.gmra.mrb[0].mxu0 %v3124
        %v3126 = vpop.f32.mrb[0].mxu0
        %v3127 = vadd.f32 %v2663, %v3126
        %v3128 = vpop.f32.mrb[0].mxu0
        %3129 = vmatprep.mubr.f32.mxu0 0.0
        %v3130 = vand.u32 %v440, 4294901760
        %3131 = vmatmul.mubr.f32.gmra.mrb[0].mxu0 %v3130
        %v3132 = vpop.f32.mrb[0].mxu0
        %v3133 = vadd.f32 %v2671, %v3132
        %v3134 = vpop.f32.mrb[0].mxu0
        %3135 = vmatprep.mubr.f32.mxu0 0.0
        %v3136 = vand.u32 %v443, 4294901760
        %3137 = vmatmul.mubr.f32.gmra.mrb[0].mxu0 %v3136
        %v3138 = vpop.f32.mrb[0].mxu0
        %v3139 = vadd.f32 %v2679, %v3138
        %v3140 = vpop.f32.mrb[0].mxu0
        %3141 = vmatprep.mubr.f32.mxu0 0.0
        %v3142 = vand.u32 %v446, 4294901760
        %3143 = vmatmul.mubr.f32.gmra.mrb[0].mxu0 %v3142
        %v3144 = vpop.f32.mrb[0].mxu0
        %v3145 = vadd.f32 %v2687, %v3144
        %v3146 = vpop.f32.mrb[0].mxu0
        %3147 = vmatprep.mubr.f32.mxu0 0.0
        %v3148 = vand.u32 %v449, 4294901760
        %3149 = vmatmul.mubr.f32.gmra.mrb[0].mxu0 %v3148
        %v3150 = vpop.f32.mrb[0].mxu0
        %v3151 = vadd.f32 %v2695, %v3150
        %v3152 = vpop.f32.mrb[0].mxu0
        %3153 = vmatprep.mubr.f32.mxu0 0.0
        %v3154 = vand.u32 %v452, 4294901760
        %3155 = vmatmul.mubr.f32.gmra.mrb[0].mxu0 %v3154
        %v3156 = vpop.f32.mrb[0].mxu0
        %v3157 = vadd.f32 %v2703, %v3156
        %v3158 = vpop.f32.mrb[0].mxu0
        %3159 = vmatprep.mubr.f32.mxu0 0.0
        %v3160 = vand.u32 %v455, 4294901760
        %3161 = vmatmul.mubr.f32.gmra.mrb[0].mxu0 %v3160
        %v3162 = vpop.f32.mrb[0].mxu0
        %v3163 = vadd.f32 %v2711, %v3162
        %v3164 = vpop.f32.mrb[0].mxu0
        %3165 = vdwg.mxu0
        %3166 = vmatprep.subr.mxu0 0.0
        %v3167 = vand.u32 %v459, 4294901760
        %3168 = vmatpush1.msra.mxu0 %v3167
        %3169 = vmatprep.subr.mxu0 0.0
        %3170 = vmatpush1.msra.mxu0 0.0
        %3171 = vmatprep.subr.mxu0 0.0
        %3172 = vmatpush1.msra.mxu0 0.0
        %3173 = vmatprep.subr.mxu0 0.0
        %3174 = vmatpush1.msra.mxu0 0.0
        %3175 = vmatprep.subr.mxu0 0.0
        %3176 = vmatpush1.msra.mxu0 0.0
        %3177 = vmatprep.subr.mxu0 0.0
        %3178 = vmatpush1.msra.mxu0 0.0
        %3179 = vmatprep.subr.mxu0 0.0
        %3180 = vmatpush1.msra.mxu0 0.0
        %3181 = vmatprep.subr.mxu0 0.0
        %3182 = vmatpush1.msra.mxu0 0.0
        %3183 = vmatprep.subr.mxu0 0.0
        %3184 = vmatpush1.msra.mxu0 0.0
        %3185 = vmatprep.subr.mxu0 0.0
        %3186 = vmatpush1.msra.mxu0 0.0
        %3187 = vmatprep.subr.mxu0 0.0
        %3188 = vmatpush1.msra.mxu0 0.0
        %3189 = vmatprep.subr.mxu0 0.0
        %3190 = vmatpush1.msra.mxu0 0.0
        %3191 = vmatprep.subr.mxu0 0.0
        %3192 = vmatpush1.msra.mxu0 0.0
        %3193 = vmatprep.subr.mxu0 0.0
        %3194 = vmatpush1.msra.mxu0 0.0
        %3195 = vmatprep.subr.mxu0 0.0
        %3196 = vmatpush1.msra.mxu0 0.0
        %3197 = vmatprep.subr.mxu0 0.0
        %3198 = vmatpush1.msra.mxu0 0.0
        %3199 = vmatprep.subr.mxu0 0.0
        %3200 = vmatpush1.msra.mxu0 0.0
        %3201 = vmatprep.subr.mxu0 0.0
        %3202 = vmatpush1.msra.mxu0 0.0
        %3203 = vmatprep.subr.mxu0 0.0
        %3204 = vmatpush1.msra.mxu0 0.0
        %3205 = vmatprep.subr.mxu0 0.0
        %3206 = vmatpush1.msra.mxu0 0.0
        %3207 = vmatprep.subr.mxu0 0.0
        %3208 = vmatpush1.msra.mxu0 0.0
        %3209 = vmatprep.subr.mxu0 0.0
        %3210 = vmatpush1.msra.mxu0 0.0
        %3211 = vmatprep.subr.mxu0 0.0
        %3212 = vmatpush1.msra.mxu0 0.0
        %3213 = vmatprep.subr.mxu0 0.0
        %3214 = vmatpush1.msra.mxu0 0.0
        %3215 = vmatprep.subr.mxu0 0.0
        %3216 = vmatpush1.msra.mxu0 0.0
        %3217 = vmatprep.subr.mxu0 0.0
        %3218 = vmatpush1.msra.mxu0 0.0
        %3219 = vmatprep.subr.mxu0 0.0
        %3220 = vmatpush1.msra.mxu0 0.0
        %3221 = vmatprep.subr.mxu0 0.0
        %3222 = vmatpush1.msra.mxu0 0.0
        %3223 = vmatprep.subr.mxu0 0.0
        %3224 = vmatpush1.msra.mxu0 0.0
        %3225 = vmatprep.subr.mxu0 0.0
        %3226 = vmatpush1.msra.mxu0 0.0
        %3227 = vmatprep.subr.mxu0 0.0
        %3228 = vmatpush1.msra.mxu0 0.0
        %3229 = vmatprep.subr.mxu0 0.0
        %3230 = vmatpush1.msra.mxu0 0.0
        %3231 = vmatprep.mubr.f32.mxu0 0.0
        %v3232 = vand.u32 %v266, 4294901760
        %3233 = vmatmul.mubr.f32.gmra.mrb[0].mxu0 %v3232
        %v3234 = vpop.f32.mrb[0].mxu0
        %v3235 = vadd.f32 %v2785, %v3234
        %v3236 = vpop.f32.mrb[0].mxu0
        %3237 = vmatprep.mubr.f32.mxu0 0.0
        %v3238 = vand.u32 %v269, 4294901760
        %3239 = vmatmul.mubr.f32.gmra.mrb[0].mxu0 %v3238
        %v3240 = vpop.f32.mrb[0].mxu0
        %v3241 = vadd.f32 %v2791, %v3240
        %v3242 = vpop.f32.mrb[0].mxu0
        %3243 = vmatprep.mubr.f32.mxu0 0.0
        %v3244 = vand.u32 %v272, 4294901760
        %3245 = vmatmul.mubr.f32.gmra.mrb[0].mxu0 %v3244
        %v3246 = vpop.f32.mrb[0].mxu0
        %v3247 = vadd.f32 %v2797, %v3246
        %v3248 = vpop.f32.mrb[0].mxu0
        %3249 = vmatprep.mubr.f32.mxu0 0.0
        %v3250 = vand.u32 %v275, 4294901760
        %3251 = vmatmul.mubr.f32.gmra.mrb[0].mxu0 %v3250
        %v3252 = vpop.f32.mrb[0].mxu0
        %v3253 = vadd.f32 %v2803, %v3252
        %v3254 = vpop.f32.mrb[0].mxu0
        %3255 = vmatprep.mubr.f32.mxu0 0.0
        %v3256 = vand.u32 %v278, 4294901760
        %3257 = vmatmul.mubr.f32.gmra.mrb[0].mxu0 %v3256
        %v3258 = vpop.f32.mrb[0].mxu0
        %v3259 = vadd.f32 %v2809, %v3258
        %v3260 = vpop.f32.mrb[0].mxu0
        %3261 = vmatprep.mubr.f32.mxu0 0.0
        %v3262 = vand.u32 %v281, 4294901760
        %3263 = vmatmul.mubr.f32.gmra.mrb[0].mxu0 %v3262
        %v3264 = vpop.f32.mrb[0].mxu0
        %v3265 = vadd.f32 %v2815, %v3264
        %v3266 = vpop.f32.mrb[0].mxu0
        %3267 = vmatprep.mubr.f32.mxu0 0.0
        %v3268 = vand.u32 %v284, 4294901760
        %3269 = vmatmul.mubr.f32.gmra.mrb[0].mxu0 %v3268
        %v3270 = vpop.f32.mrb[0].mxu0
        %v3271 = vadd.f32 %v2821, %v3270
        %v3272 = vpop.f32.mrb[0].mxu0
        %3273 = vmatprep.mubr.f32.mxu0 0.0
        %v3274 = vand.u32 %v287, 4294901760
        %3275 = vmatmul.mubr.f32.gmra.mrb[0].mxu0 %v3274
        %v3276 = vpop.f32.mrb[0].mxu0
        %v3277 = vadd.f32 %v2827, %v3276
        %v3278 = vpop.f32.mrb[0].mxu0
        %3279 = vmatprep.mubr.f32.mxu0 0.0
        %v3280 = vand.u32 %v290, 4294901760
        %3281 = vmatmul.mubr.f32.gmra.mrb[0].mxu0 %v3280
        %v3282 = vpop.f32.mrb[0].mxu0
        %v3283 = vadd.f32 %v2833, %v3282
        %v3284 = vpop.f32.mrb[0].mxu0
        %3285 = vmatprep.mubr.f32.mxu0 0.0
        %v3286 = vand.u32 %v293, 4294901760
        %3287 = vmatmul.mubr.f32.gmra.mrb[0].mxu0 %v3286
        %v3288 = vpop.f32.mrb[0].mxu0
        %v3289 = vadd.f32 %v2839, %v3288
        %v3290 = vpop.f32.mrb[0].mxu0
        %3291 = vmatprep.mubr.f32.mxu0 0.0
        %v3292 = vand.u32 %v296, 4294901760
        %3293 = vmatmul.mubr.f32.gmra.mrb[0].mxu0 %v3292
        %v3294 = vpop.f32.mrb[0].mxu0
        %v3295 = vadd.f32 %v2845, %v3294
        %v3296 = vpop.f32.mrb[0].mxu0
        %3297 = vmatprep.mubr.f32.mxu0 0.0
        %v3298 = vand.u32 %v299, 4294901760
        %3299 = vmatmul.mubr.f32.gmra.mrb[0].mxu0 %v3298
        %v3300 = vpop.f32.mrb[0].mxu0
        %v3301 = vadd.f32 %v2851, %v3300
        %v3302 = vpop.f32.mrb[0].mxu0
        %3303 = vmatprep.mubr.f32.mxu0 0.0
        %v3304 = vand.u32 %v302, 4294901760
        %3305 = vmatmul.mubr.f32.gmra.mrb[0].mxu0 %v3304
        %v3306 = vpop.f32.mrb[0].mxu0
        %v3307 = vadd.f32 %v2857, %v3306
        %v3308 = vpop.f32.mrb[0].mxu0
        %3309 = vmatprep.mubr.f32.mxu0 0.0
        %v3310 = vand.u32 %v305, 4294901760
        %3311 = vmatmul.mubr.f32.gmra.mrb[0].mxu0 %v3310
        %v3312 = vpop.f32.mrb[0].mxu0
        %v3313 = vadd.f32 %v2863, %v3312
        %v3314 = vpop.f32.mrb[0].mxu0
        %3315 = vmatprep.mubr.f32.mxu0 0.0
        %v3316 = vand.u32 %v308, 4294901760
        %3317 = vmatmul.mubr.f32.gmra.mrb[0].mxu0 %v3316
        %v3318 = vpop.f32.mrb[0].mxu0
        %v3319 = vadd.f32 %v2869, %v3318
        %v3320 = vpop.f32.mrb[0].mxu0
        %3321 = vmatprep.mubr.f32.mxu0 0.0
        %v3322 = vand.u32 %v311, 4294901760
        %3323 = vmatmul.mubr.f32.gmra.mrb[0].mxu0 %v3322
        %v3324 = vpop.f32.mrb[0].mxu0
        %v3325 = vadd.f32 %v2875, %v3324
        %v3326 = vpop.f32.mrb[0].mxu0
        %3327 = vmatprep.mubr.f32.mxu0 0.0
        %v3328 = vand.u32 %v314, 4294901760
        %3329 = vmatmul.mubr.f32.gmra.mrb[0].mxu0 %v3328
        %v3330 = vpop.f32.mrb[0].mxu0
        %v3331 = vadd.f32 %v2881, %v3330
        %v3332 = vpop.f32.mrb[0].mxu0
        %3333 = vmatprep.mubr.f32.mxu0 0.0
        %v3334 = vand.u32 %v317, 4294901760
        %3335 = vmatmul.mubr.f32.gmra.mrb[0].mxu0 %v3334
        %v3336 = vpop.f32.mrb[0].mxu0
        %v3337 = vadd.f32 %v2887, %v3336
        %v3338 = vpop.f32.mrb[0].mxu0
        %3339 = vmatprep.mubr.f32.mxu0 0.0
        %v3340 = vand.u32 %v320, 4294901760
        %3341 = vmatmul.mubr.f32.gmra.mrb[0].mxu0 %v3340
        %v3342 = vpop.f32.mrb[0].mxu0
        %v3343 = vadd.f32 %v2893, %v3342
        %v3344 = vpop.f32.mrb[0].mxu0
        %3345 = vmatprep.mubr.f32.mxu0 0.0
        %v3346 = vand.u32 %v323, 4294901760
        %3347 = vmatmul.mubr.f32.gmra.mrb[0].mxu0 %v3346
        %v3348 = vpop.f32.mrb[0].mxu0
        %v3349 = vadd.f32 %v2899, %v3348
        %v3350 = vpop.f32.mrb[0].mxu0
        %3351 = vmatprep.mubr.f32.mxu0 0.0
        %v3352 = vand.u32 %v326, 4294901760
        %3353 = vmatmul.mubr.f32.gmra.mrb[0].mxu0 %v3352
        %v3354 = vpop.f32.mrb[0].mxu0
        %v3355 = vadd.f32 %v2905, %v3354
        %v3356 = vpop.f32.mrb[0].mxu0
        %3357 = vmatprep.mubr.f32.mxu0 0.0
        %v3358 = vand.u32 %v329, 4294901760
        %3359 = vmatmul.mubr.f32.gmra.mrb[0].mxu0 %v3358
        %v3360 = vpop.f32.mrb[0].mxu0
        %v3361 = vadd.f32 %v2911, %v3360
        %v3362 = vpop.f32.mrb[0].mxu0
        %3363 = vmatprep.mubr.f32.mxu0 0.0
        %v3364 = vand.u32 %v332, 4294901760
        %3365 = vmatmul.mubr.f32.gmra.mrb[0].mxu0 %v3364
        %v3366 = vpop.f32.mrb[0].mxu0
        %v3367 = vadd.f32 %v2917, %v3366
        %v3368 = vpop.f32.mrb[0].mxu0
        %3369 = vmatprep.mubr.f32.mxu0 0.0
        %v3370 = vand.u32 %v335, 4294901760
        %3371 = vmatmul.mubr.f32.gmra.mrb[0].mxu0 %v3370
        %v3372 = vpop.f32.mrb[0].mxu0
        %v3373 = vadd.f32 %v2923, %v3372
        %v3374 = vpop.f32.mrb[0].mxu0
        %3375 = vmatprep.mubr.f32.mxu0 0.0
        %v3376 = vand.u32 %v338, 4294901760
        %3377 = vmatmul.mubr.f32.gmra.mrb[0].mxu0 %v3376
        %v3378 = vpop.f32.mrb[0].mxu0
        %v3379 = vadd.f32 %v2929, %v3378
        %v3380 = vpop.f32.mrb[0].mxu0
        %3381 = vmatprep.mubr.f32.mxu0 0.0
        %v3382 = vand.u32 %v341, 4294901760
        %3383 = vmatmul.mubr.f32.gmra.mrb[0].mxu0 %v3382
        %v3384 = vpop.f32.mrb[0].mxu0
        %v3385 = vadd.f32 %v2935, %v3384
        %v3386 = vpop.f32.mrb[0].mxu0
        %3387 = vmatprep.mubr.f32.mxu0 0.0
        %v3388 = vand.u32 %v344, 4294901760
        %3389 = vmatmul.mubr.f32.gmra.mrb[0].mxu0 %v3388
        %v3390 = vpop.f32.mrb[0].mxu0
        %v3391 = vadd.f32 %v2941, %v3390
        %v3392 = vpop.f32.mrb[0].mxu0
        %3393 = vmatprep.mubr.f32.mxu0 0.0
        %v3394 = vand.u32 %v347, 4294901760
        %3395 = vmatmul.mubr.f32.gmra.mrb[0].mxu0 %v3394
        %v3396 = vpop.f32.mrb[0].mxu0
        %v3397 = vadd.f32 %v2947, %v3396
        %v3398 = vpop.f32.mrb[0].mxu0
        %3399 = vmatprep.mubr.f32.mxu0 0.0
        %v3400 = vand.u32 %v350, 4294901760
        %3401 = vmatmul.mubr.f32.gmra.mrb[0].mxu0 %v3400
        %v3402 = vpop.f32.mrb[0].mxu0
        %v3403 = vadd.f32 %v2953, %v3402
        %v3404 = vpop.f32.mrb[0].mxu0
        %3405 = vmatprep.mubr.f32.mxu0 0.0
        %v3406 = vand.u32 %v353, 4294901760
        %3407 = vmatmul.mubr.f32.gmra.mrb[0].mxu0 %v3406
        %v3408 = vpop.f32.mrb[0].mxu0
        %v3409 = vadd.f32 %v2959, %v3408
        %v3410 = vpop.f32.mrb[0].mxu0
        %3411 = vmatprep.mubr.f32.mxu0 0.0
        %v3412 = vand.u32 %v356, 4294901760
        %3413 = vmatmul.mubr.f32.gmra.mrb[0].mxu0 %v3412
        %v3414 = vpop.f32.mrb[0].mxu0
        %v3415 = vadd.f32 %v2965, %v3414
        %v3416 = vpop.f32.mrb[0].mxu0
        %3417 = vmatprep.mubr.f32.mxu0 0.0
        %v3418 = vand.u32 %v359, 4294901760
        %3419 = vmatmul.mubr.f32.gmra.mrb[0].mxu0 %v3418
        %v3420 = vpop.f32.mrb[0].mxu0
        %v3421 = vadd.f32 %v2971, %v3420
        %v3422 = vpop.f32.mrb[0].mxu0
        %3423 = vmatprep.mubr.f32.mxu0 0.0
        %v3424 = vand.u32 %v362, 4294901760
        %3425 = vmatmul.mubr.f32.gmra.mrb[0].mxu0 %v3424
        %v3426 = vpop.f32.mrb[0].mxu0
        %v3427 = vadd.f32 %v2977, %v3426
        %v3428 = vpop.f32.mrb[0].mxu0
        %3429 = vmatprep.mubr.f32.mxu0 0.0
        %v3430 = vand.u32 %v365, 4294901760
        %3431 = vmatmul.mubr.f32.gmra.mrb[0].mxu0 %v3430
        %v3432 = vpop.f32.mrb[0].mxu0
        %v3433 = vadd.f32 %v2983, %v3432
        %v3434 = vpop.f32.mrb[0].mxu0
        %3435 = vmatprep.mubr.f32.mxu0 0.0
        %v3436 = vand.u32 %v368, 4294901760
        %3437 = vmatmul.mubr.f32.gmra.mrb[0].mxu0 %v3436
        %v3438 = vpop.f32.mrb[0].mxu0
        %v3439 = vadd.f32 %v2989, %v3438
        %v3440 = vpop.f32.mrb[0].mxu0
        %3441 = vmatprep.mubr.f32.mxu0 0.0
        %v3442 = vand.u32 %v371, 4294901760
        %3443 = vmatmul.mubr.f32.gmra.mrb[0].mxu0 %v3442
        %v3444 = vpop.f32.mrb[0].mxu0
        %v3445 = vadd.f32 %v2995, %v3444
        %v3446 = vpop.f32.mrb[0].mxu0
        %3447 = vmatprep.mubr.f32.mxu0 0.0
        %v3448 = vand.u32 %v374, 4294901760
        %3449 = vmatmul.mubr.f32.gmra.mrb[0].mxu0 %v3448
        %v3450 = vpop.f32.mrb[0].mxu0
        %v3451 = vadd.f32 %v3001, %v3450
        %v3452 = vpop.f32.mrb[0].mxu0
        %3453 = vmatprep.mubr.f32.mxu0 0.0
        %v3454 = vand.u32 %v377, 4294901760
        %3455 = vmatmul.mubr.f32.gmra.mrb[0].mxu0 %v3454
        %v3456 = vpop.f32.mrb[0].mxu0
        %v3457 = vadd.f32 %v3007, %v3456
        %v3458 = vpop.f32.mrb[0].mxu0
        %3459 = vmatprep.mubr.f32.mxu0 0.0
        %v3460 = vand.u32 %v380, 4294901760
        %3461 = vmatmul.mubr.f32.gmra.mrb[0].mxu0 %v3460
        %v3462 = vpop.f32.mrb[0].mxu0
        %v3463 = vadd.f32 %v3013, %v3462
        %v3464 = vpop.f32.mrb[0].mxu0
        %3465 = vmatprep.mubr.f32.mxu0 0.0
        %v3466 = vand.u32 %v383, 4294901760
        %3467 = vmatmul.mubr.f32.gmra.mrb[0].mxu0 %v3466
        %v3468 = vpop.f32.mrb[0].mxu0
        %v3469 = vadd.f32 %v3019, %v3468
        %v3470 = vpop.f32.mrb[0].mxu0
        %3471 = vmatprep.mubr.f32.mxu0 0.0
        %v3472 = vand.u32 %v386, 4294901760
        %3473 = vmatmul.mubr.f32.gmra.mrb[0].mxu0 %v3472
        %v3474 = vpop.f32.mrb[0].mxu0
        %v3475 = vadd.f32 %v3025, %v3474
        %v3476 = vpop.f32.mrb[0].mxu0
        %3477 = vmatprep.mubr.f32.mxu0 0.0
        %v3478 = vand.u32 %v389, 4294901760
        %3479 = vmatmul.mubr.f32.gmra.mrb[0].mxu0 %v3478
        %v3480 = vpop.f32.mrb[0].mxu0
        %v3481 = vadd.f32 %v3031, %v3480
        %v3482 = vpop.f32.mrb[0].mxu0
        %3483 = vmatprep.mubr.f32.mxu0 0.0
        %v3484 = vand.u32 %v392, 4294901760
        %3485 = vmatmul.mubr.f32.gmra.mrb[0].mxu0 %v3484
        %v3486 = vpop.f32.mrb[0].mxu0
        %v3487 = vadd.f32 %v3037, %v3486
        %v3488 = vpop.f32.mrb[0].mxu0
        %3489 = vmatprep.mubr.f32.mxu0 0.0
        %v3490 = vand.u32 %v395, 4294901760
        %3491 = vmatmul.mubr.f32.gmra.mrb[0].mxu0 %v3490
        %v3492 = vpop.f32.mrb[0].mxu0
        %v3493 = vadd.f32 %v3043, %v3492
        %v3494 = vpop.f32.mrb[0].mxu0
        %3495 = vmatprep.mubr.f32.mxu0 0.0
        %v3496 = vand.u32 %v398, 4294901760
        %3497 = vmatmul.mubr.f32.gmra.mrb[0].mxu0 %v3496
        %v3498 = vpop.f32.mrb[0].mxu0
        %v3499 = vadd.f32 %v3049, %v3498
        %v3500 = vpop.f32.mrb[0].mxu0
        %3501 = vmatprep.mubr.f32.mxu0 0.0
        %v3502 = vand.u32 %v401, 4294901760
        %3503 = vmatmul.mubr.f32.gmra.mrb[0].mxu0 %v3502
        %v3504 = vpop.f32.mrb[0].mxu0
        %v3505 = vadd.f32 %v3055, %v3504
        %v3506 = vpop.f32.mrb[0].mxu0
        %3507 = vmatprep.mubr.f32.mxu0 0.0
        %v3508 = vand.u32 %v404, 4294901760
        %3509 = vmatmul.mubr.f32.gmra.mrb[0].mxu0 %v3508
        %v3510 = vpop.f32.mrb[0].mxu0
        %v3511 = vadd.f32 %v3061, %v3510
        %v3512 = vpop.f32.mrb[0].mxu0
        %3513 = vmatprep.mubr.f32.mxu0 0.0
        %v3514 = vand.u32 %v407, 4294901760
        %3515 = vmatmul.mubr.f32.gmra.mrb[0].mxu0 %v3514
        %v3516 = vpop.f32.mrb[0].mxu0
        %v3517 = vadd.f32 %v3067, %v3516
        %v3518 = vpop.f32.mrb[0].mxu0
        %3519 = vmatprep.mubr.f32.mxu0 0.0
        %v3520 = vand.u32 %v410, 4294901760
        %3521 = vmatmul.mubr.f32.gmra.mrb[0].mxu0 %v3520
        %v3522 = vpop.f32.mrb[0].mxu0
        %v3523 = vadd.f32 %v3073, %v3522
        %v3524 = vpop.f32.mrb[0].mxu0
        %3525 = vmatprep.mubr.f32.mxu0 0.0
        %v3526 = vand.u32 %v413, 4294901760
        %3527 = vmatmul.mubr.f32.gmra.mrb[0].mxu0 %v3526
        %v3528 = vpop.f32.mrb[0].mxu0
        %v3529 = vadd.f32 %v3079, %v3528
        %v3530 = vpop.f32.mrb[0].mxu0
        %3531 = vmatprep.mubr.f32.mxu0 0.0
        %v3532 = vand.u32 %v416, 4294901760
        %3533 = vmatmul.mubr.f32.gmra.mrb[0].mxu0 %v3532
        %v3534 = vpop.f32.mrb[0].mxu0
        %v3535 = vadd.f32 %v3085, %v3534
        %v3536 = vpop.f32.mrb[0].mxu0
        %3537 = vmatprep.mubr.f32.mxu0 0.0
        %v3538 = vand.u32 %v419, 4294901760
        %3539 = vmatmul.mubr.f32.gmra.mrb[0].mxu0 %v3538
        %v3540 = vpop.f32.mrb[0].mxu0
        %v3541 = vadd.f32 %v3091, %v3540
        %v3542 = vpop.f32.mrb[0].mxu0
        %3543 = vmatprep.mubr.f32.mxu0 0.0
        %v3544 = vand.u32 %v422, 4294901760
        %3545 = vmatmul.mubr.f32.gmra.mrb[0].mxu0 %v3544
        %v3546 = vpop.f32.mrb[0].mxu0
        %v3547 = vadd.f32 %v3097, %v3546
        %v3548 = vpop.f32.mrb[0].mxu0
        %3549 = vmatprep.mubr.f32.mxu0 0.0
        %v3550 = vand.u32 %v425, 4294901760
        %3551 = vmatmul.mubr.f32.gmra.mrb[0].mxu0 %v3550
        %v3552 = vpop.f32.mrb[0].mxu0
        %v3553 = vadd.f32 %v3103, %v3552
        %v3554 = vpop.f32.mrb[0].mxu0
        %3555 = vmatprep.mubr.f32.mxu0 0.0
        %v3556 = vand.u32 %v428, 4294901760
        %3557 = vmatmul.mubr.f32.gmra.mrb[0].mxu0 %v3556
        %v3558 = vpop.f32.mrb[0].mxu0
        %v3559 = vadd.f32 %v3109, %v3558
        %v3560 = vpop.f32.mrb[0].mxu0
        %3561 = vmatprep.mubr.f32.mxu0 0.0
        %v3562 = vand.u32 %v431, 4294901760
        %3563 = vmatmul.mubr.f32.gmra.mrb[0].mxu0 %v3562
        %v3564 = vpop.f32.mrb[0].mxu0
        %v3565 = vadd.f32 %v3115, %v3564
        %v3566 = vpop.f32.mrb[0].mxu0
        %3567 = vmatprep.mubr.f32.mxu0 0.0
        %v3568 = vand.u32 %v434, 4294901760
        %3569 = vmatmul.mubr.f32.gmra.mrb[0].mxu0 %v3568
        %v3570 = vpop.f32.mrb[0].mxu0
        %v3571 = vadd.f32 %v3121, %v3570
        %v3572 = vpop.f32.mrb[0].mxu0
        %3573 = vmatprep.mubr.f32.mxu0 0.0
        %v3574 = vand.u32 %v437, 4294901760
        %3575 = vmatmul.mubr.f32.gmra.mrb[0].mxu0 %v3574
        %v3576 = vpop.f32.mrb[0].mxu0
        %v3577 = vadd.f32 %v3127, %v3576
        %v3578 = vpop.f32.mrb[0].mxu0
        %3579 = vmatprep.mubr.f32.mxu0 0.0
        %v3580 = vand.u32 %v440, 4294901760
        %3581 = vmatmul.mubr.f32.gmra.mrb[0].mxu0 %v3580
        %v3582 = vpop.f32.mrb[0].mxu0
        %v3583 = vadd.f32 %v3133, %v3582
        %v3584 = vpop.f32.mrb[0].mxu0
        %3585 = vmatprep.mubr.f32.mxu0 0.0
        %v3586 = vand.u32 %v443, 4294901760
        %3587 = vmatmul.mubr.f32.gmra.mrb[0].mxu0 %v3586
        %v3588 = vpop.f32.mrb[0].mxu0
        %v3589 = vadd.f32 %v3139, %v3588
        %v3590 = vpop.f32.mrb[0].mxu0
        %3591 = vmatprep.mubr.f32.mxu0 0.0
        %v3592 = vand.u32 %v446, 4294901760
        %3593 = vmatmul.mubr.f32.gmra.mrb[0].mxu0 %v3592
        %v3594 = vpop.f32.mrb[0].mxu0
        %v3595 = vadd.f32 %v3145, %v3594
        %v3596 = vpop.f32.mrb[0].mxu0
        %3597 = vmatprep.mubr.f32.mxu0 0.0
        %v3598 = vand.u32 %v449, 4294901760
        %3599 = vmatmul.mubr.f32.gmra.mrb[0].mxu0 %v3598
        %v3600 = vpop.f32.mrb[0].mxu0
        %v3601 = vadd.f32 %v3151, %v3600
        %v3602 = vpop.f32.mrb[0].mxu0
        %3603 = vmatprep.mubr.f32.mxu0 0.0
        %v3604 = vand.u32 %v452, 4294901760
        %3605 = vmatmul.mubr.f32.gmra.mrb[0].mxu0 %v3604
        %v3606 = vpop.f32.mrb[0].mxu0
        %v3607 = vadd.f32 %v3157, %v3606
        %v3608 = vpop.f32.mrb[0].mxu0
        %3609 = vmatprep.mubr.f32.mxu0 0.0
        %v3610 = vand.u32 %v455, 4294901760
        %3611 = vmatmul.mubr.f32.gmra.mrb[0].mxu0 %v3610
        %v3612 = vpop.f32.mrb[0].mxu0
        %v3613 = vadd.f32 %v3163, %v3612
        %v3614 = vpop.f32.mrb[0].mxu0
        %3615 = vdwg.mxu0
        %v3616 = vld [vmem:[%s2] sm:$0x1]
        %v3618 = vlaneseq
        %v3619 = vshrl.u32 %v3618, 7
        %v3620 = vsub.s32 0, %v3619
        %v3621 = vrot.slane %v3616, %v3620
        %v3623 = vmul.f32 %v3235, %v3621
        %v3624 = vmul.f32 %v3241, %v3621
        %v3625 = vmul.f32 %v3247, %v3621
        %v3626 = vmul.f32 %v3253, %v3621
        %v3627 = vmul.f32 %v3259, %v3621
        %v3628 = vmul.f32 %v3265, %v3621
        %v3629 = vmul.f32 %v3271, %v3621
        %v3630 = vmul.f32 %v3277, %v3621
        %v3631 = vmul.f32 %v3283, %v3621
        %v3632 = vmul.f32 %v3289, %v3621
        %v3633 = vmul.f32 %v3295, %v3621
        %v3634 = vmul.f32 %v3301, %v3621
        %v3635 = vmul.f32 %v3307, %v3621
        %v3636 = vmul.f32 %v3313, %v3621
        %v3637 = vmul.f32 %v3319, %v3621
        %v3638 = vmul.f32 %v3325, %v3621
        %v3639 = vmul.f32 %v3331, %v3621
        %v3640 = vmul.f32 %v3337, %v3621
        %v3641 = vmul.f32 %v3343, %v3621
        %v3642 = vmul.f32 %v3349, %v3621
        %v3643 = vmul.f32 %v3355, %v3621
        %v3644 = vmul.f32 %v3361, %v3621
        %v3645 = vmul.f32 %v3367, %v3621
        %v3646 = vmul.f32 %v3373, %v3621
        %v3647 = vmul.f32 %v3379, %v3621
        %v3648 = vmul.f32 %v3385, %v3621
        %v3649 = vmul.f32 %v3391, %v3621
        %v3650 = vmul.f32 %v3397, %v3621
        %v3651 = vmul.f32 %v3403, %v3621
        %v3652 = vmul.f32 %v3409, %v3621
        %v3653 = vmul.f32 %v3415, %v3621
        %v3654 = vmul.f32 %v3421, %v3621
        %v3655 = vmul.f32 %v3427, %v3621
        %v3656 = vmul.f32 %v3433, %v3621
        %v3657 = vmul.f32 %v3439, %v3621
        %v3658 = vmul.f32 %v3445, %v3621
        %v3659 = vmul.f32 %v3451, %v3621
        %v3660 = vmul.f32 %v3457, %v3621
        %v3661 = vmul.f32 %v3463, %v3621
        %v3662 = vmul.f32 %v3469, %v3621
        %v3663 = vmul.f32 %v3475, %v3621
        %v3664 = vmul.f32 %v3481, %v3621
        %v3665 = vmul.f32 %v3487, %v3621
        %v3666 = vmul.f32 %v3493, %v3621
        %v3667 = vmul.f32 %v3499, %v3621
        %v3668 = vmul.f32 %v3505, %v3621
        %v3669 = vmul.f32 %v3511, %v3621
        %v3670 = vmul.f32 %v3517, %v3621
        %v3671 = vmul.f32 %v3523, %v3621
        %v3672 = vmul.f32 %v3529, %v3621
        %v3673 = vmul.f32 %v3535, %v3621
        %v3674 = vmul.f32 %v3541, %v3621
        %v3675 = vmul.f32 %v3547, %v3621
        %v3676 = vmul.f32 %v3553, %v3621
        %v3677 = vmul.f32 %v3559, %v3621
        %v3678 = vmul.f32 %v3565, %v3621
        %v3679 = vmul.f32 %v3571, %v3621
        %v3680 = vmul.f32 %v3577, %v3621
        %v3681 = vmul.f32 %v3583, %v3621
        %v3682 = vmul.f32 %v3589, %v3621
        %v3683 = vmul.f32 %v3595, %v3621
        %v3684 = vmul.f32 %v3601, %v3621
        %v3685 = vmul.f32 %v3607, %v3621
        %v3686 = vmul.f32 %v3613, %v3621
        %v3687 = vld [vmem:[%s3] sm:$0x1]
        %v3689 = vlaneseq
        %v3690 = vshrl.u32 %v3689, 7
        %v3691 = vsub.s32 0, %v3690
        %v3692 = vrot.slane %v3687, %v3691
        %v3694 = vadd.f32 %v3623, %v3692
        %v3695 = vadd.f32 %v3624, %v3692
        %v3696 = vadd.f32 %v3625, %v3692
        %v3697 = vadd.f32 %v3626, %v3692
        %v3698 = vadd.f32 %v3627, %v3692
        %v3699 = vadd.f32 %v3628, %v3692
        %v3700 = vadd.f32 %v3629, %v3692
        %v3701 = vadd.f32 %v3630, %v3692
        %v3702 = vadd.f32 %v3631, %v3692
        %v3703 = vadd.f32 %v3632, %v3692
        %v3704 = vadd.f32 %v3633, %v3692
        %v3705 = vadd.f32 %v3634, %v3692
        %v3706 = vadd.f32 %v3635, %v3692
        %v3707 = vadd.f32 %v3636, %v3692
        %v3708 = vadd.f32 %v3637, %v3692
        %v3709 = vadd.f32 %v3638, %v3692
        %v3710 = vadd.f32 %v3639, %v3692
        %v3711 = vadd.f32 %v3640, %v3692
        %v3712 = vadd.f32 %v3641, %v3692
        %v3713 = vadd.f32 %v3642, %v3692
        %v3714 = vadd.f32 %v3643, %v3692
        %v3715 = vadd.f32 %v3644, %v3692
        %v3716 = vadd.f32 %v3645, %v3692
        %v3717 = vadd.f32 %v3646, %v3692
        %v3718 = vadd.f32 %v3647, %v3692
        %v3719 = vadd.f32 %v3648, %v3692
        %v3720 = vadd.f32 %v3649, %v3692
        %v3721 = vadd.f32 %v3650, %v3692
        %v3722 = vadd.f32 %v3651, %v3692
        %v3723 = vadd.f32 %v3652, %v3692
        %v3724 = vadd.f32 %v3653, %v3692
        %v3725 = vadd.f32 %v3654, %v3692
        %v3726 = vadd.f32 %v3655, %v3692
        %v3727 = vadd.f32 %v3656, %v3692
        %v3728 = vadd.f32 %v3657, %v3692
        %v3729 = vadd.f32 %v3658, %v3692
        %v3730 = vadd.f32 %v3659, %v3692
        %v3731 = vadd.f32 %v3660, %v3692
        %v3732 = vadd.f32 %v3661, %v3692
        %v3733 = vadd.f32 %v3662, %v3692
        %v3734 = vadd.f32 %v3663, %v3692
        %v3735 = vadd.f32 %v3664, %v3692
        %v3736 = vadd.f32 %v3665, %v3692
        %v3737 = vadd.f32 %v3666, %v3692
        %v3738 = vadd.f32 %v3667, %v3692
        %v3739 = vadd.f32 %v3668, %v3692
        %v3740 = vadd.f32 %v3669, %v3692
        %v3741 = vadd.f32 %v3670, %v3692
        %v3742 = vadd.f32 %v3671, %v3692
        %v3743 = vadd.f32 %v3672, %v3692
        %v3744 = vadd.f32 %v3673, %v3692
        %v3745 = vadd.f32 %v3674, %v3692
        %v3746 = vadd.f32 %v3675, %v3692
        %v3747 = vadd.f32 %v3676, %v3692
        %v3748 = vadd.f32 %v3677, %v3692
        %v3749 = vadd.f32 %v3678, %v3692
        %v3750 = vadd.f32 %v3679, %v3692
        %v3751 = vadd.f32 %v3680, %v3692
        %v3752 = vadd.f32 %v3681, %v3692
        %v3753 = vadd.f32 %v3682, %v3692
        %v3754 = vadd.f32 %v3683, %v3692
        %v3755 = vadd.f32 %v3684, %v3692
        %v3756 = vadd.f32 %v3685, %v3692
        %v3757 = vadd.f32 %v3686, %v3692
        %v3758 = vand.u32 2147483647, %v3694
        %vm3759 = vcmp.le.f32.partialorder %v3758, 0.7853982
        %vm3760 = vcmp.lt.s32.totalorder %v3694, 0
        %v3761 = vand.u32 %v3694, 2139095040
        %v3762 = vshrl.u32 %v3761, 23
        %v3763 = vsub.s32 %v3762, 127
        %v3764 = vand.u32 2147483647, %v3694
        %v3765 = vand.u32 %v3764, 8388607
        %v3766 = vor.u32 %v3765, 8388608
        %v3767 = vsub.s32 0, %v3766
        %v3768 = vadd.s32 %v3763, 1
        %vm3769 = vcmp.gt.s32.totalorder %v3768, 0
        %v3770 = vsel %vm3769, %v3768, 0
        %v3771 = vshrl.u32 %v3770, 5
        %v3772 = vand.u32 %v3770, 31
        %v3773 = vsub.s32 32, %v3772
        %v3774 = vshrl.u32 683565275, %v3773
        %v3775 = vshll.u32 683565275, %v3772
        %v3776 = vshrl.u32 2475754826, %v3773
        %v3777 = vor.u32 %v3775, %v3776
        %v3778 = vshll.u32 2475754826, %v3772
        %v3779 = vshrl.u32 2131351028, %v3773
        %v3780 = vor.u32 %v3778, %v3779
        %v3781 = vshll.u32 2131351028, %v3772
        %v3782 = vshrl.u32 2102212464, %v3773
        %v3783 = vor.u32 %v3781, %v3782
        %v3784 = vshll.u32 2102212464, %v3772
        %v3785 = vshrl.u32 920167782, %v3773
        %v3786 = vor.u32 %v3784, %v3785
        %v3787 = vshll.u32 920167782, %v3772
        %v3788 = vshrl.u32 1326507024, %v3773
        %v3789 = vor.u32 %v3787, %v3788
        %vm3790 = vcmp.lt.s32.totalorder %v3771, 1
        %vm3791 = vcmp.lt.s32.totalorder %v3771, 2
        %vm3792 = vcmp.lt.s32.totalorder %v3771, 3
        %vm3793 = vcmp.lt.s32.totalorder %v3771, 4
        %v3794 = vsel %vm3790, %v3774, %v3777
        %v3795 = vsel %vm3793, %v3783, 2102212464
        %v3796 = vsel %vm3792, %v3780, %v3795
        %v3797 = vsel %vm3791, %v3794, %v3796
        %v3798 = vsel %vm3790, %v3777, %v3780
        %v3799 = vsel %vm3793, %v3786, 920167782
        %v3800 = vsel %vm3792, %v3783, %v3799
        %v3801 = vsel %vm3791, %v3798, %v3800
        %v3802 = vsel %vm3790, %v3780, %v3783
        %v3803 = vsel %vm3793, %v3789, 1326507024
        %v3804 = vsel %vm3792, %v3786, %v3803
        %v3805 = vsel %vm3791, %v3802, %v3804
        %v3806 = vshll.u32 %v3766, 8
        %v3807 = vmul.u32.u64.compose %v3806, %v3805
        %v3808 = vextract.low.u32 %v3807
        %v3809 = vextract.high.u32 %v3807
        %v3810 = vmul.u32.u64.compose %v3806, %v3801
        %v3811 = vextract.low.u32 %v3810
        %v3812 = vextract.high.u32 %v3810
        %v3813 = vmul.u32 %v3806, %v3797
        %v3814 = vadd.s32 %v3809, %v3811
        %vm3815 = vc.u32 %v3809, %v3811
        %v3816 = vadd.s32 %v3812, 1
        %v3817 = vsel %vm3815, %v3816, %v3812
        %v3818 = vadd.s32 %v3813, %v3817
        %v3819 = vadd.s32 %v3818, 536870912
        %v3820 = vshrl.u32 %v3819, 30
        %v3821 = vshll.u32 %v3820, 30
        %v3822 = vsub.s32 %v3818, %v3821
        %vm3823 = vcmp.lt.s32.totalorder %v3822, 0
        %v3824 = vsub.s32 0, %v3822
        %v3825 = vsel %vm3823, %v3824, %v3822
        %v3826 = vclz %v3825
        %v3827 = vsub.s32 %v3826, 2
        %vm3828 = vcmp.gt.s32.totalorder 0, %v3827
        %v3829 = vsel %vm3828, 0, %v3827
        %v3830 = vsub.s32 32, %v3829
        %v3831 = vshll.u32 %v3822, %v3829
        %v3832 = vshrl.u32 %v3814, %v3830
        %v3833 = vor.u32 %v3831, %v3832
        %v3834 = vsub.s32 4294967266, %v3829
        %v3835 = vadd.s32 %v3834, 127
        %v3836 = vshll.u32 %v3835, 23
        %v3837 = vor.u32 4788187, %v3836
        %v3838 = vand.u32 2147483647, %v3837
        %v3840 = vcvt.s32.f32 %v3833
        %v3841 = vmul.f32 %v3840, %v3838
        %v3842 = vxor.u32 %v3841, 2147483648
        %v3843 = vsel %vm3760, %v3842, %v3841
        %v3844 = vsub.s32 4, %v3820
        %v3845 = vsel %vm3760, %v3844, %v3820
        %v3846 = vsel %vm3759, %v3694, %v3843
        %v3847 = vsel %vm3759, 0, %v3845
        %v3848 = vcosq.f32.pop %v3846
        %v3849 = vsinq.f32.pop %v3846
        %vm3850 = vweird.f32 %v3694
        %v3851 = vadd.s32 %v3847, 3
        %v3852 = vand.u32 %v3851, 3
        %vm3853 = vcmp.lt.s32.totalorder %v3852, 2
        %vm3854 = vcmp.eq.s32.totalorder %v3852, 0
        %v3855 = vxor.u32 %v3849, 2147483648
        %v3856 = vsel %vm3854, %v3848, %v3855
        %vm3857 = vcmp.eq.s32.totalorder %v3852, 2
        %v3858 = vxor.u32 %v3848, 2147483648
        %v3859 = vsel %vm3857, %v3858, %v3849
        %v3860 = vsel %vm3853, %v3856, %v3859
        %v3861 = vsel %vm3850, nan, %v3860
        %v3862 = vand.u32 2147483647, %v3695
        %vm3863 = vcmp.le.f32.partialorder %v3862, 0.7853982
        %vm3864 = vcmp.lt.s32.totalorder %v3695, 0
        %v3865 = vand.u32 %v3695, 2139095040
        %v3866 = vshrl.u32 %v3865, 23
        %v3867 = vsub.s32 %v3866, 127
        %v3868 = vand.u32 2147483647, %v3695
        %v3869 = vand.u32 %v3868, 8388607
        %v3870 = vor.u32 %v3869, 8388608
        %v3871 = vsub.s32 0, %v3870
        %v3872 = vadd.s32 %v3867, 1
        %vm3873 = vcmp.gt.s32.totalorder %v3872, 0
        %v3874 = vsel %vm3873, %v3872, 0
        %v3875 = vshrl.u32 %v3874, 5
        %v3876 = vand.u32 %v3874, 31
        %v3877 = vsub.s32 32, %v3876
        %v3878 = vshrl.u32 683565275, %v3877
        %v3879 = vshll.u32 683565275, %v3876
        %v3880 = vshrl.u32 2475754826, %v3877
        %v3881 = vor.u32 %v3879, %v3880
        %v3882 = vshll.u32 2475754826, %v3876
        %v3883 = vshrl.u32 2131351028, %v3877
        %v3884 = vor.u32 %v3882, %v3883
        %v3885 = vshll.u32 2131351028, %v3876
        %v3886 = vshrl.u32 2102212464, %v3877
        %v3887 = vor.u32 %v3885, %v3886
        %v3888 = vshll.u32 2102212464, %v3876
        %v3889 = vshrl.u32 920167782, %v3877
        %v3890 = vor.u32 %v3888, %v3889
        %v3891 = vshll.u32 920167782, %v3876
        %v3892 = vshrl.u32 1326507024, %v3877
        %v3893 = vor.u32 %v3891, %v3892
        %vm3894 = vcmp.lt.s32.totalorder %v3875, 1
        %vm3895 = vcmp.lt.s32.totalorder %v3875, 2
        %vm3896 = vcmp.lt.s32.totalorder %v3875, 3
        %vm3897 = vcmp.lt.s32.totalorder %v3875, 4
        %v3898 = vsel %vm3894, %v3878, %v3881
        %v3899 = vsel %vm3897, %v3887, 2102212464
        %v3900 = vsel %vm3896, %v3884, %v3899
        %v3901 = vsel %vm3895, %v3898, %v3900
        %v3902 = vsel %vm3894, %v3881, %v3884
        %v3903 = vsel %vm3897, %v3890, 920167782
        %v3904 = vsel %vm3896, %v3887, %v3903
        %v3905 = vsel %vm3895, %v3902, %v3904
        %v3906 = vsel %vm3894, %v3884, %v3887
        %v3907 = vsel %vm3897, %v3893, 1326507024
        %v3908 = vsel %vm3896, %v3890, %v3907
        %v3909 = vsel %vm3895, %v3906, %v3908
        %v3910 = vshll.u32 %v3870, 8
        %v3911 = vmul.u32.u64.compose %v3910, %v3909
        %v3912 = vextract.low.u32 %v3911
        %v3913 = vextract.high.u32 %v3911
        %v3914 = vmul.u32.u64.compose %v3910, %v3905
        %v3915 = vextract.low.u32 %v3914
        %v3916 = vextract.high.u32 %v3914
        %v3917 = vmul.u32 %v3910, %v3901
        %v3918 = vadd.s32 %v3913, %v3915
        %vm3919 = vc.u32 %v3913, %v3915
        %v3920 = vadd.s32 %v3916, 1
        %v3921 = vsel %vm3919, %v3920, %v3916
        %v3922 = vadd.s32 %v3917, %v3921
        %v3923 = vadd.s32 %v3922, 536870912
        %v3924 = vshrl.u32 %v3923, 30
        %v3925 = vshll.u32 %v3924, 30
        %v3926 = vsub.s32 %v3922, %v3925
        %vm3927 = vcmp.lt.s32.totalorder %v3926, 0
        %v3928 = vsub.s32 0, %v3926
        %v3929 = vsel %vm3927, %v3928, %v3926
        %v3930 = vclz %v3929
        %v3931 = vsub.s32 %v3930, 2
        %vm3932 = vcmp.gt.s32.totalorder 0, %v3931
        %v3933 = vsel %vm3932, 0, %v3931
        %v3934 = vsub.s32 32, %v3933
        %v3935 = vshll.u32 %v3926, %v3933
        %v3936 = vshrl.u32 %v3918, %v3934
        %v3937 = vor.u32 %v3935, %v3936
        %v3938 = vsub.s32 4294967266, %v3933
        %v3939 = vadd.s32 %v3938, 127
        %v3940 = vshll.u32 %v3939, 23
        %v3941 = vor.u32 4788187, %v3940
        %v3942 = vand.u32 2147483647, %v3941
        %v3944 = vcvt.s32.f32 %v3937
        %v3945 = vmul.f32 %v3944, %v3942
        %v3946 = vxor.u32 %v3945, 2147483648
        %v3947 = vsel %vm3864, %v3946, %v3945
        %v3948 = vsub.s32 4, %v3924
        %v3949 = vsel %vm3864, %v3948, %v3924
        %v3950 = vsel %vm3863, %v3695, %v3947
        %v3951 = vsel %vm3863, 0, %v3949
        %v3952 = vcosq.f32.pop %v3950
        %v3953 = vsinq.f32.pop %v3950
        %vm3954 = vweird.f32 %v3695
        %v3955 = vadd.s32 %v3951, 3
        %v3956 = vand.u32 %v3955, 3
        %vm3957 = vcmp.lt.s32.totalorder %v3956, 2
        %vm3958 = vcmp.eq.s32.totalorder %v3956, 0
        %v3959 = vxor.u32 %v3953, 2147483648
        %v3960 = vsel %vm3958, %v3952, %v3959
        %vm3961 = vcmp.eq.s32.totalorder %v3956, 2
        %v3962 = vxor.u32 %v3952, 2147483648
        %v3963 = vsel %vm3961, %v3962, %v3953
        %v3964 = vsel %vm3957, %v3960, %v3963
        %v3965 = vsel %vm3954, nan, %v3964
        %v3966 = vand.u32 2147483647, %v3696
        %vm3967 = vcmp.le.f32.partialorder %v3966, 0.7853982
        %vm3968 = vcmp.lt.s32.totalorder %v3696, 0
        %v3969 = vand.u32 %v3696, 2139095040
        %v3970 = vshrl.u32 %v3969, 23
        %v3971 = vsub.s32 %v3970, 127
        %v3972 = vand.u32 2147483647, %v3696
        %v3973 = vand.u32 %v3972, 8388607
        %v3974 = vor.u32 %v3973, 8388608
        %v3975 = vsub.s32 0, %v3974
        %v3976 = vadd.s32 %v3971, 1
        %vm3977 = vcmp.gt.s32.totalorder %v3976, 0
        %v3978 = vsel %vm3977, %v3976, 0
        %v3979 = vshrl.u32 %v3978, 5
        %v3980 = vand.u32 %v3978, 31
        %v3981 = vsub.s32 32, %v3980
        %v3982 = vshrl.u32 683565275, %v3981
        %v3983 = vshll.u32 683565275, %v3980
        %v3984 = vshrl.u32 2475754826, %v3981
        %v3985 = vor.u32 %v3983, %v3984
        %v3986 = vshll.u32 2475754826, %v3980
        %v3987 = vshrl.u32 2131351028, %v3981
        %v3988 = vor.u32 %v3986, %v3987
        %v3989 = vshll.u32 2131351028, %v3980
        %v3990 = vshrl.u32 2102212464, %v3981
        %v3991 = vor.u32 %v3989, %v3990
        %v3992 = vshll.u32 2102212464, %v3980
        %v3993 = vshrl.u32 920167782, %v3981
        %v3994 = vor.u32 %v3992, %v3993
        %v3995 = vshll.u32 920167782, %v3980
        %v3996 = vshrl.u32 1326507024, %v3981
        %v3997 = vor.u32 %v3995, %v3996
        %vm3998 = vcmp.lt.s32.totalorder %v3979, 1
        %vm3999 = vcmp.lt.s32.totalorder %v3979, 2
        %vm4000 = vcmp.lt.s32.totalorder %v3979, 3
        %vm4001 = vcmp.lt.s32.totalorder %v3979, 4
        %v4002 = vsel %vm3998, %v3982, %v3985
        %v4003 = vsel %vm4001, %v3991, 2102212464
        %v4004 = vsel %vm4000, %v3988, %v4003
        %v4005 = vsel %vm3999, %v4002, %v4004
        %v4006 = vsel %vm3998, %v3985, %v3988
        %v4007 = vsel %vm4001, %v3994, 920167782
        %v4008 = vsel %vm4000, %v3991, %v4007
        %v4009 = vsel %vm3999, %v4006, %v4008
        %v4010 = vsel %vm3998, %v3988, %v3991
        %v4011 = vsel %vm4001, %v3997, 1326507024
        %v4012 = vsel %vm4000, %v3994, %v4011
        %v4013 = vsel %vm3999, %v4010, %v4012
        %v4014 = vshll.u32 %v3974, 8
        %v4015 = vmul.u32.u64.compose %v4014, %v4013
        %v4016 = vextract.low.u32 %v4015
        %v4017 = vextract.high.u32 %v4015
        %v4018 = vmul.u32.u64.compose %v4014, %v4009
        %v4019 = vextract.low.u32 %v4018
        %v4020 = vextract.high.u32 %v4018
        %v4021 = vmul.u32 %v4014, %v4005
        %v4022 = vadd.s32 %v4017, %v4019
        %vm4023 = vc.u32 %v4017, %v4019
        %v4024 = vadd.s32 %v4020, 1
        %v4025 = vsel %vm4023, %v4024, %v4020
        %v4026 = vadd.s32 %v4021, %v4025
        %v4027 = vadd.s32 %v4026, 536870912
        %v4028 = vshrl.u32 %v4027, 30
        %v4029 = vshll.u32 %v4028, 30
        %v4030 = vsub.s32 %v4026, %v4029
        %vm4031 = vcmp.lt.s32.totalorder %v4030, 0
        %v4032 = vsub.s32 0, %v4030
        %v4033 = vsel %vm4031, %v4032, %v4030
        %v4034 = vclz %v4033
        %v4035 = vsub.s32 %v4034, 2
        %vm4036 = vcmp.gt.s32.totalorder 0, %v4035
        %v4037 = vsel %vm4036, 0, %v4035
        %v4038 = vsub.s32 32, %v4037
        %v4039 = vshll.u32 %v4030, %v4037
        %v4040 = vshrl.u32 %v4022, %v4038
        %v4041 = vor.u32 %v4039, %v4040
        %v4042 = vsub.s32 4294967266, %v4037
        %v4043 = vadd.s32 %v4042, 127
        %v4044 = vshll.u32 %v4043, 23
        %v4045 = vor.u32 4788187, %v4044
        %v4046 = vand.u32 2147483647, %v4045
        %v4048 = vcvt.s32.f32 %v4041
        %v4049 = vmul.f32 %v4048, %v4046
        %v4050 = vxor.u32 %v4049, 2147483648
        %v4051 = vsel %vm3968, %v4050, %v4049
        %v4052 = vsub.s32 4, %v4028
        %v4053 = vsel %vm3968, %v4052, %v4028
        %v4054 = vsel %vm3967, %v3696, %v4051
        %v4055 = vsel %vm3967, 0, %v4053
        %v4056 = vcosq.f32.pop %v4054
        %v4057 = vsinq.f32.pop %v4054
        %vm4058 = vweird.f32 %v3696
        %v4059 = vadd.s32 %v4055, 3
        %v4060 = vand.u32 %v4059, 3
        %vm4061 = vcmp.lt.s32.totalorder %v4060, 2
        %vm4062 = vcmp.eq.s32.totalorder %v4060, 0
        %v4063 = vxor.u32 %v4057, 2147483648
        %v4064 = vsel %vm4062, %v4056, %v4063
        %vm4065 = vcmp.eq.s32.totalorder %v4060, 2
        %v4066 = vxor.u32 %v4056, 2147483648
        %v4067 = vsel %vm4065, %v4066, %v4057
        %v4068 = vsel %vm4061, %v4064, %v4067
        %v4069 = vsel %vm4058, nan, %v4068
        %v4070 = vand.u32 2147483647, %v3697
        %vm4071 = vcmp.le.f32.partialorder %v4070, 0.7853982
        %vm4072 = vcmp.lt.s32.totalorder %v3697, 0
        %v4073 = vand.u32 %v3697, 2139095040
        %v4074 = vshrl.u32 %v4073, 23
        %v4075 = vsub.s32 %v4074, 127
        %v4076 = vand.u32 2147483647, %v3697
        %v4077 = vand.u32 %v4076, 8388607
        %v4078 = vor.u32 %v4077, 8388608
        %v4079 = vsub.s32 0, %v4078
        %v4080 = vadd.s32 %v4075, 1
        %vm4081 = vcmp.gt.s32.totalorder %v4080, 0
        %v4082 = vsel %vm4081, %v4080, 0
        %v4083 = vshrl.u32 %v4082, 5
        %v4084 = vand.u32 %v4082, 31
        %v4085 = vsub.s32 32, %v4084
        %v4086 = vshrl.u32 683565275, %v4085
        %v4087 = vshll.u32 683565275, %v4084
        %v4088 = vshrl.u32 2475754826, %v4085
        %v4089 = vor.u32 %v4087, %v4088
        %v4090 = vshll.u32 2475754826, %v4084
        %v4091 = vshrl.u32 2131351028, %v4085
        %v4092 = vor.u32 %v4090, %v4091
        %v4093 = vshll.u32 2131351028, %v4084
        %v4094 = vshrl.u32 2102212464, %v4085
        %v4095 = vor.u32 %v4093, %v4094
        %v4096 = vshll.u32 2102212464, %v4084
        %v4097 = vshrl.u32 920167782, %v4085
        %v4098 = vor.u32 %v4096, %v4097
        %v4099 = vshll.u32 920167782, %v4084
        %v4100 = vshrl.u32 1326507024, %v4085
        %v4101 = vor.u32 %v4099, %v4100
        %vm4102 = vcmp.lt.s32.totalorder %v4083, 1
        %vm4103 = vcmp.lt.s32.totalorder %v4083, 2
        %vm4104 = vcmp.lt.s32.totalorder %v4083, 3
        %vm4105 = vcmp.lt.s32.totalorder %v4083, 4
        %v4106 = vsel %vm4102, %v4086, %v4089
        %v4107 = vsel %vm4105, %v4095, 2102212464
        %v4108 = vsel %vm4104, %v4092, %v4107
        %v4109 = vsel %vm4103, %v4106, %v4108
        %v4110 = vsel %vm4102, %v4089, %v4092
        %v4111 = vsel %vm4105, %v4098, 920167782
        %v4112 = vsel %vm4104, %v4095, %v4111
        %v4113 = vsel %vm4103, %v4110, %v4112
        %v4114 = vsel %vm4102, %v4092, %v4095
        %v4115 = vsel %vm4105, %v4101, 1326507024
        %v4116 = vsel %vm4104, %v4098, %v4115
        %v4117 = vsel %vm4103, %v4114, %v4116
        %v4118 = vshll.u32 %v4078, 8
        %v4119 = vmul.u32.u64.compose %v4118, %v4117
        %v4120 = vextract.low.u32 %v4119
        %v4121 = vextract.high.u32 %v4119
        %v4122 = vmul.u32.u64.compose %v4118, %v4113
        %v4123 = vextract.low.u32 %v4122
        %v4124 = vextract.high.u32 %v4122
        %v4125 = vmul.u32 %v4118, %v4109
        %v4126 = vadd.s32 %v4121, %v4123
        %vm4127 = vc.u32 %v4121, %v4123
        %v4128 = vadd.s32 %v4124, 1
        %v4129 = vsel %vm4127, %v4128, %v4124
        %v4130 = vadd.s32 %v4125, %v4129
        %v4131 = vadd.s32 %v4130, 536870912
        %v4132 = vshrl.u32 %v4131, 30
        %v4133 = vshll.u32 %v4132, 30
        %v4134 = vsub.s32 %v4130, %v4133
        %vm4135 = vcmp.lt.s32.totalorder %v4134, 0
        %v4136 = vsub.s32 0, %v4134
        %v4137 = vsel %vm4135, %v4136, %v4134
        %v4138 = vclz %v4137
        %v4139 = vsub.s32 %v4138, 2
        %vm4140 = vcmp.gt.s32.totalorder 0, %v4139
        %v4141 = vsel %vm4140, 0, %v4139
        %v4142 = vsub.s32 32, %v4141
        %v4143 = vshll.u32 %v4134, %v4141
        %v4144 = vshrl.u32 %v4126, %v4142
        %v4145 = vor.u32 %v4143, %v4144
        %v4146 = vsub.s32 4294967266, %v4141
        %v4147 = vadd.s32 %v4146, 127
        %v4148 = vshll.u32 %v4147, 23
        %v4149 = vor.u32 4788187, %v4148
        %v4150 = vand.u32 2147483647, %v4149
        %v4152 = vcvt.s32.f32 %v4145
        %v4153 = vmul.f32 %v4152, %v4150
        %v4154 = vxor.u32 %v4153, 2147483648
        %v4155 = vsel %vm4072, %v4154, %v4153
        %v4156 = vsub.s32 4, %v4132
        %v4157 = vsel %vm4072, %v4156, %v4132
        %v4158 = vsel %vm4071, %v3697, %v4155
        %v4159 = vsel %vm4071, 0, %v4157
        %v4160 = vcosq.f32.pop %v4158
        %v4161 = vsinq.f32.pop %v4158
        %vm4162 = vweird.f32 %v3697
        %v4163 = vadd.s32 %v4159, 3
        %v4164 = vand.u32 %v4163, 3
        %vm4165 = vcmp.lt.s32.totalorder %v4164, 2
        %vm4166 = vcmp.eq.s32.totalorder %v4164, 0
        %v4167 = vxor.u32 %v4161, 2147483648
        %v4168 = vsel %vm4166, %v4160, %v4167
        %vm4169 = vcmp.eq.s32.totalorder %v4164, 2
        %v4170 = vxor.u32 %v4160, 2147483648
        %v4171 = vsel %vm4169, %v4170, %v4161
        %v4172 = vsel %vm4165, %v4168, %v4171
        %v4173 = vsel %vm4162, nan, %v4172
        %v4174 = vand.u32 2147483647, %v3698
        %vm4175 = vcmp.le.f32.partialorder %v4174, 0.7853982
        %vm4176 = vcmp.lt.s32.totalorder %v3698, 0
        %v4177 = vand.u32 %v3698, 2139095040
        %v4178 = vshrl.u32 %v4177, 23
        %v4179 = vsub.s32 %v4178, 127
        %v4180 = vand.u32 2147483647, %v3698
        %v4181 = vand.u32 %v4180, 8388607
        %v4182 = vor.u32 %v4181, 8388608
        %v4183 = vsub.s32 0, %v4182
        %v4184 = vadd.s32 %v4179, 1
        %vm4185 = vcmp.gt.s32.totalorder %v4184, 0
        %v4186 = vsel %vm4185, %v4184, 0
        %v4187 = vshrl.u32 %v4186, 5
        %v4188 = vand.u32 %v4186, 31
        %v4189 = vsub.s32 32, %v4188
        %v4190 = vshrl.u32 683565275, %v4189
        %v4191 = vshll.u32 683565275, %v4188
        %v4192 = vshrl.u32 2475754826, %v4189
        %v4193 = vor.u32 %v4191, %v4192
        %v4194 = vshll.u32 2475754826, %v4188
        %v4195 = vshrl.u32 2131351028, %v4189
        %v4196 = vor.u32 %v4194, %v4195
        %v4197 = vshll.u32 2131351028, %v4188
        %v4198 = vshrl.u32 2102212464, %v4189
        %v4199 = vor.u32 %v4197, %v4198
        %v4200 = vshll.u32 2102212464, %v4188
        %v4201 = vshrl.u32 920167782, %v4189
        %v4202 = vor.u32 %v4200, %v4201
        %v4203 = vshll.u32 920167782, %v4188
        %v4204 = vshrl.u32 1326507024, %v4189
        %v4205 = vor.u32 %v4203, %v4204
        %vm4206 = vcmp.lt.s32.totalorder %v4187, 1
        %vm4207 = vcmp.lt.s32.totalorder %v4187, 2
        %vm4208 = vcmp.lt.s32.totalorder %v4187, 3
        %vm4209 = vcmp.lt.s32.totalorder %v4187, 4
        %v4210 = vsel %vm4206, %v4190, %v4193
        %v4211 = vsel %vm4209, %v4199, 2102212464
        %v4212 = vsel %vm4208, %v4196, %v4211
        %v4213 = vsel %vm4207, %v4210, %v4212
        %v4214 = vsel %vm4206, %v4193, %v4196
        %v4215 = vsel %vm4209, %v4202, 920167782
        %v4216 = vsel %vm4208, %v4199, %v4215
        %v4217 = vsel %vm4207, %v4214, %v4216
        %v4218 = vsel %vm4206, %v4196, %v4199
        %v4219 = vsel %vm4209, %v4205, 1326507024
        %v4220 = vsel %vm4208, %v4202, %v4219
        %v4221 = vsel %vm4207, %v4218, %v4220
        %v4222 = vshll.u32 %v4182, 8
        %v4223 = vmul.u32.u64.compose %v4222, %v4221
        %v4224 = vextract.low.u32 %v4223
        %v4225 = vextract.high.u32 %v4223
        %v4226 = vmul.u32.u64.compose %v4222, %v4217
        %v4227 = vextract.low.u32 %v4226
        %v4228 = vextract.high.u32 %v4226
        %v4229 = vmul.u32 %v4222, %v4213
        %v4230 = vadd.s32 %v4225, %v4227
        %vm4231 = vc.u32 %v4225, %v4227
        %v4232 = vadd.s32 %v4228, 1
        %v4233 = vsel %vm4231, %v4232, %v4228
        %v4234 = vadd.s32 %v4229, %v4233
        %v4235 = vadd.s32 %v4234, 536870912
        %v4236 = vshrl.u32 %v4235, 30
        %v4237 = vshll.u32 %v4236, 30
        %v4238 = vsub.s32 %v4234, %v4237
        %vm4239 = vcmp.lt.s32.totalorder %v4238, 0
        %v4240 = vsub.s32 0, %v4238
        %v4241 = vsel %vm4239, %v4240, %v4238
        %v4242 = vclz %v4241
        %v4243 = vsub.s32 %v4242, 2
        %vm4244 = vcmp.gt.s32.totalorder 0, %v4243
        %v4245 = vsel %vm4244, 0, %v4243
        %v4246 = vsub.s32 32, %v4245
        %v4247 = vshll.u32 %v4238, %v4245
        %v4248 = vshrl.u32 %v4230, %v4246
        %v4249 = vor.u32 %v4247, %v4248
        %v4250 = vsub.s32 4294967266, %v4245
        %v4251 = vadd.s32 %v4250, 127
        %v4252 = vshll.u32 %v4251, 23
        %v4253 = vor.u32 4788187, %v4252
        %v4254 = vand.u32 2147483647, %v4253
        %v4256 = vcvt.s32.f32 %v4249
        %v4257 = vmul.f32 %v4256, %v4254
        %v4258 = vxor.u32 %v4257, 2147483648
        %v4259 = vsel %vm4176, %v4258, %v4257
        %v4260 = vsub.s32 4, %v4236
        %v4261 = vsel %vm4176, %v4260, %v4236
        %v4262 = vsel %vm4175, %v3698, %v4259
        %v4263 = vsel %vm4175, 0, %v4261
        %v4264 = vcosq.f32.pop %v4262
        %v4265 = vsinq.f32.pop %v4262
        %vm4266 = vweird.f32 %v3698
        %v4267 = vadd.s32 %v4263, 3
        %v4268 = vand.u32 %v4267, 3
        %vm4269 = vcmp.lt.s32.totalorder %v4268, 2
        %vm4270 = vcmp.eq.s32.totalorder %v4268, 0
        %v4271 = vxor.u32 %v4265, 2147483648
        %v4272 = vsel %vm4270, %v4264, %v4271
        %vm4273 = vcmp.eq.s32.totalorder %v4268, 2
        %v4274 = vxor.u32 %v4264, 2147483648
        %v4275 = vsel %vm4273, %v4274, %v4265
        %v4276 = vsel %vm4269, %v4272, %v4275
        %v4277 = vsel %vm4266, nan, %v4276
        %v4278 = vand.u32 2147483647, %v3699
        %vm4279 = vcmp.le.f32.partialorder %v4278, 0.7853982
        %vm4280 = vcmp.lt.s32.totalorder %v3699, 0
        %v4281 = vand.u32 %v3699, 2139095040
        %v4282 = vshrl.u32 %v4281, 23
        %v4283 = vsub.s32 %v4282, 127
        %v4284 = vand.u32 2147483647, %v3699
        %v4285 = vand.u32 %v4284, 8388607
        %v4286 = vor.u32 %v4285, 8388608
        %v4287 = vsub.s32 0, %v4286
        %v4288 = vadd.s32 %v4283, 1
        %vm4289 = vcmp.gt.s32.totalorder %v4288, 0
        %v4290 = vsel %vm4289, %v4288, 0
        %v4291 = vshrl.u32 %v4290, 5
        %v4292 = vand.u32 %v4290, 31
        %v4293 = vsub.s32 32, %v4292
        %v4294 = vshrl.u32 683565275, %v4293
        %v4295 = vshll.u32 683565275, %v4292
        %v4296 = vshrl.u32 2475754826, %v4293
        %v4297 = vor.u32 %v4295, %v4296
        %v4298 = vshll.u32 2475754826, %v4292
        %v4299 = vshrl.u32 2131351028, %v4293
        %v4300 = vor.u32 %v4298, %v4299
        %v4301 = vshll.u32 2131351028, %v4292
        %v4302 = vshrl.u32 2102212464, %v4293
        %v4303 = vor.u32 %v4301, %v4302
        %v4304 = vshll.u32 2102212464, %v4292
        %v4305 = vshrl.u32 920167782, %v4293
        %v4306 = vor.u32 %v4304, %v4305
        %v4307 = vshll.u32 920167782, %v4292
        %v4308 = vshrl.u32 1326507024, %v4293
        %v4309 = vor.u32 %v4307, %v4308
        %vm4310 = vcmp.lt.s32.totalorder %v4291, 1
        %vm4311 = vcmp.lt.s32.totalorder %v4291, 2
        %vm4312 = vcmp.lt.s32.totalorder %v4291, 3
        %vm4313 = vcmp.lt.s32.totalorder %v4291, 4
        %v4314 = vsel %vm4310, %v4294, %v4297
        %v4315 = vsel %vm4313, %v4303, 2102212464
        %v4316 = vsel %vm4312, %v4300, %v4315
        %v4317 = vsel %vm4311, %v4314, %v4316
        %v4318 = vsel %vm4310, %v4297, %v4300
        %v4319 = vsel %vm4313, %v4306, 920167782
        %v4320 = vsel %vm4312, %v4303, %v4319
        %v4321 = vsel %vm4311, %v4318, %v4320
        %v4322 = vsel %vm4310, %v4300, %v4303
        %v4323 = vsel %vm4313, %v4309, 1326507024
        %v4324 = vsel %vm4312, %v4306, %v4323
        %v4325 = vsel %vm4311, %v4322, %v4324
        %v4326 = vshll.u32 %v4286, 8
        %v4327 = vmul.u32.u64.compose %v4326, %v4325
        %v4328 = vextract.low.u32 %v4327
        %v4329 = vextract.high.u32 %v4327
        %v4330 = vmul.u32.u64.compose %v4326, %v4321
        %v4331 = vextract.low.u32 %v4330
        %v4332 = vextract.high.u32 %v4330
        %v4333 = vmul.u32 %v4326, %v4317
        %v4334 = vadd.s32 %v4329, %v4331
        %vm4335 = vc.u32 %v4329, %v4331
        %v4336 = vadd.s32 %v4332, 1
        %v4337 = vsel %vm4335, %v4336, %v4332
        %v4338 = vadd.s32 %v4333, %v4337
        %v4339 = vadd.s32 %v4338, 536870912
        %v4340 = vshrl.u32 %v4339, 30
        %v4341 = vshll.u32 %v4340, 30
        %v4342 = vsub.s32 %v4338, %v4341
        %vm4343 = vcmp.lt.s32.totalorder %v4342, 0
        %v4344 = vsub.s32 0, %v4342
        %v4345 = vsel %vm4343, %v4344, %v4342
        %v4346 = vclz %v4345
        %v4347 = vsub.s32 %v4346, 2
        %vm4348 = vcmp.gt.s32.totalorder 0, %v4347
        %v4349 = vsel %vm4348, 0, %v4347
        %v4350 = vsub.s32 32, %v4349
        %v4351 = vshll.u32 %v4342, %v4349
        %v4352 = vshrl.u32 %v4334, %v4350
        %v4353 = vor.u32 %v4351, %v4352
        %v4354 = vsub.s32 4294967266, %v4349
        %v4355 = vadd.s32 %v4354, 127
        %v4356 = vshll.u32 %v4355, 23
        %v4357 = vor.u32 4788187, %v4356
        %v4358 = vand.u32 2147483647, %v4357
        %v4360 = vcvt.s32.f32 %v4353
        %v4361 = vmul.f32 %v4360, %v4358
        %v4362 = vxor.u32 %v4361, 2147483648
        %v4363 = vsel %vm4280, %v4362, %v4361
        %v4364 = vsub.s32 4, %v4340
        %v4365 = vsel %vm4280, %v4364, %v4340
        %v4366 = vsel %vm4279, %v3699, %v4363
        %v4367 = vsel %vm4279, 0, %v4365
        %v4368 = vcosq.f32.pop %v4366
        %v4369 = vsinq.f32.pop %v4366
        %vm4370 = vweird.f32 %v3699
        %v4371 = vadd.s32 %v4367, 3
        %v4372 = vand.u32 %v4371, 3
        %vm4373 = vcmp.lt.s32.totalorder %v4372, 2
        %vm4374 = vcmp.eq.s32.totalorder %v4372, 0
        %v4375 = vxor.u32 %v4369, 2147483648
        %v4376 = vsel %vm4374, %v4368, %v4375
        %vm4377 = vcmp.eq.s32.totalorder %v4372, 2
        %v4378 = vxor.u32 %v4368, 2147483648
        %v4379 = vsel %vm4377, %v4378, %v4369
        %v4380 = vsel %vm4373, %v4376, %v4379
        %v4381 = vsel %vm4370, nan, %v4380
        %v4382 = vand.u32 2147483647, %v3700
        %vm4383 = vcmp.le.f32.partialorder %v4382, 0.7853982
        %vm4384 = vcmp.lt.s32.totalorder %v3700, 0
        %v4385 = vand.u32 %v3700, 2139095040
        %v4386 = vshrl.u32 %v4385, 23
        %v4387 = vsub.s32 %v4386, 127
        %v4388 = vand.u32 2147483647, %v3700
        %v4389 = vand.u32 %v4388, 8388607
        %v4390 = vor.u32 %v4389, 8388608
        %v4391 = vsub.s32 0, %v4390
        %v4392 = vadd.s32 %v4387, 1
        %vm4393 = vcmp.gt.s32.totalorder %v4392, 0
        %v4394 = vsel %vm4393, %v4392, 0
        %v4395 = vshrl.u32 %v4394, 5
        %v4396 = vand.u32 %v4394, 31
        %v4397 = vsub.s32 32, %v4396
        %v4398 = vshrl.u32 683565275, %v4397
        %v4399 = vshll.u32 683565275, %v4396
        %v4400 = vshrl.u32 2475754826, %v4397
        %v4401 = vor.u32 %v4399, %v4400
        %v4402 = vshll.u32 2475754826, %v4396
        %v4403 = vshrl.u32 2131351028, %v4397
        %v4404 = vor.u32 %v4402, %v4403
        %v4405 = vshll.u32 2131351028, %v4396
        %v4406 = vshrl.u32 2102212464, %v4397
        %v4407 = vor.u32 %v4405, %v4406
        %v4408 = vshll.u32 2102212464, %v4396
        %v4409 = vshrl.u32 920167782, %v4397
        %v4410 = vor.u32 %v4408, %v4409
        %v4411 = vshll.u32 920167782, %v4396
        %v4412 = vshrl.u32 1326507024, %v4397
        %v4413 = vor.u32 %v4411, %v4412
        %vm4414 = vcmp.lt.s32.totalorder %v4395, 1
        %vm4415 = vcmp.lt.s32.totalorder %v4395, 2
        %vm4416 = vcmp.lt.s32.totalorder %v4395, 3
        %vm4417 = vcmp.lt.s32.totalorder %v4395, 4
        %v4418 = vsel %vm4414, %v4398, %v4401
        %v4419 = vsel %vm4417, %v4407, 2102212464
        %v4420 = vsel %vm4416, %v4404, %v4419
        %v4421 = vsel %vm4415, %v4418, %v4420
        %v4422 = vsel %vm4414, %v4401, %v4404
        %v4423 = vsel %vm4417, %v4410, 920167782
        %v4424 = vsel %vm4416, %v4407, %v4423
        %v4425 = vsel %vm4415, %v4422, %v4424
        %v4426 = vsel %vm4414, %v4404, %v4407
        %v4427 = vsel %vm4417, %v4413, 1326507024
        %v4428 = vsel %vm4416, %v4410, %v4427
        %v4429 = vsel %vm4415, %v4426, %v4428
        %v4430 = vshll.u32 %v4390, 8
        %v4431 = vmul.u32.u64.compose %v4430, %v4429
        %v4432 = vextract.low.u32 %v4431
        %v4433 = vextract.high.u32 %v4431
        %v4434 = vmul.u32.u64.compose %v4430, %v4425
        %v4435 = vextract.low.u32 %v4434
        %v4436 = vextract.high.u32 %v4434
        %v4437 = vmul.u32 %v4430, %v4421
        %v4438 = vadd.s32 %v4433, %v4435
        %vm4439 = vc.u32 %v4433, %v4435
        %v4440 = vadd.s32 %v4436, 1
        %v4441 = vsel %vm4439, %v4440, %v4436
        %v4442 = vadd.s32 %v4437, %v4441
        %v4443 = vadd.s32 %v4442, 536870912
        %v4444 = vshrl.u32 %v4443, 30
        %v4445 = vshll.u32 %v4444, 30
        %v4446 = vsub.s32 %v4442, %v4445
        %vm4447 = vcmp.lt.s32.totalorder %v4446, 0
        %v4448 = vsub.s32 0, %v4446
        %v4449 = vsel %vm4447, %v4448, %v4446
        %v4450 = vclz %v4449
        %v4451 = vsub.s32 %v4450, 2
        %vm4452 = vcmp.gt.s32.totalorder 0, %v4451
        %v4453 = vsel %vm4452, 0, %v4451
        %v4454 = vsub.s32 32, %v4453
        %v4455 = vshll.u32 %v4446, %v4453
        %v4456 = vshrl.u32 %v4438, %v4454
        %v4457 = vor.u32 %v4455, %v4456
        %v4458 = vsub.s32 4294967266, %v4453
        %v4459 = vadd.s32 %v4458, 127
        %v4460 = vshll.u32 %v4459, 23
        %v4461 = vor.u32 4788187, %v4460
        %v4462 = vand.u32 2147483647, %v4461
        %v4464 = vcvt.s32.f32 %v4457
        %v4465 = vmul.f32 %v4464, %v4462
        %v4466 = vxor.u32 %v4465, 2147483648
        %v4467 = vsel %vm4384, %v4466, %v4465
        %v4468 = vsub.s32 4, %v4444
        %v4469 = vsel %vm4384, %v4468, %v4444
        %v4470 = vsel %vm4383, %v3700, %v4467
        %v4471 = vsel %vm4383, 0, %v4469
        %v4472 = vcosq.f32.pop %v4470
        %v4473 = vsinq.f32.pop %v4470
        %vm4474 = vweird.f32 %v3700
        %v4475 = vadd.s32 %v4471, 3
        %v4476 = vand.u32 %v4475, 3
        %vm4477 = vcmp.lt.s32.totalorder %v4476, 2
        %vm4478 = vcmp.eq.s32.totalorder %v4476, 0
        %v4479 = vxor.u32 %v4473, 2147483648
        %v4480 = vsel %vm4478, %v4472, %v4479
        %vm4481 = vcmp.eq.s32.totalorder %v4476, 2
        %v4482 = vxor.u32 %v4472, 2147483648
        %v4483 = vsel %vm4481, %v4482, %v4473
        %v4484 = vsel %vm4477, %v4480, %v4483
        %v4485 = vsel %vm4474, nan, %v4484
        %v4486 = vand.u32 2147483647, %v3701
        %vm4487 = vcmp.le.f32.partialorder %v4486, 0.7853982
        %vm4488 = vcmp.lt.s32.totalorder %v3701, 0
        %v4489 = vand.u32 %v3701, 2139095040
        %v4490 = vshrl.u32 %v4489, 23
        %v4491 = vsub.s32 %v4490, 127
        %v4492 = vand.u32 2147483647, %v3701
        %v4493 = vand.u32 %v4492, 8388607
        %v4494 = vor.u32 %v4493, 8388608
        %v4495 = vsub.s32 0, %v4494
        %v4496 = vadd.s32 %v4491, 1
        %vm4497 = vcmp.gt.s32.totalorder %v4496, 0
        %v4498 = vsel %vm4497, %v4496, 0
        %v4499 = vshrl.u32 %v4498, 5
        %v4500 = vand.u32 %v4498, 31
        %v4501 = vsub.s32 32, %v4500
        %v4502 = vshrl.u32 683565275, %v4501
        %v4503 = vshll.u32 683565275, %v4500
        %v4504 = vshrl.u32 2475754826, %v4501
        %v4505 = vor.u32 %v4503, %v4504
        %v4506 = vshll.u32 2475754826, %v4500
        %v4507 = vshrl.u32 2131351028, %v4501
        %v4508 = vor.u32 %v4506, %v4507
        %v4509 = vshll.u32 2131351028, %v4500
        %v4510 = vshrl.u32 2102212464, %v4501
        %v4511 = vor.u32 %v4509, %v4510
        %v4512 = vshll.u32 2102212464, %v4500
        %v4513 = vshrl.u32 920167782, %v4501
        %v4514 = vor.u32 %v4512, %v4513
        %v4515 = vshll.u32 920167782, %v4500
        %v4516 = vshrl.u32 1326507024, %v4501
        %v4517 = vor.u32 %v4515, %v4516
        %vm4518 = vcmp.lt.s32.totalorder %v4499, 1
        %vm4519 = vcmp.lt.s32.totalorder %v4499, 2
        %vm4520 = vcmp.lt.s32.totalorder %v4499, 3
        %vm4521 = vcmp.lt.s32.totalorder %v4499, 4
        %v4522 = vsel %vm4518, %v4502, %v4505
        %v4523 = vsel %vm4521, %v4511, 2102212464
        %v4524 = vsel %vm4520, %v4508, %v4523
        %v4525 = vsel %vm4519, %v4522, %v4524
        %v4526 = vsel %vm4518, %v4505, %v4508
        %v4527 = vsel %vm4521, %v4514, 920167782
        %v4528 = vsel %vm4520, %v4511, %v4527
        %v4529 = vsel %vm4519, %v4526, %v4528
        %v4530 = vsel %vm4518, %v4508, %v4511
        %v4531 = vsel %vm4521, %v4517, 1326507024
        %v4532 = vsel %vm4520, %v4514, %v4531
        %v4533 = vsel %vm4519, %v4530, %v4532
        %v4534 = vshll.u32 %v4494, 8
        %v4535 = vmul.u32.u64.compose %v4534, %v4533
        %v4536 = vextract.low.u32 %v4535
        %v4537 = vextract.high.u32 %v4535
        %v4538 = vmul.u32.u64.compose %v4534, %v4529
        %v4539 = vextract.low.u32 %v4538
        %v4540 = vextract.high.u32 %v4538
        %v4541 = vmul.u32 %v4534, %v4525
        %v4542 = vadd.s32 %v4537, %v4539
        %vm4543 = vc.u32 %v4537, %v4539
        %v4544 = vadd.s32 %v4540, 1
        %v4545 = vsel %vm4543, %v4544, %v4540
        %v4546 = vadd.s32 %v4541, %v4545
        %v4547 = vadd.s32 %v4546, 536870912
        %v4548 = vshrl.u32 %v4547, 30
        %v4549 = vshll.u32 %v4548, 30
        %v4550 = vsub.s32 %v4546, %v4549
        %vm4551 = vcmp.lt.s32.totalorder %v4550, 0
        %v4552 = vsub.s32 0, %v4550
        %v4553 = vsel %vm4551, %v4552, %v4550
        %v4554 = vclz %v4553
        %v4555 = vsub.s32 %v4554, 2
        %vm4556 = vcmp.gt.s32.totalorder 0, %v4555
        %v4557 = vsel %vm4556, 0, %v4555
        %v4558 = vsub.s32 32, %v4557
        %v4559 = vshll.u32 %v4550, %v4557
        %v4560 = vshrl.u32 %v4542, %v4558
        %v4561 = vor.u32 %v4559, %v4560
        %v4562 = vsub.s32 4294967266, %v4557
        %v4563 = vadd.s32 %v4562, 127
        %v4564 = vshll.u32 %v4563, 23
        %v4565 = vor.u32 4788187, %v4564
        %v4566 = vand.u32 2147483647, %v4565
        %v4568 = vcvt.s32.f32 %v4561
        %v4569 = vmul.f32 %v4568, %v4566
        %v4570 = vxor.u32 %v4569, 2147483648
        %v4571 = vsel %vm4488, %v4570, %v4569
        %v4572 = vsub.s32 4, %v4548
        %v4573 = vsel %vm4488, %v4572, %v4548
        %v4574 = vsel %vm4487, %v3701, %v4571
        %v4575 = vsel %vm4487, 0, %v4573
        %v4576 = vcosq.f32.pop %v4574
        %v4577 = vsinq.f32.pop %v4574
        %vm4578 = vweird.f32 %v3701
        %v4579 = vadd.s32 %v4575, 3
        %v4580 = vand.u32 %v4579, 3
        %vm4581 = vcmp.lt.s32.totalorder %v4580, 2
        %vm4582 = vcmp.eq.s32.totalorder %v4580, 0
        %v4583 = vxor.u32 %v4577, 2147483648
        %v4584 = vsel %vm4582, %v4576, %v4583
        %vm4585 = vcmp.eq.s32.totalorder %v4580, 2
        %v4586 = vxor.u32 %v4576, 2147483648
        %v4587 = vsel %vm4585, %v4586, %v4577
        %v4588 = vsel %vm4581, %v4584, %v4587
        %v4589 = vsel %vm4578, nan, %v4588
        %v4590 = vand.u32 2147483647, %v3702
        %vm4591 = vcmp.le.f32.partialorder %v4590, 0.7853982
        %vm4592 = vcmp.lt.s32.totalorder %v3702, 0
        %v4593 = vand.u32 %v3702, 2139095040
        %v4594 = vshrl.u32 %v4593, 23
        %v4595 = vsub.s32 %v4594, 127
        %v4596 = vand.u32 2147483647, %v3702
        %v4597 = vand.u32 %v4596, 8388607
        %v4598 = vor.u32 %v4597, 8388608
        %v4599 = vsub.s32 0, %v4598
        %v4600 = vadd.s32 %v4595, 1
        %vm4601 = vcmp.gt.s32.totalorder %v4600, 0
        %v4602 = vsel %vm4601, %v4600, 0
        %v4603 = vshrl.u32 %v4602, 5
        %v4604 = vand.u32 %v4602, 31
        %v4605 = vsub.s32 32, %v4604
        %v4606 = vshrl.u32 683565275, %v4605
        %v4607 = vshll.u32 683565275, %v4604
        %v4608 = vshrl.u32 2475754826, %v4605
        %v4609 = vor.u32 %v4607, %v4608
        %v4610 = vshll.u32 2475754826, %v4604
        %v4611 = vshrl.u32 2131351028, %v4605
        %v4612 = vor.u32 %v4610, %v4611
        %v4613 = vshll.u32 2131351028, %v4604
        %v4614 = vshrl.u32 2102212464, %v4605
        %v4615 = vor.u32 %v4613, %v4614
        %v4616 = vshll.u32 2102212464, %v4604
        %v4617 = vshrl.u32 920167782, %v4605
        %v4618 = vor.u32 %v4616, %v4617
        %v4619 = vshll.u32 920167782, %v4604
        %v4620 = vshrl.u32 1326507024, %v4605
        %v4621 = vor.u32 %v4619, %v4620
        %vm4622 = vcmp.lt.s32.totalorder %v4603, 1
        %vm4623 = vcmp.lt.s32.totalorder %v4603, 2
        %vm4624 = vcmp.lt.s32.totalorder %v4603, 3
        %vm4625 = vcmp.lt.s32.totalorder %v4603, 4
        %v4626 = vsel %vm4622, %v4606, %v4609
        %v4627 = vsel %vm4625, %v4615, 2102212464
        %v4628 = vsel %vm4624, %v4612, %v4627
        %v4629 = vsel %vm4623, %v4626, %v4628
        %v4630 = vsel %vm4622, %v4609, %v4612
        %v4631 = vsel %vm4625, %v4618, 920167782
        %v4632 = vsel %vm4624, %v4615, %v4631
        %v4633 = vsel %vm4623, %v4630, %v4632
        %v4634 = vsel %vm4622, %v4612, %v4615
        %v4635 = vsel %vm4625, %v4621, 1326507024
        %v4636 = vsel %vm4624, %v4618, %v4635
        %v4637 = vsel %vm4623, %v4634, %v4636
        %v4638 = vshll.u32 %v4598, 8
        %v4639 = vmul.u32.u64.compose %v4638, %v4637
        %v4640 = vextract.low.u32 %v4639
        %v4641 = vextract.high.u32 %v4639
        %v4642 = vmul.u32.u64.compose %v4638, %v4633
        %v4643 = vextract.low.u32 %v4642
        %v4644 = vextract.high.u32 %v4642
        %v4645 = vmul.u32 %v4638, %v4629
        %v4646 = vadd.s32 %v4641, %v4643
        %vm4647 = vc.u32 %v4641, %v4643
        %v4648 = vadd.s32 %v4644, 1
        %v4649 = vsel %vm4647, %v4648, %v4644
        %v4650 = vadd.s32 %v4645, %v4649
        %v4651 = vadd.s32 %v4650, 536870912
        %v4652 = vshrl.u32 %v4651, 30
        %v4653 = vshll.u32 %v4652, 30
        %v4654 = vsub.s32 %v4650, %v4653
        %vm4655 = vcmp.lt.s32.totalorder %v4654, 0
        %v4656 = vsub.s32 0, %v4654
        %v4657 = vsel %vm4655, %v4656, %v4654
        %v4658 = vclz %v4657
        %v4659 = vsub.s32 %v4658, 2
        %vm4660 = vcmp.gt.s32.totalorder 0, %v4659
        %v4661 = vsel %vm4660, 0, %v4659
        %v4662 = vsub.s32 32, %v4661
        %v4663 = vshll.u32 %v4654, %v4661
        %v4664 = vshrl.u32 %v4646, %v4662
        %v4665 = vor.u32 %v4663, %v4664
        %v4666 = vsub.s32 4294967266, %v4661
        %v4667 = vadd.s32 %v4666, 127
        %v4668 = vshll.u32 %v4667, 23
        %v4669 = vor.u32 4788187, %v4668
        %v4670 = vand.u32 2147483647, %v4669
        %v4672 = vcvt.s32.f32 %v4665
        %v4673 = vmul.f32 %v4672, %v4670
        %v4674 = vxor.u32 %v4673, 2147483648
        %v4675 = vsel %vm4592, %v4674, %v4673
        %v4676 = vsub.s32 4, %v4652
        %v4677 = vsel %vm4592, %v4676, %v4652
        %v4678 = vsel %vm4591, %v3702, %v4675
        %v4679 = vsel %vm4591, 0, %v4677
        %v4680 = vcosq.f32.pop %v4678
        %v4681 = vsinq.f32.pop %v4678
        %vm4682 = vweird.f32 %v3702
        %v4683 = vadd.s32 %v4679, 3
        %v4684 = vand.u32 %v4683, 3
        %vm4685 = vcmp.lt.s32.totalorder %v4684, 2
        %vm4686 = vcmp.eq.s32.totalorder %v4684, 0
        %v4687 = vxor.u32 %v4681, 2147483648
        %v4688 = vsel %vm4686, %v4680, %v4687
        %vm4689 = vcmp.eq.s32.totalorder %v4684, 2
        %v4690 = vxor.u32 %v4680, 2147483648
        %v4691 = vsel %vm4689, %v4690, %v4681
        %v4692 = vsel %vm4685, %v4688, %v4691
        %v4693 = vsel %vm4682, nan, %v4692
        %v4694 = vand.u32 2147483647, %v3703
        %vm4695 = vcmp.le.f32.partialorder %v4694, 0.7853982
        %vm4696 = vcmp.lt.s32.totalorder %v3703, 0
        %v4697 = vand.u32 %v3703, 2139095040
        %v4698 = vshrl.u32 %v4697, 23
        %v4699 = vsub.s32 %v4698, 127
        %v4700 = vand.u32 2147483647, %v3703
        %v4701 = vand.u32 %v4700, 8388607
        %v4702 = vor.u32 %v4701, 8388608
        %v4703 = vsub.s32 0, %v4702
        %v4704 = vadd.s32 %v4699, 1
        %vm4705 = vcmp.gt.s32.totalorder %v4704, 0
        %v4706 = vsel %vm4705, %v4704, 0
        %v4707 = vshrl.u32 %v4706, 5
        %v4708 = vand.u32 %v4706, 31
        %v4709 = vsub.s32 32, %v4708
        %v4710 = vshrl.u32 683565275, %v4709
        %v4711 = vshll.u32 683565275, %v4708
        %v4712 = vshrl.u32 2475754826, %v4709
        %v4713 = vor.u32 %v4711, %v4712
        %v4714 = vshll.u32 2475754826, %v4708
        %v4715 = vshrl.u32 2131351028, %v4709
        %v4716 = vor.u32 %v4714, %v4715
        %v4717 = vshll.u32 2131351028, %v4708
        %v4718 = vshrl.u32 2102212464, %v4709
        %v4719 = vor.u32 %v4717, %v4718
        %v4720 = vshll.u32 2102212464, %v4708
        %v4721 = vshrl.u32 920167782, %v4709
        %v4722 = vor.u32 %v4720, %v4721
        %v4723 = vshll.u32 920167782, %v4708
        %v4724 = vshrl.u32 1326507024, %v4709
        %v4725 = vor.u32 %v4723, %v4724
        %vm4726 = vcmp.lt.s32.totalorder %v4707, 1
        %vm4727 = vcmp.lt.s32.totalorder %v4707, 2
        %vm4728 = vcmp.lt.s32.totalorder %v4707, 3
        %vm4729 = vcmp.lt.s32.totalorder %v4707, 4
        %v4730 = vsel %vm4726, %v4710, %v4713
        %v4731 = vsel %vm4729, %v4719, 2102212464
        %v4732 = vsel %vm4728, %v4716, %v4731
        %v4733 = vsel %vm4727, %v4730, %v4732
        %v4734 = vsel %vm4726, %v4713, %v4716
        %v4735 = vsel %vm4729, %v4722, 920167782
        %v4736 = vsel %vm4728, %v4719, %v4735
        %v4737 = vsel %vm4727, %v4734, %v4736
        %v4738 = vsel %vm4726, %v4716, %v4719
        %v4739 = vsel %vm4729, %v4725, 1326507024
        %v4740 = vsel %vm4728, %v4722, %v4739
        %v4741 = vsel %vm4727, %v4738, %v4740
        %v4742 = vshll.u32 %v4702, 8
        %v4743 = vmul.u32.u64.compose %v4742, %v4741
        %v4744 = vextract.low.u32 %v4743
        %v4745 = vextract.high.u32 %v4743
        %v4746 = vmul.u32.u64.compose %v4742, %v4737
        %v4747 = vextract.low.u32 %v4746
        %v4748 = vextract.high.u32 %v4746
        %v4749 = vmul.u32 %v4742, %v4733
        %v4750 = vadd.s32 %v4745, %v4747
        %vm4751 = vc.u32 %v4745, %v4747
        %v4752 = vadd.s32 %v4748, 1
        %v4753 = vsel %vm4751, %v4752, %v4748
        %v4754 = vadd.s32 %v4749, %v4753
        %v4755 = vadd.s32 %v4754, 536870912
        %v4756 = vshrl.u32 %v4755, 30
        %v4757 = vshll.u32 %v4756, 30
        %v4758 = vsub.s32 %v4754, %v4757
        %vm4759 = vcmp.lt.s32.totalorder %v4758, 0
        %v4760 = vsub.s32 0, %v4758
        %v4761 = vsel %vm4759, %v4760, %v4758
        %v4762 = vclz %v4761
        %v4763 = vsub.s32 %v4762, 2
        %vm4764 = vcmp.gt.s32.totalorder 0, %v4763
        %v4765 = vsel %vm4764, 0, %v4763
        %v4766 = vsub.s32 32, %v4765
        %v4767 = vshll.u32 %v4758, %v4765
        %v4768 = vshrl.u32 %v4750, %v4766
        %v4769 = vor.u32 %v4767, %v4768
        %v4770 = vsub.s32 4294967266, %v4765
        %v4771 = vadd.s32 %v4770, 127
        %v4772 = vshll.u32 %v4771, 23
        %v4773 = vor.u32 4788187, %v4772
        %v4774 = vand.u32 2147483647, %v4773
        %v4776 = vcvt.s32.f32 %v4769
        %v4777 = vmul.f32 %v4776, %v4774
        %v4778 = vxor.u32 %v4777, 2147483648
        %v4779 = vsel %vm4696, %v4778, %v4777
        %v4780 = vsub.s32 4, %v4756
        %v4781 = vsel %vm4696, %v4780, %v4756
        %v4782 = vsel %vm4695, %v3703, %v4779
        %v4783 = vsel %vm4695, 0, %v4781
        %v4784 = vcosq.f32.pop %v4782
        %v4785 = vsinq.f32.pop %v4782
        %vm4786 = vweird.f32 %v3703
        %v4787 = vadd.s32 %v4783, 3
        %v4788 = vand.u32 %v4787, 3
        %vm4789 = vcmp.lt.s32.totalorder %v4788, 2
        %vm4790 = vcmp.eq.s32.totalorder %v4788, 0
        %v4791 = vxor.u32 %v4785, 2147483648
        %v4792 = vsel %vm4790, %v4784, %v4791
        %vm4793 = vcmp.eq.s32.totalorder %v4788, 2
        %v4794 = vxor.u32 %v4784, 2147483648
        %v4795 = vsel %vm4793, %v4794, %v4785
        %v4796 = vsel %vm4789, %v4792, %v4795
        %v4797 = vsel %vm4786, nan, %v4796
        %v4798 = vand.u32 2147483647, %v3704
        %vm4799 = vcmp.le.f32.partialorder %v4798, 0.7853982
        %vm4800 = vcmp.lt.s32.totalorder %v3704, 0
        %v4801 = vand.u32 %v3704, 2139095040
        %v4802 = vshrl.u32 %v4801, 23
        %v4803 = vsub.s32 %v4802, 127
        %v4804 = vand.u32 2147483647, %v3704
        %v4805 = vand.u32 %v4804, 8388607
        %v4806 = vor.u32 %v4805, 8388608
        %v4807 = vsub.s32 0, %v4806
        %v4808 = vadd.s32 %v4803, 1
        %vm4809 = vcmp.gt.s32.totalorder %v4808, 0
        %v4810 = vsel %vm4809, %v4808, 0
        %v4811 = vshrl.u32 %v4810, 5
        %v4812 = vand.u32 %v4810, 31
        %v4813 = vsub.s32 32, %v4812
        %v4814 = vshrl.u32 683565275, %v4813
        %v4815 = vshll.u32 683565275, %v4812
        %v4816 = vshrl.u32 2475754826, %v4813
        %v4817 = vor.u32 %v4815, %v4816
        %v4818 = vshll.u32 2475754826, %v4812
        %v4819 = vshrl.u32 2131351028, %v4813
        %v4820 = vor.u32 %v4818, %v4819
        %v4821 = vshll.u32 2131351028, %v4812
        %v4822 = vshrl.u32 2102212464, %v4813
        %v4823 = vor.u32 %v4821, %v4822
        %v4824 = vshll.u32 2102212464, %v4812
        %v4825 = vshrl.u32 920167782, %v4813
        %v4826 = vor.u32 %v4824, %v4825
        %v4827 = vshll.u32 920167782, %v4812
        %v4828 = vshrl.u32 1326507024, %v4813
        %v4829 = vor.u32 %v4827, %v4828
        %vm4830 = vcmp.lt.s32.totalorder %v4811, 1
        %vm4831 = vcmp.lt.s32.totalorder %v4811, 2
        %vm4832 = vcmp.lt.s32.totalorder %v4811, 3
        %vm4833 = vcmp.lt.s32.totalorder %v4811, 4
        %v4834 = vsel %vm4830, %v4814, %v4817
        %v4835 = vsel %vm4833, %v4823, 2102212464
        %v4836 = vsel %vm4832, %v4820, %v4835
        %v4837 = vsel %vm4831, %v4834, %v4836
        %v4838 = vsel %vm4830, %v4817, %v4820
        %v4839 = vsel %vm4833, %v4826, 920167782
        %v4840 = vsel %vm4832, %v4823, %v4839
        %v4841 = vsel %vm4831, %v4838, %v4840
        %v4842 = vsel %vm4830, %v4820, %v4823
        %v4843 = vsel %vm4833, %v4829, 1326507024
        %v4844 = vsel %vm4832, %v4826, %v4843
        %v4845 = vsel %vm4831, %v4842, %v4844
        %v4846 = vshll.u32 %v4806, 8
        %v4847 = vmul.u32.u64.compose %v4846, %v4845
        %v4848 = vextract.low.u32 %v4847
        %v4849 = vextract.high.u32 %v4847
        %v4850 = vmul.u32.u64.compose %v4846, %v4841
        %v4851 = vextract.low.u32 %v4850
        %v4852 = vextract.high.u32 %v4850
        %v4853 = vmul.u32 %v4846, %v4837
        %v4854 = vadd.s32 %v4849, %v4851
        %vm4855 = vc.u32 %v4849, %v4851
        %v4856 = vadd.s32 %v4852, 1
        %v4857 = vsel %vm4855, %v4856, %v4852
        %v4858 = vadd.s32 %v4853, %v4857
        %v4859 = vadd.s32 %v4858, 536870912
        %v4860 = vshrl.u32 %v4859, 30
        %v4861 = vshll.u32 %v4860, 30
        %v4862 = vsub.s32 %v4858, %v4861
        %vm4863 = vcmp.lt.s32.totalorder %v4862, 0
        %v4864 = vsub.s32 0, %v4862
        %v4865 = vsel %vm4863, %v4864, %v4862
        %v4866 = vclz %v4865
        %v4867 = vsub.s32 %v4866, 2
        %vm4868 = vcmp.gt.s32.totalorder 0, %v4867
        %v4869 = vsel %vm4868, 0, %v4867
        %v4870 = vsub.s32 32, %v4869
        %v4871 = vshll.u32 %v4862, %v4869
        %v4872 = vshrl.u32 %v4854, %v4870
        %v4873 = vor.u32 %v4871, %v4872
        %v4874 = vsub.s32 4294967266, %v4869
        %v4875 = vadd.s32 %v4874, 127
        %v4876 = vshll.u32 %v4875, 23
        %v4877 = vor.u32 4788187, %v4876
        %v4878 = vand.u32 2147483647, %v4877
        %v4880 = vcvt.s32.f32 %v4873
        %v4881 = vmul.f32 %v4880, %v4878
        %v4882 = vxor.u32 %v4881, 2147483648
        %v4883 = vsel %vm4800, %v4882, %v4881
        %v4884 = vsub.s32 4, %v4860
        %v4885 = vsel %vm4800, %v4884, %v4860
        %v4886 = vsel %vm4799, %v3704, %v4883
        %v4887 = vsel %vm4799, 0, %v4885
        %v4888 = vcosq.f32.pop %v4886
        %v4889 = vsinq.f32.pop %v4886
        %vm4890 = vweird.f32 %v3704
        %v4891 = vadd.s32 %v4887, 3
        %v4892 = vand.u32 %v4891, 3
        %vm4893 = vcmp.lt.s32.totalorder %v4892, 2
        %vm4894 = vcmp.eq.s32.totalorder %v4892, 0
        %v4895 = vxor.u32 %v4889, 2147483648
        %v4896 = vsel %vm4894, %v4888, %v4895
        %vm4897 = vcmp.eq.s32.totalorder %v4892, 2
        %v4898 = vxor.u32 %v4888, 2147483648
        %v4899 = vsel %vm4897, %v4898, %v4889
        %v4900 = vsel %vm4893, %v4896, %v4899
        %v4901 = vsel %vm4890, nan, %v4900
        %v4902 = vand.u32 2147483647, %v3705
        %vm4903 = vcmp.le.f32.partialorder %v4902, 0.7853982
        %vm4904 = vcmp.lt.s32.totalorder %v3705, 0
        %v4905 = vand.u32 %v3705, 2139095040
        %v4906 = vshrl.u32 %v4905, 23
        %v4907 = vsub.s32 %v4906, 127
        %v4908 = vand.u32 2147483647, %v3705
        %v4909 = vand.u32 %v4908, 8388607
        %v4910 = vor.u32 %v4909, 8388608
        %v4911 = vsub.s32 0, %v4910
        %v4912 = vadd.s32 %v4907, 1
        %vm4913 = vcmp.gt.s32.totalorder %v4912, 0
        %v4914 = vsel %vm4913, %v4912, 0
        %v4915 = vshrl.u32 %v4914, 5
        %v4916 = vand.u32 %v4914, 31
        %v4917 = vsub.s32 32, %v4916
        %v4918 = vshrl.u32 683565275, %v4917
        %v4919 = vshll.u32 683565275, %v4916
        %v4920 = vshrl.u32 2475754826, %v4917
        %v4921 = vor.u32 %v4919, %v4920
        %v4922 = vshll.u32 2475754826, %v4916
        %v4923 = vshrl.u32 2131351028, %v4917
        %v4924 = vor.u32 %v4922, %v4923
        %v4925 = vshll.u32 2131351028, %v4916
        %v4926 = vshrl.u32 2102212464, %v4917
        %v4927 = vor.u32 %v4925, %v4926
        %v4928 = vshll.u32 2102212464, %v4916
        %v4929 = vshrl.u32 920167782, %v4917
        %v4930 = vor.u32 %v4928, %v4929
        %v4931 = vshll.u32 920167782, %v4916
        %v4932 = vshrl.u32 1326507024, %v4917
        %v4933 = vor.u32 %v4931, %v4932
        %vm4934 = vcmp.lt.s32.totalorder %v4915, 1
        %vm4935 = vcmp.lt.s32.totalorder %v4915, 2
        %vm4936 = vcmp.lt.s32.totalorder %v4915, 3
        %vm4937 = vcmp.lt.s32.totalorder %v4915, 4
        %v4938 = vsel %vm4934, %v4918, %v4921
        %v4939 = vsel %vm4937, %v4927, 2102212464
        %v4940 = vsel %vm4936, %v4924, %v4939
        %v4941 = vsel %vm4935, %v4938, %v4940
        %v4942 = vsel %vm4934, %v4921, %v4924
        %v4943 = vsel %vm4937, %v4930, 920167782
        %v4944 = vsel %vm4936, %v4927, %v4943
        %v4945 = vsel %vm4935, %v4942, %v4944
        %v4946 = vsel %vm4934, %v4924, %v4927
        %v4947 = vsel %vm4937, %v4933, 1326507024
        %v4948 = vsel %vm4936, %v4930, %v4947
        %v4949 = vsel %vm4935, %v4946, %v4948
        %v4950 = vshll.u32 %v4910, 8
        %v4951 = vmul.u32.u64.compose %v4950, %v4949
        %v4952 = vextract.low.u32 %v4951
        %v4953 = vextract.high.u32 %v4951
        %v4954 = vmul.u32.u64.compose %v4950, %v4945
        %v4955 = vextract.low.u32 %v4954
        %v4956 = vextract.high.u32 %v4954
        %v4957 = vmul.u32 %v4950, %v4941
        %v4958 = vadd.s32 %v4953, %v4955
        %vm4959 = vc.u32 %v4953, %v4955
        %v4960 = vadd.s32 %v4956, 1
        %v4961 = vsel %vm4959, %v4960, %v4956
        %v4962 = vadd.s32 %v4957, %v4961
        %v4963 = vadd.s32 %v4962, 536870912
        %v4964 = vshrl.u32 %v4963, 30
        %v4965 = vshll.u32 %v4964, 30
        %v4966 = vsub.s32 %v4962, %v4965
        %vm4967 = vcmp.lt.s32.totalorder %v4966, 0
        %v4968 = vsub.s32 0, %v4966
        %v4969 = vsel %vm4967, %v4968, %v4966
        %v4970 = vclz %v4969
        %v4971 = vsub.s32 %v4970, 2
        %vm4972 = vcmp.gt.s32.totalorder 0, %v4971
        %v4973 = vsel %vm4972, 0, %v4971
        %v4974 = vsub.s32 32, %v4973
        %v4975 = vshll.u32 %v4966, %v4973
        %v4976 = vshrl.u32 %v4958, %v4974
        %v4977 = vor.u32 %v4975, %v4976
        %v4978 = vsub.s32 4294967266, %v4973
        %v4979 = vadd.s32 %v4978, 127
        %v4980 = vshll.u32 %v4979, 23
        %v4981 = vor.u32 4788187, %v4980
        %v4982 = vand.u32 2147483647, %v4981
        %v4984 = vcvt.s32.f32 %v4977
        %v4985 = vmul.f32 %v4984, %v4982
        %v4986 = vxor.u32 %v4985, 2147483648
        %v4987 = vsel %vm4904, %v4986, %v4985
        %v4988 = vsub.s32 4, %v4964
        %v4989 = vsel %vm4904, %v4988, %v4964
        %v4990 = vsel %vm4903, %v3705, %v4987
        %v4991 = vsel %vm4903, 0, %v4989
        %v4992 = vcosq.f32.pop %v4990
        %v4993 = vsinq.f32.pop %v4990
        %vm4994 = vweird.f32 %v3705
        %v4995 = vadd.s32 %v4991, 3
        %v4996 = vand.u32 %v4995, 3
        %vm4997 = vcmp.lt.s32.totalorder %v4996, 2
        %vm4998 = vcmp.eq.s32.totalorder %v4996, 0
        %v4999 = vxor.u32 %v4993, 2147483648
        %v5000 = vsel %vm4998, %v4992, %v4999
        %vm5001 = vcmp.eq.s32.totalorder %v4996, 2
        %v5002 = vxor.u32 %v4992, 2147483648
        %v5003 = vsel %vm5001, %v5002, %v4993
        %v5004 = vsel %vm4997, %v5000, %v5003
        %v5005 = vsel %vm4994, nan, %v5004
        %v5006 = vand.u32 2147483647, %v3706
        %vm5007 = vcmp.le.f32.partialorder %v5006, 0.7853982
        %vm5008 = vcmp.lt.s32.totalorder %v3706, 0
        %v5009 = vand.u32 %v3706, 2139095040
        %v5010 = vshrl.u32 %v5009, 23
        %v5011 = vsub.s32 %v5010, 127
        %v5012 = vand.u32 2147483647, %v3706
        %v5013 = vand.u32 %v5012, 8388607
        %v5014 = vor.u32 %v5013, 8388608
        %v5015 = vsub.s32 0, %v5014
        %v5016 = vadd.s32 %v5011, 1
        %vm5017 = vcmp.gt.s32.totalorder %v5016, 0
        %v5018 = vsel %vm5017, %v5016, 0
        %v5019 = vshrl.u32 %v5018, 5
        %v5020 = vand.u32 %v5018, 31
        %v5021 = vsub.s32 32, %v5020
        %v5022 = vshrl.u32 683565275, %v5021
        %v5023 = vshll.u32 683565275, %v5020
        %v5024 = vshrl.u32 2475754826, %v5021
        %v5025 = vor.u32 %v5023, %v5024
        %v5026 = vshll.u32 2475754826, %v5020
        %v5027 = vshrl.u32 2131351028, %v5021
        %v5028 = vor.u32 %v5026, %v5027
        %v5029 = vshll.u32 2131351028, %v5020
        %v5030 = vshrl.u32 2102212464, %v5021
        %v5031 = vor.u32 %v5029, %v5030
        %v5032 = vshll.u32 2102212464, %v5020
        %v5033 = vshrl.u32 920167782, %v5021
        %v5034 = vor.u32 %v5032, %v5033
        %v5035 = vshll.u32 920167782, %v5020
        %v5036 = vshrl.u32 1326507024, %v5021
        %v5037 = vor.u32 %v5035, %v5036
        %vm5038 = vcmp.lt.s32.totalorder %v5019, 1
        %vm5039 = vcmp.lt.s32.totalorder %v5019, 2
        %vm5040 = vcmp.lt.s32.totalorder %v5019, 3
        %vm5041 = vcmp.lt.s32.totalorder %v5019, 4
        %v5042 = vsel %vm5038, %v5022, %v5025
        %v5043 = vsel %vm5041, %v5031, 2102212464
        %v5044 = vsel %vm5040, %v5028, %v5043
        %v5045 = vsel %vm5039, %v5042, %v5044
        %v5046 = vsel %vm5038, %v5025, %v5028
        %v5047 = vsel %vm5041, %v5034, 920167782
        %v5048 = vsel %vm5040, %v5031, %v5047
        %v5049 = vsel %vm5039, %v5046, %v5048
        %v5050 = vsel %vm5038, %v5028, %v5031
        %v5051 = vsel %vm5041, %v5037, 1326507024
        %v5052 = vsel %vm5040, %v5034, %v5051
        %v5053 = vsel %vm5039, %v5050, %v5052
        %v5054 = vshll.u32 %v5014, 8
        %v5055 = vmul.u32.u64.compose %v5054, %v5053
        %v5056 = vextract.low.u32 %v5055
        %v5057 = vextract.high.u32 %v5055
        %v5058 = vmul.u32.u64.compose %v5054, %v5049
        %v5059 = vextract.low.u32 %v5058
        %v5060 = vextract.high.u32 %v5058
        %v5061 = vmul.u32 %v5054, %v5045
        %v5062 = vadd.s32 %v5057, %v5059
        %vm5063 = vc.u32 %v5057, %v5059
        %v5064 = vadd.s32 %v5060, 1
        %v5065 = vsel %vm5063, %v5064, %v5060
        %v5066 = vadd.s32 %v5061, %v5065
        %v5067 = vadd.s32 %v5066, 536870912
        %v5068 = vshrl.u32 %v5067, 30
        %v5069 = vshll.u32 %v5068, 30
        %v5070 = vsub.s32 %v5066, %v5069
        %vm5071 = vcmp.lt.s32.totalorder %v5070, 0
        %v5072 = vsub.s32 0, %v5070
        %v5073 = vsel %vm5071, %v5072, %v5070
        %v5074 = vclz %v5073
        %v5075 = vsub.s32 %v5074, 2
        %vm5076 = vcmp.gt.s32.totalorder 0, %v5075
        %v5077 = vsel %vm5076, 0, %v5075
        %v5078 = vsub.s32 32, %v5077
        %v5079 = vshll.u32 %v5070, %v5077
        %v5080 = vshrl.u32 %v5062, %v5078
        %v5081 = vor.u32 %v5079, %v5080
        %v5082 = vsub.s32 4294967266, %v5077
        %v5083 = vadd.s32 %v5082, 127
        %v5084 = vshll.u32 %v5083, 23
        %v5085 = vor.u32 4788187, %v5084
        %v5086 = vand.u32 2147483647, %v5085
        %v5088 = vcvt.s32.f32 %v5081
        %v5089 = vmul.f32 %v5088, %v5086
        %v5090 = vxor.u32 %v5089, 2147483648
        %v5091 = vsel %vm5008, %v5090, %v5089
        %v5092 = vsub.s32 4, %v5068
        %v5093 = vsel %vm5008, %v5092, %v5068
        %v5094 = vsel %vm5007, %v3706, %v5091
        %v5095 = vsel %vm5007, 0, %v5093
        %v5096 = vcosq.f32.pop %v5094
        %v5097 = vsinq.f32.pop %v5094
        %vm5098 = vweird.f32 %v3706
        %v5099 = vadd.s32 %v5095, 3
        %v5100 = vand.u32 %v5099, 3
        %vm5101 = vcmp.lt.s32.totalorder %v5100, 2
        %vm5102 = vcmp.eq.s32.totalorder %v5100, 0
        %v5103 = vxor.u32 %v5097, 2147483648
        %v5104 = vsel %vm5102, %v5096, %v5103
        %vm5105 = vcmp.eq.s32.totalorder %v5100, 2
        %v5106 = vxor.u32 %v5096, 2147483648
        %v5107 = vsel %vm5105, %v5106, %v5097
        %v5108 = vsel %vm5101, %v5104, %v5107
        %v5109 = vsel %vm5098, nan, %v5108
        %v5110 = vand.u32 2147483647, %v3707
        %vm5111 = vcmp.le.f32.partialorder %v5110, 0.7853982
        %vm5112 = vcmp.lt.s32.totalorder %v3707, 0
        %v5113 = vand.u32 %v3707, 2139095040
        %v5114 = vshrl.u32 %v5113, 23
        %v5115 = vsub.s32 %v5114, 127
        %v5116 = vand.u32 2147483647, %v3707
        %v5117 = vand.u32 %v5116, 8388607
        %v5118 = vor.u32 %v5117, 8388608
        %v5119 = vsub.s32 0, %v5118
        %v5120 = vadd.s32 %v5115, 1
        %vm5121 = vcmp.gt.s32.totalorder %v5120, 0
        %v5122 = vsel %vm5121, %v5120, 0
        %v5123 = vshrl.u32 %v5122, 5
        %v5124 = vand.u32 %v5122, 31
        %v5125 = vsub.s32 32, %v5124
        %v5126 = vshrl.u32 683565275, %v5125
        %v5127 = vshll.u32 683565275, %v5124
        %v5128 = vshrl.u32 2475754826, %v5125
        %v5129 = vor.u32 %v5127, %v5128
        %v5130 = vshll.u32 2475754826, %v5124
        %v5131 = vshrl.u32 2131351028, %v5125
        %v5132 = vor.u32 %v5130, %v5131
        %v5133 = vshll.u32 2131351028, %v5124
        %v5134 = vshrl.u32 2102212464, %v5125
        %v5135 = vor.u32 %v5133, %v5134
        %v5136 = vshll.u32 2102212464, %v5124
        %v5137 = vshrl.u32 920167782, %v5125
        %v5138 = vor.u32 %v5136, %v5137
        %v5139 = vshll.u32 920167782, %v5124
        %v5140 = vshrl.u32 1326507024, %v5125
        %v5141 = vor.u32 %v5139, %v5140
        %vm5142 = vcmp.lt.s32.totalorder %v5123, 1
        %vm5143 = vcmp.lt.s32.totalorder %v5123, 2
        %vm5144 = vcmp.lt.s32.totalorder %v5123, 3
        %vm5145 = vcmp.lt.s32.totalorder %v5123, 4
        %v5146 = vsel %vm5142, %v5126, %v5129
        %v5147 = vsel %vm5145, %v5135, 2102212464
        %v5148 = vsel %vm5144, %v5132, %v5147
        %v5149 = vsel %vm5143, %v5146, %v5148
        %v5150 = vsel %vm5142, %v5129, %v5132
        %v5151 = vsel %vm5145, %v5138, 920167782
        %v5152 = vsel %vm5144, %v5135, %v5151
        %v5153 = vsel %vm5143, %v5150, %v5152
        %v5154 = vsel %vm5142, %v5132, %v5135
        %v5155 = vsel %vm5145, %v5141, 1326507024
        %v5156 = vsel %vm5144, %v5138, %v5155
        %v5157 = vsel %vm5143, %v5154, %v5156
        %v5158 = vshll.u32 %v5118, 8
        %v5159 = vmul.u32.u64.compose %v5158, %v5157
        %v5160 = vextract.low.u32 %v5159
        %v5161 = vextract.high.u32 %v5159
        %v5162 = vmul.u32.u64.compose %v5158, %v5153
        %v5163 = vextract.low.u32 %v5162
        %v5164 = vextract.high.u32 %v5162
        %v5165 = vmul.u32 %v5158, %v5149
        %v5166 = vadd.s32 %v5161, %v5163
        %vm5167 = vc.u32 %v5161, %v5163
        %v5168 = vadd.s32 %v5164, 1
        %v5169 = vsel %vm5167, %v5168, %v5164
        %v5170 = vadd.s32 %v5165, %v5169
        %v5171 = vadd.s32 %v5170, 536870912
        %v5172 = vshrl.u32 %v5171, 30
        %v5173 = vshll.u32 %v5172, 30
        %v5174 = vsub.s32 %v5170, %v5173
        %vm5175 = vcmp.lt.s32.totalorder %v5174, 0
        %v5176 = vsub.s32 0, %v5174
        %v5177 = vsel %vm5175, %v5176, %v5174
        %v5178 = vclz %v5177
        %v5179 = vsub.s32 %v5178, 2
        %vm5180 = vcmp.gt.s32.totalorder 0, %v5179
        %v5181 = vsel %vm5180, 0, %v5179
        %v5182 = vsub.s32 32, %v5181
        %v5183 = vshll.u32 %v5174, %v5181
        %v5184 = vshrl.u32 %v5166, %v5182
        %v5185 = vor.u32 %v5183, %v5184
        %v5186 = vsub.s32 4294967266, %v5181
        %v5187 = vadd.s32 %v5186, 127
        %v5188 = vshll.u32 %v5187, 23
        %v5189 = vor.u32 4788187, %v5188
        %v5190 = vand.u32 2147483647, %v5189
        %v5192 = vcvt.s32.f32 %v5185
        %v5193 = vmul.f32 %v5192, %v5190
        %v5194 = vxor.u32 %v5193, 2147483648
        %v5195 = vsel %vm5112, %v5194, %v5193
        %v5196 = vsub.s32 4, %v5172
        %v5197 = vsel %vm5112, %v5196, %v5172
        %v5198 = vsel %vm5111, %v3707, %v5195
        %v5199 = vsel %vm5111, 0, %v5197
        %v5200 = vcosq.f32.pop %v5198
        %v5201 = vsinq.f32.pop %v5198
        %vm5202 = vweird.f32 %v3707
        %v5203 = vadd.s32 %v5199, 3
        %v5204 = vand.u32 %v5203, 3
        %vm5205 = vcmp.lt.s32.totalorder %v5204, 2
        %vm5206 = vcmp.eq.s32.totalorder %v5204, 0
        %v5207 = vxor.u32 %v5201, 2147483648
        %v5208 = vsel %vm5206, %v5200, %v5207
        %vm5209 = vcmp.eq.s32.totalorder %v5204, 2
        %v5210 = vxor.u32 %v5200, 2147483648
        %v5211 = vsel %vm5209, %v5210, %v5201
        %v5212 = vsel %vm5205, %v5208, %v5211
        %v5213 = vsel %vm5202, nan, %v5212
        %v5214 = vand.u32 2147483647, %v3708
        %vm5215 = vcmp.le.f32.partialorder %v5214, 0.7853982
        %vm5216 = vcmp.lt.s32.totalorder %v3708, 0
        %v5217 = vand.u32 %v3708, 2139095040
        %v5218 = vshrl.u32 %v5217, 23
        %v5219 = vsub.s32 %v5218, 127
        %v5220 = vand.u32 2147483647, %v3708
        %v5221 = vand.u32 %v5220, 8388607
        %v5222 = vor.u32 %v5221, 8388608
        %v5223 = vsub.s32 0, %v5222
        %v5224 = vadd.s32 %v5219, 1
        %vm5225 = vcmp.gt.s32.totalorder %v5224, 0
        %v5226 = vsel %vm5225, %v5224, 0
        %v5227 = vshrl.u32 %v5226, 5
        %v5228 = vand.u32 %v5226, 31
        %v5229 = vsub.s32 32, %v5228
        %v5230 = vshrl.u32 683565275, %v5229
        %v5231 = vshll.u32 683565275, %v5228
        %v5232 = vshrl.u32 2475754826, %v5229
        %v5233 = vor.u32 %v5231, %v5232
        %v5234 = vshll.u32 2475754826, %v5228
        %v5235 = vshrl.u32 2131351028, %v5229
        %v5236 = vor.u32 %v5234, %v5235
        %v5237 = vshll.u32 2131351028, %v5228
        %v5238 = vshrl.u32 2102212464, %v5229
        %v5239 = vor.u32 %v5237, %v5238
        %v5240 = vshll.u32 2102212464, %v5228
        %v5241 = vshrl.u32 920167782, %v5229
        %v5242 = vor.u32 %v5240, %v5241
        %v5243 = vshll.u32 920167782, %v5228
        %v5244 = vshrl.u32 1326507024, %v5229
        %v5245 = vor.u32 %v5243, %v5244
        %vm5246 = vcmp.lt.s32.totalorder %v5227, 1
        %vm5247 = vcmp.lt.s32.totalorder %v5227, 2
        %vm5248 = vcmp.lt.s32.totalorder %v5227, 3
        %vm5249 = vcmp.lt.s32.totalorder %v5227, 4
        %v5250 = vsel %vm5246, %v5230, %v5233
        %v5251 = vsel %vm5249, %v5239, 2102212464
        %v5252 = vsel %vm5248, %v5236, %v5251
        %v5253 = vsel %vm5247, %v5250, %v5252
        %v5254 = vsel %vm5246, %v5233, %v5236
        %v5255 = vsel %vm5249, %v5242, 920167782
        %v5256 = vsel %vm5248, %v5239, %v5255
        %v5257 = vsel %vm5247, %v5254, %v5256
        %v5258 = vsel %vm5246, %v5236, %v5239
        %v5259 = vsel %vm5249, %v5245, 1326507024
        %v5260 = vsel %vm5248, %v5242, %v5259
        %v5261 = vsel %vm5247, %v5258, %v5260
        %v5262 = vshll.u32 %v5222, 8
        %v5263 = vmul.u32.u64.compose %v5262, %v5261
        %v5264 = vextract.low.u32 %v5263
        %v5265 = vextract.high.u32 %v5263
        %v5266 = vmul.u32.u64.compose %v5262, %v5257
        %v5267 = vextract.low.u32 %v5266
        %v5268 = vextract.high.u32 %v5266
        %v5269 = vmul.u32 %v5262, %v5253
        %v5270 = vadd.s32 %v5265, %v5267
        %vm5271 = vc.u32 %v5265, %v5267
        %v5272 = vadd.s32 %v5268, 1
        %v5273 = vsel %vm5271, %v5272, %v5268
        %v5274 = vadd.s32 %v5269, %v5273
        %v5275 = vadd.s32 %v5274, 536870912
        %v5276 = vshrl.u32 %v5275, 30
        %v5277 = vshll.u32 %v5276, 30
        %v5278 = vsub.s32 %v5274, %v5277
        %vm5279 = vcmp.lt.s32.totalorder %v5278, 0
        %v5280 = vsub.s32 0, %v5278
        %v5281 = vsel %vm5279, %v5280, %v5278
        %v5282 = vclz %v5281
        %v5283 = vsub.s32 %v5282, 2
        %vm5284 = vcmp.gt.s32.totalorder 0, %v5283
        %v5285 = vsel %vm5284, 0, %v5283
        %v5286 = vsub.s32 32, %v5285
        %v5287 = vshll.u32 %v5278, %v5285
        %v5288 = vshrl.u32 %v5270, %v5286
        %v5289 = vor.u32 %v5287, %v5288
        %v5290 = vsub.s32 4294967266, %v5285
        %v5291 = vadd.s32 %v5290, 127
        %v5292 = vshll.u32 %v5291, 23
        %v5293 = vor.u32 4788187, %v5292
        %v5294 = vand.u32 2147483647, %v5293
        %v5296 = vcvt.s32.f32 %v5289
        %v5297 = vmul.f32 %v5296, %v5294
        %v5298 = vxor.u32 %v5297, 2147483648
        %v5299 = vsel %vm5216, %v5298, %v5297
        %v5300 = vsub.s32 4, %v5276
        %v5301 = vsel %vm5216, %v5300, %v5276
        %v5302 = vsel %vm5215, %v3708, %v5299
        %v5303 = vsel %vm5215, 0, %v5301
        %v5304 = vcosq.f32.pop %v5302
        %v5305 = vsinq.f32.pop %v5302
        %vm5306 = vweird.f32 %v3708
        %v5307 = vadd.s32 %v5303, 3
        %v5308 = vand.u32 %v5307, 3
        %vm5309 = vcmp.lt.s32.totalorder %v5308, 2
        %vm5310 = vcmp.eq.s32.totalorder %v5308, 0
        %v5311 = vxor.u32 %v5305, 2147483648
        %v5312 = vsel %vm5310, %v5304, %v5311
        %vm5313 = vcmp.eq.s32.totalorder %v5308, 2
        %v5314 = vxor.u32 %v5304, 2147483648
        %v5315 = vsel %vm5313, %v5314, %v5305
        %v5316 = vsel %vm5309, %v5312, %v5315
        %v5317 = vsel %vm5306, nan, %v5316
        %v5318 = vand.u32 2147483647, %v3709
        %vm5319 = vcmp.le.f32.partialorder %v5318, 0.7853982
        %vm5320 = vcmp.lt.s32.totalorder %v3709, 0
        %v5321 = vand.u32 %v3709, 2139095040
        %v5322 = vshrl.u32 %v5321, 23
        %v5323 = vsub.s32 %v5322, 127
        %v5324 = vand.u32 2147483647, %v3709
        %v5325 = vand.u32 %v5324, 8388607
        %v5326 = vor.u32 %v5325, 8388608
        %v5327 = vsub.s32 0, %v5326
        %v5328 = vadd.s32 %v5323, 1
        %vm5329 = vcmp.gt.s32.totalorder %v5328, 0
        %v5330 = vsel %vm5329, %v5328, 0
        %v5331 = vshrl.u32 %v5330, 5
        %v5332 = vand.u32 %v5330, 31
        %v5333 = vsub.s32 32, %v5332
        %v5334 = vshrl.u32 683565275, %v5333
        %v5335 = vshll.u32 683565275, %v5332
        %v5336 = vshrl.u32 2475754826, %v5333
        %v5337 = vor.u32 %v5335, %v5336
        %v5338 = vshll.u32 2475754826, %v5332
        %v5339 = vshrl.u32 2131351028, %v5333
        %v5340 = vor.u32 %v5338, %v5339
        %v5341 = vshll.u32 2131351028, %v5332
        %v5342 = vshrl.u32 2102212464, %v5333
        %v5343 = vor.u32 %v5341, %v5342
        %v5344 = vshll.u32 2102212464, %v5332
        %v5345 = vshrl.u32 920167782, %v5333
        %v5346 = vor.u32 %v5344, %v5345
        %v5347 = vshll.u32 920167782, %v5332
        %v5348 = vshrl.u32 1326507024, %v5333
        %v5349 = vor.u32 %v5347, %v5348
        %vm5350 = vcmp.lt.s32.totalorder %v5331, 1
        %vm5351 = vcmp.lt.s32.totalorder %v5331, 2
        %vm5352 = vcmp.lt.s32.totalorder %v5331, 3
        %vm5353 = vcmp.lt.s32.totalorder %v5331, 4
        %v5354 = vsel %vm5350, %v5334, %v5337
        %v5355 = vsel %vm5353, %v5343, 2102212464
        %v5356 = vsel %vm5352, %v5340, %v5355
        %v5357 = vsel %vm5351, %v5354, %v5356
        %v5358 = vsel %vm5350, %v5337, %v5340
        %v5359 = vsel %vm5353, %v5346, 920167782
        %v5360 = vsel %vm5352, %v5343, %v5359
        %v5361 = vsel %vm5351, %v5358, %v5360
        %v5362 = vsel %vm5350, %v5340, %v5343
        %v5363 = vsel %vm5353, %v5349, 1326507024
        %v5364 = vsel %vm5352, %v5346, %v5363
        %v5365 = vsel %vm5351, %v5362, %v5364
        %v5366 = vshll.u32 %v5326, 8
        %v5367 = vmul.u32.u64.compose %v5366, %v5365
        %v5368 = vextract.low.u32 %v5367
        %v5369 = vextract.high.u32 %v5367
        %v5370 = vmul.u32.u64.compose %v5366, %v5361
        %v5371 = vextract.low.u32 %v5370
        %v5372 = vextract.high.u32 %v5370
        %v5373 = vmul.u32 %v5366, %v5357
        %v5374 = vadd.s32 %v5369, %v5371
        %vm5375 = vc.u32 %v5369, %v5371
        %v5376 = vadd.s32 %v5372, 1
        %v5377 = vsel %vm5375, %v5376, %v5372
        %v5378 = vadd.s32 %v5373, %v5377
        %v5379 = vadd.s32 %v5378, 536870912
        %v5380 = vshrl.u32 %v5379, 30
        %v5381 = vshll.u32 %v5380, 30
        %v5382 = vsub.s32 %v5378, %v5381
        %vm5383 = vcmp.lt.s32.totalorder %v5382, 0
        %v5384 = vsub.s32 0, %v5382
        %v5385 = vsel %vm5383, %v5384, %v5382
        %v5386 = vclz %v5385
        %v5387 = vsub.s32 %v5386, 2
        %vm5388 = vcmp.gt.s32.totalorder 0, %v5387
        %v5389 = vsel %vm5388, 0, %v5387
        %v5390 = vsub.s32 32, %v5389
        %v5391 = vshll.u32 %v5382, %v5389
        %v5392 = vshrl.u32 %v5374, %v5390
        %v5393 = vor.u32 %v5391, %v5392
        %v5394 = vsub.s32 4294967266, %v5389
        %v5395 = vadd.s32 %v5394, 127
        %v5396 = vshll.u32 %v5395, 23
        %v5397 = vor.u32 4788187, %v5396
        %v5398 = vand.u32 2147483647, %v5397
        %v5400 = vcvt.s32.f32 %v5393
        %v5401 = vmul.f32 %v5400, %v5398
        %v5402 = vxor.u32 %v5401, 2147483648
        %v5403 = vsel %vm5320, %v5402, %v5401
        %v5404 = vsub.s32 4, %v5380
        %v5405 = vsel %vm5320, %v5404, %v5380
        %v5406 = vsel %vm5319, %v3709, %v5403
        %v5407 = vsel %vm5319, 0, %v5405
        %v5408 = vcosq.f32.pop %v5406
        %v5409 = vsinq.f32.pop %v5406
        %vm5410 = vweird.f32 %v3709
        %v5411 = vadd.s32 %v5407, 3
        %v5412 = vand.u32 %v5411, 3
        %vm5413 = vcmp.lt.s32.totalorder %v5412, 2
        %vm5414 = vcmp.eq.s32.totalorder %v5412, 0
        %v5415 = vxor.u32 %v5409, 2147483648
        %v5416 = vsel %vm5414, %v5408, %v5415
        %vm5417 = vcmp.eq.s32.totalorder %v5412, 2
        %v5418 = vxor.u32 %v5408, 2147483648
        %v5419 = vsel %vm5417, %v5418, %v5409
        %v5420 = vsel %vm5413, %v5416, %v5419
        %v5421 = vsel %vm5410, nan, %v5420
        %v5422 = vand.u32 2147483647, %v3710
        %vm5423 = vcmp.le.f32.partialorder %v5422, 0.7853982
        %vm5424 = vcmp.lt.s32.totalorder %v3710, 0
        %v5425 = vand.u32 %v3710, 2139095040
        %v5426 = vshrl.u32 %v5425, 23
        %v5427 = vsub.s32 %v5426, 127
        %v5428 = vand.u32 2147483647, %v3710
        %v5429 = vand.u32 %v5428, 8388607
        %v5430 = vor.u32 %v5429, 8388608
        %v5431 = vsub.s32 0, %v5430
        %v5432 = vadd.s32 %v5427, 1
        %vm5433 = vcmp.gt.s32.totalorder %v5432, 0
        %v5434 = vsel %vm5433, %v5432, 0
        %v5435 = vshrl.u32 %v5434, 5
        %v5436 = vand.u32 %v5434, 31
        %v5437 = vsub.s32 32, %v5436
        %v5438 = vshrl.u32 683565275, %v5437
        %v5439 = vshll.u32 683565275, %v5436
        %v5440 = vshrl.u32 2475754826, %v5437
        %v5441 = vor.u32 %v5439, %v5440
        %v5442 = vshll.u32 2475754826, %v5436
        %v5443 = vshrl.u32 2131351028, %v5437
        %v5444 = vor.u32 %v5442, %v5443
        %v5445 = vshll.u32 2131351028, %v5436
        %v5446 = vshrl.u32 2102212464, %v5437
        %v5447 = vor.u32 %v5445, %v5446
        %v5448 = vshll.u32 2102212464, %v5436
        %v5449 = vshrl.u32 920167782, %v5437
        %v5450 = vor.u32 %v5448, %v5449
        %v5451 = vshll.u32 920167782, %v5436
        %v5452 = vshrl.u32 1326507024, %v5437
        %v5453 = vor.u32 %v5451, %v5452
        %vm5454 = vcmp.lt.s32.totalorder %v5435, 1
        %vm5455 = vcmp.lt.s32.totalorder %v5435, 2
        %vm5456 = vcmp.lt.s32.totalorder %v5435, 3
        %vm5457 = vcmp.lt.s32.totalorder %v5435, 4
        %v5458 = vsel %vm5454, %v5438, %v5441
        %v5459 = vsel %vm5457, %v5447, 2102212464
        %v5460 = vsel %vm5456, %v5444, %v5459
        %v5461 = vsel %vm5455, %v5458, %v5460
        %v5462 = vsel %vm5454, %v5441, %v5444
        %v5463 = vsel %vm5457, %v5450, 920167782
        %v5464 = vsel %vm5456, %v5447, %v5463
        %v5465 = vsel %vm5455, %v5462, %v5464
        %v5466 = vsel %vm5454, %v5444, %v5447
        %v5467 = vsel %vm5457, %v5453, 1326507024
        %v5468 = vsel %vm5456, %v5450, %v5467
        %v5469 = vsel %vm5455, %v5466, %v5468
        %v5470 = vshll.u32 %v5430, 8
        %v5471 = vmul.u32.u64.compose %v5470, %v5469
        %v5472 = vextract.low.u32 %v5471
        %v5473 = vextract.high.u32 %v5471
        %v5474 = vmul.u32.u64.compose %v5470, %v5465
        %v5475 = vextract.low.u32 %v5474
        %v5476 = vextract.high.u32 %v5474
        %v5477 = vmul.u32 %v5470, %v5461
        %v5478 = vadd.s32 %v5473, %v5475
        %vm5479 = vc.u32 %v5473, %v5475
        %v5480 = vadd.s32 %v5476, 1
        %v5481 = vsel %vm5479, %v5480, %v5476
        %v5482 = vadd.s32 %v5477, %v5481
        %v5483 = vadd.s32 %v5482, 536870912
        %v5484 = vshrl.u32 %v5483, 30
        %v5485 = vshll.u32 %v5484, 30
        %v5486 = vsub.s32 %v5482, %v5485
        %vm5487 = vcmp.lt.s32.totalorder %v5486, 0
        %v5488 = vsub.s32 0, %v5486
        %v5489 = vsel %vm5487, %v5488, %v5486
        %v5490 = vclz %v5489
        %v5491 = vsub.s32 %v5490, 2
        %vm5492 = vcmp.gt.s32.totalorder 0, %v5491
        %v5493 = vsel %vm5492, 0, %v5491
        %v5494 = vsub.s32 32, %v5493
        %v5495 = vshll.u32 %v5486, %v5493
        %v5496 = vshrl.u32 %v5478, %v5494
        %v5497 = vor.u32 %v5495, %v5496
        %v5498 = vsub.s32 4294967266, %v5493
        %v5499 = vadd.s32 %v5498, 127
        %v5500 = vshll.u32 %v5499, 23
        %v5501 = vor.u32 4788187, %v5500
        %v5502 = vand.u32 2147483647, %v5501
        %v5504 = vcvt.s32.f32 %v5497
        %v5505 = vmul.f32 %v5504, %v5502
        %v5506 = vxor.u32 %v5505, 2147483648
        %v5507 = vsel %vm5424, %v5506, %v5505
        %v5508 = vsub.s32 4, %v5484
        %v5509 = vsel %vm5424, %v5508, %v5484
        %v5510 = vsel %vm5423, %v3710, %v5507
        %v5511 = vsel %vm5423, 0, %v5509
        %v5512 = vcosq.f32.pop %v5510
        %v5513 = vsinq.f32.pop %v5510
        %vm5514 = vweird.f32 %v3710
        %v5515 = vadd.s32 %v5511, 3
        %v5516 = vand.u32 %v5515, 3
        %vm5517 = vcmp.lt.s32.totalorder %v5516, 2
        %vm5518 = vcmp.eq.s32.totalorder %v5516, 0
        %v5519 = vxor.u32 %v5513, 2147483648
        %v5520 = vsel %vm5518, %v5512, %v5519
        %vm5521 = vcmp.eq.s32.totalorder %v5516, 2
        %v5522 = vxor.u32 %v5512, 2147483648
        %v5523 = vsel %vm5521, %v5522, %v5513
        %v5524 = vsel %vm5517, %v5520, %v5523
        %v5525 = vsel %vm5514, nan, %v5524
        %v5526 = vand.u32 2147483647, %v3711
        %vm5527 = vcmp.le.f32.partialorder %v5526, 0.7853982
        %vm5528 = vcmp.lt.s32.totalorder %v3711, 0
        %v5529 = vand.u32 %v3711, 2139095040
        %v5530 = vshrl.u32 %v5529, 23
        %v5531 = vsub.s32 %v5530, 127
        %v5532 = vand.u32 2147483647, %v3711
        %v5533 = vand.u32 %v5532, 8388607
        %v5534 = vor.u32 %v5533, 8388608
        %v5535 = vsub.s32 0, %v5534
        %v5536 = vadd.s32 %v5531, 1
        %vm5537 = vcmp.gt.s32.totalorder %v5536, 0
        %v5538 = vsel %vm5537, %v5536, 0
        %v5539 = vshrl.u32 %v5538, 5
        %v5540 = vand.u32 %v5538, 31
        %v5541 = vsub.s32 32, %v5540
        %v5542 = vshrl.u32 683565275, %v5541
        %v5543 = vshll.u32 683565275, %v5540
        %v5544 = vshrl.u32 2475754826, %v5541
        %v5545 = vor.u32 %v5543, %v5544
        %v5546 = vshll.u32 2475754826, %v5540
        %v5547 = vshrl.u32 2131351028, %v5541
        %v5548 = vor.u32 %v5546, %v5547
        %v5549 = vshll.u32 2131351028, %v5540
        %v5550 = vshrl.u32 2102212464, %v5541
        %v5551 = vor.u32 %v5549, %v5550
        %v5552 = vshll.u32 2102212464, %v5540
        %v5553 = vshrl.u32 920167782, %v5541
        %v5554 = vor.u32 %v5552, %v5553
        %v5555 = vshll.u32 920167782, %v5540
        %v5556 = vshrl.u32 1326507024, %v5541
        %v5557 = vor.u32 %v5555, %v5556
        %vm5558 = vcmp.lt.s32.totalorder %v5539, 1
        %vm5559 = vcmp.lt.s32.totalorder %v5539, 2
        %vm5560 = vcmp.lt.s32.totalorder %v5539, 3
        %vm5561 = vcmp.lt.s32.totalorder %v5539, 4
        %v5562 = vsel %vm5558, %v5542, %v5545
        %v5563 = vsel %vm5561, %v5551, 2102212464
        %v5564 = vsel %vm5560, %v5548, %v5563
        %v5565 = vsel %vm5559, %v5562, %v5564
        %v5566 = vsel %vm5558, %v5545, %v5548
        %v5567 = vsel %vm5561, %v5554, 920167782
        %v5568 = vsel %vm5560, %v5551, %v5567
        %v5569 = vsel %vm5559, %v5566, %v5568
        %v5570 = vsel %vm5558, %v5548, %v5551
        %v5571 = vsel %vm5561, %v5557, 1326507024
        %v5572 = vsel %vm5560, %v5554, %v5571
        %v5573 = vsel %vm5559, %v5570, %v5572
        %v5574 = vshll.u32 %v5534, 8
        %v5575 = vmul.u32.u64.compose %v5574, %v5573
        %v5576 = vextract.low.u32 %v5575
        %v5577 = vextract.high.u32 %v5575
        %v5578 = vmul.u32.u64.compose %v5574, %v5569
        %v5579 = vextract.low.u32 %v5578
        %v5580 = vextract.high.u32 %v5578
        %v5581 = vmul.u32 %v5574, %v5565
        %v5582 = vadd.s32 %v5577, %v5579
        %vm5583 = vc.u32 %v5577, %v5579
        %v5584 = vadd.s32 %v5580, 1
        %v5585 = vsel %vm5583, %v5584, %v5580
        %v5586 = vadd.s32 %v5581, %v5585
        %v5587 = vadd.s32 %v5586, 536870912
        %v5588 = vshrl.u32 %v5587, 30
        %v5589 = vshll.u32 %v5588, 30
        %v5590 = vsub.s32 %v5586, %v5589
        %vm5591 = vcmp.lt.s32.totalorder %v5590, 0
        %v5592 = vsub.s32 0, %v5590
        %v5593 = vsel %vm5591, %v5592, %v5590
        %v5594 = vclz %v5593
        %v5595 = vsub.s32 %v5594, 2
        %vm5596 = vcmp.gt.s32.totalorder 0, %v5595
        %v5597 = vsel %vm5596, 0, %v5595
        %v5598 = vsub.s32 32, %v5597
        %v5599 = vshll.u32 %v5590, %v5597
        %v5600 = vshrl.u32 %v5582, %v5598
        %v5601 = vor.u32 %v5599, %v5600
        %v5602 = vsub.s32 4294967266, %v5597
        %v5603 = vadd.s32 %v5602, 127
        %v5604 = vshll.u32 %v5603, 23
        %v5605 = vor.u32 4788187, %v5604
        %v5606 = vand.u32 2147483647, %v5605
        %v5608 = vcvt.s32.f32 %v5601
        %v5609 = vmul.f32 %v5608, %v5606
        %v5610 = vxor.u32 %v5609, 2147483648
        %v5611 = vsel %vm5528, %v5610, %v5609
        %v5612 = vsub.s32 4, %v5588
        %v5613 = vsel %vm5528, %v5612, %v5588
        %v5614 = vsel %vm5527, %v3711, %v5611
        %v5615 = vsel %vm5527, 0, %v5613
        %v5616 = vcosq.f32.pop %v5614
        %v5617 = vsinq.f32.pop %v5614
        %vm5618 = vweird.f32 %v3711
        %v5619 = vadd.s32 %v5615, 3
        %v5620 = vand.u32 %v5619, 3
        %vm5621 = vcmp.lt.s32.totalorder %v5620, 2
        %vm5622 = vcmp.eq.s32.totalorder %v5620, 0
        %v5623 = vxor.u32 %v5617, 2147483648
        %v5624 = vsel %vm5622, %v5616, %v5623
        %vm5625 = vcmp.eq.s32.totalorder %v5620, 2
        %v5626 = vxor.u32 %v5616, 2147483648
        %v5627 = vsel %vm5625, %v5626, %v5617
        %v5628 = vsel %vm5621, %v5624, %v5627
        %v5629 = vsel %vm5618, nan, %v5628
        %v5630 = vand.u32 2147483647, %v3712
        %vm5631 = vcmp.le.f32.partialorder %v5630, 0.7853982
        %vm5632 = vcmp.lt.s32.totalorder %v3712, 0
        %v5633 = vand.u32 %v3712, 2139095040
        %v5634 = vshrl.u32 %v5633, 23
        %v5635 = vsub.s32 %v5634, 127
        %v5636 = vand.u32 2147483647, %v3712
        %v5637 = vand.u32 %v5636, 8388607
        %v5638 = vor.u32 %v5637, 8388608
        %v5639 = vsub.s32 0, %v5638
        %v5640 = vadd.s32 %v5635, 1
        %vm5641 = vcmp.gt.s32.totalorder %v5640, 0
        %v5642 = vsel %vm5641, %v5640, 0
        %v5643 = vshrl.u32 %v5642, 5
        %v5644 = vand.u32 %v5642, 31
        %v5645 = vsub.s32 32, %v5644
        %v5646 = vshrl.u32 683565275, %v5645
        %v5647 = vshll.u32 683565275, %v5644
        %v5648 = vshrl.u32 2475754826, %v5645
        %v5649 = vor.u32 %v5647, %v5648
        %v5650 = vshll.u32 2475754826, %v5644
        %v5651 = vshrl.u32 2131351028, %v5645
        %v5652 = vor.u32 %v5650, %v5651
        %v5653 = vshll.u32 2131351028, %v5644
        %v5654 = vshrl.u32 2102212464, %v5645
        %v5655 = vor.u32 %v5653, %v5654
        %v5656 = vshll.u32 2102212464, %v5644
        %v5657 = vshrl.u32 920167782, %v5645
        %v5658 = vor.u32 %v5656, %v5657
        %v5659 = vshll.u32 920167782, %v5644
        %v5660 = vshrl.u32 1326507024, %v5645
        %v5661 = vor.u32 %v5659, %v5660
        %vm5662 = vcmp.lt.s32.totalorder %v5643, 1
        %vm5663 = vcmp.lt.s32.totalorder %v5643, 2
        %vm5664 = vcmp.lt.s32.totalorder %v5643, 3
        %vm5665 = vcmp.lt.s32.totalorder %v5643, 4
        %v5666 = vsel %vm5662, %v5646, %v5649
        %v5667 = vsel %vm5665, %v5655, 2102212464
        %v5668 = vsel %vm5664, %v5652, %v5667
        %v5669 = vsel %vm5663, %v5666, %v5668
        %v5670 = vsel %vm5662, %v5649, %v5652
        %v5671 = vsel %vm5665, %v5658, 920167782
        %v5672 = vsel %vm5664, %v5655, %v5671
        %v5673 = vsel %vm5663, %v5670, %v5672
        %v5674 = vsel %vm5662, %v5652, %v5655
        %v5675 = vsel %vm5665, %v5661, 1326507024
        %v5676 = vsel %vm5664, %v5658, %v5675
        %v5677 = vsel %vm5663, %v5674, %v5676
        %v5678 = vshll.u32 %v5638, 8
        %v5679 = vmul.u32.u64.compose %v5678, %v5677
        %v5680 = vextract.low.u32 %v5679
        %v5681 = vextract.high.u32 %v5679
        %v5682 = vmul.u32.u64.compose %v5678, %v5673
        %v5683 = vextract.low.u32 %v5682
        %v5684 = vextract.high.u32 %v5682
        %v5685 = vmul.u32 %v5678, %v5669
        %v5686 = vadd.s32 %v5681, %v5683
        %vm5687 = vc.u32 %v5681, %v5683
        %v5688 = vadd.s32 %v5684, 1
        %v5689 = vsel %vm5687, %v5688, %v5684
        %v5690 = vadd.s32 %v5685, %v5689
        %v5691 = vadd.s32 %v5690, 536870912
        %v5692 = vshrl.u32 %v5691, 30
        %v5693 = vshll.u32 %v5692, 30
        %v5694 = vsub.s32 %v5690, %v5693
        %vm5695 = vcmp.lt.s32.totalorder %v5694, 0
        %v5696 = vsub.s32 0, %v5694
        %v5697 = vsel %vm5695, %v5696, %v5694
        %v5698 = vclz %v5697
        %v5699 = vsub.s32 %v5698, 2
        %vm5700 = vcmp.gt.s32.totalorder 0, %v5699
        %v5701 = vsel %vm5700, 0, %v5699
        %v5702 = vsub.s32 32, %v5701
        %v5703 = vshll.u32 %v5694, %v5701
        %v5704 = vshrl.u32 %v5686, %v5702
        %v5705 = vor.u32 %v5703, %v5704
        %v5706 = vsub.s32 4294967266, %v5701
        %v5707 = vadd.s32 %v5706, 127
        %v5708 = vshll.u32 %v5707, 23
        %v5709 = vor.u32 4788187, %v5708
        %v5710 = vand.u32 2147483647, %v5709
        %v5712 = vcvt.s32.f32 %v5705
        %v5713 = vmul.f32 %v5712, %v5710
        %v5714 = vxor.u32 %v5713, 2147483648
        %v5715 = vsel %vm5632, %v5714, %v5713
        %v5716 = vsub.s32 4, %v5692
        %v5717 = vsel %vm5632, %v5716, %v5692
        %v5718 = vsel %vm5631, %v3712, %v5715
        %v5719 = vsel %vm5631, 0, %v5717
        %v5720 = vcosq.f32.pop %v5718
        %v5721 = vsinq.f32.pop %v5718
        %vm5722 = vweird.f32 %v3712
        %v5723 = vadd.s32 %v5719, 3
        %v5724 = vand.u32 %v5723, 3
        %vm5725 = vcmp.lt.s32.totalorder %v5724, 2
        %vm5726 = vcmp.eq.s32.totalorder %v5724, 0
        %v5727 = vxor.u32 %v5721, 2147483648
        %v5728 = vsel %vm5726, %v5720, %v5727
        %vm5729 = vcmp.eq.s32.totalorder %v5724, 2
        %v5730 = vxor.u32 %v5720, 2147483648
        %v5731 = vsel %vm5729, %v5730, %v5721
        %v5732 = vsel %vm5725, %v5728, %v5731
        %v5733 = vsel %vm5722, nan, %v5732
        %v5734 = vand.u32 2147483647, %v3713
        %vm5735 = vcmp.le.f32.partialorder %v5734, 0.7853982
        %vm5736 = vcmp.lt.s32.totalorder %v3713, 0
        %v5737 = vand.u32 %v3713, 2139095040
        %v5738 = vshrl.u32 %v5737, 23
        %v5739 = vsub.s32 %v5738, 127
        %v5740 = vand.u32 2147483647, %v3713
        %v5741 = vand.u32 %v5740, 8388607
        %v5742 = vor.u32 %v5741, 8388608
        %v5743 = vsub.s32 0, %v5742
        %v5744 = vadd.s32 %v5739, 1
        %vm5745 = vcmp.gt.s32.totalorder %v5744, 0
        %v5746 = vsel %vm5745, %v5744, 0
        %v5747 = vshrl.u32 %v5746, 5
        %v5748 = vand.u32 %v5746, 31
        %v5749 = vsub.s32 32, %v5748
        %v5750 = vshrl.u32 683565275, %v5749
        %v5751 = vshll.u32 683565275, %v5748
        %v5752 = vshrl.u32 2475754826, %v5749
        %v5753 = vor.u32 %v5751, %v5752
        %v5754 = vshll.u32 2475754826, %v5748
        %v5755 = vshrl.u32 2131351028, %v5749
        %v5756 = vor.u32 %v5754, %v5755
        %v5757 = vshll.u32 2131351028, %v5748
        %v5758 = vshrl.u32 2102212464, %v5749
        %v5759 = vor.u32 %v5757, %v5758
        %v5760 = vshll.u32 2102212464, %v5748
        %v5761 = vshrl.u32 920167782, %v5749
        %v5762 = vor.u32 %v5760, %v5761
        %v5763 = vshll.u32 920167782, %v5748
        %v5764 = vshrl.u32 1326507024, %v5749
        %v5765 = vor.u32 %v5763, %v5764
        %vm5766 = vcmp.lt.s32.totalorder %v5747, 1
        %vm5767 = vcmp.lt.s32.totalorder %v5747, 2
        %vm5768 = vcmp.lt.s32.totalorder %v5747, 3
        %vm5769 = vcmp.lt.s32.totalorder %v5747, 4
        %v5770 = vsel %vm5766, %v5750, %v5753
        %v5771 = vsel %vm5769, %v5759, 2102212464
        %v5772 = vsel %vm5768, %v5756, %v5771
        %v5773 = vsel %vm5767, %v5770, %v5772
        %v5774 = vsel %vm5766, %v5753, %v5756
        %v5775 = vsel %vm5769, %v5762, 920167782
        %v5776 = vsel %vm5768, %v5759, %v5775
        %v5777 = vsel %vm5767, %v5774, %v5776
        %v5778 = vsel %vm5766, %v5756, %v5759
        %v5779 = vsel %vm5769, %v5765, 1326507024
        %v5780 = vsel %vm5768, %v5762, %v5779
        %v5781 = vsel %vm5767, %v5778, %v5780
        %v5782 = vshll.u32 %v5742, 8
        %v5783 = vmul.u32.u64.compose %v5782, %v5781
        %v5784 = vextract.low.u32 %v5783
        %v5785 = vextract.high.u32 %v5783
        %v5786 = vmul.u32.u64.compose %v5782, %v5777
        %v5787 = vextract.low.u32 %v5786
        %v5788 = vextract.high.u32 %v5786
        %v5789 = vmul.u32 %v5782, %v5773
        %v5790 = vadd.s32 %v5785, %v5787
        %vm5791 = vc.u32 %v5785, %v5787
        %v5792 = vadd.s32 %v5788, 1
        %v5793 = vsel %vm5791, %v5792, %v5788
        %v5794 = vadd.s32 %v5789, %v5793
        %v5795 = vadd.s32 %v5794, 536870912
        %v5796 = vshrl.u32 %v5795, 30
        %v5797 = vshll.u32 %v5796, 30
        %v5798 = vsub.s32 %v5794, %v5797
        %vm5799 = vcmp.lt.s32.totalorder %v5798, 0
        %v5800 = vsub.s32 0, %v5798
        %v5801 = vsel %vm5799, %v5800, %v5798
        %v5802 = vclz %v5801
        %v5803 = vsub.s32 %v5802, 2
        %vm5804 = vcmp.gt.s32.totalorder 0, %v5803
        %v5805 = vsel %vm5804, 0, %v5803
        %v5806 = vsub.s32 32, %v5805
        %v5807 = vshll.u32 %v5798, %v5805
        %v5808 = vshrl.u32 %v5790, %v5806
        %v5809 = vor.u32 %v5807, %v5808
        %v5810 = vsub.s32 4294967266, %v5805
        %v5811 = vadd.s32 %v5810, 127
        %v5812 = vshll.u32 %v5811, 23
        %v5813 = vor.u32 4788187, %v5812
        %v5814 = vand.u32 2147483647, %v5813
        %v5816 = vcvt.s32.f32 %v5809
        %v5817 = vmul.f32 %v5816, %v5814
        %v5818 = vxor.u32 %v5817, 2147483648
        %v5819 = vsel %vm5736, %v5818, %v5817
        %v5820 = vsub.s32 4, %v5796
        %v5821 = vsel %vm5736, %v5820, %v5796
        %v5822 = vsel %vm5735, %v3713, %v5819
        %v5823 = vsel %vm5735, 0, %v5821
        %v5824 = vcosq.f32.pop %v5822
        %v5825 = vsinq.f32.pop %v5822
        %vm5826 = vweird.f32 %v3713
        %v5827 = vadd.s32 %v5823, 3
        %v5828 = vand.u32 %v5827, 3
        %vm5829 = vcmp.lt.s32.totalorder %v5828, 2
        %vm5830 = vcmp.eq.s32.totalorder %v5828, 0
        %v5831 = vxor.u32 %v5825, 2147483648
        %v5832 = vsel %vm5830, %v5824, %v5831
        %vm5833 = vcmp.eq.s32.totalorder %v5828, 2
        %v5834 = vxor.u32 %v5824, 2147483648
        %v5835 = vsel %vm5833, %v5834, %v5825
        %v5836 = vsel %vm5829, %v5832, %v5835
        %v5837 = vsel %vm5826, nan, %v5836
        %v5838 = vand.u32 2147483647, %v3714
        %vm5839 = vcmp.le.f32.partialorder %v5838, 0.7853982
        %vm5840 = vcmp.lt.s32.totalorder %v3714, 0
        %v5841 = vand.u32 %v3714, 2139095040
        %v5842 = vshrl.u32 %v5841, 23
        %v5843 = vsub.s32 %v5842, 127
        %v5844 = vand.u32 2147483647, %v3714
        %v5845 = vand.u32 %v5844, 8388607
        %v5846 = vor.u32 %v5845, 8388608
        %v5847 = vsub.s32 0, %v5846
        %v5848 = vadd.s32 %v5843, 1
        %vm5849 = vcmp.gt.s32.totalorder %v5848, 0
        %v5850 = vsel %vm5849, %v5848, 0
        %v5851 = vshrl.u32 %v5850, 5
        %v5852 = vand.u32 %v5850, 31
        %v5853 = vsub.s32 32, %v5852
        %v5854 = vshrl.u32 683565275, %v5853
        %v5855 = vshll.u32 683565275, %v5852
        %v5856 = vshrl.u32 2475754826, %v5853
        %v5857 = vor.u32 %v5855, %v5856
        %v5858 = vshll.u32 2475754826, %v5852
        %v5859 = vshrl.u32 2131351028, %v5853
        %v5860 = vor.u32 %v5858, %v5859
        %v5861 = vshll.u32 2131351028, %v5852
        %v5862 = vshrl.u32 2102212464, %v5853
        %v5863 = vor.u32 %v5861, %v5862
        %v5864 = vshll.u32 2102212464, %v5852
        %v5865 = vshrl.u32 920167782, %v5853
        %v5866 = vor.u32 %v5864, %v5865
        %v5867 = vshll.u32 920167782, %v5852
        %v5868 = vshrl.u32 1326507024, %v5853
        %v5869 = vor.u32 %v5867, %v5868
        %vm5870 = vcmp.lt.s32.totalorder %v5851, 1
        %vm5871 = vcmp.lt.s32.totalorder %v5851, 2
        %vm5872 = vcmp.lt.s32.totalorder %v5851, 3
        %vm5873 = vcmp.lt.s32.totalorder %v5851, 4
        %v5874 = vsel %vm5870, %v5854, %v5857
        %v5875 = vsel %vm5873, %v5863, 2102212464
        %v5876 = vsel %vm5872, %v5860, %v5875
        %v5877 = vsel %vm5871, %v5874, %v5876
        %v5878 = vsel %vm5870, %v5857, %v5860
        %v5879 = vsel %vm5873, %v5866, 920167782
        %v5880 = vsel %vm5872, %v5863, %v5879
        %v5881 = vsel %vm5871, %v5878, %v5880
        %v5882 = vsel %vm5870, %v5860, %v5863
        %v5883 = vsel %vm5873, %v5869, 1326507024
        %v5884 = vsel %vm5872, %v5866, %v5883
        %v5885 = vsel %vm5871, %v5882, %v5884
        %v5886 = vshll.u32 %v5846, 8
        %v5887 = vmul.u32.u64.compose %v5886, %v5885
        %v5888 = vextract.low.u32 %v5887
        %v5889 = vextract.high.u32 %v5887
        %v5890 = vmul.u32.u64.compose %v5886, %v5881
        %v5891 = vextract.low.u32 %v5890
        %v5892 = vextract.high.u32 %v5890
        %v5893 = vmul.u32 %v5886, %v5877
        %v5894 = vadd.s32 %v5889, %v5891
        %vm5895 = vc.u32 %v5889, %v5891
        %v5896 = vadd.s32 %v5892, 1
        %v5897 = vsel %vm5895, %v5896, %v5892
        %v5898 = vadd.s32 %v5893, %v5897
        %v5899 = vadd.s32 %v5898, 536870912
        %v5900 = vshrl.u32 %v5899, 30
        %v5901 = vshll.u32 %v5900, 30
        %v5902 = vsub.s32 %v5898, %v5901
        %vm5903 = vcmp.lt.s32.totalorder %v5902, 0
        %v5904 = vsub.s32 0, %v5902
        %v5905 = vsel %vm5903, %v5904, %v5902
        %v5906 = vclz %v5905
        %v5907 = vsub.s32 %v5906, 2
        %vm5908 = vcmp.gt.s32.totalorder 0, %v5907
        %v5909 = vsel %vm5908, 0, %v5907
        %v5910 = vsub.s32 32, %v5909
        %v5911 = vshll.u32 %v5902, %v5909
        %v5912 = vshrl.u32 %v5894, %v5910
        %v5913 = vor.u32 %v5911, %v5912
        %v5914 = vsub.s32 4294967266, %v5909
        %v5915 = vadd.s32 %v5914, 127
        %v5916 = vshll.u32 %v5915, 23
        %v5917 = vor.u32 4788187, %v5916
        %v5918 = vand.u32 2147483647, %v5917
        %v5920 = vcvt.s32.f32 %v5913
        %v5921 = vmul.f32 %v5920, %v5918
        %v5922 = vxor.u32 %v5921, 2147483648
        %v5923 = vsel %vm5840, %v5922, %v5921
        %v5924 = vsub.s32 4, %v5900
        %v5925 = vsel %vm5840, %v5924, %v5900
        %v5926 = vsel %vm5839, %v3714, %v5923
        %v5927 = vsel %vm5839, 0, %v5925
        %v5928 = vcosq.f32.pop %v5926
        %v5929 = vsinq.f32.pop %v5926
        %vm5930 = vweird.f32 %v3714
        %v5931 = vadd.s32 %v5927, 3
        %v5932 = vand.u32 %v5931, 3
        %vm5933 = vcmp.lt.s32.totalorder %v5932, 2
        %vm5934 = vcmp.eq.s32.totalorder %v5932, 0
        %v5935 = vxor.u32 %v5929, 2147483648
        %v5936 = vsel %vm5934, %v5928, %v5935
        %vm5937 = vcmp.eq.s32.totalorder %v5932, 2
        %v5938 = vxor.u32 %v5928, 2147483648
        %v5939 = vsel %vm5937, %v5938, %v5929
        %v5940 = vsel %vm5933, %v5936, %v5939
        %v5941 = vsel %vm5930, nan, %v5940
        %v5942 = vand.u32 2147483647, %v3715
        %vm5943 = vcmp.le.f32.partialorder %v5942, 0.7853982
        %vm5944 = vcmp.lt.s32.totalorder %v3715, 0
        %v5945 = vand.u32 %v3715, 2139095040
        %v5946 = vshrl.u32 %v5945, 23
        %v5947 = vsub.s32 %v5946, 127
        %v5948 = vand.u32 2147483647, %v3715
        %v5949 = vand.u32 %v5948, 8388607
        %v5950 = vor.u32 %v5949, 8388608
        %v5951 = vsub.s32 0, %v5950
        %v5952 = vadd.s32 %v5947, 1
        %vm5953 = vcmp.gt.s32.totalorder %v5952, 0
        %v5954 = vsel %vm5953, %v5952, 0
        %v5955 = vshrl.u32 %v5954, 5
        %v5956 = vand.u32 %v5954, 31
        %v5957 = vsub.s32 32, %v5956
        %v5958 = vshrl.u32 683565275, %v5957
        %v5959 = vshll.u32 683565275, %v5956
        %v5960 = vshrl.u32 2475754826, %v5957
        %v5961 = vor.u32 %v5959, %v5960
        %v5962 = vshll.u32 2475754826, %v5956
        %v5963 = vshrl.u32 2131351028, %v5957
        %v5964 = vor.u32 %v5962, %v5963
        %v5965 = vshll.u32 2131351028, %v5956
        %v5966 = vshrl.u32 2102212464, %v5957
        %v5967 = vor.u32 %v5965, %v5966
        %v5968 = vshll.u32 2102212464, %v5956
        %v5969 = vshrl.u32 920167782, %v5957
        %v5970 = vor.u32 %v5968, %v5969
        %v5971 = vshll.u32 920167782, %v5956
        %v5972 = vshrl.u32 1326507024, %v5957
        %v5973 = vor.u32 %v5971, %v5972
        %vm5974 = vcmp.lt.s32.totalorder %v5955, 1
        %vm5975 = vcmp.lt.s32.totalorder %v5955, 2
        %vm5976 = vcmp.lt.s32.totalorder %v5955, 3
        %vm5977 = vcmp.lt.s32.totalorder %v5955, 4
        %v5978 = vsel %vm5974, %v5958, %v5961
        %v5979 = vsel %vm5977, %v5967, 2102212464
        %v5980 = vsel %vm5976, %v5964, %v5979
        %v5981 = vsel %vm5975, %v5978, %v5980
        %v5982 = vsel %vm5974, %v5961, %v5964
        %v5983 = vsel %vm5977, %v5970, 920167782
        %v5984 = vsel %vm5976, %v5967, %v5983
        %v5985 = vsel %vm5975, %v5982, %v5984
        %v5986 = vsel %vm5974, %v5964, %v5967
        %v5987 = vsel %vm5977, %v5973, 1326507024
        %v5988 = vsel %vm5976, %v5970, %v5987
        %v5989 = vsel %vm5975, %v5986, %v5988
        %v5990 = vshll.u32 %v5950, 8
        %v5991 = vmul.u32.u64.compose %v5990, %v5989
        %v5992 = vextract.low.u32 %v5991
        %v5993 = vextract.high.u32 %v5991
        %v5994 = vmul.u32.u64.compose %v5990, %v5985
        %v5995 = vextract.low.u32 %v5994
        %v5996 = vextract.high.u32 %v5994
        %v5997 = vmul.u32 %v5990, %v5981
        %v5998 = vadd.s32 %v5993, %v5995
        %vm5999 = vc.u32 %v5993, %v5995
        %v6000 = vadd.s32 %v5996, 1
        %v6001 = vsel %vm5999, %v6000, %v5996
        %v6002 = vadd.s32 %v5997, %v6001
        %v6003 = vadd.s32 %v6002, 536870912
        %v6004 = vshrl.u32 %v6003, 30
        %v6005 = vshll.u32 %v6004, 30
        %v6006 = vsub.s32 %v6002, %v6005
        %vm6007 = vcmp.lt.s32.totalorder %v6006, 0
        %v6008 = vsub.s32 0, %v6006
        %v6009 = vsel %vm6007, %v6008, %v6006
        %v6010 = vclz %v6009
        %v6011 = vsub.s32 %v6010, 2
        %vm6012 = vcmp.gt.s32.totalorder 0, %v6011
        %v6013 = vsel %vm6012, 0, %v6011
        %v6014 = vsub.s32 32, %v6013
        %v6015 = vshll.u32 %v6006, %v6013
        %v6016 = vshrl.u32 %v5998, %v6014
        %v6017 = vor.u32 %v6015, %v6016
        %v6018 = vsub.s32 4294967266, %v6013
        %v6019 = vadd.s32 %v6018, 127
        %v6020 = vshll.u32 %v6019, 23
        %v6021 = vor.u32 4788187, %v6020
        %v6022 = vand.u32 2147483647, %v6021
        %v6024 = vcvt.s32.f32 %v6017
        %v6025 = vmul.f32 %v6024, %v6022
        %v6026 = vxor.u32 %v6025, 2147483648
        %v6027 = vsel %vm5944, %v6026, %v6025
        %v6028 = vsub.s32 4, %v6004
        %v6029 = vsel %vm5944, %v6028, %v6004
        %v6030 = vsel %vm5943, %v3715, %v6027
        %v6031 = vsel %vm5943, 0, %v6029
        %v6032 = vcosq.f32.pop %v6030
        %v6033 = vsinq.f32.pop %v6030
        %vm6034 = vweird.f32 %v3715
        %v6035 = vadd.s32 %v6031, 3
        %v6036 = vand.u32 %v6035, 3
        %vm6037 = vcmp.lt.s32.totalorder %v6036, 2
        %vm6038 = vcmp.eq.s32.totalorder %v6036, 0
        %v6039 = vxor.u32 %v6033, 2147483648
        %v6040 = vsel %vm6038, %v6032, %v6039
        %vm6041 = vcmp.eq.s32.totalorder %v6036, 2
        %v6042 = vxor.u32 %v6032, 2147483648
        %v6043 = vsel %vm6041, %v6042, %v6033
        %v6044 = vsel %vm6037, %v6040, %v6043
        %v6045 = vsel %vm6034, nan, %v6044
        %v6046 = vand.u32 2147483647, %v3716
        %vm6047 = vcmp.le.f32.partialorder %v6046, 0.7853982
        %vm6048 = vcmp.lt.s32.totalorder %v3716, 0
        %v6049 = vand.u32 %v3716, 2139095040
        %v6050 = vshrl.u32 %v6049, 23
        %v6051 = vsub.s32 %v6050, 127
        %v6052 = vand.u32 2147483647, %v3716
        %v6053 = vand.u32 %v6052, 8388607
        %v6054 = vor.u32 %v6053, 8388608
        %v6055 = vsub.s32 0, %v6054
        %v6056 = vadd.s32 %v6051, 1
        %vm6057 = vcmp.gt.s32.totalorder %v6056, 0
        %v6058 = vsel %vm6057, %v6056, 0
        %v6059 = vshrl.u32 %v6058, 5
        %v6060 = vand.u32 %v6058, 31
        %v6061 = vsub.s32 32, %v6060
        %v6062 = vshrl.u32 683565275, %v6061
        %v6063 = vshll.u32 683565275, %v6060
        %v6064 = vshrl.u32 2475754826, %v6061
        %v6065 = vor.u32 %v6063, %v6064
        %v6066 = vshll.u32 2475754826, %v6060
        %v6067 = vshrl.u32 2131351028, %v6061
        %v6068 = vor.u32 %v6066, %v6067
        %v6069 = vshll.u32 2131351028, %v6060
        %v6070 = vshrl.u32 2102212464, %v6061
        %v6071 = vor.u32 %v6069, %v6070
        %v6072 = vshll.u32 2102212464, %v6060
        %v6073 = vshrl.u32 920167782, %v6061
        %v6074 = vor.u32 %v6072, %v6073
        %v6075 = vshll.u32 920167782, %v6060
        %v6076 = vshrl.u32 1326507024, %v6061
        %v6077 = vor.u32 %v6075, %v6076
        %vm6078 = vcmp.lt.s32.totalorder %v6059, 1
        %vm6079 = vcmp.lt.s32.totalorder %v6059, 2
        %vm6080 = vcmp.lt.s32.totalorder %v6059, 3
        %vm6081 = vcmp.lt.s32.totalorder %v6059, 4
        %v6082 = vsel %vm6078, %v6062, %v6065
        %v6083 = vsel %vm6081, %v6071, 2102212464
        %v6084 = vsel %vm6080, %v6068, %v6083
        %v6085 = vsel %vm6079, %v6082, %v6084
        %v6086 = vsel %vm6078, %v6065, %v6068
        %v6087 = vsel %vm6081, %v6074, 920167782
        %v6088 = vsel %vm6080, %v6071, %v6087
        %v6089 = vsel %vm6079, %v6086, %v6088
        %v6090 = vsel %vm6078, %v6068, %v6071
        %v6091 = vsel %vm6081, %v6077, 1326507024
        %v6092 = vsel %vm6080, %v6074, %v6091
        %v6093 = vsel %vm6079, %v6090, %v6092
        %v6094 = vshll.u32 %v6054, 8
        %v6095 = vmul.u32.u64.compose %v6094, %v6093
        %v6096 = vextract.low.u32 %v6095
        %v6097 = vextract.high.u32 %v6095
        %v6098 = vmul.u32.u64.compose %v6094, %v6089
        %v6099 = vextract.low.u32 %v6098
        %v6100 = vextract.high.u32 %v6098
        %v6101 = vmul.u32 %v6094, %v6085
        %v6102 = vadd.s32 %v6097, %v6099
        %vm6103 = vc.u32 %v6097, %v6099
        %v6104 = vadd.s32 %v6100, 1
        %v6105 = vsel %vm6103, %v6104, %v6100
        %v6106 = vadd.s32 %v6101, %v6105
        %v6107 = vadd.s32 %v6106, 536870912
        %v6108 = vshrl.u32 %v6107, 30
        %v6109 = vshll.u32 %v6108, 30
        %v6110 = vsub.s32 %v6106, %v6109
        %vm6111 = vcmp.lt.s32.totalorder %v6110, 0
        %v6112 = vsub.s32 0, %v6110
        %v6113 = vsel %vm6111, %v6112, %v6110
        %v6114 = vclz %v6113
        %v6115 = vsub.s32 %v6114, 2
        %vm6116 = vcmp.gt.s32.totalorder 0, %v6115
        %v6117 = vsel %vm6116, 0, %v6115
        %v6118 = vsub.s32 32, %v6117
        %v6119 = vshll.u32 %v6110, %v6117
        %v6120 = vshrl.u32 %v6102, %v6118
        %v6121 = vor.u32 %v6119, %v6120
        %v6122 = vsub.s32 4294967266, %v6117
        %v6123 = vadd.s32 %v6122, 127
        %v6124 = vshll.u32 %v6123, 23
        %v6125 = vor.u32 4788187, %v6124
        %v6126 = vand.u32 2147483647, %v6125
        %v6128 = vcvt.s32.f32 %v6121
        %v6129 = vmul.f32 %v6128, %v6126
        %v6130 = vxor.u32 %v6129, 2147483648
        %v6131 = vsel %vm6048, %v6130, %v6129
        %v6132 = vsub.s32 4, %v6108
        %v6133 = vsel %vm6048, %v6132, %v6108
        %v6134 = vsel %vm6047, %v3716, %v6131
        %v6135 = vsel %vm6047, 0, %v6133
        %v6136 = vcosq.f32.pop %v6134
        %v6137 = vsinq.f32.pop %v6134
        %vm6138 = vweird.f32 %v3716
        %v6139 = vadd.s32 %v6135, 3
        %v6140 = vand.u32 %v6139, 3
        %vm6141 = vcmp.lt.s32.totalorder %v6140, 2
        %vm6142 = vcmp.eq.s32.totalorder %v6140, 0
        %v6143 = vxor.u32 %v6137, 2147483648
        %v6144 = vsel %vm6142, %v6136, %v6143
        %vm6145 = vcmp.eq.s32.totalorder %v6140, 2
        %v6146 = vxor.u32 %v6136, 2147483648
        %v6147 = vsel %vm6145, %v6146, %v6137
        %v6148 = vsel %vm6141, %v6144, %v6147
        %v6149 = vsel %vm6138, nan, %v6148
        %v6150 = vand.u32 2147483647, %v3717
        %vm6151 = vcmp.le.f32.partialorder %v6150, 0.7853982
        %vm6152 = vcmp.lt.s32.totalorder %v3717, 0
        %v6153 = vand.u32 %v3717, 2139095040
        %v6154 = vshrl.u32 %v6153, 23
        %v6155 = vsub.s32 %v6154, 127
        %v6156 = vand.u32 2147483647, %v3717
        %v6157 = vand.u32 %v6156, 8388607
        %v6158 = vor.u32 %v6157, 8388608
        %v6159 = vsub.s32 0, %v6158
        %v6160 = vadd.s32 %v6155, 1
        %vm6161 = vcmp.gt.s32.totalorder %v6160, 0
        %v6162 = vsel %vm6161, %v6160, 0
        %v6163 = vshrl.u32 %v6162, 5
        %v6164 = vand.u32 %v6162, 31
        %v6165 = vsub.s32 32, %v6164
        %v6166 = vshrl.u32 683565275, %v6165
        %v6167 = vshll.u32 683565275, %v6164
        %v6168 = vshrl.u32 2475754826, %v6165
        %v6169 = vor.u32 %v6167, %v6168
        %v6170 = vshll.u32 2475754826, %v6164
        %v6171 = vshrl.u32 2131351028, %v6165
        %v6172 = vor.u32 %v6170, %v6171
        %v6173 = vshll.u32 2131351028, %v6164
        %v6174 = vshrl.u32 2102212464, %v6165
        %v6175 = vor.u32 %v6173, %v6174
        %v6176 = vshll.u32 2102212464, %v6164
        %v6177 = vshrl.u32 920167782, %v6165
        %v6178 = vor.u32 %v6176, %v6177
        %v6179 = vshll.u32 920167782, %v6164
        %v6180 = vshrl.u32 1326507024, %v6165
        %v6181 = vor.u32 %v6179, %v6180
        %vm6182 = vcmp.lt.s32.totalorder %v6163, 1
        %vm6183 = vcmp.lt.s32.totalorder %v6163, 2
        %vm6184 = vcmp.lt.s32.totalorder %v6163, 3
        %vm6185 = vcmp.lt.s32.totalorder %v6163, 4
        %v6186 = vsel %vm6182, %v6166, %v6169
        %v6187 = vsel %vm6185, %v6175, 2102212464
        %v6188 = vsel %vm6184, %v6172, %v6187
        %v6189 = vsel %vm6183, %v6186, %v6188
        %v6190 = vsel %vm6182, %v6169, %v6172
        %v6191 = vsel %vm6185, %v6178, 920167782
        %v6192 = vsel %vm6184, %v6175, %v6191
        %v6193 = vsel %vm6183, %v6190, %v6192
        %v6194 = vsel %vm6182, %v6172, %v6175
        %v6195 = vsel %vm6185, %v6181, 1326507024
        %v6196 = vsel %vm6184, %v6178, %v6195
        %v6197 = vsel %vm6183, %v6194, %v6196
        %v6198 = vshll.u32 %v6158, 8
        %v6199 = vmul.u32.u64.compose %v6198, %v6197
        %v6200 = vextract.low.u32 %v6199
        %v6201 = vextract.high.u32 %v6199
        %v6202 = vmul.u32.u64.compose %v6198, %v6193
        %v6203 = vextract.low.u32 %v6202
        %v6204 = vextract.high.u32 %v6202
        %v6205 = vmul.u32 %v6198, %v6189
        %v6206 = vadd.s32 %v6201, %v6203
        %vm6207 = vc.u32 %v6201, %v6203
        %v6208 = vadd.s32 %v6204, 1
        %v6209 = vsel %vm6207, %v6208, %v6204
        %v6210 = vadd.s32 %v6205, %v6209
        %v6211 = vadd.s32 %v6210, 536870912
        %v6212 = vshrl.u32 %v6211, 30
        %v6213 = vshll.u32 %v6212, 30
        %v6214 = vsub.s32 %v6210, %v6213
        %vm6215 = vcmp.lt.s32.totalorder %v6214, 0
        %v6216 = vsub.s32 0, %v6214
        %v6217 = vsel %vm6215, %v6216, %v6214
        %v6218 = vclz %v6217
        %v6219 = vsub.s32 %v6218, 2
        %vm6220 = vcmp.gt.s32.totalorder 0, %v6219
        %v6221 = vsel %vm6220, 0, %v6219
        %v6222 = vsub.s32 32, %v6221
        %v6223 = vshll.u32 %v6214, %v6221
        %v6224 = vshrl.u32 %v6206, %v6222
        %v6225 = vor.u32 %v6223, %v6224
        %v6226 = vsub.s32 4294967266, %v6221
        %v6227 = vadd.s32 %v6226, 127
        %v6228 = vshll.u32 %v6227, 23
        %v6229 = vor.u32 4788187, %v6228
        %v6230 = vand.u32 2147483647, %v6229
        %v6232 = vcvt.s32.f32 %v6225
        %v6233 = vmul.f32 %v6232, %v6230
        %v6234 = vxor.u32 %v6233, 2147483648
        %v6235 = vsel %vm6152, %v6234, %v6233
        %v6236 = vsub.s32 4, %v6212
        %v6237 = vsel %vm6152, %v6236, %v6212
        %v6238 = vsel %vm6151, %v3717, %v6235
        %v6239 = vsel %vm6151, 0, %v6237
        %v6240 = vcosq.f32.pop %v6238
        %v6241 = vsinq.f32.pop %v6238
        %vm6242 = vweird.f32 %v3717
        %v6243 = vadd.s32 %v6239, 3
        %v6244 = vand.u32 %v6243, 3
        %vm6245 = vcmp.lt.s32.totalorder %v6244, 2
        %vm6246 = vcmp.eq.s32.totalorder %v6244, 0
        %v6247 = vxor.u32 %v6241, 2147483648
        %v6248 = vsel %vm6246, %v6240, %v6247
        %vm6249 = vcmp.eq.s32.totalorder %v6244, 2
        %v6250 = vxor.u32 %v6240, 2147483648
        %v6251 = vsel %vm6249, %v6250, %v6241
        %v6252 = vsel %vm6245, %v6248, %v6251
        %v6253 = vsel %vm6242, nan, %v6252
        %v6254 = vand.u32 2147483647, %v3718
        %vm6255 = vcmp.le.f32.partialorder %v6254, 0.7853982
        %vm6256 = vcmp.lt.s32.totalorder %v3718, 0
        %v6257 = vand.u32 %v3718, 2139095040
        %v6258 = vshrl.u32 %v6257, 23
        %v6259 = vsub.s32 %v6258, 127
        %v6260 = vand.u32 2147483647, %v3718
        %v6261 = vand.u32 %v6260, 8388607
        %v6262 = vor.u32 %v6261, 8388608
        %v6263 = vsub.s32 0, %v6262
        %v6264 = vadd.s32 %v6259, 1
        %vm6265 = vcmp.gt.s32.totalorder %v6264, 0
        %v6266 = vsel %vm6265, %v6264, 0
        %v6267 = vshrl.u32 %v6266, 5
        %v6268 = vand.u32 %v6266, 31
        %v6269 = vsub.s32 32, %v6268
        %v6270 = vshrl.u32 683565275, %v6269
        %v6271 = vshll.u32 683565275, %v6268
        %v6272 = vshrl.u32 2475754826, %v6269
        %v6273 = vor.u32 %v6271, %v6272
        %v6274 = vshll.u32 2475754826, %v6268
        %v6275 = vshrl.u32 2131351028, %v6269
        %v6276 = vor.u32 %v6274, %v6275
        %v6277 = vshll.u32 2131351028, %v6268
        %v6278 = vshrl.u32 2102212464, %v6269
        %v6279 = vor.u32 %v6277, %v6278
        %v6280 = vshll.u32 2102212464, %v6268
        %v6281 = vshrl.u32 920167782, %v6269
        %v6282 = vor.u32 %v6280, %v6281
        %v6283 = vshll.u32 920167782, %v6268
        %v6284 = vshrl.u32 1326507024, %v6269
        %v6285 = vor.u32 %v6283, %v6284
        %vm6286 = vcmp.lt.s32.totalorder %v6267, 1
        %vm6287 = vcmp.lt.s32.totalorder %v6267, 2
        %vm6288 = vcmp.lt.s32.totalorder %v6267, 3
        %vm6289 = vcmp.lt.s32.totalorder %v6267, 4
        %v6290 = vsel %vm6286, %v6270, %v6273
        %v6291 = vsel %vm6289, %v6279, 2102212464
        %v6292 = vsel %vm6288, %v6276, %v6291
        %v6293 = vsel %vm6287, %v6290, %v6292
        %v6294 = vsel %vm6286, %v6273, %v6276
        %v6295 = vsel %vm6289, %v6282, 920167782
        %v6296 = vsel %vm6288, %v6279, %v6295
        %v6297 = vsel %vm6287, %v6294, %v6296
        %v6298 = vsel %vm6286, %v6276, %v6279
        %v6299 = vsel %vm6289, %v6285, 1326507024
        %v6300 = vsel %vm6288, %v6282, %v6299
        %v6301 = vsel %vm6287, %v6298, %v6300
        %v6302 = vshll.u32 %v6262, 8
        %v6303 = vmul.u32.u64.compose %v6302, %v6301
        %v6304 = vextract.low.u32 %v6303
        %v6305 = vextract.high.u32 %v6303
        %v6306 = vmul.u32.u64.compose %v6302, %v6297
        %v6307 = vextract.low.u32 %v6306
        %v6308 = vextract.high.u32 %v6306
        %v6309 = vmul.u32 %v6302, %v6293
        %v6310 = vadd.s32 %v6305, %v6307
        %vm6311 = vc.u32 %v6305, %v6307
        %v6312 = vadd.s32 %v6308, 1
        %v6313 = vsel %vm6311, %v6312, %v6308
        %v6314 = vadd.s32 %v6309, %v6313
        %v6315 = vadd.s32 %v6314, 536870912
        %v6316 = vshrl.u32 %v6315, 30
        %v6317 = vshll.u32 %v6316, 30
        %v6318 = vsub.s32 %v6314, %v6317
        %vm6319 = vcmp.lt.s32.totalorder %v6318, 0
        %v6320 = vsub.s32 0, %v6318
        %v6321 = vsel %vm6319, %v6320, %v6318
        %v6322 = vclz %v6321
        %v6323 = vsub.s32 %v6322, 2
        %vm6324 = vcmp.gt.s32.totalorder 0, %v6323
        %v6325 = vsel %vm6324, 0, %v6323
        %v6326 = vsub.s32 32, %v6325
        %v6327 = vshll.u32 %v6318, %v6325
        %v6328 = vshrl.u32 %v6310, %v6326
        %v6329 = vor.u32 %v6327, %v6328
        %v6330 = vsub.s32 4294967266, %v6325
        %v6331 = vadd.s32 %v6330, 127
        %v6332 = vshll.u32 %v6331, 23
        %v6333 = vor.u32 4788187, %v6332
        %v6334 = vand.u32 2147483647, %v6333
        %v6336 = vcvt.s32.f32 %v6329
        %v6337 = vmul.f32 %v6336, %v6334
        %v6338 = vxor.u32 %v6337, 2147483648
        %v6339 = vsel %vm6256, %v6338, %v6337
        %v6340 = vsub.s32 4, %v6316
        %v6341 = vsel %vm6256, %v6340, %v6316
        %v6342 = vsel %vm6255, %v3718, %v6339
        %v6343 = vsel %vm6255, 0, %v6341
        %v6344 = vcosq.f32.pop %v6342
        %v6345 = vsinq.f32.pop %v6342
        %vm6346 = vweird.f32 %v3718
        %v6347 = vadd.s32 %v6343, 3
        %v6348 = vand.u32 %v6347, 3
        %vm6349 = vcmp.lt.s32.totalorder %v6348, 2
        %vm6350 = vcmp.eq.s32.totalorder %v6348, 0
        %v6351 = vxor.u32 %v6345, 2147483648
        %v6352 = vsel %vm6350, %v6344, %v6351
        %vm6353 = vcmp.eq.s32.totalorder %v6348, 2
        %v6354 = vxor.u32 %v6344, 2147483648
        %v6355 = vsel %vm6353, %v6354, %v6345
        %v6356 = vsel %vm6349, %v6352, %v6355
        %v6357 = vsel %vm6346, nan, %v6356
        %v6358 = vand.u32 2147483647, %v3719
        %vm6359 = vcmp.le.f32.partialorder %v6358, 0.7853982
        %vm6360 = vcmp.lt.s32.totalorder %v3719, 0
        %v6361 = vand.u32 %v3719, 2139095040
        %v6362 = vshrl.u32 %v6361, 23
        %v6363 = vsub.s32 %v6362, 127
        %v6364 = vand.u32 2147483647, %v3719
        %v6365 = vand.u32 %v6364, 8388607
        %v6366 = vor.u32 %v6365, 8388608
        %v6367 = vsub.s32 0, %v6366
        %v6368 = vadd.s32 %v6363, 1
        %vm6369 = vcmp.gt.s32.totalorder %v6368, 0
        %v6370 = vsel %vm6369, %v6368, 0
        %v6371 = vshrl.u32 %v6370, 5
        %v6372 = vand.u32 %v6370, 31
        %v6373 = vsub.s32 32, %v6372
        %v6374 = vshrl.u32 683565275, %v6373
        %v6375 = vshll.u32 683565275, %v6372
        %v6376 = vshrl.u32 2475754826, %v6373
        %v6377 = vor.u32 %v6375, %v6376
        %v6378 = vshll.u32 2475754826, %v6372
        %v6379 = vshrl.u32 2131351028, %v6373
        %v6380 = vor.u32 %v6378, %v6379
        %v6381 = vshll.u32 2131351028, %v6372
        %v6382 = vshrl.u32 2102212464, %v6373
        %v6383 = vor.u32 %v6381, %v6382
        %v6384 = vshll.u32 2102212464, %v6372
        %v6385 = vshrl.u32 920167782, %v6373
        %v6386 = vor.u32 %v6384, %v6385
        %v6387 = vshll.u32 920167782, %v6372
        %v6388 = vshrl.u32 1326507024, %v6373
        %v6389 = vor.u32 %v6387, %v6388
        %vm6390 = vcmp.lt.s32.totalorder %v6371, 1
        %vm6391 = vcmp.lt.s32.totalorder %v6371, 2
        %vm6392 = vcmp.lt.s32.totalorder %v6371, 3
        %vm6393 = vcmp.lt.s32.totalorder %v6371, 4
        %v6394 = vsel %vm6390, %v6374, %v6377
        %v6395 = vsel %vm6393, %v6383, 2102212464
        %v6396 = vsel %vm6392, %v6380, %v6395
        %v6397 = vsel %vm6391, %v6394, %v6396
        %v6398 = vsel %vm6390, %v6377, %v6380
        %v6399 = vsel %vm6393, %v6386, 920167782
        %v6400 = vsel %vm6392, %v6383, %v6399
        %v6401 = vsel %vm6391, %v6398, %v6400
        %v6402 = vsel %vm6390, %v6380, %v6383
        %v6403 = vsel %vm6393, %v6389, 1326507024
        %v6404 = vsel %vm6392, %v6386, %v6403
        %v6405 = vsel %vm6391, %v6402, %v6404
        %v6406 = vshll.u32 %v6366, 8
        %v6407 = vmul.u32.u64.compose %v6406, %v6405
        %v6408 = vextract.low.u32 %v6407
        %v6409 = vextract.high.u32 %v6407
        %v6410 = vmul.u32.u64.compose %v6406, %v6401
        %v6411 = vextract.low.u32 %v6410
        %v6412 = vextract.high.u32 %v6410
        %v6413 = vmul.u32 %v6406, %v6397
        %v6414 = vadd.s32 %v6409, %v6411
        %vm6415 = vc.u32 %v6409, %v6411
        %v6416 = vadd.s32 %v6412, 1
        %v6417 = vsel %vm6415, %v6416, %v6412
        %v6418 = vadd.s32 %v6413, %v6417
        %v6419 = vadd.s32 %v6418, 536870912
        %v6420 = vshrl.u32 %v6419, 30
        %v6421 = vshll.u32 %v6420, 30
        %v6422 = vsub.s32 %v6418, %v6421
        %vm6423 = vcmp.lt.s32.totalorder %v6422, 0
        %v6424 = vsub.s32 0, %v6422
        %v6425 = vsel %vm6423, %v6424, %v6422
        %v6426 = vclz %v6425
        %v6427 = vsub.s32 %v6426, 2
        %vm6428 = vcmp.gt.s32.totalorder 0, %v6427
        %v6429 = vsel %vm6428, 0, %v6427
        %v6430 = vsub.s32 32, %v6429
        %v6431 = vshll.u32 %v6422, %v6429
        %v6432 = vshrl.u32 %v6414, %v6430
        %v6433 = vor.u32 %v6431, %v6432
        %v6434 = vsub.s32 4294967266, %v6429
        %v6435 = vadd.s32 %v6434, 127
        %v6436 = vshll.u32 %v6435, 23
        %v6437 = vor.u32 4788187, %v6436
        %v6438 = vand.u32 2147483647, %v6437
        %v6440 = vcvt.s32.f32 %v6433
        %v6441 = vmul.f32 %v6440, %v6438
        %v6442 = vxor.u32 %v6441, 2147483648
        %v6443 = vsel %vm6360, %v6442, %v6441
        %v6444 = vsub.s32 4, %v6420
        %v6445 = vsel %vm6360, %v6444, %v6420
        %v6446 = vsel %vm6359, %v3719, %v6443
        %v6447 = vsel %vm6359, 0, %v6445
        %v6448 = vcosq.f32.pop %v6446
        %v6449 = vsinq.f32.pop %v6446
        %vm6450 = vweird.f32 %v3719
        %v6451 = vadd.s32 %v6447, 3
        %v6452 = vand.u32 %v6451, 3
        %vm6453 = vcmp.lt.s32.totalorder %v6452, 2
        %vm6454 = vcmp.eq.s32.totalorder %v6452, 0
        %v6455 = vxor.u32 %v6449, 2147483648
        %v6456 = vsel %vm6454, %v6448, %v6455
        %vm6457 = vcmp.eq.s32.totalorder %v6452, 2
        %v6458 = vxor.u32 %v6448, 2147483648
        %v6459 = vsel %vm6457, %v6458, %v6449
        %v6460 = vsel %vm6453, %v6456, %v6459
        %v6461 = vsel %vm6450, nan, %v6460
        %v6462 = vand.u32 2147483647, %v3720
        %vm6463 = vcmp.le.f32.partialorder %v6462, 0.7853982
        %vm6464 = vcmp.lt.s32.totalorder %v3720, 0
        %v6465 = vand.u32 %v3720, 2139095040
        %v6466 = vshrl.u32 %v6465, 23
        %v6467 = vsub.s32 %v6466, 127
        %v6468 = vand.u32 2147483647, %v3720
        %v6469 = vand.u32 %v6468, 8388607
        %v6470 = vor.u32 %v6469, 8388608
        %v6471 = vsub.s32 0, %v6470
        %v6472 = vadd.s32 %v6467, 1
        %vm6473 = vcmp.gt.s32.totalorder %v6472, 0
        %v6474 = vsel %vm6473, %v6472, 0
        %v6475 = vshrl.u32 %v6474, 5
        %v6476 = vand.u32 %v6474, 31
        %v6477 = vsub.s32 32, %v6476
        %v6478 = vshrl.u32 683565275, %v6477
        %v6479 = vshll.u32 683565275, %v6476
        %v6480 = vshrl.u32 2475754826, %v6477
        %v6481 = vor.u32 %v6479, %v6480
        %v6482 = vshll.u32 2475754826, %v6476
        %v6483 = vshrl.u32 2131351028, %v6477
        %v6484 = vor.u32 %v6482, %v6483
        %v6485 = vshll.u32 2131351028, %v6476
        %v6486 = vshrl.u32 2102212464, %v6477
        %v6487 = vor.u32 %v6485, %v6486
        %v6488 = vshll.u32 2102212464, %v6476
        %v6489 = vshrl.u32 920167782, %v6477
        %v6490 = vor.u32 %v6488, %v6489
        %v6491 = vshll.u32 920167782, %v6476
        %v6492 = vshrl.u32 1326507024, %v6477
        %v6493 = vor.u32 %v6491, %v6492
        %vm6494 = vcmp.lt.s32.totalorder %v6475, 1
        %vm6495 = vcmp.lt.s32.totalorder %v6475, 2
        %vm6496 = vcmp.lt.s32.totalorder %v6475, 3
        %vm6497 = vcmp.lt.s32.totalorder %v6475, 4
        %v6498 = vsel %vm6494, %v6478, %v6481
        %v6499 = vsel %vm6497, %v6487, 2102212464
        %v6500 = vsel %vm6496, %v6484, %v6499
        %v6501 = vsel %vm6495, %v6498, %v6500
        %v6502 = vsel %vm6494, %v6481, %v6484
        %v6503 = vsel %vm6497, %v6490, 920167782
        %v6504 = vsel %vm6496, %v6487, %v6503
        %v6505 = vsel %vm6495, %v6502, %v6504
        %v6506 = vsel %vm6494, %v6484, %v6487
        %v6507 = vsel %vm6497, %v6493, 1326507024
        %v6508 = vsel %vm6496, %v6490, %v6507
        %v6509 = vsel %vm6495, %v6506, %v6508
        %v6510 = vshll.u32 %v6470, 8
        %v6511 = vmul.u32.u64.compose %v6510, %v6509
        %v6512 = vextract.low.u32 %v6511
        %v6513 = vextract.high.u32 %v6511
        %v6514 = vmul.u32.u64.compose %v6510, %v6505
        %v6515 = vextract.low.u32 %v6514
        %v6516 = vextract.high.u32 %v6514
        %v6517 = vmul.u32 %v6510, %v6501
        %v6518 = vadd.s32 %v6513, %v6515
        %vm6519 = vc.u32 %v6513, %v6515
        %v6520 = vadd.s32 %v6516, 1
        %v6521 = vsel %vm6519, %v6520, %v6516
        %v6522 = vadd.s32 %v6517, %v6521
        %v6523 = vadd.s32 %v6522, 536870912
        %v6524 = vshrl.u32 %v6523, 30
        %v6525 = vshll.u32 %v6524, 30
        %v6526 = vsub.s32 %v6522, %v6525
        %vm6527 = vcmp.lt.s32.totalorder %v6526, 0
        %v6528 = vsub.s32 0, %v6526
        %v6529 = vsel %vm6527, %v6528, %v6526
        %v6530 = vclz %v6529
        %v6531 = vsub.s32 %v6530, 2
        %vm6532 = vcmp.gt.s32.totalorder 0, %v6531
        %v6533 = vsel %vm6532, 0, %v6531
        %v6534 = vsub.s32 32, %v6533
        %v6535 = vshll.u32 %v6526, %v6533
        %v6536 = vshrl.u32 %v6518, %v6534
        %v6537 = vor.u32 %v6535, %v6536
        %v6538 = vsub.s32 4294967266, %v6533
        %v6539 = vadd.s32 %v6538, 127
        %v6540 = vshll.u32 %v6539, 23
        %v6541 = vor.u32 4788187, %v6540
        %v6542 = vand.u32 2147483647, %v6541
        %v6544 = vcvt.s32.f32 %v6537
        %v6545 = vmul.f32 %v6544, %v6542
        %v6546 = vxor.u32 %v6545, 2147483648
        %v6547 = vsel %vm6464, %v6546, %v6545
        %v6548 = vsub.s32 4, %v6524
        %v6549 = vsel %vm6464, %v6548, %v6524
        %v6550 = vsel %vm6463, %v3720, %v6547
        %v6551 = vsel %vm6463, 0, %v6549
        %v6552 = vcosq.f32.pop %v6550
        %v6553 = vsinq.f32.pop %v6550
        %vm6554 = vweird.f32 %v3720
        %v6555 = vadd.s32 %v6551, 3
        %v6556 = vand.u32 %v6555, 3
        %vm6557 = vcmp.lt.s32.totalorder %v6556, 2
        %vm6558 = vcmp.eq.s32.totalorder %v6556, 0
        %v6559 = vxor.u32 %v6553, 2147483648
        %v6560 = vsel %vm6558, %v6552, %v6559
        %vm6561 = vcmp.eq.s32.totalorder %v6556, 2
        %v6562 = vxor.u32 %v6552, 2147483648
        %v6563 = vsel %vm6561, %v6562, %v6553
        %v6564 = vsel %vm6557, %v6560, %v6563
        %v6565 = vsel %vm6554, nan, %v6564
        %v6566 = vand.u32 2147483647, %v3721
        %vm6567 = vcmp.le.f32.partialorder %v6566, 0.7853982
        %vm6568 = vcmp.lt.s32.totalorder %v3721, 0
        %v6569 = vand.u32 %v3721, 2139095040
        %v6570 = vshrl.u32 %v6569, 23
        %v6571 = vsub.s32 %v6570, 127
        %v6572 = vand.u32 2147483647, %v3721
        %v6573 = vand.u32 %v6572, 8388607
        %v6574 = vor.u32 %v6573, 8388608
        %v6575 = vsub.s32 0, %v6574
        %v6576 = vadd.s32 %v6571, 1
        %vm6577 = vcmp.gt.s32.totalorder %v6576, 0
        %v6578 = vsel %vm6577, %v6576, 0
        %v6579 = vshrl.u32 %v6578, 5
        %v6580 = vand.u32 %v6578, 31
        %v6581 = vsub.s32 32, %v6580
        %v6582 = vshrl.u32 683565275, %v6581
        %v6583 = vshll.u32 683565275, %v6580
        %v6584 = vshrl.u32 2475754826, %v6581
        %v6585 = vor.u32 %v6583, %v6584
        %v6586 = vshll.u32 2475754826, %v6580
        %v6587 = vshrl.u32 2131351028, %v6581
        %v6588 = vor.u32 %v6586, %v6587
        %v6589 = vshll.u32 2131351028, %v6580
        %v6590 = vshrl.u32 2102212464, %v6581
        %v6591 = vor.u32 %v6589, %v6590
        %v6592 = vshll.u32 2102212464, %v6580
        %v6593 = vshrl.u32 920167782, %v6581
        %v6594 = vor.u32 %v6592, %v6593
        %v6595 = vshll.u32 920167782, %v6580
        %v6596 = vshrl.u32 1326507024, %v6581
        %v6597 = vor.u32 %v6595, %v6596
        %vm6598 = vcmp.lt.s32.totalorder %v6579, 1
        %vm6599 = vcmp.lt.s32.totalorder %v6579, 2
        %vm6600 = vcmp.lt.s32.totalorder %v6579, 3
        %vm6601 = vcmp.lt.s32.totalorder %v6579, 4
        %v6602 = vsel %vm6598, %v6582, %v6585
        %v6603 = vsel %vm6601, %v6591, 2102212464
        %v6604 = vsel %vm6600, %v6588, %v6603
        %v6605 = vsel %vm6599, %v6602, %v6604
        %v6606 = vsel %vm6598, %v6585, %v6588
        %v6607 = vsel %vm6601, %v6594, 920167782
        %v6608 = vsel %vm6600, %v6591, %v6607
        %v6609 = vsel %vm6599, %v6606, %v6608
        %v6610 = vsel %vm6598, %v6588, %v6591
        %v6611 = vsel %vm6601, %v6597, 1326507024
        %v6612 = vsel %vm6600, %v6594, %v6611
        %v6613 = vsel %vm6599, %v6610, %v6612
        %v6614 = vshll.u32 %v6574, 8
        %v6615 = vmul.u32.u64.compose %v6614, %v6613
        %v6616 = vextract.low.u32 %v6615
        %v6617 = vextract.high.u32 %v6615
        %v6618 = vmul.u32.u64.compose %v6614, %v6609
        %v6619 = vextract.low.u32 %v6618
        %v6620 = vextract.high.u32 %v6618
        %v6621 = vmul.u32 %v6614, %v6605
        %v6622 = vadd.s32 %v6617, %v6619
        %vm6623 = vc.u32 %v6617, %v6619
        %v6624 = vadd.s32 %v6620, 1
        %v6625 = vsel %vm6623, %v6624, %v6620
        %v6626 = vadd.s32 %v6621, %v6625
        %v6627 = vadd.s32 %v6626, 536870912
        %v6628 = vshrl.u32 %v6627, 30
        %v6629 = vshll.u32 %v6628, 30
        %v6630 = vsub.s32 %v6626, %v6629
        %vm6631 = vcmp.lt.s32.totalorder %v6630, 0
        %v6632 = vsub.s32 0, %v6630
        %v6633 = vsel %vm6631, %v6632, %v6630
        %v6634 = vclz %v6633
        %v6635 = vsub.s32 %v6634, 2
        %vm6636 = vcmp.gt.s32.totalorder 0, %v6635
        %v6637 = vsel %vm6636, 0, %v6635
        %v6638 = vsub.s32 32, %v6637
        %v6639 = vshll.u32 %v6630, %v6637
        %v6640 = vshrl.u32 %v6622, %v6638
        %v6641 = vor.u32 %v6639, %v6640
        %v6642 = vsub.s32 4294967266, %v6637
        %v6643 = vadd.s32 %v6642, 127
        %v6644 = vshll.u32 %v6643, 23
        %v6645 = vor.u32 4788187, %v6644
        %v6646 = vand.u32 2147483647, %v6645
        %v6648 = vcvt.s32.f32 %v6641
        %v6649 = vmul.f32 %v6648, %v6646
        %v6650 = vxor.u32 %v6649, 2147483648
        %v6651 = vsel %vm6568, %v6650, %v6649
        %v6652 = vsub.s32 4, %v6628
        %v6653 = vsel %vm6568, %v6652, %v6628
        %v6654 = vsel %vm6567, %v3721, %v6651
        %v6655 = vsel %vm6567, 0, %v6653
        %v6656 = vcosq.f32.pop %v6654
        %v6657 = vsinq.f32.pop %v6654
        %vm6658 = vweird.f32 %v3721
        %v6659 = vadd.s32 %v6655, 3
        %v6660 = vand.u32 %v6659, 3
        %vm6661 = vcmp.lt.s32.totalorder %v6660, 2
        %vm6662 = vcmp.eq.s32.totalorder %v6660, 0
        %v6663 = vxor.u32 %v6657, 2147483648
        %v6664 = vsel %vm6662, %v6656, %v6663
        %vm6665 = vcmp.eq.s32.totalorder %v6660, 2
        %v6666 = vxor.u32 %v6656, 2147483648
        %v6667 = vsel %vm6665, %v6666, %v6657
        %v6668 = vsel %vm6661, %v6664, %v6667
        %v6669 = vsel %vm6658, nan, %v6668
        %v6670 = vand.u32 2147483647, %v3722
        %vm6671 = vcmp.le.f32.partialorder %v6670, 0.7853982
        %vm6672 = vcmp.lt.s32.totalorder %v3722, 0
        %v6673 = vand.u32 %v3722, 2139095040
        %v6674 = vshrl.u32 %v6673, 23
        %v6675 = vsub.s32 %v6674, 127
        %v6676 = vand.u32 2147483647, %v3722
        %v6677 = vand.u32 %v6676, 8388607
        %v6678 = vor.u32 %v6677, 8388608
        %v6679 = vsub.s32 0, %v6678
        %v6680 = vadd.s32 %v6675, 1
        %vm6681 = vcmp.gt.s32.totalorder %v6680, 0
        %v6682 = vsel %vm6681, %v6680, 0
        %v6683 = vshrl.u32 %v6682, 5
        %v6684 = vand.u32 %v6682, 31
        %v6685 = vsub.s32 32, %v6684
        %v6686 = vshrl.u32 683565275, %v6685
        %v6687 = vshll.u32 683565275, %v6684
        %v6688 = vshrl.u32 2475754826, %v6685
        %v6689 = vor.u32 %v6687, %v6688
        %v6690 = vshll.u32 2475754826, %v6684
        %v6691 = vshrl.u32 2131351028, %v6685
        %v6692 = vor.u32 %v6690, %v6691
        %v6693 = vshll.u32 2131351028, %v6684
        %v6694 = vshrl.u32 2102212464, %v6685
        %v6695 = vor.u32 %v6693, %v6694
        %v6696 = vshll.u32 2102212464, %v6684
        %v6697 = vshrl.u32 920167782, %v6685
        %v6698 = vor.u32 %v6696, %v6697
        %v6699 = vshll.u32 920167782, %v6684
        %v6700 = vshrl.u32 1326507024, %v6685
        %v6701 = vor.u32 %v6699, %v6700
        %vm6702 = vcmp.lt.s32.totalorder %v6683, 1
        %vm6703 = vcmp.lt.s32.totalorder %v6683, 2
        %vm6704 = vcmp.lt.s32.totalorder %v6683, 3
        %vm6705 = vcmp.lt.s32.totalorder %v6683, 4
        %v6706 = vsel %vm6702, %v6686, %v6689
        %v6707 = vsel %vm6705, %v6695, 2102212464
        %v6708 = vsel %vm6704, %v6692, %v6707
        %v6709 = vsel %vm6703, %v6706, %v6708
        %v6710 = vsel %vm6702, %v6689, %v6692
        %v6711 = vsel %vm6705, %v6698, 920167782
        %v6712 = vsel %vm6704, %v6695, %v6711
        %v6713 = vsel %vm6703, %v6710, %v6712
        %v6714 = vsel %vm6702, %v6692, %v6695
        %v6715 = vsel %vm6705, %v6701, 1326507024
        %v6716 = vsel %vm6704, %v6698, %v6715
        %v6717 = vsel %vm6703, %v6714, %v6716
        %v6718 = vshll.u32 %v6678, 8
        %v6719 = vmul.u32.u64.compose %v6718, %v6717
        %v6720 = vextract.low.u32 %v6719
        %v6721 = vextract.high.u32 %v6719
        %v6722 = vmul.u32.u64.compose %v6718, %v6713
        %v6723 = vextract.low.u32 %v6722
        %v6724 = vextract.high.u32 %v6722
        %v6725 = vmul.u32 %v6718, %v6709
        %v6726 = vadd.s32 %v6721, %v6723
        %vm6727 = vc.u32 %v6721, %v6723
        %v6728 = vadd.s32 %v6724, 1
        %v6729 = vsel %vm6727, %v6728, %v6724
        %v6730 = vadd.s32 %v6725, %v6729
        %v6731 = vadd.s32 %v6730, 536870912
        %v6732 = vshrl.u32 %v6731, 30
        %v6733 = vshll.u32 %v6732, 30
        %v6734 = vsub.s32 %v6730, %v6733
        %vm6735 = vcmp.lt.s32.totalorder %v6734, 0
        %v6736 = vsub.s32 0, %v6734
        %v6737 = vsel %vm6735, %v6736, %v6734
        %v6738 = vclz %v6737
        %v6739 = vsub.s32 %v6738, 2
        %vm6740 = vcmp.gt.s32.totalorder 0, %v6739
        %v6741 = vsel %vm6740, 0, %v6739
        %v6742 = vsub.s32 32, %v6741
        %v6743 = vshll.u32 %v6734, %v6741
        %v6744 = vshrl.u32 %v6726, %v6742
        %v6745 = vor.u32 %v6743, %v6744
        %v6746 = vsub.s32 4294967266, %v6741
        %v6747 = vadd.s32 %v6746, 127
        %v6748 = vshll.u32 %v6747, 23
        %v6749 = vor.u32 4788187, %v6748
        %v6750 = vand.u32 2147483647, %v6749
        %v6752 = vcvt.s32.f32 %v6745
        %v6753 = vmul.f32 %v6752, %v6750
        %v6754 = vxor.u32 %v6753, 2147483648
        %v6755 = vsel %vm6672, %v6754, %v6753
        %v6756 = vsub.s32 4, %v6732
        %v6757 = vsel %vm6672, %v6756, %v6732
        %v6758 = vsel %vm6671, %v3722, %v6755
        %v6759 = vsel %vm6671, 0, %v6757
        %v6760 = vcosq.f32.pop %v6758
        %v6761 = vsinq.f32.pop %v6758
        %vm6762 = vweird.f32 %v3722
        %v6763 = vadd.s32 %v6759, 3
        %v6764 = vand.u32 %v6763, 3
        %vm6765 = vcmp.lt.s32.totalorder %v6764, 2
        %vm6766 = vcmp.eq.s32.totalorder %v6764, 0
        %v6767 = vxor.u32 %v6761, 2147483648
        %v6768 = vsel %vm6766, %v6760, %v6767
        %vm6769 = vcmp.eq.s32.totalorder %v6764, 2
        %v6770 = vxor.u32 %v6760, 2147483648
        %v6771 = vsel %vm6769, %v6770, %v6761
        %v6772 = vsel %vm6765, %v6768, %v6771
        %v6773 = vsel %vm6762, nan, %v6772
        %v6774 = vand.u32 2147483647, %v3723
        %vm6775 = vcmp.le.f32.partialorder %v6774, 0.7853982
        %vm6776 = vcmp.lt.s32.totalorder %v3723, 0
        %v6777 = vand.u32 %v3723, 2139095040
        %v6778 = vshrl.u32 %v6777, 23
        %v6779 = vsub.s32 %v6778, 127
        %v6780 = vand.u32 2147483647, %v3723
        %v6781 = vand.u32 %v6780, 8388607
        %v6782 = vor.u32 %v6781, 8388608
        %v6783 = vsub.s32 0, %v6782
        %v6784 = vadd.s32 %v6779, 1
        %vm6785 = vcmp.gt.s32.totalorder %v6784, 0
        %v6786 = vsel %vm6785, %v6784, 0
        %v6787 = vshrl.u32 %v6786, 5
        %v6788 = vand.u32 %v6786, 31
        %v6789 = vsub.s32 32, %v6788
        %v6790 = vshrl.u32 683565275, %v6789
        %v6791 = vshll.u32 683565275, %v6788
        %v6792 = vshrl.u32 2475754826, %v6789
        %v6793 = vor.u32 %v6791, %v6792
        %v6794 = vshll.u32 2475754826, %v6788
        %v6795 = vshrl.u32 2131351028, %v6789
        %v6796 = vor.u32 %v6794, %v6795
        %v6797 = vshll.u32 2131351028, %v6788
        %v6798 = vshrl.u32 2102212464, %v6789
        %v6799 = vor.u32 %v6797, %v6798
        %v6800 = vshll.u32 2102212464, %v6788
        %v6801 = vshrl.u32 920167782, %v6789
        %v6802 = vor.u32 %v6800, %v6801
        %v6803 = vshll.u32 920167782, %v6788
        %v6804 = vshrl.u32 1326507024, %v6789
        %v6805 = vor.u32 %v6803, %v6804
        %vm6806 = vcmp.lt.s32.totalorder %v6787, 1
        %vm6807 = vcmp.lt.s32.totalorder %v6787, 2
        %vm6808 = vcmp.lt.s32.totalorder %v6787, 3
        %vm6809 = vcmp.lt.s32.totalorder %v6787, 4
        %v6810 = vsel %vm6806, %v6790, %v6793
        %v6811 = vsel %vm6809, %v6799, 2102212464
        %v6812 = vsel %vm6808, %v6796, %v6811
        %v6813 = vsel %vm6807, %v6810, %v6812
        %v6814 = vsel %vm6806, %v6793, %v6796
        %v6815 = vsel %vm6809, %v6802, 920167782
        %v6816 = vsel %vm6808, %v6799, %v6815
        %v6817 = vsel %vm6807, %v6814, %v6816
        %v6818 = vsel %vm6806, %v6796, %v6799
        %v6819 = vsel %vm6809, %v6805, 1326507024
        %v6820 = vsel %vm6808, %v6802, %v6819
        %v6821 = vsel %vm6807, %v6818, %v6820
        %v6822 = vshll.u32 %v6782, 8
        %v6823 = vmul.u32.u64.compose %v6822, %v6821
        %v6824 = vextract.low.u32 %v6823
        %v6825 = vextract.high.u32 %v6823
        %v6826 = vmul.u32.u64.compose %v6822, %v6817
        %v6827 = vextract.low.u32 %v6826
        %v6828 = vextract.high.u32 %v6826
        %v6829 = vmul.u32 %v6822, %v6813
        %v6830 = vadd.s32 %v6825, %v6827
        %vm6831 = vc.u32 %v6825, %v6827
        %v6832 = vadd.s32 %v6828, 1
        %v6833 = vsel %vm6831, %v6832, %v6828
        %v6834 = vadd.s32 %v6829, %v6833
        %v6835 = vadd.s32 %v6834, 536870912
        %v6836 = vshrl.u32 %v6835, 30
        %v6837 = vshll.u32 %v6836, 30
        %v6838 = vsub.s32 %v6834, %v6837
        %vm6839 = vcmp.lt.s32.totalorder %v6838, 0
        %v6840 = vsub.s32 0, %v6838
        %v6841 = vsel %vm6839, %v6840, %v6838
        %v6842 = vclz %v6841
        %v6843 = vsub.s32 %v6842, 2
        %vm6844 = vcmp.gt.s32.totalorder 0, %v6843
        %v6845 = vsel %vm6844, 0, %v6843
        %v6846 = vsub.s32 32, %v6845
        %v6847 = vshll.u32 %v6838, %v6845
        %v6848 = vshrl.u32 %v6830, %v6846
        %v6849 = vor.u32 %v6847, %v6848
        %v6850 = vsub.s32 4294967266, %v6845
        %v6851 = vadd.s32 %v6850, 127
        %v6852 = vshll.u32 %v6851, 23
        %v6853 = vor.u32 4788187, %v6852
        %v6854 = vand.u32 2147483647, %v6853
        %v6856 = vcvt.s32.f32 %v6849
        %v6857 = vmul.f32 %v6856, %v6854
        %v6858 = vxor.u32 %v6857, 2147483648
        %v6859 = vsel %vm6776, %v6858, %v6857
        %v6860 = vsub.s32 4, %v6836
        %v6861 = vsel %vm6776, %v6860, %v6836
        %v6862 = vsel %vm6775, %v3723, %v6859
        %v6863 = vsel %vm6775, 0, %v6861
        %v6864 = vcosq.f32.pop %v6862
        %v6865 = vsinq.f32.pop %v6862
        %vm6866 = vweird.f32 %v3723
        %v6867 = vadd.s32 %v6863, 3
        %v6868 = vand.u32 %v6867, 3
        %vm6869 = vcmp.lt.s32.totalorder %v6868, 2
        %vm6870 = vcmp.eq.s32.totalorder %v6868, 0
        %v6871 = vxor.u32 %v6865, 2147483648
        %v6872 = vsel %vm6870, %v6864, %v6871
        %vm6873 = vcmp.eq.s32.totalorder %v6868, 2
        %v6874 = vxor.u32 %v6864, 2147483648
        %v6875 = vsel %vm6873, %v6874, %v6865
        %v6876 = vsel %vm6869, %v6872, %v6875
        %v6877 = vsel %vm6866, nan, %v6876
        %v6878 = vand.u32 2147483647, %v3724
        %vm6879 = vcmp.le.f32.partialorder %v6878, 0.7853982
        %vm6880 = vcmp.lt.s32.totalorder %v3724, 0
        %v6881 = vand.u32 %v3724, 2139095040
        %v6882 = vshrl.u32 %v6881, 23
        %v6883 = vsub.s32 %v6882, 127
        %v6884 = vand.u32 2147483647, %v3724
        %v6885 = vand.u32 %v6884, 8388607
        %v6886 = vor.u32 %v6885, 8388608
        %v6887 = vsub.s32 0, %v6886
        %v6888 = vadd.s32 %v6883, 1
        %vm6889 = vcmp.gt.s32.totalorder %v6888, 0
        %v6890 = vsel %vm6889, %v6888, 0
        %v6891 = vshrl.u32 %v6890, 5
        %v6892 = vand.u32 %v6890, 31
        %v6893 = vsub.s32 32, %v6892
        %v6894 = vshrl.u32 683565275, %v6893
        %v6895 = vshll.u32 683565275, %v6892
        %v6896 = vshrl.u32 2475754826, %v6893
        %v6897 = vor.u32 %v6895, %v6896
        %v6898 = vshll.u32 2475754826, %v6892
        %v6899 = vshrl.u32 2131351028, %v6893
        %v6900 = vor.u32 %v6898, %v6899
        %v6901 = vshll.u32 2131351028, %v6892
        %v6902 = vshrl.u32 2102212464, %v6893
        %v6903 = vor.u32 %v6901, %v6902
        %v6904 = vshll.u32 2102212464, %v6892
        %v6905 = vshrl.u32 920167782, %v6893
        %v6906 = vor.u32 %v6904, %v6905
        %v6907 = vshll.u32 920167782, %v6892
        %v6908 = vshrl.u32 1326507024, %v6893
        %v6909 = vor.u32 %v6907, %v6908
        %vm6910 = vcmp.lt.s32.totalorder %v6891, 1
        %vm6911 = vcmp.lt.s32.totalorder %v6891, 2
        %vm6912 = vcmp.lt.s32.totalorder %v6891, 3
        %vm6913 = vcmp.lt.s32.totalorder %v6891, 4
        %v6914 = vsel %vm6910, %v6894, %v6897
        %v6915 = vsel %vm6913, %v6903, 2102212464
        %v6916 = vsel %vm6912, %v6900, %v6915
        %v6917 = vsel %vm6911, %v6914, %v6916
        %v6918 = vsel %vm6910, %v6897, %v6900
        %v6919 = vsel %vm6913, %v6906, 920167782
        %v6920 = vsel %vm6912, %v6903, %v6919
        %v6921 = vsel %vm6911, %v6918, %v6920
        %v6922 = vsel %vm6910, %v6900, %v6903
        %v6923 = vsel %vm6913, %v6909, 1326507024
        %v6924 = vsel %vm6912, %v6906, %v6923
        %v6925 = vsel %vm6911, %v6922, %v6924
        %v6926 = vshll.u32 %v6886, 8
        %v6927 = vmul.u32.u64.compose %v6926, %v6925
        %v6928 = vextract.low.u32 %v6927
        %v6929 = vextract.high.u32 %v6927
        %v6930 = vmul.u32.u64.compose %v6926, %v6921
        %v6931 = vextract.low.u32 %v6930
        %v6932 = vextract.high.u32 %v6930
        %v6933 = vmul.u32 %v6926, %v6917
        %v6934 = vadd.s32 %v6929, %v6931
        %vm6935 = vc.u32 %v6929, %v6931
        %v6936 = vadd.s32 %v6932, 1
        %v6937 = vsel %vm6935, %v6936, %v6932
        %v6938 = vadd.s32 %v6933, %v6937
        %v6939 = vadd.s32 %v6938, 536870912
        %v6940 = vshrl.u32 %v6939, 30
        %v6941 = vshll.u32 %v6940, 30
        %v6942 = vsub.s32 %v6938, %v6941
        %vm6943 = vcmp.lt.s32.totalorder %v6942, 0
        %v6944 = vsub.s32 0, %v6942
        %v6945 = vsel %vm6943, %v6944, %v6942
        %v6946 = vclz %v6945
        %v6947 = vsub.s32 %v6946, 2
        %vm6948 = vcmp.gt.s32.totalorder 0, %v6947
        %v6949 = vsel %vm6948, 0, %v6947
        %v6950 = vsub.s32 32, %v6949
        %v6951 = vshll.u32 %v6942, %v6949
        %v6952 = vshrl.u32 %v6934, %v6950
        %v6953 = vor.u32 %v6951, %v6952
        %v6954 = vsub.s32 4294967266, %v6949
        %v6955 = vadd.s32 %v6954, 127
        %v6956 = vshll.u32 %v6955, 23
        %v6957 = vor.u32 4788187, %v6956
        %v6958 = vand.u32 2147483647, %v6957
        %v6960 = vcvt.s32.f32 %v6953
        %v6961 = vmul.f32 %v6960, %v6958
        %v6962 = vxor.u32 %v6961, 2147483648
        %v6963 = vsel %vm6880, %v6962, %v6961
        %v6964 = vsub.s32 4, %v6940
        %v6965 = vsel %vm6880, %v6964, %v6940
        %v6966 = vsel %vm6879, %v3724, %v6963
        %v6967 = vsel %vm6879, 0, %v6965
        %v6968 = vcosq.f32.pop %v6966
        %v6969 = vsinq.f32.pop %v6966
        %vm6970 = vweird.f32 %v3724
        %v6971 = vadd.s32 %v6967, 3
        %v6972 = vand.u32 %v6971, 3
        %vm6973 = vcmp.lt.s32.totalorder %v6972, 2
        %vm6974 = vcmp.eq.s32.totalorder %v6972, 0
        %v6975 = vxor.u32 %v6969, 2147483648
        %v6976 = vsel %vm6974, %v6968, %v6975
        %vm6977 = vcmp.eq.s32.totalorder %v6972, 2
        %v6978 = vxor.u32 %v6968, 2147483648
        %v6979 = vsel %vm6977, %v6978, %v6969
        %v6980 = vsel %vm6973, %v6976, %v6979
        %v6981 = vsel %vm6970, nan, %v6980
        %v6982 = vand.u32 2147483647, %v3725
        %vm6983 = vcmp.le.f32.partialorder %v6982, 0.7853982
        %vm6984 = vcmp.lt.s32.totalorder %v3725, 0
        %v6985 = vand.u32 %v3725, 2139095040
        %v6986 = vshrl.u32 %v6985, 23
        %v6987 = vsub.s32 %v6986, 127
        %v6988 = vand.u32 2147483647, %v3725
        %v6989 = vand.u32 %v6988, 8388607
        %v6990 = vor.u32 %v6989, 8388608
        %v6991 = vsub.s32 0, %v6990
        %v6992 = vadd.s32 %v6987, 1
        %vm6993 = vcmp.gt.s32.totalorder %v6992, 0
        %v6994 = vsel %vm6993, %v6992, 0
        %v6995 = vshrl.u32 %v6994, 5
        %v6996 = vand.u32 %v6994, 31
        %v6997 = vsub.s32 32, %v6996
        %v6998 = vshrl.u32 683565275, %v6997
        %v6999 = vshll.u32 683565275, %v6996
        %v7000 = vshrl.u32 2475754826, %v6997
        %v7001 = vor.u32 %v6999, %v7000
        %v7002 = vshll.u32 2475754826, %v6996
        %v7003 = vshrl.u32 2131351028, %v6997
        %v7004 = vor.u32 %v7002, %v7003
        %v7005 = vshll.u32 2131351028, %v6996
        %v7006 = vshrl.u32 2102212464, %v6997
        %v7007 = vor.u32 %v7005, %v7006
        %v7008 = vshll.u32 2102212464, %v6996
        %v7009 = vshrl.u32 920167782, %v6997
        %v7010 = vor.u32 %v7008, %v7009
        %v7011 = vshll.u32 920167782, %v6996
        %v7012 = vshrl.u32 1326507024, %v6997
        %v7013 = vor.u32 %v7011, %v7012
        %vm7014 = vcmp.lt.s32.totalorder %v6995, 1
        %vm7015 = vcmp.lt.s32.totalorder %v6995, 2
        %vm7016 = vcmp.lt.s32.totalorder %v6995, 3
        %vm7017 = vcmp.lt.s32.totalorder %v6995, 4
        %v7018 = vsel %vm7014, %v6998, %v7001
        %v7019 = vsel %vm7017, %v7007, 2102212464
        %v7020 = vsel %vm7016, %v7004, %v7019
        %v7021 = vsel %vm7015, %v7018, %v7020
        %v7022 = vsel %vm7014, %v7001, %v7004
        %v7023 = vsel %vm7017, %v7010, 920167782
        %v7024 = vsel %vm7016, %v7007, %v7023
        %v7025 = vsel %vm7015, %v7022, %v7024
        %v7026 = vsel %vm7014, %v7004, %v7007
        %v7027 = vsel %vm7017, %v7013, 1326507024
        %v7028 = vsel %vm7016, %v7010, %v7027
        %v7029 = vsel %vm7015, %v7026, %v7028
        %v7030 = vshll.u32 %v6990, 8
        %v7031 = vmul.u32.u64.compose %v7030, %v7029
        %v7032 = vextract.low.u32 %v7031
        %v7033 = vextract.high.u32 %v7031
        %v7034 = vmul.u32.u64.compose %v7030, %v7025
        %v7035 = vextract.low.u32 %v7034
        %v7036 = vextract.high.u32 %v7034
        %v7037 = vmul.u32 %v7030, %v7021
        %v7038 = vadd.s32 %v7033, %v7035
        %vm7039 = vc.u32 %v7033, %v7035
        %v7040 = vadd.s32 %v7036, 1
        %v7041 = vsel %vm7039, %v7040, %v7036
        %v7042 = vadd.s32 %v7037, %v7041
        %v7043 = vadd.s32 %v7042, 536870912
        %v7044 = vshrl.u32 %v7043, 30
        %v7045 = vshll.u32 %v7044, 30
        %v7046 = vsub.s32 %v7042, %v7045
        %vm7047 = vcmp.lt.s32.totalorder %v7046, 0
        %v7048 = vsub.s32 0, %v7046
        %v7049 = vsel %vm7047, %v7048, %v7046
        %v7050 = vclz %v7049
        %v7051 = vsub.s32 %v7050, 2
        %vm7052 = vcmp.gt.s32.totalorder 0, %v7051
        %v7053 = vsel %vm7052, 0, %v7051
        %v7054 = vsub.s32 32, %v7053
        %v7055 = vshll.u32 %v7046, %v7053
        %v7056 = vshrl.u32 %v7038, %v7054
        %v7057 = vor.u32 %v7055, %v7056
        %v7058 = vsub.s32 4294967266, %v7053
        %v7059 = vadd.s32 %v7058, 127
        %v7060 = vshll.u32 %v7059, 23
        %v7061 = vor.u32 4788187, %v7060
        %v7062 = vand.u32 2147483647, %v7061
        %v7064 = vcvt.s32.f32 %v7057
        %v7065 = vmul.f32 %v7064, %v7062
        %v7066 = vxor.u32 %v7065, 2147483648
        %v7067 = vsel %vm6984, %v7066, %v7065
        %v7068 = vsub.s32 4, %v7044
        %v7069 = vsel %vm6984, %v7068, %v7044
        %v7070 = vsel %vm6983, %v3725, %v7067
        %v7071 = vsel %vm6983, 0, %v7069
        %v7072 = vcosq.f32.pop %v7070
        %v7073 = vsinq.f32.pop %v7070
        %vm7074 = vweird.f32 %v3725
        %v7075 = vadd.s32 %v7071, 3
        %v7076 = vand.u32 %v7075, 3
        %vm7077 = vcmp.lt.s32.totalorder %v7076, 2
        %vm7078 = vcmp.eq.s32.totalorder %v7076, 0
        %v7079 = vxor.u32 %v7073, 2147483648
        %v7080 = vsel %vm7078, %v7072, %v7079
        %vm7081 = vcmp.eq.s32.totalorder %v7076, 2
        %v7082 = vxor.u32 %v7072, 2147483648
        %v7083 = vsel %vm7081, %v7082, %v7073
        %v7084 = vsel %vm7077, %v7080, %v7083
        %v7085 = vsel %vm7074, nan, %v7084
        %v7086 = vand.u32 2147483647, %v3726
        %vm7087 = vcmp.le.f32.partialorder %v7086, 0.7853982
        %vm7088 = vcmp.lt.s32.totalorder %v3726, 0
        %v7089 = vand.u32 %v3726, 2139095040
        %v7090 = vshrl.u32 %v7089, 23
        %v7091 = vsub.s32 %v7090, 127
        %v7092 = vand.u32 2147483647, %v3726
        %v7093 = vand.u32 %v7092, 8388607
        %v7094 = vor.u32 %v7093, 8388608
        %v7095 = vsub.s32 0, %v7094
        %v7096 = vadd.s32 %v7091, 1
        %vm7097 = vcmp.gt.s32.totalorder %v7096, 0
        %v7098 = vsel %vm7097, %v7096, 0
        %v7099 = vshrl.u32 %v7098, 5
        %v7100 = vand.u32 %v7098, 31
        %v7101 = vsub.s32 32, %v7100
        %v7102 = vshrl.u32 683565275, %v7101
        %v7103 = vshll.u32 683565275, %v7100
        %v7104 = vshrl.u32 2475754826, %v7101
        %v7105 = vor.u32 %v7103, %v7104
        %v7106 = vshll.u32 2475754826, %v7100
        %v7107 = vshrl.u32 2131351028, %v7101
        %v7108 = vor.u32 %v7106, %v7107
        %v7109 = vshll.u32 2131351028, %v7100
        %v7110 = vshrl.u32 2102212464, %v7101
        %v7111 = vor.u32 %v7109, %v7110
        %v7112 = vshll.u32 2102212464, %v7100
        %v7113 = vshrl.u32 920167782, %v7101
        %v7114 = vor.u32 %v7112, %v7113
        %v7115 = vshll.u32 920167782, %v7100
        %v7116 = vshrl.u32 1326507024, %v7101
        %v7117 = vor.u32 %v7115, %v7116
        %vm7118 = vcmp.lt.s32.totalorder %v7099, 1
        %vm7119 = vcmp.lt.s32.totalorder %v7099, 2
        %vm7120 = vcmp.lt.s32.totalorder %v7099, 3
        %vm7121 = vcmp.lt.s32.totalorder %v7099, 4
        %v7122 = vsel %vm7118, %v7102, %v7105
        %v7123 = vsel %vm7121, %v7111, 2102212464
        %v7124 = vsel %vm7120, %v7108, %v7123
        %v7125 = vsel %vm7119, %v7122, %v7124
        %v7126 = vsel %vm7118, %v7105, %v7108
        %v7127 = vsel %vm7121, %v7114, 920167782
        %v7128 = vsel %vm7120, %v7111, %v7127
        %v7129 = vsel %vm7119, %v7126, %v7128
        %v7130 = vsel %vm7118, %v7108, %v7111
        %v7131 = vsel %vm7121, %v7117, 1326507024
        %v7132 = vsel %vm7120, %v7114, %v7131
        %v7133 = vsel %vm7119, %v7130, %v7132
        %v7134 = vshll.u32 %v7094, 8
        %v7135 = vmul.u32.u64.compose %v7134, %v7133
        %v7136 = vextract.low.u32 %v7135
        %v7137 = vextract.high.u32 %v7135
        %v7138 = vmul.u32.u64.compose %v7134, %v7129
        %v7139 = vextract.low.u32 %v7138
        %v7140 = vextract.high.u32 %v7138
        %v7141 = vmul.u32 %v7134, %v7125
        %v7142 = vadd.s32 %v7137, %v7139
        %vm7143 = vc.u32 %v7137, %v7139
        %v7144 = vadd.s32 %v7140, 1
        %v7145 = vsel %vm7143, %v7144, %v7140
        %v7146 = vadd.s32 %v7141, %v7145
        %v7147 = vadd.s32 %v7146, 536870912
        %v7148 = vshrl.u32 %v7147, 30
        %v7149 = vshll.u32 %v7148, 30
        %v7150 = vsub.s32 %v7146, %v7149
        %vm7151 = vcmp.lt.s32.totalorder %v7150, 0
        %v7152 = vsub.s32 0, %v7150
        %v7153 = vsel %vm7151, %v7152, %v7150
        %v7154 = vclz %v7153
        %v7155 = vsub.s32 %v7154, 2
        %vm7156 = vcmp.gt.s32.totalorder 0, %v7155
        %v7157 = vsel %vm7156, 0, %v7155
        %v7158 = vsub.s32 32, %v7157
        %v7159 = vshll.u32 %v7150, %v7157
        %v7160 = vshrl.u32 %v7142, %v7158
        %v7161 = vor.u32 %v7159, %v7160
        %v7162 = vsub.s32 4294967266, %v7157
        %v7163 = vadd.s32 %v7162, 127
        %v7164 = vshll.u32 %v7163, 23
        %v7165 = vor.u32 4788187, %v7164
        %v7166 = vand.u32 2147483647, %v7165
        %v7168 = vcvt.s32.f32 %v7161
        %v7169 = vmul.f32 %v7168, %v7166
        %v7170 = vxor.u32 %v7169, 2147483648
        %v7171 = vsel %vm7088, %v7170, %v7169
        %v7172 = vsub.s32 4, %v7148
        %v7173 = vsel %vm7088, %v7172, %v7148
        %v7174 = vsel %vm7087, %v3726, %v7171
        %v7175 = vsel %vm7087, 0, %v7173
        %v7176 = vcosq.f32.pop %v7174
        %v7177 = vsinq.f32.pop %v7174
        %vm7178 = vweird.f32 %v3726
        %v7179 = vadd.s32 %v7175, 3
        %v7180 = vand.u32 %v7179, 3
        %vm7181 = vcmp.lt.s32.totalorder %v7180, 2
        %vm7182 = vcmp.eq.s32.totalorder %v7180, 0
        %v7183 = vxor.u32 %v7177, 2147483648
        %v7184 = vsel %vm7182, %v7176, %v7183
        %vm7185 = vcmp.eq.s32.totalorder %v7180, 2
        %v7186 = vxor.u32 %v7176, 2147483648
        %v7187 = vsel %vm7185, %v7186, %v7177
        %v7188 = vsel %vm7181, %v7184, %v7187
        %v7189 = vsel %vm7178, nan, %v7188
        %v7190 = vand.u32 2147483647, %v3727
        %vm7191 = vcmp.le.f32.partialorder %v7190, 0.7853982
        %vm7192 = vcmp.lt.s32.totalorder %v3727, 0
        %v7193 = vand.u32 %v3727, 2139095040
        %v7194 = vshrl.u32 %v7193, 23
        %v7195 = vsub.s32 %v7194, 127
        %v7196 = vand.u32 2147483647, %v3727
        %v7197 = vand.u32 %v7196, 8388607
        %v7198 = vor.u32 %v7197, 8388608
        %v7199 = vsub.s32 0, %v7198
        %v7200 = vadd.s32 %v7195, 1
        %vm7201 = vcmp.gt.s32.totalorder %v7200, 0
        %v7202 = vsel %vm7201, %v7200, 0
        %v7203 = vshrl.u32 %v7202, 5
        %v7204 = vand.u32 %v7202, 31
        %v7205 = vsub.s32 32, %v7204
        %v7206 = vshrl.u32 683565275, %v7205
        %v7207 = vshll.u32 683565275, %v7204
        %v7208 = vshrl.u32 2475754826, %v7205
        %v7209 = vor.u32 %v7207, %v7208
        %v7210 = vshll.u32 2475754826, %v7204
        %v7211 = vshrl.u32 2131351028, %v7205
        %v7212 = vor.u32 %v7210, %v7211
        %v7213 = vshll.u32 2131351028, %v7204
        %v7214 = vshrl.u32 2102212464, %v7205
        %v7215 = vor.u32 %v7213, %v7214
        %v7216 = vshll.u32 2102212464, %v7204
        %v7217 = vshrl.u32 920167782, %v7205
        %v7218 = vor.u32 %v7216, %v7217
        %v7219 = vshll.u32 920167782, %v7204
        %v7220 = vshrl.u32 1326507024, %v7205
        %v7221 = vor.u32 %v7219, %v7220
        %vm7222 = vcmp.lt.s32.totalorder %v7203, 1
        %vm7223 = vcmp.lt.s32.totalorder %v7203, 2
        %vm7224 = vcmp.lt.s32.totalorder %v7203, 3
        %vm7225 = vcmp.lt.s32.totalorder %v7203, 4
        %v7226 = vsel %vm7222, %v7206, %v7209
        %v7227 = vsel %vm7225, %v7215, 2102212464
        %v7228 = vsel %vm7224, %v7212, %v7227
        %v7229 = vsel %vm7223, %v7226, %v7228
        %v7230 = vsel %vm7222, %v7209, %v7212
        %v7231 = vsel %vm7225, %v7218, 920167782
        %v7232 = vsel %vm7224, %v7215, %v7231
        %v7233 = vsel %vm7223, %v7230, %v7232
        %v7234 = vsel %vm7222, %v7212, %v7215
        %v7235 = vsel %vm7225, %v7221, 1326507024
        %v7236 = vsel %vm7224, %v7218, %v7235
        %v7237 = vsel %vm7223, %v7234, %v7236
        %v7238 = vshll.u32 %v7198, 8
        %v7239 = vmul.u32.u64.compose %v7238, %v7237
        %v7240 = vextract.low.u32 %v7239
        %v7241 = vextract.high.u32 %v7239
        %v7242 = vmul.u32.u64.compose %v7238, %v7233
        %v7243 = vextract.low.u32 %v7242
        %v7244 = vextract.high.u32 %v7242
        %v7245 = vmul.u32 %v7238, %v7229
        %v7246 = vadd.s32 %v7241, %v7243
        %vm7247 = vc.u32 %v7241, %v7243
        %v7248 = vadd.s32 %v7244, 1
        %v7249 = vsel %vm7247, %v7248, %v7244
        %v7250 = vadd.s32 %v7245, %v7249
        %v7251 = vadd.s32 %v7250, 536870912
        %v7252 = vshrl.u32 %v7251, 30
        %v7253 = vshll.u32 %v7252, 30
        %v7254 = vsub.s32 %v7250, %v7253
        %vm7255 = vcmp.lt.s32.totalorder %v7254, 0
        %v7256 = vsub.s32 0, %v7254
        %v7257 = vsel %vm7255, %v7256, %v7254
        %v7258 = vclz %v7257
        %v7259 = vsub.s32 %v7258, 2
        %vm7260 = vcmp.gt.s32.totalorder 0, %v7259
        %v7261 = vsel %vm7260, 0, %v7259
        %v7262 = vsub.s32 32, %v7261
        %v7263 = vshll.u32 %v7254, %v7261
        %v7264 = vshrl.u32 %v7246, %v7262
        %v7265 = vor.u32 %v7263, %v7264
        %v7266 = vsub.s32 4294967266, %v7261
        %v7267 = vadd.s32 %v7266, 127
        %v7268 = vshll.u32 %v7267, 23
        %v7269 = vor.u32 4788187, %v7268
        %v7270 = vand.u32 2147483647, %v7269
        %v7272 = vcvt.s32.f32 %v7265
        %v7273 = vmul.f32 %v7272, %v7270
        %v7274 = vxor.u32 %v7273, 2147483648
        %v7275 = vsel %vm7192, %v7274, %v7273
        %v7276 = vsub.s32 4, %v7252
        %v7277 = vsel %vm7192, %v7276, %v7252
        %v7278 = vsel %vm7191, %v3727, %v7275
        %v7279 = vsel %vm7191, 0, %v7277
        %v7280 = vcosq.f32.pop %v7278
        %v7281 = vsinq.f32.pop %v7278
        %vm7282 = vweird.f32 %v3727
        %v7283 = vadd.s32 %v7279, 3
        %v7284 = vand.u32 %v7283, 3
        %vm7285 = vcmp.lt.s32.totalorder %v7284, 2
        %vm7286 = vcmp.eq.s32.totalorder %v7284, 0
        %v7287 = vxor.u32 %v7281, 2147483648
        %v7288 = vsel %vm7286, %v7280, %v7287
        %vm7289 = vcmp.eq.s32.totalorder %v7284, 2
        %v7290 = vxor.u32 %v7280, 2147483648
        %v7291 = vsel %vm7289, %v7290, %v7281
        %v7292 = vsel %vm7285, %v7288, %v7291
        %v7293 = vsel %vm7282, nan, %v7292
        %v7294 = vand.u32 2147483647, %v3728
        %vm7295 = vcmp.le.f32.partialorder %v7294, 0.7853982
        %vm7296 = vcmp.lt.s32.totalorder %v3728, 0
        %v7297 = vand.u32 %v3728, 2139095040
        %v7298 = vshrl.u32 %v7297, 23
        %v7299 = vsub.s32 %v7298, 127
        %v7300 = vand.u32 2147483647, %v3728
        %v7301 = vand.u32 %v7300, 8388607
        %v7302 = vor.u32 %v7301, 8388608
        %v7303 = vsub.s32 0, %v7302
        %v7304 = vadd.s32 %v7299, 1
        %vm7305 = vcmp.gt.s32.totalorder %v7304, 0
        %v7306 = vsel %vm7305, %v7304, 0
        %v7307 = vshrl.u32 %v7306, 5
        %v7308 = vand.u32 %v7306, 31
        %v7309 = vsub.s32 32, %v7308
        %v7310 = vshrl.u32 683565275, %v7309
        %v7311 = vshll.u32 683565275, %v7308
        %v7312 = vshrl.u32 2475754826, %v7309
        %v7313 = vor.u32 %v7311, %v7312
        %v7314 = vshll.u32 2475754826, %v7308
        %v7315 = vshrl.u32 2131351028, %v7309
        %v7316 = vor.u32 %v7314, %v7315
        %v7317 = vshll.u32 2131351028, %v7308
        %v7318 = vshrl.u32 2102212464, %v7309
        %v7319 = vor.u32 %v7317, %v7318
        %v7320 = vshll.u32 2102212464, %v7308
        %v7321 = vshrl.u32 920167782, %v7309
        %v7322 = vor.u32 %v7320, %v7321
        %v7323 = vshll.u32 920167782, %v7308
        %v7324 = vshrl.u32 1326507024, %v7309
        %v7325 = vor.u32 %v7323, %v7324
        %vm7326 = vcmp.lt.s32.totalorder %v7307, 1
        %vm7327 = vcmp.lt.s32.totalorder %v7307, 2
        %vm7328 = vcmp.lt.s32.totalorder %v7307, 3
        %vm7329 = vcmp.lt.s32.totalorder %v7307, 4
        %v7330 = vsel %vm7326, %v7310, %v7313
        %v7331 = vsel %vm7329, %v7319, 2102212464
        %v7332 = vsel %vm7328, %v7316, %v7331
        %v7333 = vsel %vm7327, %v7330, %v7332
        %v7334 = vsel %vm7326, %v7313, %v7316
        %v7335 = vsel %vm7329, %v7322, 920167782
        %v7336 = vsel %vm7328, %v7319, %v7335
        %v7337 = vsel %vm7327, %v7334, %v7336
        %v7338 = vsel %vm7326, %v7316, %v7319
        %v7339 = vsel %vm7329, %v7325, 1326507024
        %v7340 = vsel %vm7328, %v7322, %v7339
        %v7341 = vsel %vm7327, %v7338, %v7340
        %v7342 = vshll.u32 %v7302, 8
        %v7343 = vmul.u32.u64.compose %v7342, %v7341
        %v7344 = vextract.low.u32 %v7343
        %v7345 = vextract.high.u32 %v7343
        %v7346 = vmul.u32.u64.compose %v7342, %v7337
        %v7347 = vextract.low.u32 %v7346
        %v7348 = vextract.high.u32 %v7346
        %v7349 = vmul.u32 %v7342, %v7333
        %v7350 = vadd.s32 %v7345, %v7347
        %vm7351 = vc.u32 %v7345, %v7347
        %v7352 = vadd.s32 %v7348, 1
        %v7353 = vsel %vm7351, %v7352, %v7348
        %v7354 = vadd.s32 %v7349, %v7353
        %v7355 = vadd.s32 %v7354, 536870912
        %v7356 = vshrl.u32 %v7355, 30
        %v7357 = vshll.u32 %v7356, 30
        %v7358 = vsub.s32 %v7354, %v7357
        %vm7359 = vcmp.lt.s32.totalorder %v7358, 0
        %v7360 = vsub.s32 0, %v7358
        %v7361 = vsel %vm7359, %v7360, %v7358
        %v7362 = vclz %v7361
        %v7363 = vsub.s32 %v7362, 2
        %vm7364 = vcmp.gt.s32.totalorder 0, %v7363
        %v7365 = vsel %vm7364, 0, %v7363
        %v7366 = vsub.s32 32, %v7365
        %v7367 = vshll.u32 %v7358, %v7365
        %v7368 = vshrl.u32 %v7350, %v7366
        %v7369 = vor.u32 %v7367, %v7368
        %v7370 = vsub.s32 4294967266, %v7365
        %v7371 = vadd.s32 %v7370, 127
        %v7372 = vshll.u32 %v7371, 23
        %v7373 = vor.u32 4788187, %v7372
        %v7374 = vand.u32 2147483647, %v7373
        %v7376 = vcvt.s32.f32 %v7369
        %v7377 = vmul.f32 %v7376, %v7374
        %v7378 = vxor.u32 %v7377, 2147483648
        %v7379 = vsel %vm7296, %v7378, %v7377
        %v7380 = vsub.s32 4, %v7356
        %v7381 = vsel %vm7296, %v7380, %v7356
        %v7382 = vsel %vm7295, %v3728, %v7379
        %v7383 = vsel %vm7295, 0, %v7381
        %v7384 = vcosq.f32.pop %v7382
        %v7385 = vsinq.f32.pop %v7382
        %vm7386 = vweird.f32 %v3728
        %v7387 = vadd.s32 %v7383, 3
        %v7388 = vand.u32 %v7387, 3
        %vm7389 = vcmp.lt.s32.totalorder %v7388, 2
        %vm7390 = vcmp.eq.s32.totalorder %v7388, 0
        %v7391 = vxor.u32 %v7385, 2147483648
        %v7392 = vsel %vm7390, %v7384, %v7391
        %vm7393 = vcmp.eq.s32.totalorder %v7388, 2
        %v7394 = vxor.u32 %v7384, 2147483648
        %v7395 = vsel %vm7393, %v7394, %v7385
        %v7396 = vsel %vm7389, %v7392, %v7395
        %v7397 = vsel %vm7386, nan, %v7396
        %v7398 = vand.u32 2147483647, %v3729
        %vm7399 = vcmp.le.f32.partialorder %v7398, 0.7853982
        %vm7400 = vcmp.lt.s32.totalorder %v3729, 0
        %v7401 = vand.u32 %v3729, 2139095040
        %v7402 = vshrl.u32 %v7401, 23
        %v7403 = vsub.s32 %v7402, 127
        %v7404 = vand.u32 2147483647, %v3729
        %v7405 = vand.u32 %v7404, 8388607
        %v7406 = vor.u32 %v7405, 8388608
        %v7407 = vsub.s32 0, %v7406
        %v7408 = vadd.s32 %v7403, 1
        %vm7409 = vcmp.gt.s32.totalorder %v7408, 0
        %v7410 = vsel %vm7409, %v7408, 0
        %v7411 = vshrl.u32 %v7410, 5
        %v7412 = vand.u32 %v7410, 31
        %v7413 = vsub.s32 32, %v7412
        %v7414 = vshrl.u32 683565275, %v7413
        %v7415 = vshll.u32 683565275, %v7412
        %v7416 = vshrl.u32 2475754826, %v7413
        %v7417 = vor.u32 %v7415, %v7416
        %v7418 = vshll.u32 2475754826, %v7412
        %v7419 = vshrl.u32 2131351028, %v7413
        %v7420 = vor.u32 %v7418, %v7419
        %v7421 = vshll.u32 2131351028, %v7412
        %v7422 = vshrl.u32 2102212464, %v7413
        %v7423 = vor.u32 %v7421, %v7422
        %v7424 = vshll.u32 2102212464, %v7412
        %v7425 = vshrl.u32 920167782, %v7413
        %v7426 = vor.u32 %v7424, %v7425
        %v7427 = vshll.u32 920167782, %v7412
        %v7428 = vshrl.u32 1326507024, %v7413
        %v7429 = vor.u32 %v7427, %v7428
        %vm7430 = vcmp.lt.s32.totalorder %v7411, 1
        %vm7431 = vcmp.lt.s32.totalorder %v7411, 2
        %vm7432 = vcmp.lt.s32.totalorder %v7411, 3
        %vm7433 = vcmp.lt.s32.totalorder %v7411, 4
        %v7434 = vsel %vm7430, %v7414, %v7417
        %v7435 = vsel %vm7433, %v7423, 2102212464
        %v7436 = vsel %vm7432, %v7420, %v7435
        %v7437 = vsel %vm7431, %v7434, %v7436
        %v7438 = vsel %vm7430, %v7417, %v7420
        %v7439 = vsel %vm7433, %v7426, 920167782
        %v7440 = vsel %vm7432, %v7423, %v7439
        %v7441 = vsel %vm7431, %v7438, %v7440
        %v7442 = vsel %vm7430, %v7420, %v7423
        %v7443 = vsel %vm7433, %v7429, 1326507024
        %v7444 = vsel %vm7432, %v7426, %v7443
        %v7445 = vsel %vm7431, %v7442, %v7444
        %v7446 = vshll.u32 %v7406, 8
        %v7447 = vmul.u32.u64.compose %v7446, %v7445
        %v7448 = vextract.low.u32 %v7447
        %v7449 = vextract.high.u32 %v7447
        %v7450 = vmul.u32.u64.compose %v7446, %v7441
        %v7451 = vextract.low.u32 %v7450
        %v7452 = vextract.high.u32 %v7450
        %v7453 = vmul.u32 %v7446, %v7437
        %v7454 = vadd.s32 %v7449, %v7451
        %vm7455 = vc.u32 %v7449, %v7451
        %v7456 = vadd.s32 %v7452, 1
        %v7457 = vsel %vm7455, %v7456, %v7452
        %v7458 = vadd.s32 %v7453, %v7457
        %v7459 = vadd.s32 %v7458, 536870912
        %v7460 = vshrl.u32 %v7459, 30
        %v7461 = vshll.u32 %v7460, 30
        %v7462 = vsub.s32 %v7458, %v7461
        %vm7463 = vcmp.lt.s32.totalorder %v7462, 0
        %v7464 = vsub.s32 0, %v7462
        %v7465 = vsel %vm7463, %v7464, %v7462
        %v7466 = vclz %v7465
        %v7467 = vsub.s32 %v7466, 2
        %vm7468 = vcmp.gt.s32.totalorder 0, %v7467
        %v7469 = vsel %vm7468, 0, %v7467
        %v7470 = vsub.s32 32, %v7469
        %v7471 = vshll.u32 %v7462, %v7469
        %v7472 = vshrl.u32 %v7454, %v7470
        %v7473 = vor.u32 %v7471, %v7472
        %v7474 = vsub.s32 4294967266, %v7469
        %v7475 = vadd.s32 %v7474, 127
        %v7476 = vshll.u32 %v7475, 23
        %v7477 = vor.u32 4788187, %v7476
        %v7478 = vand.u32 2147483647, %v7477
        %v7480 = vcvt.s32.f32 %v7473
        %v7481 = vmul.f32 %v7480, %v7478
        %v7482 = vxor.u32 %v7481, 2147483648
        %v7483 = vsel %vm7400, %v7482, %v7481
        %v7484 = vsub.s32 4, %v7460
        %v7485 = vsel %vm7400, %v7484, %v7460
        %v7486 = vsel %vm7399, %v3729, %v7483
        %v7487 = vsel %vm7399, 0, %v7485
        %v7488 = vcosq.f32.pop %v7486
        %v7489 = vsinq.f32.pop %v7486
        %vm7490 = vweird.f32 %v3729
        %v7491 = vadd.s32 %v7487, 3
        %v7492 = vand.u32 %v7491, 3
        %vm7493 = vcmp.lt.s32.totalorder %v7492, 2
        %vm7494 = vcmp.eq.s32.totalorder %v7492, 0
        %v7495 = vxor.u32 %v7489, 2147483648
        %v7496 = vsel %vm7494, %v7488, %v7495
        %vm7497 = vcmp.eq.s32.totalorder %v7492, 2
        %v7498 = vxor.u32 %v7488, 2147483648
        %v7499 = vsel %vm7497, %v7498, %v7489
        %v7500 = vsel %vm7493, %v7496, %v7499
        %v7501 = vsel %vm7490, nan, %v7500
        %v7502 = vand.u32 2147483647, %v3730
        %vm7503 = vcmp.le.f32.partialorder %v7502, 0.7853982
        %vm7504 = vcmp.lt.s32.totalorder %v3730, 0
        %v7505 = vand.u32 %v3730, 2139095040
        %v7506 = vshrl.u32 %v7505, 23
        %v7507 = vsub.s32 %v7506, 127
        %v7508 = vand.u32 2147483647, %v3730
        %v7509 = vand.u32 %v7508, 8388607
        %v7510 = vor.u32 %v7509, 8388608
        %v7511 = vsub.s32 0, %v7510
        %v7512 = vadd.s32 %v7507, 1
        %vm7513 = vcmp.gt.s32.totalorder %v7512, 0
        %v7514 = vsel %vm7513, %v7512, 0
        %v7515 = vshrl.u32 %v7514, 5
        %v7516 = vand.u32 %v7514, 31
        %v7517 = vsub.s32 32, %v7516
        %v7518 = vshrl.u32 683565275, %v7517
        %v7519 = vshll.u32 683565275, %v7516
        %v7520 = vshrl.u32 2475754826, %v7517
        %v7521 = vor.u32 %v7519, %v7520
        %v7522 = vshll.u32 2475754826, %v7516
        %v7523 = vshrl.u32 2131351028, %v7517
        %v7524 = vor.u32 %v7522, %v7523
        %v7525 = vshll.u32 2131351028, %v7516
        %v7526 = vshrl.u32 2102212464, %v7517
        %v7527 = vor.u32 %v7525, %v7526
        %v7528 = vshll.u32 2102212464, %v7516
        %v7529 = vshrl.u32 920167782, %v7517
        %v7530 = vor.u32 %v7528, %v7529
        %v7531 = vshll.u32 920167782, %v7516
        %v7532 = vshrl.u32 1326507024, %v7517
        %v7533 = vor.u32 %v7531, %v7532
        %vm7534 = vcmp.lt.s32.totalorder %v7515, 1
        %vm7535 = vcmp.lt.s32.totalorder %v7515, 2
        %vm7536 = vcmp.lt.s32.totalorder %v7515, 3
        %vm7537 = vcmp.lt.s32.totalorder %v7515, 4
        %v7538 = vsel %vm7534, %v7518, %v7521
        %v7539 = vsel %vm7537, %v7527, 2102212464
        %v7540 = vsel %vm7536, %v7524, %v7539
        %v7541 = vsel %vm7535, %v7538, %v7540
        %v7542 = vsel %vm7534, %v7521, %v7524
        %v7543 = vsel %vm7537, %v7530, 920167782
        %v7544 = vsel %vm7536, %v7527, %v7543
        %v7545 = vsel %vm7535, %v7542, %v7544
        %v7546 = vsel %vm7534, %v7524, %v7527
        %v7547 = vsel %vm7537, %v7533, 1326507024
        %v7548 = vsel %vm7536, %v7530, %v7547
        %v7549 = vsel %vm7535, %v7546, %v7548
        %v7550 = vshll.u32 %v7510, 8
        %v7551 = vmul.u32.u64.compose %v7550, %v7549
        %v7552 = vextract.low.u32 %v7551
        %v7553 = vextract.high.u32 %v7551
        %v7554 = vmul.u32.u64.compose %v7550, %v7545
        %v7555 = vextract.low.u32 %v7554
        %v7556 = vextract.high.u32 %v7554
        %v7557 = vmul.u32 %v7550, %v7541
        %v7558 = vadd.s32 %v7553, %v7555
        %vm7559 = vc.u32 %v7553, %v7555
        %v7560 = vadd.s32 %v7556, 1
        %v7561 = vsel %vm7559, %v7560, %v7556
        %v7562 = vadd.s32 %v7557, %v7561
        %v7563 = vadd.s32 %v7562, 536870912
        %v7564 = vshrl.u32 %v7563, 30
        %v7565 = vshll.u32 %v7564, 30
        %v7566 = vsub.s32 %v7562, %v7565
        %vm7567 = vcmp.lt.s32.totalorder %v7566, 0
        %v7568 = vsub.s32 0, %v7566
        %v7569 = vsel %vm7567, %v7568, %v7566
        %v7570 = vclz %v7569
        %v7571 = vsub.s32 %v7570, 2
        %vm7572 = vcmp.gt.s32.totalorder 0, %v7571
        %v7573 = vsel %vm7572, 0, %v7571
        %v7574 = vsub.s32 32, %v7573
        %v7575 = vshll.u32 %v7566, %v7573
        %v7576 = vshrl.u32 %v7558, %v7574
        %v7577 = vor.u32 %v7575, %v7576
        %v7578 = vsub.s32 4294967266, %v7573
        %v7579 = vadd.s32 %v7578, 127
        %v7580 = vshll.u32 %v7579, 23
        %v7581 = vor.u32 4788187, %v7580
        %v7582 = vand.u32 2147483647, %v7581
        %v7584 = vcvt.s32.f32 %v7577
        %v7585 = vmul.f32 %v7584, %v7582
        %v7586 = vxor.u32 %v7585, 2147483648
        %v7587 = vsel %vm7504, %v7586, %v7585
        %v7588 = vsub.s32 4, %v7564
        %v7589 = vsel %vm7504, %v7588, %v7564
        %v7590 = vsel %vm7503, %v3730, %v7587
        %v7591 = vsel %vm7503, 0, %v7589
        %v7592 = vcosq.f32.pop %v7590
        %v7593 = vsinq.f32.pop %v7590
        %vm7594 = vweird.f32 %v3730
        %v7595 = vadd.s32 %v7591, 3
        %v7596 = vand.u32 %v7595, 3
        %vm7597 = vcmp.lt.s32.totalorder %v7596, 2
        %vm7598 = vcmp.eq.s32.totalorder %v7596, 0
        %v7599 = vxor.u32 %v7593, 2147483648
        %v7600 = vsel %vm7598, %v7592, %v7599
        %vm7601 = vcmp.eq.s32.totalorder %v7596, 2
        %v7602 = vxor.u32 %v7592, 2147483648
        %v7603 = vsel %vm7601, %v7602, %v7593
        %v7604 = vsel %vm7597, %v7600, %v7603
        %v7605 = vsel %vm7594, nan, %v7604
        %v7606 = vand.u32 2147483647, %v3731
        %vm7607 = vcmp.le.f32.partialorder %v7606, 0.7853982
        %vm7608 = vcmp.lt.s32.totalorder %v3731, 0
        %v7609 = vand.u32 %v3731, 2139095040
        %v7610 = vshrl.u32 %v7609, 23
        %v7611 = vsub.s32 %v7610, 127
        %v7612 = vand.u32 2147483647, %v3731
        %v7613 = vand.u32 %v7612, 8388607
        %v7614 = vor.u32 %v7613, 8388608
        %v7615 = vsub.s32 0, %v7614
        %v7616 = vadd.s32 %v7611, 1
        %vm7617 = vcmp.gt.s32.totalorder %v7616, 0
        %v7618 = vsel %vm7617, %v7616, 0
        %v7619 = vshrl.u32 %v7618, 5
        %v7620 = vand.u32 %v7618, 31
        %v7621 = vsub.s32 32, %v7620
        %v7622 = vshrl.u32 683565275, %v7621
        %v7623 = vshll.u32 683565275, %v7620
        %v7624 = vshrl.u32 2475754826, %v7621
        %v7625 = vor.u32 %v7623, %v7624
        %v7626 = vshll.u32 2475754826, %v7620
        %v7627 = vshrl.u32 2131351028, %v7621
        %v7628 = vor.u32 %v7626, %v7627
        %v7629 = vshll.u32 2131351028, %v7620
        %v7630 = vshrl.u32 2102212464, %v7621
        %v7631 = vor.u32 %v7629, %v7630
        %v7632 = vshll.u32 2102212464, %v7620
        %v7633 = vshrl.u32 920167782, %v7621
        %v7634 = vor.u32 %v7632, %v7633
        %v7635 = vshll.u32 920167782, %v7620
        %v7636 = vshrl.u32 1326507024, %v7621
        %v7637 = vor.u32 %v7635, %v7636
        %vm7638 = vcmp.lt.s32.totalorder %v7619, 1
        %vm7639 = vcmp.lt.s32.totalorder %v7619, 2
        %vm7640 = vcmp.lt.s32.totalorder %v7619, 3
        %vm7641 = vcmp.lt.s32.totalorder %v7619, 4
        %v7642 = vsel %vm7638, %v7622, %v7625
        %v7643 = vsel %vm7641, %v7631, 2102212464
        %v7644 = vsel %vm7640, %v7628, %v7643
        %v7645 = vsel %vm7639, %v7642, %v7644
        %v7646 = vsel %vm7638, %v7625, %v7628
        %v7647 = vsel %vm7641, %v7634, 920167782
        %v7648 = vsel %vm7640, %v7631, %v7647
        %v7649 = vsel %vm7639, %v7646, %v7648
        %v7650 = vsel %vm7638, %v7628, %v7631
        %v7651 = vsel %vm7641, %v7637, 1326507024
        %v7652 = vsel %vm7640, %v7634, %v7651
        %v7653 = vsel %vm7639, %v7650, %v7652
        %v7654 = vshll.u32 %v7614, 8
        %v7655 = vmul.u32.u64.compose %v7654, %v7653
        %v7656 = vextract.low.u32 %v7655
        %v7657 = vextract.high.u32 %v7655
        %v7658 = vmul.u32.u64.compose %v7654, %v7649
        %v7659 = vextract.low.u32 %v7658
        %v7660 = vextract.high.u32 %v7658
        %v7661 = vmul.u32 %v7654, %v7645
        %v7662 = vadd.s32 %v7657, %v7659
        %vm7663 = vc.u32 %v7657, %v7659
        %v7664 = vadd.s32 %v7660, 1
        %v7665 = vsel %vm7663, %v7664, %v7660
        %v7666 = vadd.s32 %v7661, %v7665
        %v7667 = vadd.s32 %v7666, 536870912
        %v7668 = vshrl.u32 %v7667, 30
        %v7669 = vshll.u32 %v7668, 30
        %v7670 = vsub.s32 %v7666, %v7669
        %vm7671 = vcmp.lt.s32.totalorder %v7670, 0
        %v7672 = vsub.s32 0, %v7670
        %v7673 = vsel %vm7671, %v7672, %v7670
        %v7674 = vclz %v7673
        %v7675 = vsub.s32 %v7674, 2
        %vm7676 = vcmp.gt.s32.totalorder 0, %v7675
        %v7677 = vsel %vm7676, 0, %v7675
        %v7678 = vsub.s32 32, %v7677
        %v7679 = vshll.u32 %v7670, %v7677
        %v7680 = vshrl.u32 %v7662, %v7678
        %v7681 = vor.u32 %v7679, %v7680
        %v7682 = vsub.s32 4294967266, %v7677
        %v7683 = vadd.s32 %v7682, 127
        %v7684 = vshll.u32 %v7683, 23
        %v7685 = vor.u32 4788187, %v7684
        %v7686 = vand.u32 2147483647, %v7685
        %v7688 = vcvt.s32.f32 %v7681
        %v7689 = vmul.f32 %v7688, %v7686
        %v7690 = vxor.u32 %v7689, 2147483648
        %v7691 = vsel %vm7608, %v7690, %v7689
        %v7692 = vsub.s32 4, %v7668
        %v7693 = vsel %vm7608, %v7692, %v7668
        %v7694 = vsel %vm7607, %v3731, %v7691
        %v7695 = vsel %vm7607, 0, %v7693
        %v7696 = vcosq.f32.pop %v7694
        %v7697 = vsinq.f32.pop %v7694
        %vm7698 = vweird.f32 %v3731
        %v7699 = vadd.s32 %v7695, 3
        %v7700 = vand.u32 %v7699, 3
        %vm7701 = vcmp.lt.s32.totalorder %v7700, 2
        %vm7702 = vcmp.eq.s32.totalorder %v7700, 0
        %v7703 = vxor.u32 %v7697, 2147483648
        %v7704 = vsel %vm7702, %v7696, %v7703
        %vm7705 = vcmp.eq.s32.totalorder %v7700, 2
        %v7706 = vxor.u32 %v7696, 2147483648
        %v7707 = vsel %vm7705, %v7706, %v7697
        %v7708 = vsel %vm7701, %v7704, %v7707
        %v7709 = vsel %vm7698, nan, %v7708
        %v7710 = vand.u32 2147483647, %v3732
        %vm7711 = vcmp.le.f32.partialorder %v7710, 0.7853982
        %vm7712 = vcmp.lt.s32.totalorder %v3732, 0
        %v7713 = vand.u32 %v3732, 2139095040
        %v7714 = vshrl.u32 %v7713, 23
        %v7715 = vsub.s32 %v7714, 127
        %v7716 = vand.u32 2147483647, %v3732
        %v7717 = vand.u32 %v7716, 8388607
        %v7718 = vor.u32 %v7717, 8388608
        %v7719 = vsub.s32 0, %v7718
        %v7720 = vadd.s32 %v7715, 1
        %vm7721 = vcmp.gt.s32.totalorder %v7720, 0
        %v7722 = vsel %vm7721, %v7720, 0
        %v7723 = vshrl.u32 %v7722, 5
        %v7724 = vand.u32 %v7722, 31
        %v7725 = vsub.s32 32, %v7724
        %v7726 = vshrl.u32 683565275, %v7725
        %v7727 = vshll.u32 683565275, %v7724
        %v7728 = vshrl.u32 2475754826, %v7725
        %v7729 = vor.u32 %v7727, %v7728
        %v7730 = vshll.u32 2475754826, %v7724
        %v7731 = vshrl.u32 2131351028, %v7725
        %v7732 = vor.u32 %v7730, %v7731
        %v7733 = vshll.u32 2131351028, %v7724
        %v7734 = vshrl.u32 2102212464, %v7725
        %v7735 = vor.u32 %v7733, %v7734
        %v7736 = vshll.u32 2102212464, %v7724
        %v7737 = vshrl.u32 920167782, %v7725
        %v7738 = vor.u32 %v7736, %v7737
        %v7739 = vshll.u32 920167782, %v7724
        %v7740 = vshrl.u32 1326507024, %v7725
        %v7741 = vor.u32 %v7739, %v7740
        %vm7742 = vcmp.lt.s32.totalorder %v7723, 1
        %vm7743 = vcmp.lt.s32.totalorder %v7723, 2
        %vm7744 = vcmp.lt.s32.totalorder %v7723, 3
        %vm7745 = vcmp.lt.s32.totalorder %v7723, 4
        %v7746 = vsel %vm7742, %v7726, %v7729
        %v7747 = vsel %vm7745, %v7735, 2102212464
        %v7748 = vsel %vm7744, %v7732, %v7747
        %v7749 = vsel %vm7743, %v7746, %v7748
        %v7750 = vsel %vm7742, %v7729, %v7732
        %v7751 = vsel %vm7745, %v7738, 920167782
        %v7752 = vsel %vm7744, %v7735, %v7751
        %v7753 = vsel %vm7743, %v7750, %v7752
        %v7754 = vsel %vm7742, %v7732, %v7735
        %v7755 = vsel %vm7745, %v7741, 1326507024
        %v7756 = vsel %vm7744, %v7738, %v7755
        %v7757 = vsel %vm7743, %v7754, %v7756
        %v7758 = vshll.u32 %v7718, 8
        %v7759 = vmul.u32.u64.compose %v7758, %v7757
        %v7760 = vextract.low.u32 %v7759
        %v7761 = vextract.high.u32 %v7759
        %v7762 = vmul.u32.u64.compose %v7758, %v7753
        %v7763 = vextract.low.u32 %v7762
        %v7764 = vextract.high.u32 %v7762
        %v7765 = vmul.u32 %v7758, %v7749
        %v7766 = vadd.s32 %v7761, %v7763
        %vm7767 = vc.u32 %v7761, %v7763
        %v7768 = vadd.s32 %v7764, 1
        %v7769 = vsel %vm7767, %v7768, %v7764
        %v7770 = vadd.s32 %v7765, %v7769
        %v7771 = vadd.s32 %v7770, 536870912
        %v7772 = vshrl.u32 %v7771, 30
        %v7773 = vshll.u32 %v7772, 30
        %v7774 = vsub.s32 %v7770, %v7773
        %vm7775 = vcmp.lt.s32.totalorder %v7774, 0
        %v7776 = vsub.s32 0, %v7774
        %v7777 = vsel %vm7775, %v7776, %v7774
        %v7778 = vclz %v7777
        %v7779 = vsub.s32 %v7778, 2
        %vm7780 = vcmp.gt.s32.totalorder 0, %v7779
        %v7781 = vsel %vm7780, 0, %v7779
        %v7782 = vsub.s32 32, %v7781
        %v7783 = vshll.u32 %v7774, %v7781
        %v7784 = vshrl.u32 %v7766, %v7782
        %v7785 = vor.u32 %v7783, %v7784
        %v7786 = vsub.s32 4294967266, %v7781
        %v7787 = vadd.s32 %v7786, 127
        %v7788 = vshll.u32 %v7787, 23
        %v7789 = vor.u32 4788187, %v7788
        %v7790 = vand.u32 2147483647, %v7789
        %v7792 = vcvt.s32.f32 %v7785
        %v7793 = vmul.f32 %v7792, %v7790
        %v7794 = vxor.u32 %v7793, 2147483648
        %v7795 = vsel %vm7712, %v7794, %v7793
        %v7796 = vsub.s32 4, %v7772
        %v7797 = vsel %vm7712, %v7796, %v7772
        %v7798 = vsel %vm7711, %v3732, %v7795
        %v7799 = vsel %vm7711, 0, %v7797
        %v7800 = vcosq.f32.pop %v7798
        %v7801 = vsinq.f32.pop %v7798
        %vm7802 = vweird.f32 %v3732
        %v7803 = vadd.s32 %v7799, 3
        %v7804 = vand.u32 %v7803, 3
        %vm7805 = vcmp.lt.s32.totalorder %v7804, 2
        %vm7806 = vcmp.eq.s32.totalorder %v7804, 0
        %v7807 = vxor.u32 %v7801, 2147483648
        %v7808 = vsel %vm7806, %v7800, %v7807
        %vm7809 = vcmp.eq.s32.totalorder %v7804, 2
        %v7810 = vxor.u32 %v7800, 2147483648
        %v7811 = vsel %vm7809, %v7810, %v7801
        %v7812 = vsel %vm7805, %v7808, %v7811
        %v7813 = vsel %vm7802, nan, %v7812
        %v7814 = vand.u32 2147483647, %v3733
        %vm7815 = vcmp.le.f32.partialorder %v7814, 0.7853982
        %vm7816 = vcmp.lt.s32.totalorder %v3733, 0
        %v7817 = vand.u32 %v3733, 2139095040
        %v7818 = vshrl.u32 %v7817, 23
        %v7819 = vsub.s32 %v7818, 127
        %v7820 = vand.u32 2147483647, %v3733
        %v7821 = vand.u32 %v7820, 8388607
        %v7822 = vor.u32 %v7821, 8388608
        %v7823 = vsub.s32 0, %v7822
        %v7824 = vadd.s32 %v7819, 1
        %vm7825 = vcmp.gt.s32.totalorder %v7824, 0
        %v7826 = vsel %vm7825, %v7824, 0
        %v7827 = vshrl.u32 %v7826, 5
        %v7828 = vand.u32 %v7826, 31
        %v7829 = vsub.s32 32, %v7828
        %v7830 = vshrl.u32 683565275, %v7829
        %v7831 = vshll.u32 683565275, %v7828
        %v7832 = vshrl.u32 2475754826, %v7829
        %v7833 = vor.u32 %v7831, %v7832
        %v7834 = vshll.u32 2475754826, %v7828
        %v7835 = vshrl.u32 2131351028, %v7829
        %v7836 = vor.u32 %v7834, %v7835
        %v7837 = vshll.u32 2131351028, %v7828
        %v7838 = vshrl.u32 2102212464, %v7829
        %v7839 = vor.u32 %v7837, %v7838
        %v7840 = vshll.u32 2102212464, %v7828
        %v7841 = vshrl.u32 920167782, %v7829
        %v7842 = vor.u32 %v7840, %v7841
        %v7843 = vshll.u32 920167782, %v7828
        %v7844 = vshrl.u32 1326507024, %v7829
        %v7845 = vor.u32 %v7843, %v7844
        %vm7846 = vcmp.lt.s32.totalorder %v7827, 1
        %vm7847 = vcmp.lt.s32.totalorder %v7827, 2
        %vm7848 = vcmp.lt.s32.totalorder %v7827, 3
        %vm7849 = vcmp.lt.s32.totalorder %v7827, 4
        %v7850 = vsel %vm7846, %v7830, %v7833
        %v7851 = vsel %vm7849, %v7839, 2102212464
        %v7852 = vsel %vm7848, %v7836, %v7851
        %v7853 = vsel %vm7847, %v7850, %v7852
        %v7854 = vsel %vm7846, %v7833, %v7836
        %v7855 = vsel %vm7849, %v7842, 920167782
        %v7856 = vsel %vm7848, %v7839, %v7855
        %v7857 = vsel %vm7847, %v7854, %v7856
        %v7858 = vsel %vm7846, %v7836, %v7839
        %v7859 = vsel %vm7849, %v7845, 1326507024
        %v7860 = vsel %vm7848, %v7842, %v7859
        %v7861 = vsel %vm7847, %v7858, %v7860
        %v7862 = vshll.u32 %v7822, 8
        %v7863 = vmul.u32.u64.compose %v7862, %v7861
        %v7864 = vextract.low.u32 %v7863
        %v7865 = vextract.high.u32 %v7863
        %v7866 = vmul.u32.u64.compose %v7862, %v7857
        %v7867 = vextract.low.u32 %v7866
        %v7868 = vextract.high.u32 %v7866
        %v7869 = vmul.u32 %v7862, %v7853
        %v7870 = vadd.s32 %v7865, %v7867
        %vm7871 = vc.u32 %v7865, %v7867
        %v7872 = vadd.s32 %v7868, 1
        %v7873 = vsel %vm7871, %v7872, %v7868
        %v7874 = vadd.s32 %v7869, %v7873
        %v7875 = vadd.s32 %v7874, 536870912
        %v7876 = vshrl.u32 %v7875, 30
        %v7877 = vshll.u32 %v7876, 30
        %v7878 = vsub.s32 %v7874, %v7877
        %vm7879 = vcmp.lt.s32.totalorder %v7878, 0
        %v7880 = vsub.s32 0, %v7878
        %v7881 = vsel %vm7879, %v7880, %v7878
        %v7882 = vclz %v7881
        %v7883 = vsub.s32 %v7882, 2
        %vm7884 = vcmp.gt.s32.totalorder 0, %v7883
        %v7885 = vsel %vm7884, 0, %v7883
        %v7886 = vsub.s32 32, %v7885
        %v7887 = vshll.u32 %v7878, %v7885
        %v7888 = vshrl.u32 %v7870, %v7886
        %v7889 = vor.u32 %v7887, %v7888
        %v7890 = vsub.s32 4294967266, %v7885
        %v7891 = vadd.s32 %v7890, 127
        %v7892 = vshll.u32 %v7891, 23
        %v7893 = vor.u32 4788187, %v7892
        %v7894 = vand.u32 2147483647, %v7893
        %v7896 = vcvt.s32.f32 %v7889
        %v7897 = vmul.f32 %v7896, %v7894
        %v7898 = vxor.u32 %v7897, 2147483648
        %v7899 = vsel %vm7816, %v7898, %v7897
        %v7900 = vsub.s32 4, %v7876
        %v7901 = vsel %vm7816, %v7900, %v7876
        %v7902 = vsel %vm7815, %v3733, %v7899
        %v7903 = vsel %vm7815, 0, %v7901
        %v7904 = vcosq.f32.pop %v7902
        %v7905 = vsinq.f32.pop %v7902
        %vm7906 = vweird.f32 %v3733
        %v7907 = vadd.s32 %v7903, 3
        %v7908 = vand.u32 %v7907, 3
        %vm7909 = vcmp.lt.s32.totalorder %v7908, 2
        %vm7910 = vcmp.eq.s32.totalorder %v7908, 0
        %v7911 = vxor.u32 %v7905, 2147483648
        %v7912 = vsel %vm7910, %v7904, %v7911
        %vm7913 = vcmp.eq.s32.totalorder %v7908, 2
        %v7914 = vxor.u32 %v7904, 2147483648
        %v7915 = vsel %vm7913, %v7914, %v7905
        %v7916 = vsel %vm7909, %v7912, %v7915
        %v7917 = vsel %vm7906, nan, %v7916
        %v7918 = vand.u32 2147483647, %v3734
        %vm7919 = vcmp.le.f32.partialorder %v7918, 0.7853982
        %vm7920 = vcmp.lt.s32.totalorder %v3734, 0
        %v7921 = vand.u32 %v3734, 2139095040
        %v7922 = vshrl.u32 %v7921, 23
        %v7923 = vsub.s32 %v7922, 127
        %v7924 = vand.u32 2147483647, %v3734
        %v7925 = vand.u32 %v7924, 8388607
        %v7926 = vor.u32 %v7925, 8388608
        %v7927 = vsub.s32 0, %v7926
        %v7928 = vadd.s32 %v7923, 1
        %vm7929 = vcmp.gt.s32.totalorder %v7928, 0
        %v7930 = vsel %vm7929, %v7928, 0
        %v7931 = vshrl.u32 %v7930, 5
        %v7932 = vand.u32 %v7930, 31
        %v7933 = vsub.s32 32, %v7932
        %v7934 = vshrl.u32 683565275, %v7933
        %v7935 = vshll.u32 683565275, %v7932
        %v7936 = vshrl.u32 2475754826, %v7933
        %v7937 = vor.u32 %v7935, %v7936
        %v7938 = vshll.u32 2475754826, %v7932
        %v7939 = vshrl.u32 2131351028, %v7933
        %v7940 = vor.u32 %v7938, %v7939
        %v7941 = vshll.u32 2131351028, %v7932
        %v7942 = vshrl.u32 2102212464, %v7933
        %v7943 = vor.u32 %v7941, %v7942
        %v7944 = vshll.u32 2102212464, %v7932
        %v7945 = vshrl.u32 920167782, %v7933
        %v7946 = vor.u32 %v7944, %v7945
        %v7947 = vshll.u32 920167782, %v7932
        %v7948 = vshrl.u32 1326507024, %v7933
        %v7949 = vor.u32 %v7947, %v7948
        %vm7950 = vcmp.lt.s32.totalorder %v7931, 1
        %vm7951 = vcmp.lt.s32.totalorder %v7931, 2
        %vm7952 = vcmp.lt.s32.totalorder %v7931, 3
        %vm7953 = vcmp.lt.s32.totalorder %v7931, 4
        %v7954 = vsel %vm7950, %v7934, %v7937
        %v7955 = vsel %vm7953, %v7943, 2102212464
        %v7956 = vsel %vm7952, %v7940, %v7955
        %v7957 = vsel %vm7951, %v7954, %v7956
        %v7958 = vsel %vm7950, %v7937, %v7940
        %v7959 = vsel %vm7953, %v7946, 920167782
        %v7960 = vsel %vm7952, %v7943, %v7959
        %v7961 = vsel %vm7951, %v7958, %v7960
        %v7962 = vsel %vm7950, %v7940, %v7943
        %v7963 = vsel %vm7953, %v7949, 1326507024
        %v7964 = vsel %vm7952, %v7946, %v7963
        %v7965 = vsel %vm7951, %v7962, %v7964
        %v7966 = vshll.u32 %v7926, 8
        %v7967 = vmul.u32.u64.compose %v7966, %v7965
        %v7968 = vextract.low.u32 %v7967
        %v7969 = vextract.high.u32 %v7967
        %v7970 = vmul.u32.u64.compose %v7966, %v7961
        %v7971 = vextract.low.u32 %v7970
        %v7972 = vextract.high.u32 %v7970
        %v7973 = vmul.u32 %v7966, %v7957
        %v7974 = vadd.s32 %v7969, %v7971
        %vm7975 = vc.u32 %v7969, %v7971
        %v7976 = vadd.s32 %v7972, 1
        %v7977 = vsel %vm7975, %v7976, %v7972
        %v7978 = vadd.s32 %v7973, %v7977
        %v7979 = vadd.s32 %v7978, 536870912
        %v7980 = vshrl.u32 %v7979, 30
        %v7981 = vshll.u32 %v7980, 30
        %v7982 = vsub.s32 %v7978, %v7981
        %vm7983 = vcmp.lt.s32.totalorder %v7982, 0
        %v7984 = vsub.s32 0, %v7982
        %v7985 = vsel %vm7983, %v7984, %v7982
        %v7986 = vclz %v7985
        %v7987 = vsub.s32 %v7986, 2
        %vm7988 = vcmp.gt.s32.totalorder 0, %v7987
        %v7989 = vsel %vm7988, 0, %v7987
        %v7990 = vsub.s32 32, %v7989
        %v7991 = vshll.u32 %v7982, %v7989
        %v7992 = vshrl.u32 %v7974, %v7990
        %v7993 = vor.u32 %v7991, %v7992
        %v7994 = vsub.s32 4294967266, %v7989
        %v7995 = vadd.s32 %v7994, 127
        %v7996 = vshll.u32 %v7995, 23
        %v7997 = vor.u32 4788187, %v7996
        %v7998 = vand.u32 2147483647, %v7997
        %v8000 = vcvt.s32.f32 %v7993
        %v8001 = vmul.f32 %v8000, %v7998
        %v8002 = vxor.u32 %v8001, 2147483648
        %v8003 = vsel %vm7920, %v8002, %v8001
        %v8004 = vsub.s32 4, %v7980
        %v8005 = vsel %vm7920, %v8004, %v7980
        %v8006 = vsel %vm7919, %v3734, %v8003
        %v8007 = vsel %vm7919, 0, %v8005
        %v8008 = vcosq.f32.pop %v8006
        %v8009 = vsinq.f32.pop %v8006
        %vm8010 = vweird.f32 %v3734
        %v8011 = vadd.s32 %v8007, 3
        %v8012 = vand.u32 %v8011, 3
        %vm8013 = vcmp.lt.s32.totalorder %v8012, 2
        %vm8014 = vcmp.eq.s32.totalorder %v8012, 0
        %v8015 = vxor.u32 %v8009, 2147483648
        %v8016 = vsel %vm8014, %v8008, %v8015
        %vm8017 = vcmp.eq.s32.totalorder %v8012, 2
        %v8018 = vxor.u32 %v8008, 2147483648
        %v8019 = vsel %vm8017, %v8018, %v8009
        %v8020 = vsel %vm8013, %v8016, %v8019
        %v8021 = vsel %vm8010, nan, %v8020
        %v8022 = vand.u32 2147483647, %v3735
        %vm8023 = vcmp.le.f32.partialorder %v8022, 0.7853982
        %vm8024 = vcmp.lt.s32.totalorder %v3735, 0
        %v8025 = vand.u32 %v3735, 2139095040
        %v8026 = vshrl.u32 %v8025, 23
        %v8027 = vsub.s32 %v8026, 127
        %v8028 = vand.u32 2147483647, %v3735
        %v8029 = vand.u32 %v8028, 8388607
        %v8030 = vor.u32 %v8029, 8388608
        %v8031 = vsub.s32 0, %v8030
        %v8032 = vadd.s32 %v8027, 1
        %vm8033 = vcmp.gt.s32.totalorder %v8032, 0
        %v8034 = vsel %vm8033, %v8032, 0
        %v8035 = vshrl.u32 %v8034, 5
        %v8036 = vand.u32 %v8034, 31
        %v8037 = vsub.s32 32, %v8036
        %v8038 = vshrl.u32 683565275, %v8037
        %v8039 = vshll.u32 683565275, %v8036
        %v8040 = vshrl.u32 2475754826, %v8037
        %v8041 = vor.u32 %v8039, %v8040
        %v8042 = vshll.u32 2475754826, %v8036
        %v8043 = vshrl.u32 2131351028, %v8037
        %v8044 = vor.u32 %v8042, %v8043
        %v8045 = vshll.u32 2131351028, %v8036
        %v8046 = vshrl.u32 2102212464, %v8037
        %v8047 = vor.u32 %v8045, %v8046
        %v8048 = vshll.u32 2102212464, %v8036
        %v8049 = vshrl.u32 920167782, %v8037
        %v8050 = vor.u32 %v8048, %v8049
        %v8051 = vshll.u32 920167782, %v8036
        %v8052 = vshrl.u32 1326507024, %v8037
        %v8053 = vor.u32 %v8051, %v8052
        %vm8054 = vcmp.lt.s32.totalorder %v8035, 1
        %vm8055 = vcmp.lt.s32.totalorder %v8035, 2
        %vm8056 = vcmp.lt.s32.totalorder %v8035, 3
        %vm8057 = vcmp.lt.s32.totalorder %v8035, 4
        %v8058 = vsel %vm8054, %v8038, %v8041
        %v8059 = vsel %vm8057, %v8047, 2102212464
        %v8060 = vsel %vm8056, %v8044, %v8059
        %v8061 = vsel %vm8055, %v8058, %v8060
        %v8062 = vsel %vm8054, %v8041, %v8044
        %v8063 = vsel %vm8057, %v8050, 920167782
        %v8064 = vsel %vm8056, %v8047, %v8063
        %v8065 = vsel %vm8055, %v8062, %v8064
        %v8066 = vsel %vm8054, %v8044, %v8047
        %v8067 = vsel %vm8057, %v8053, 1326507024
        %v8068 = vsel %vm8056, %v8050, %v8067
        %v8069 = vsel %vm8055, %v8066, %v8068
        %v8070 = vshll.u32 %v8030, 8
        %v8071 = vmul.u32.u64.compose %v8070, %v8069
        %v8072 = vextract.low.u32 %v8071
        %v8073 = vextract.high.u32 %v8071
        %v8074 = vmul.u32.u64.compose %v8070, %v8065
        %v8075 = vextract.low.u32 %v8074
        %v8076 = vextract.high.u32 %v8074
        %v8077 = vmul.u32 %v8070, %v8061
        %v8078 = vadd.s32 %v8073, %v8075
        %vm8079 = vc.u32 %v8073, %v8075
        %v8080 = vadd.s32 %v8076, 1
        %v8081 = vsel %vm8079, %v8080, %v8076
        %v8082 = vadd.s32 %v8077, %v8081
        %v8083 = vadd.s32 %v8082, 536870912
        %v8084 = vshrl.u32 %v8083, 30
        %v8085 = vshll.u32 %v8084, 30
        %v8086 = vsub.s32 %v8082, %v8085
        %vm8087 = vcmp.lt.s32.totalorder %v8086, 0
        %v8088 = vsub.s32 0, %v8086
        %v8089 = vsel %vm8087, %v8088, %v8086
        %v8090 = vclz %v8089
        %v8091 = vsub.s32 %v8090, 2
        %vm8092 = vcmp.gt.s32.totalorder 0, %v8091
        %v8093 = vsel %vm8092, 0, %v8091
        %v8094 = vsub.s32 32, %v8093
        %v8095 = vshll.u32 %v8086, %v8093
        %v8096 = vshrl.u32 %v8078, %v8094
        %v8097 = vor.u32 %v8095, %v8096
        %v8098 = vsub.s32 4294967266, %v8093
        %v8099 = vadd.s32 %v8098, 127
        %v8100 = vshll.u32 %v8099, 23
        %v8101 = vor.u32 4788187, %v8100
        %v8102 = vand.u32 2147483647, %v8101
        %v8104 = vcvt.s32.f32 %v8097
        %v8105 = vmul.f32 %v8104, %v8102
        %v8106 = vxor.u32 %v8105, 2147483648
        %v8107 = vsel %vm8024, %v8106, %v8105
        %v8108 = vsub.s32 4, %v8084
        %v8109 = vsel %vm8024, %v8108, %v8084
        %v8110 = vsel %vm8023, %v3735, %v8107
        %v8111 = vsel %vm8023, 0, %v8109
        %v8112 = vcosq.f32.pop %v8110
        %v8113 = vsinq.f32.pop %v8110
        %vm8114 = vweird.f32 %v3735
        %v8115 = vadd.s32 %v8111, 3
        %v8116 = vand.u32 %v8115, 3
        %vm8117 = vcmp.lt.s32.totalorder %v8116, 2
        %vm8118 = vcmp.eq.s32.totalorder %v8116, 0
        %v8119 = vxor.u32 %v8113, 2147483648
        %v8120 = vsel %vm8118, %v8112, %v8119
        %vm8121 = vcmp.eq.s32.totalorder %v8116, 2
        %v8122 = vxor.u32 %v8112, 2147483648
        %v8123 = vsel %vm8121, %v8122, %v8113
        %v8124 = vsel %vm8117, %v8120, %v8123
        %v8125 = vsel %vm8114, nan, %v8124
        %v8126 = vand.u32 2147483647, %v3736
        %vm8127 = vcmp.le.f32.partialorder %v8126, 0.7853982
        %vm8128 = vcmp.lt.s32.totalorder %v3736, 0
        %v8129 = vand.u32 %v3736, 2139095040
        %v8130 = vshrl.u32 %v8129, 23
        %v8131 = vsub.s32 %v8130, 127
        %v8132 = vand.u32 2147483647, %v3736
        %v8133 = vand.u32 %v8132, 8388607
        %v8134 = vor.u32 %v8133, 8388608
        %v8135 = vsub.s32 0, %v8134
        %v8136 = vadd.s32 %v8131, 1
        %vm8137 = vcmp.gt.s32.totalorder %v8136, 0
        %v8138 = vsel %vm8137, %v8136, 0
        %v8139 = vshrl.u32 %v8138, 5
        %v8140 = vand.u32 %v8138, 31
        %v8141 = vsub.s32 32, %v8140
        %v8142 = vshrl.u32 683565275, %v8141
        %v8143 = vshll.u32 683565275, %v8140
        %v8144 = vshrl.u32 2475754826, %v8141
        %v8145 = vor.u32 %v8143, %v8144
        %v8146 = vshll.u32 2475754826, %v8140
        %v8147 = vshrl.u32 2131351028, %v8141
        %v8148 = vor.u32 %v8146, %v8147
        %v8149 = vshll.u32 2131351028, %v8140
        %v8150 = vshrl.u32 2102212464, %v8141
        %v8151 = vor.u32 %v8149, %v8150
        %v8152 = vshll.u32 2102212464, %v8140
        %v8153 = vshrl.u32 920167782, %v8141
        %v8154 = vor.u32 %v8152, %v8153
        %v8155 = vshll.u32 920167782, %v8140
        %v8156 = vshrl.u32 1326507024, %v8141
        %v8157 = vor.u32 %v8155, %v8156
        %vm8158 = vcmp.lt.s32.totalorder %v8139, 1
        %vm8159 = vcmp.lt.s32.totalorder %v8139, 2
        %vm8160 = vcmp.lt.s32.totalorder %v8139, 3
        %vm8161 = vcmp.lt.s32.totalorder %v8139, 4
        %v8162 = vsel %vm8158, %v8142, %v8145
        %v8163 = vsel %vm8161, %v8151, 2102212464
        %v8164 = vsel %vm8160, %v8148, %v8163
        %v8165 = vsel %vm8159, %v8162, %v8164
        %v8166 = vsel %vm8158, %v8145, %v8148
        %v8167 = vsel %vm8161, %v8154, 920167782
        %v8168 = vsel %vm8160, %v8151, %v8167
        %v8169 = vsel %vm8159, %v8166, %v8168
        %v8170 = vsel %vm8158, %v8148, %v8151
        %v8171 = vsel %vm8161, %v8157, 1326507024
        %v8172 = vsel %vm8160, %v8154, %v8171
        %v8173 = vsel %vm8159, %v8170, %v8172
        %v8174 = vshll.u32 %v8134, 8
        %v8175 = vmul.u32.u64.compose %v8174, %v8173
        %v8176 = vextract.low.u32 %v8175
        %v8177 = vextract.high.u32 %v8175
        %v8178 = vmul.u32.u64.compose %v8174, %v8169
        %v8179 = vextract.low.u32 %v8178
        %v8180 = vextract.high.u32 %v8178
        %v8181 = vmul.u32 %v8174, %v8165
        %v8182 = vadd.s32 %v8177, %v8179
        %vm8183 = vc.u32 %v8177, %v8179
        %v8184 = vadd.s32 %v8180, 1
        %v8185 = vsel %vm8183, %v8184, %v8180
        %v8186 = vadd.s32 %v8181, %v8185
        %v8187 = vadd.s32 %v8186, 536870912
        %v8188 = vshrl.u32 %v8187, 30
        %v8189 = vshll.u32 %v8188, 30
        %v8190 = vsub.s32 %v8186, %v8189
        %vm8191 = vcmp.lt.s32.totalorder %v8190, 0
        %v8192 = vsub.s32 0, %v8190
        %v8193 = vsel %vm8191, %v8192, %v8190
        %v8194 = vclz %v8193
        %v8195 = vsub.s32 %v8194, 2
        %vm8196 = vcmp.gt.s32.totalorder 0, %v8195
        %v8197 = vsel %vm8196, 0, %v8195
        %v8198 = vsub.s32 32, %v8197
        %v8199 = vshll.u32 %v8190, %v8197
        %v8200 = vshrl.u32 %v8182, %v8198
        %v8201 = vor.u32 %v8199, %v8200
        %v8202 = vsub.s32 4294967266, %v8197
        %v8203 = vadd.s32 %v8202, 127
        %v8204 = vshll.u32 %v8203, 23
        %v8205 = vor.u32 4788187, %v8204
        %v8206 = vand.u32 2147483647, %v8205
        %v8208 = vcvt.s32.f32 %v8201
        %v8209 = vmul.f32 %v8208, %v8206
        %v8210 = vxor.u32 %v8209, 2147483648
        %v8211 = vsel %vm8128, %v8210, %v8209
        %v8212 = vsub.s32 4, %v8188
        %v8213 = vsel %vm8128, %v8212, %v8188
        %v8214 = vsel %vm8127, %v3736, %v8211
        %v8215 = vsel %vm8127, 0, %v8213
        %v8216 = vcosq.f32.pop %v8214
        %v8217 = vsinq.f32.pop %v8214
        %vm8218 = vweird.f32 %v3736
        %v8219 = vadd.s32 %v8215, 3
        %v8220 = vand.u32 %v8219, 3
        %vm8221 = vcmp.lt.s32.totalorder %v8220, 2
        %vm8222 = vcmp.eq.s32.totalorder %v8220, 0
        %v8223 = vxor.u32 %v8217, 2147483648
        %v8224 = vsel %vm8222, %v8216, %v8223
        %vm8225 = vcmp.eq.s32.totalorder %v8220, 2
        %v8226 = vxor.u32 %v8216, 2147483648
        %v8227 = vsel %vm8225, %v8226, %v8217
        %v8228 = vsel %vm8221, %v8224, %v8227
        %v8229 = vsel %vm8218, nan, %v8228
        %v8230 = vand.u32 2147483647, %v3737
        %vm8231 = vcmp.le.f32.partialorder %v8230, 0.7853982
        %vm8232 = vcmp.lt.s32.totalorder %v3737, 0
        %v8233 = vand.u32 %v3737, 2139095040
        %v8234 = vshrl.u32 %v8233, 23
        %v8235 = vsub.s32 %v8234, 127
        %v8236 = vand.u32 2147483647, %v3737
        %v8237 = vand.u32 %v8236, 8388607
        %v8238 = vor.u32 %v8237, 8388608
        %v8239 = vsub.s32 0, %v8238
        %v8240 = vadd.s32 %v8235, 1
        %vm8241 = vcmp.gt.s32.totalorder %v8240, 0
        %v8242 = vsel %vm8241, %v8240, 0
        %v8243 = vshrl.u32 %v8242, 5
        %v8244 = vand.u32 %v8242, 31
        %v8245 = vsub.s32 32, %v8244
        %v8246 = vshrl.u32 683565275, %v8245
        %v8247 = vshll.u32 683565275, %v8244
        %v8248 = vshrl.u32 2475754826, %v8245
        %v8249 = vor.u32 %v8247, %v8248
        %v8250 = vshll.u32 2475754826, %v8244
        %v8251 = vshrl.u32 2131351028, %v8245
        %v8252 = vor.u32 %v8250, %v8251
        %v8253 = vshll.u32 2131351028, %v8244
        %v8254 = vshrl.u32 2102212464, %v8245
        %v8255 = vor.u32 %v8253, %v8254
        %v8256 = vshll.u32 2102212464, %v8244
        %v8257 = vshrl.u32 920167782, %v8245
        %v8258 = vor.u32 %v8256, %v8257
        %v8259 = vshll.u32 920167782, %v8244
        %v8260 = vshrl.u32 1326507024, %v8245
        %v8261 = vor.u32 %v8259, %v8260
        %vm8262 = vcmp.lt.s32.totalorder %v8243, 1
        %vm8263 = vcmp.lt.s32.totalorder %v8243, 2
        %vm8264 = vcmp.lt.s32.totalorder %v8243, 3
        %vm8265 = vcmp.lt.s32.totalorder %v8243, 4
        %v8266 = vsel %vm8262, %v8246, %v8249
        %v8267 = vsel %vm8265, %v8255, 2102212464
        %v8268 = vsel %vm8264, %v8252, %v8267
        %v8269 = vsel %vm8263, %v8266, %v8268
        %v8270 = vsel %vm8262, %v8249, %v8252
        %v8271 = vsel %vm8265, %v8258, 920167782
        %v8272 = vsel %vm8264, %v8255, %v8271
        %v8273 = vsel %vm8263, %v8270, %v8272
        %v8274 = vsel %vm8262, %v8252, %v8255
        %v8275 = vsel %vm8265, %v8261, 1326507024
        %v8276 = vsel %vm8264, %v8258, %v8275
        %v8277 = vsel %vm8263, %v8274, %v8276
        %v8278 = vshll.u32 %v8238, 8
        %v8279 = vmul.u32.u64.compose %v8278, %v8277
        %v8280 = vextract.low.u32 %v8279
        %v8281 = vextract.high.u32 %v8279
        %v8282 = vmul.u32.u64.compose %v8278, %v8273
        %v8283 = vextract.low.u32 %v8282
        %v8284 = vextract.high.u32 %v8282
        %v8285 = vmul.u32 %v8278, %v8269
        %v8286 = vadd.s32 %v8281, %v8283
        %vm8287 = vc.u32 %v8281, %v8283
        %v8288 = vadd.s32 %v8284, 1
        %v8289 = vsel %vm8287, %v8288, %v8284
        %v8290 = vadd.s32 %v8285, %v8289
        %v8291 = vadd.s32 %v8290, 536870912
        %v8292 = vshrl.u32 %v8291, 30
        %v8293 = vshll.u32 %v8292, 30
        %v8294 = vsub.s32 %v8290, %v8293
        %vm8295 = vcmp.lt.s32.totalorder %v8294, 0
        %v8296 = vsub.s32 0, %v8294
        %v8297 = vsel %vm8295, %v8296, %v8294
        %v8298 = vclz %v8297
        %v8299 = vsub.s32 %v8298, 2
        %vm8300 = vcmp.gt.s32.totalorder 0, %v8299
        %v8301 = vsel %vm8300, 0, %v8299
        %v8302 = vsub.s32 32, %v8301
        %v8303 = vshll.u32 %v8294, %v8301
        %v8304 = vshrl.u32 %v8286, %v8302
        %v8305 = vor.u32 %v8303, %v8304
        %v8306 = vsub.s32 4294967266, %v8301
        %v8307 = vadd.s32 %v8306, 127
        %v8308 = vshll.u32 %v8307, 23
        %v8309 = vor.u32 4788187, %v8308
        %v8310 = vand.u32 2147483647, %v8309
        %v8312 = vcvt.s32.f32 %v8305
        %v8313 = vmul.f32 %v8312, %v8310
        %v8314 = vxor.u32 %v8313, 2147483648
        %v8315 = vsel %vm8232, %v8314, %v8313
        %v8316 = vsub.s32 4, %v8292
        %v8317 = vsel %vm8232, %v8316, %v8292
        %v8318 = vsel %vm8231, %v3737, %v8315
        %v8319 = vsel %vm8231, 0, %v8317
        %v8320 = vcosq.f32.pop %v8318
        %v8321 = vsinq.f32.pop %v8318
        %vm8322 = vweird.f32 %v3737
        %v8323 = vadd.s32 %v8319, 3
        %v8324 = vand.u32 %v8323, 3
        %vm8325 = vcmp.lt.s32.totalorder %v8324, 2
        %vm8326 = vcmp.eq.s32.totalorder %v8324, 0
        %v8327 = vxor.u32 %v8321, 2147483648
        %v8328 = vsel %vm8326, %v8320, %v8327
        %vm8329 = vcmp.eq.s32.totalorder %v8324, 2
        %v8330 = vxor.u32 %v8320, 2147483648
        %v8331 = vsel %vm8329, %v8330, %v8321
        %v8332 = vsel %vm8325, %v8328, %v8331
        %v8333 = vsel %vm8322, nan, %v8332
        %v8334 = vand.u32 2147483647, %v3738
        %vm8335 = vcmp.le.f32.partialorder %v8334, 0.7853982
        %vm8336 = vcmp.lt.s32.totalorder %v3738, 0
        %v8337 = vand.u32 %v3738, 2139095040
        %v8338 = vshrl.u32 %v8337, 23
        %v8339 = vsub.s32 %v8338, 127
        %v8340 = vand.u32 2147483647, %v3738
        %v8341 = vand.u32 %v8340, 8388607
        %v8342 = vor.u32 %v8341, 8388608
        %v8343 = vsub.s32 0, %v8342
        %v8344 = vadd.s32 %v8339, 1
        %vm8345 = vcmp.gt.s32.totalorder %v8344, 0
        %v8346 = vsel %vm8345, %v8344, 0
        %v8347 = vshrl.u32 %v8346, 5
        %v8348 = vand.u32 %v8346, 31
        %v8349 = vsub.s32 32, %v8348
        %v8350 = vshrl.u32 683565275, %v8349
        %v8351 = vshll.u32 683565275, %v8348
        %v8352 = vshrl.u32 2475754826, %v8349
        %v8353 = vor.u32 %v8351, %v8352
        %v8354 = vshll.u32 2475754826, %v8348
        %v8355 = vshrl.u32 2131351028, %v8349
        %v8356 = vor.u32 %v8354, %v8355
        %v8357 = vshll.u32 2131351028, %v8348
        %v8358 = vshrl.u32 2102212464, %v8349
        %v8359 = vor.u32 %v8357, %v8358
        %v8360 = vshll.u32 2102212464, %v8348
        %v8361 = vshrl.u32 920167782, %v8349
        %v8362 = vor.u32 %v8360, %v8361
        %v8363 = vshll.u32 920167782, %v8348
        %v8364 = vshrl.u32 1326507024, %v8349
        %v8365 = vor.u32 %v8363, %v8364
        %vm8366 = vcmp.lt.s32.totalorder %v8347, 1
        %vm8367 = vcmp.lt.s32.totalorder %v8347, 2
        %vm8368 = vcmp.lt.s32.totalorder %v8347, 3
        %vm8369 = vcmp.lt.s32.totalorder %v8347, 4
        %v8370 = vsel %vm8366, %v8350, %v8353
        %v8371 = vsel %vm8369, %v8359, 2102212464
        %v8372 = vsel %vm8368, %v8356, %v8371
        %v8373 = vsel %vm8367, %v8370, %v8372
        %v8374 = vsel %vm8366, %v8353, %v8356
        %v8375 = vsel %vm8369, %v8362, 920167782
        %v8376 = vsel %vm8368, %v8359, %v8375
        %v8377 = vsel %vm8367, %v8374, %v8376
        %v8378 = vsel %vm8366, %v8356, %v8359
        %v8379 = vsel %vm8369, %v8365, 1326507024
        %v8380 = vsel %vm8368, %v8362, %v8379
        %v8381 = vsel %vm8367, %v8378, %v8380
        %v8382 = vshll.u32 %v8342, 8
        %v8383 = vmul.u32.u64.compose %v8382, %v8381
        %v8384 = vextract.low.u32 %v8383
        %v8385 = vextract.high.u32 %v8383
        %v8386 = vmul.u32.u64.compose %v8382, %v8377
        %v8387 = vextract.low.u32 %v8386
        %v8388 = vextract.high.u32 %v8386
        %v8389 = vmul.u32 %v8382, %v8373
        %v8390 = vadd.s32 %v8385, %v8387
        %vm8391 = vc.u32 %v8385, %v8387
        %v8392 = vadd.s32 %v8388, 1
        %v8393 = vsel %vm8391, %v8392, %v8388
        %v8394 = vadd.s32 %v8389, %v8393
        %v8395 = vadd.s32 %v8394, 536870912
        %v8396 = vshrl.u32 %v8395, 30
        %v8397 = vshll.u32 %v8396, 30
        %v8398 = vsub.s32 %v8394, %v8397
        %vm8399 = vcmp.lt.s32.totalorder %v8398, 0
        %v8400 = vsub.s32 0, %v8398
        %v8401 = vsel %vm8399, %v8400, %v8398
        %v8402 = vclz %v8401
        %v8403 = vsub.s32 %v8402, 2
        %vm8404 = vcmp.gt.s32.totalorder 0, %v8403
        %v8405 = vsel %vm8404, 0, %v8403
        %v8406 = vsub.s32 32, %v8405
        %v8407 = vshll.u32 %v8398, %v8405
        %v8408 = vshrl.u32 %v8390, %v8406
        %v8409 = vor.u32 %v8407, %v8408
        %v8410 = vsub.s32 4294967266, %v8405
        %v8411 = vadd.s32 %v8410, 127
        %v8412 = vshll.u32 %v8411, 23
        %v8413 = vor.u32 4788187, %v8412
        %v8414 = vand.u32 2147483647, %v8413
        %v8416 = vcvt.s32.f32 %v8409
        %v8417 = vmul.f32 %v8416, %v8414
        %v8418 = vxor.u32 %v8417, 2147483648
        %v8419 = vsel %vm8336, %v8418, %v8417
        %v8420 = vsub.s32 4, %v8396
        %v8421 = vsel %vm8336, %v8420, %v8396
        %v8422 = vsel %vm8335, %v3738, %v8419
        %v8423 = vsel %vm8335, 0, %v8421
        %v8424 = vcosq.f32.pop %v8422
        %v8425 = vsinq.f32.pop %v8422
        %vm8426 = vweird.f32 %v3738
        %v8427 = vadd.s32 %v8423, 3
        %v8428 = vand.u32 %v8427, 3
        %vm8429 = vcmp.lt.s32.totalorder %v8428, 2
        %vm8430 = vcmp.eq.s32.totalorder %v8428, 0
        %v8431 = vxor.u32 %v8425, 2147483648
        %v8432 = vsel %vm8430, %v8424, %v8431
        %vm8433 = vcmp.eq.s32.totalorder %v8428, 2
        %v8434 = vxor.u32 %v8424, 2147483648
        %v8435 = vsel %vm8433, %v8434, %v8425
        %v8436 = vsel %vm8429, %v8432, %v8435
        %v8437 = vsel %vm8426, nan, %v8436
        %v8438 = vand.u32 2147483647, %v3739
        %vm8439 = vcmp.le.f32.partialorder %v8438, 0.7853982
        %vm8440 = vcmp.lt.s32.totalorder %v3739, 0
        %v8441 = vand.u32 %v3739, 2139095040
        %v8442 = vshrl.u32 %v8441, 23
        %v8443 = vsub.s32 %v8442, 127
        %v8444 = vand.u32 2147483647, %v3739
        %v8445 = vand.u32 %v8444, 8388607
        %v8446 = vor.u32 %v8445, 8388608
        %v8447 = vsub.s32 0, %v8446
        %v8448 = vadd.s32 %v8443, 1
        %vm8449 = vcmp.gt.s32.totalorder %v8448, 0
        %v8450 = vsel %vm8449, %v8448, 0
        %v8451 = vshrl.u32 %v8450, 5
        %v8452 = vand.u32 %v8450, 31
        %v8453 = vsub.s32 32, %v8452
        %v8454 = vshrl.u32 683565275, %v8453
        %v8455 = vshll.u32 683565275, %v8452
        %v8456 = vshrl.u32 2475754826, %v8453
        %v8457 = vor.u32 %v8455, %v8456
        %v8458 = vshll.u32 2475754826, %v8452
        %v8459 = vshrl.u32 2131351028, %v8453
        %v8460 = vor.u32 %v8458, %v8459
        %v8461 = vshll.u32 2131351028, %v8452
        %v8462 = vshrl.u32 2102212464, %v8453
        %v8463 = vor.u32 %v8461, %v8462
        %v8464 = vshll.u32 2102212464, %v8452
        %v8465 = vshrl.u32 920167782, %v8453
        %v8466 = vor.u32 %v8464, %v8465
        %v8467 = vshll.u32 920167782, %v8452
        %v8468 = vshrl.u32 1326507024, %v8453
        %v8469 = vor.u32 %v8467, %v8468
        %vm8470 = vcmp.lt.s32.totalorder %v8451, 1
        %vm8471 = vcmp.lt.s32.totalorder %v8451, 2
        %vm8472 = vcmp.lt.s32.totalorder %v8451, 3
        %vm8473 = vcmp.lt.s32.totalorder %v8451, 4
        %v8474 = vsel %vm8470, %v8454, %v8457
        %v8475 = vsel %vm8473, %v8463, 2102212464
        %v8476 = vsel %vm8472, %v8460, %v8475
        %v8477 = vsel %vm8471, %v8474, %v8476
        %v8478 = vsel %vm8470, %v8457, %v8460
        %v8479 = vsel %vm8473, %v8466, 920167782
        %v8480 = vsel %vm8472, %v8463, %v8479
        %v8481 = vsel %vm8471, %v8478, %v8480
        %v8482 = vsel %vm8470, %v8460, %v8463
        %v8483 = vsel %vm8473, %v8469, 1326507024
        %v8484 = vsel %vm8472, %v8466, %v8483
        %v8485 = vsel %vm8471, %v8482, %v8484
        %v8486 = vshll.u32 %v8446, 8
        %v8487 = vmul.u32.u64.compose %v8486, %v8485
        %v8488 = vextract.low.u32 %v8487
        %v8489 = vextract.high.u32 %v8487
        %v8490 = vmul.u32.u64.compose %v8486, %v8481
        %v8491 = vextract.low.u32 %v8490
        %v8492 = vextract.high.u32 %v8490
        %v8493 = vmul.u32 %v8486, %v8477
        %v8494 = vadd.s32 %v8489, %v8491
        %vm8495 = vc.u32 %v8489, %v8491
        %v8496 = vadd.s32 %v8492, 1
        %v8497 = vsel %vm8495, %v8496, %v8492
        %v8498 = vadd.s32 %v8493, %v8497
        %v8499 = vadd.s32 %v8498, 536870912
        %v8500 = vshrl.u32 %v8499, 30
        %v8501 = vshll.u32 %v8500, 30
        %v8502 = vsub.s32 %v8498, %v8501
        %vm8503 = vcmp.lt.s32.totalorder %v8502, 0
        %v8504 = vsub.s32 0, %v8502
        %v8505 = vsel %vm8503, %v8504, %v8502
        %v8506 = vclz %v8505
        %v8507 = vsub.s32 %v8506, 2
        %vm8508 = vcmp.gt.s32.totalorder 0, %v8507
        %v8509 = vsel %vm8508, 0, %v8507
        %v8510 = vsub.s32 32, %v8509
        %v8511 = vshll.u32 %v8502, %v8509
        %v8512 = vshrl.u32 %v8494, %v8510
        %v8513 = vor.u32 %v8511, %v8512
        %v8514 = vsub.s32 4294967266, %v8509
        %v8515 = vadd.s32 %v8514, 127
        %v8516 = vshll.u32 %v8515, 23
        %v8517 = vor.u32 4788187, %v8516
        %v8518 = vand.u32 2147483647, %v8517
        %v8520 = vcvt.s32.f32 %v8513
        %v8521 = vmul.f32 %v8520, %v8518
        %v8522 = vxor.u32 %v8521, 2147483648
        %v8523 = vsel %vm8440, %v8522, %v8521
        %v8524 = vsub.s32 4, %v8500
        %v8525 = vsel %vm8440, %v8524, %v8500
        %v8526 = vsel %vm8439, %v3739, %v8523
        %v8527 = vsel %vm8439, 0, %v8525
        %v8528 = vcosq.f32.pop %v8526
        %v8529 = vsinq.f32.pop %v8526
        %vm8530 = vweird.f32 %v3739
        %v8531 = vadd.s32 %v8527, 3
        %v8532 = vand.u32 %v8531, 3
        %vm8533 = vcmp.lt.s32.totalorder %v8532, 2
        %vm8534 = vcmp.eq.s32.totalorder %v8532, 0
        %v8535 = vxor.u32 %v8529, 2147483648
        %v8536 = vsel %vm8534, %v8528, %v8535
        %vm8537 = vcmp.eq.s32.totalorder %v8532, 2
        %v8538 = vxor.u32 %v8528, 2147483648
        %v8539 = vsel %vm8537, %v8538, %v8529
        %v8540 = vsel %vm8533, %v8536, %v8539
        %v8541 = vsel %vm8530, nan, %v8540
        %v8542 = vand.u32 2147483647, %v3740
        %vm8543 = vcmp.le.f32.partialorder %v8542, 0.7853982
        %vm8544 = vcmp.lt.s32.totalorder %v3740, 0
        %v8545 = vand.u32 %v3740, 2139095040
        %v8546 = vshrl.u32 %v8545, 23
        %v8547 = vsub.s32 %v8546, 127
        %v8548 = vand.u32 2147483647, %v3740
        %v8549 = vand.u32 %v8548, 8388607
        %v8550 = vor.u32 %v8549, 8388608
        %v8551 = vsub.s32 0, %v8550
        %v8552 = vadd.s32 %v8547, 1
        %vm8553 = vcmp.gt.s32.totalorder %v8552, 0
        %v8554 = vsel %vm8553, %v8552, 0
        %v8555 = vshrl.u32 %v8554, 5
        %v8556 = vand.u32 %v8554, 31
        %v8557 = vsub.s32 32, %v8556
        %v8558 = vshrl.u32 683565275, %v8557
        %v8559 = vshll.u32 683565275, %v8556
        %v8560 = vshrl.u32 2475754826, %v8557
        %v8561 = vor.u32 %v8559, %v8560
        %v8562 = vshll.u32 2475754826, %v8556
        %v8563 = vshrl.u32 2131351028, %v8557
        %v8564 = vor.u32 %v8562, %v8563
        %v8565 = vshll.u32 2131351028, %v8556
        %v8566 = vshrl.u32 2102212464, %v8557
        %v8567 = vor.u32 %v8565, %v8566
        %v8568 = vshll.u32 2102212464, %v8556
        %v8569 = vshrl.u32 920167782, %v8557
        %v8570 = vor.u32 %v8568, %v8569
        %v8571 = vshll.u32 920167782, %v8556
        %v8572 = vshrl.u32 1326507024, %v8557
        %v8573 = vor.u32 %v8571, %v8572
        %vm8574 = vcmp.lt.s32.totalorder %v8555, 1
        %vm8575 = vcmp.lt.s32.totalorder %v8555, 2
        %vm8576 = vcmp.lt.s32.totalorder %v8555, 3
        %vm8577 = vcmp.lt.s32.totalorder %v8555, 4
        %v8578 = vsel %vm8574, %v8558, %v8561
        %v8579 = vsel %vm8577, %v8567, 2102212464
        %v8580 = vsel %vm8576, %v8564, %v8579
        %v8581 = vsel %vm8575, %v8578, %v8580
        %v8582 = vsel %vm8574, %v8561, %v8564
        %v8583 = vsel %vm8577, %v8570, 920167782
        %v8584 = vsel %vm8576, %v8567, %v8583
        %v8585 = vsel %vm8575, %v8582, %v8584
        %v8586 = vsel %vm8574, %v8564, %v8567
        %v8587 = vsel %vm8577, %v8573, 1326507024
        %v8588 = vsel %vm8576, %v8570, %v8587
        %v8589 = vsel %vm8575, %v8586, %v8588
        %v8590 = vshll.u32 %v8550, 8
        %v8591 = vmul.u32.u64.compose %v8590, %v8589
        %v8592 = vextract.low.u32 %v8591
        %v8593 = vextract.high.u32 %v8591
        %v8594 = vmul.u32.u64.compose %v8590, %v8585
        %v8595 = vextract.low.u32 %v8594
        %v8596 = vextract.high.u32 %v8594
        %v8597 = vmul.u32 %v8590, %v8581
        %v8598 = vadd.s32 %v8593, %v8595
        %vm8599 = vc.u32 %v8593, %v8595
        %v8600 = vadd.s32 %v8596, 1
        %v8601 = vsel %vm8599, %v8600, %v8596
        %v8602 = vadd.s32 %v8597, %v8601
        %v8603 = vadd.s32 %v8602, 536870912
        %v8604 = vshrl.u32 %v8603, 30
        %v8605 = vshll.u32 %v8604, 30
        %v8606 = vsub.s32 %v8602, %v8605
        %vm8607 = vcmp.lt.s32.totalorder %v8606, 0
        %v8608 = vsub.s32 0, %v8606
        %v8609 = vsel %vm8607, %v8608, %v8606
        %v8610 = vclz %v8609
        %v8611 = vsub.s32 %v8610, 2
        %vm8612 = vcmp.gt.s32.totalorder 0, %v8611
        %v8613 = vsel %vm8612, 0, %v8611
        %v8614 = vsub.s32 32, %v8613
        %v8615 = vshll.u32 %v8606, %v8613
        %v8616 = vshrl.u32 %v8598, %v8614
        %v8617 = vor.u32 %v8615, %v8616
        %v8618 = vsub.s32 4294967266, %v8613
        %v8619 = vadd.s32 %v8618, 127
        %v8620 = vshll.u32 %v8619, 23
        %v8621 = vor.u32 4788187, %v8620
        %v8622 = vand.u32 2147483647, %v8621
        %v8624 = vcvt.s32.f32 %v8617
        %v8625 = vmul.f32 %v8624, %v8622
        %v8626 = vxor.u32 %v8625, 2147483648
        %v8627 = vsel %vm8544, %v8626, %v8625
        %v8628 = vsub.s32 4, %v8604
        %v8629 = vsel %vm8544, %v8628, %v8604
        %v8630 = vsel %vm8543, %v3740, %v8627
        %v8631 = vsel %vm8543, 0, %v8629
        %v8632 = vcosq.f32.pop %v8630
        %v8633 = vsinq.f32.pop %v8630
        %vm8634 = vweird.f32 %v3740
        %v8635 = vadd.s32 %v8631, 3
        %v8636 = vand.u32 %v8635, 3
        %vm8637 = vcmp.lt.s32.totalorder %v8636, 2
        %vm8638 = vcmp.eq.s32.totalorder %v8636, 0
        %v8639 = vxor.u32 %v8633, 2147483648
        %v8640 = vsel %vm8638, %v8632, %v8639
        %vm8641 = vcmp.eq.s32.totalorder %v8636, 2
        %v8642 = vxor.u32 %v8632, 2147483648
        %v8643 = vsel %vm8641, %v8642, %v8633
        %v8644 = vsel %vm8637, %v8640, %v8643
        %v8645 = vsel %vm8634, nan, %v8644
        %v8646 = vand.u32 2147483647, %v3741
        %vm8647 = vcmp.le.f32.partialorder %v8646, 0.7853982
        %vm8648 = vcmp.lt.s32.totalorder %v3741, 0
        %v8649 = vand.u32 %v3741, 2139095040
        %v8650 = vshrl.u32 %v8649, 23
        %v8651 = vsub.s32 %v8650, 127
        %v8652 = vand.u32 2147483647, %v3741
        %v8653 = vand.u32 %v8652, 8388607
        %v8654 = vor.u32 %v8653, 8388608
        %v8655 = vsub.s32 0, %v8654
        %v8656 = vadd.s32 %v8651, 1
        %vm8657 = vcmp.gt.s32.totalorder %v8656, 0
        %v8658 = vsel %vm8657, %v8656, 0
        %v8659 = vshrl.u32 %v8658, 5
        %v8660 = vand.u32 %v8658, 31
        %v8661 = vsub.s32 32, %v8660
        %v8662 = vshrl.u32 683565275, %v8661
        %v8663 = vshll.u32 683565275, %v8660
        %v8664 = vshrl.u32 2475754826, %v8661
        %v8665 = vor.u32 %v8663, %v8664
        %v8666 = vshll.u32 2475754826, %v8660
        %v8667 = vshrl.u32 2131351028, %v8661
        %v8668 = vor.u32 %v8666, %v8667
        %v8669 = vshll.u32 2131351028, %v8660
        %v8670 = vshrl.u32 2102212464, %v8661
        %v8671 = vor.u32 %v8669, %v8670
        %v8672 = vshll.u32 2102212464, %v8660
        %v8673 = vshrl.u32 920167782, %v8661
        %v8674 = vor.u32 %v8672, %v8673
        %v8675 = vshll.u32 920167782, %v8660
        %v8676 = vshrl.u32 1326507024, %v8661
        %v8677 = vor.u32 %v8675, %v8676
        %vm8678 = vcmp.lt.s32.totalorder %v8659, 1
        %vm8679 = vcmp.lt.s32.totalorder %v8659, 2
        %vm8680 = vcmp.lt.s32.totalorder %v8659, 3
        %vm8681 = vcmp.lt.s32.totalorder %v8659, 4
        %v8682 = vsel %vm8678, %v8662, %v8665
        %v8683 = vsel %vm8681, %v8671, 2102212464
        %v8684 = vsel %vm8680, %v8668, %v8683
        %v8685 = vsel %vm8679, %v8682, %v8684
        %v8686 = vsel %vm8678, %v8665, %v8668
        %v8687 = vsel %vm8681, %v8674, 920167782
        %v8688 = vsel %vm8680, %v8671, %v8687
        %v8689 = vsel %vm8679, %v8686, %v8688
        %v8690 = vsel %vm8678, %v8668, %v8671
        %v8691 = vsel %vm8681, %v8677, 1326507024
        %v8692 = vsel %vm8680, %v8674, %v8691
        %v8693 = vsel %vm8679, %v8690, %v8692
        %v8694 = vshll.u32 %v8654, 8
        %v8695 = vmul.u32.u64.compose %v8694, %v8693
        %v8696 = vextract.low.u32 %v8695
        %v8697 = vextract.high.u32 %v8695
        %v8698 = vmul.u32.u64.compose %v8694, %v8689
        %v8699 = vextract.low.u32 %v8698
        %v8700 = vextract.high.u32 %v8698
        %v8701 = vmul.u32 %v8694, %v8685
        %v8702 = vadd.s32 %v8697, %v8699
        %vm8703 = vc.u32 %v8697, %v8699
        %v8704 = vadd.s32 %v8700, 1
        %v8705 = vsel %vm8703, %v8704, %v8700
        %v8706 = vadd.s32 %v8701, %v8705
        %v8707 = vadd.s32 %v8706, 536870912
        %v8708 = vshrl.u32 %v8707, 30
        %v8709 = vshll.u32 %v8708, 30
        %v8710 = vsub.s32 %v8706, %v8709
        %vm8711 = vcmp.lt.s32.totalorder %v8710, 0
        %v8712 = vsub.s32 0, %v8710
        %v8713 = vsel %vm8711, %v8712, %v8710
        %v8714 = vclz %v8713
        %v8715 = vsub.s32 %v8714, 2
        %vm8716 = vcmp.gt.s32.totalorder 0, %v8715
        %v8717 = vsel %vm8716, 0, %v8715
        %v8718 = vsub.s32 32, %v8717
        %v8719 = vshll.u32 %v8710, %v8717
        %v8720 = vshrl.u32 %v8702, %v8718
        %v8721 = vor.u32 %v8719, %v8720
        %v8722 = vsub.s32 4294967266, %v8717
        %v8723 = vadd.s32 %v8722, 127
        %v8724 = vshll.u32 %v8723, 23
        %v8725 = vor.u32 4788187, %v8724
        %v8726 = vand.u32 2147483647, %v8725
        %v8728 = vcvt.s32.f32 %v8721
        %v8729 = vmul.f32 %v8728, %v8726
        %v8730 = vxor.u32 %v8729, 2147483648
        %v8731 = vsel %vm8648, %v8730, %v8729
        %v8732 = vsub.s32 4, %v8708
        %v8733 = vsel %vm8648, %v8732, %v8708
        %v8734 = vsel %vm8647, %v3741, %v8731
        %v8735 = vsel %vm8647, 0, %v8733
        %v8736 = vcosq.f32.pop %v8734
        %v8737 = vsinq.f32.pop %v8734
        %vm8738 = vweird.f32 %v3741
        %v8739 = vadd.s32 %v8735, 3
        %v8740 = vand.u32 %v8739, 3
        %vm8741 = vcmp.lt.s32.totalorder %v8740, 2
        %vm8742 = vcmp.eq.s32.totalorder %v8740, 0
        %v8743 = vxor.u32 %v8737, 2147483648
        %v8744 = vsel %vm8742, %v8736, %v8743
        %vm8745 = vcmp.eq.s32.totalorder %v8740, 2
        %v8746 = vxor.u32 %v8736, 2147483648
        %v8747 = vsel %vm8745, %v8746, %v8737
        %v8748 = vsel %vm8741, %v8744, %v8747
        %v8749 = vsel %vm8738, nan, %v8748
        %v8750 = vand.u32 2147483647, %v3742
        %vm8751 = vcmp.le.f32.partialorder %v8750, 0.7853982
        %vm8752 = vcmp.lt.s32.totalorder %v3742, 0
        %v8753 = vand.u32 %v3742, 2139095040
        %v8754 = vshrl.u32 %v8753, 23
        %v8755 = vsub.s32 %v8754, 127
        %v8756 = vand.u32 2147483647, %v3742
        %v8757 = vand.u32 %v8756, 8388607
        %v8758 = vor.u32 %v8757, 8388608
        %v8759 = vsub.s32 0, %v8758
        %v8760 = vadd.s32 %v8755, 1
        %vm8761 = vcmp.gt.s32.totalorder %v8760, 0
        %v8762 = vsel %vm8761, %v8760, 0
        %v8763 = vshrl.u32 %v8762, 5
        %v8764 = vand.u32 %v8762, 31
        %v8765 = vsub.s32 32, %v8764
        %v8766 = vshrl.u32 683565275, %v8765
        %v8767 = vshll.u32 683565275, %v8764
        %v8768 = vshrl.u32 2475754826, %v8765
        %v8769 = vor.u32 %v8767, %v8768
        %v8770 = vshll.u32 2475754826, %v8764
        %v8771 = vshrl.u32 2131351028, %v8765
        %v8772 = vor.u32 %v8770, %v8771
        %v8773 = vshll.u32 2131351028, %v8764
        %v8774 = vshrl.u32 2102212464, %v8765
        %v8775 = vor.u32 %v8773, %v8774
        %v8776 = vshll.u32 2102212464, %v8764
        %v8777 = vshrl.u32 920167782, %v8765
        %v8778 = vor.u32 %v8776, %v8777
        %v8779 = vshll.u32 920167782, %v8764
        %v8780 = vshrl.u32 1326507024, %v8765
        %v8781 = vor.u32 %v8779, %v8780
        %vm8782 = vcmp.lt.s32.totalorder %v8763, 1
        %vm8783 = vcmp.lt.s32.totalorder %v8763, 2
        %vm8784 = vcmp.lt.s32.totalorder %v8763, 3
        %vm8785 = vcmp.lt.s32.totalorder %v8763, 4
        %v8786 = vsel %vm8782, %v8766, %v8769
        %v8787 = vsel %vm8785, %v8775, 2102212464
        %v8788 = vsel %vm8784, %v8772, %v8787
        %v8789 = vsel %vm8783, %v8786, %v8788
        %v8790 = vsel %vm8782, %v8769, %v8772
        %v8791 = vsel %vm8785, %v8778, 920167782
        %v8792 = vsel %vm8784, %v8775, %v8791
        %v8793 = vsel %vm8783, %v8790, %v8792
        %v8794 = vsel %vm8782, %v8772, %v8775
        %v8795 = vsel %vm8785, %v8781, 1326507024
        %v8796 = vsel %vm8784, %v8778, %v8795
        %v8797 = vsel %vm8783, %v8794, %v8796
        %v8798 = vshll.u32 %v8758, 8
        %v8799 = vmul.u32.u64.compose %v8798, %v8797
        %v8800 = vextract.low.u32 %v8799
        %v8801 = vextract.high.u32 %v8799
        %v8802 = vmul.u32.u64.compose %v8798, %v8793
        %v8803 = vextract.low.u32 %v8802
        %v8804 = vextract.high.u32 %v8802
        %v8805 = vmul.u32 %v8798, %v8789
        %v8806 = vadd.s32 %v8801, %v8803
        %vm8807 = vc.u32 %v8801, %v8803
        %v8808 = vadd.s32 %v8804, 1
        %v8809 = vsel %vm8807, %v8808, %v8804
        %v8810 = vadd.s32 %v8805, %v8809
        %v8811 = vadd.s32 %v8810, 536870912
        %v8812 = vshrl.u32 %v8811, 30
        %v8813 = vshll.u32 %v8812, 30
        %v8814 = vsub.s32 %v8810, %v8813
        %vm8815 = vcmp.lt.s32.totalorder %v8814, 0
        %v8816 = vsub.s32 0, %v8814
        %v8817 = vsel %vm8815, %v8816, %v8814
        %v8818 = vclz %v8817
        %v8819 = vsub.s32 %v8818, 2
        %vm8820 = vcmp.gt.s32.totalorder 0, %v8819
        %v8821 = vsel %vm8820, 0, %v8819
        %v8822 = vsub.s32 32, %v8821
        %v8823 = vshll.u32 %v8814, %v8821
        %v8824 = vshrl.u32 %v8806, %v8822
        %v8825 = vor.u32 %v8823, %v8824
        %v8826 = vsub.s32 4294967266, %v8821
        %v8827 = vadd.s32 %v8826, 127
        %v8828 = vshll.u32 %v8827, 23
        %v8829 = vor.u32 4788187, %v8828
        %v8830 = vand.u32 2147483647, %v8829
        %v8832 = vcvt.s32.f32 %v8825
        %v8833 = vmul.f32 %v8832, %v8830
        %v8834 = vxor.u32 %v8833, 2147483648
        %v8835 = vsel %vm8752, %v8834, %v8833
        %v8836 = vsub.s32 4, %v8812
        %v8837 = vsel %vm8752, %v8836, %v8812
        %v8838 = vsel %vm8751, %v3742, %v8835
        %v8839 = vsel %vm8751, 0, %v8837
        %v8840 = vcosq.f32.pop %v8838
        %v8841 = vsinq.f32.pop %v8838
        %vm8842 = vweird.f32 %v3742
        %v8843 = vadd.s32 %v8839, 3
        %v8844 = vand.u32 %v8843, 3
        %vm8845 = vcmp.lt.s32.totalorder %v8844, 2
        %vm8846 = vcmp.eq.s32.totalorder %v8844, 0
        %v8847 = vxor.u32 %v8841, 2147483648
        %v8848 = vsel %vm8846, %v8840, %v8847
        %vm8849 = vcmp.eq.s32.totalorder %v8844, 2
        %v8850 = vxor.u32 %v8840, 2147483648
        %v8851 = vsel %vm8849, %v8850, %v8841
        %v8852 = vsel %vm8845, %v8848, %v8851
        %v8853 = vsel %vm8842, nan, %v8852
        %v8854 = vand.u32 2147483647, %v3743
        %vm8855 = vcmp.le.f32.partialorder %v8854, 0.7853982
        %vm8856 = vcmp.lt.s32.totalorder %v3743, 0
        %v8857 = vand.u32 %v3743, 2139095040
        %v8858 = vshrl.u32 %v8857, 23
        %v8859 = vsub.s32 %v8858, 127
        %v8860 = vand.u32 2147483647, %v3743
        %v8861 = vand.u32 %v8860, 8388607
        %v8862 = vor.u32 %v8861, 8388608
        %v8863 = vsub.s32 0, %v8862
        %v8864 = vadd.s32 %v8859, 1
        %vm8865 = vcmp.gt.s32.totalorder %v8864, 0
        %v8866 = vsel %vm8865, %v8864, 0
        %v8867 = vshrl.u32 %v8866, 5
        %v8868 = vand.u32 %v8866, 31
        %v8869 = vsub.s32 32, %v8868
        %v8870 = vshrl.u32 683565275, %v8869
        %v8871 = vshll.u32 683565275, %v8868
        %v8872 = vshrl.u32 2475754826, %v8869
        %v8873 = vor.u32 %v8871, %v8872
        %v8874 = vshll.u32 2475754826, %v8868
        %v8875 = vshrl.u32 2131351028, %v8869
        %v8876 = vor.u32 %v8874, %v8875
        %v8877 = vshll.u32 2131351028, %v8868
        %v8878 = vshrl.u32 2102212464, %v8869
        %v8879 = vor.u32 %v8877, %v8878
        %v8880 = vshll.u32 2102212464, %v8868
        %v8881 = vshrl.u32 920167782, %v8869
        %v8882 = vor.u32 %v8880, %v8881
        %v8883 = vshll.u32 920167782, %v8868
        %v8884 = vshrl.u32 1326507024, %v8869
        %v8885 = vor.u32 %v8883, %v8884
        %vm8886 = vcmp.lt.s32.totalorder %v8867, 1
        %vm8887 = vcmp.lt.s32.totalorder %v8867, 2
        %vm8888 = vcmp.lt.s32.totalorder %v8867, 3
        %vm8889 = vcmp.lt.s32.totalorder %v8867, 4
        %v8890 = vsel %vm8886, %v8870, %v8873
        %v8891 = vsel %vm8889, %v8879, 2102212464
        %v8892 = vsel %vm8888, %v8876, %v8891
        %v8893 = vsel %vm8887, %v8890, %v8892
        %v8894 = vsel %vm8886, %v8873, %v8876
        %v8895 = vsel %vm8889, %v8882, 920167782
        %v8896 = vsel %vm8888, %v8879, %v8895
        %v8897 = vsel %vm8887, %v8894, %v8896
        %v8898 = vsel %vm8886, %v8876, %v8879
        %v8899 = vsel %vm8889, %v8885, 1326507024
        %v8900 = vsel %vm8888, %v8882, %v8899
        %v8901 = vsel %vm8887, %v8898, %v8900
        %v8902 = vshll.u32 %v8862, 8
        %v8903 = vmul.u32.u64.compose %v8902, %v8901
        %v8904 = vextract.low.u32 %v8903
        %v8905 = vextract.high.u32 %v8903
        %v8906 = vmul.u32.u64.compose %v8902, %v8897
        %v8907 = vextract.low.u32 %v8906
        %v8908 = vextract.high.u32 %v8906
        %v8909 = vmul.u32 %v8902, %v8893
        %v8910 = vadd.s32 %v8905, %v8907
        %vm8911 = vc.u32 %v8905, %v8907
        %v8912 = vadd.s32 %v8908, 1
        %v8913 = vsel %vm8911, %v8912, %v8908
        %v8914 = vadd.s32 %v8909, %v8913
        %v8915 = vadd.s32 %v8914, 536870912
        %v8916 = vshrl.u32 %v8915, 30
        %v8917 = vshll.u32 %v8916, 30
        %v8918 = vsub.s32 %v8914, %v8917
        %vm8919 = vcmp.lt.s32.totalorder %v8918, 0
        %v8920 = vsub.s32 0, %v8918
        %v8921 = vsel %vm8919, %v8920, %v8918
        %v8922 = vclz %v8921
        %v8923 = vsub.s32 %v8922, 2
        %vm8924 = vcmp.gt.s32.totalorder 0, %v8923
        %v8925 = vsel %vm8924, 0, %v8923
        %v8926 = vsub.s32 32, %v8925
        %v8927 = vshll.u32 %v8918, %v8925
        %v8928 = vshrl.u32 %v8910, %v8926
        %v8929 = vor.u32 %v8927, %v8928
        %v8930 = vsub.s32 4294967266, %v8925
        %v8931 = vadd.s32 %v8930, 127
        %v8932 = vshll.u32 %v8931, 23
        %v8933 = vor.u32 4788187, %v8932
        %v8934 = vand.u32 2147483647, %v8933
        %v8936 = vcvt.s32.f32 %v8929
        %v8937 = vmul.f32 %v8936, %v8934
        %v8938 = vxor.u32 %v8937, 2147483648
        %v8939 = vsel %vm8856, %v8938, %v8937
        %v8940 = vsub.s32 4, %v8916
        %v8941 = vsel %vm8856, %v8940, %v8916
        %v8942 = vsel %vm8855, %v3743, %v8939
        %v8943 = vsel %vm8855, 0, %v8941
        %v8944 = vcosq.f32.pop %v8942
        %v8945 = vsinq.f32.pop %v8942
        %vm8946 = vweird.f32 %v3743
        %v8947 = vadd.s32 %v8943, 3
        %v8948 = vand.u32 %v8947, 3
        %vm8949 = vcmp.lt.s32.totalorder %v8948, 2
        %vm8950 = vcmp.eq.s32.totalorder %v8948, 0
        %v8951 = vxor.u32 %v8945, 2147483648
        %v8952 = vsel %vm8950, %v8944, %v8951
        %vm8953 = vcmp.eq.s32.totalorder %v8948, 2
        %v8954 = vxor.u32 %v8944, 2147483648
        %v8955 = vsel %vm8953, %v8954, %v8945
        %v8956 = vsel %vm8949, %v8952, %v8955
        %v8957 = vsel %vm8946, nan, %v8956
        %v8958 = vand.u32 2147483647, %v3744
        %vm8959 = vcmp.le.f32.partialorder %v8958, 0.7853982
        %vm8960 = vcmp.lt.s32.totalorder %v3744, 0
        %v8961 = vand.u32 %v3744, 2139095040
        %v8962 = vshrl.u32 %v8961, 23
        %v8963 = vsub.s32 %v8962, 127
        %v8964 = vand.u32 2147483647, %v3744
        %v8965 = vand.u32 %v8964, 8388607
        %v8966 = vor.u32 %v8965, 8388608
        %v8967 = vsub.s32 0, %v8966
        %v8968 = vadd.s32 %v8963, 1
        %vm8969 = vcmp.gt.s32.totalorder %v8968, 0
        %v8970 = vsel %vm8969, %v8968, 0
        %v8971 = vshrl.u32 %v8970, 5
        %v8972 = vand.u32 %v8970, 31
        %v8973 = vsub.s32 32, %v8972
        %v8974 = vshrl.u32 683565275, %v8973
        %v8975 = vshll.u32 683565275, %v8972
        %v8976 = vshrl.u32 2475754826, %v8973
        %v8977 = vor.u32 %v8975, %v8976
        %v8978 = vshll.u32 2475754826, %v8972
        %v8979 = vshrl.u32 2131351028, %v8973
        %v8980 = vor.u32 %v8978, %v8979
        %v8981 = vshll.u32 2131351028, %v8972
        %v8982 = vshrl.u32 2102212464, %v8973
        %v8983 = vor.u32 %v8981, %v8982
        %v8984 = vshll.u32 2102212464, %v8972
        %v8985 = vshrl.u32 920167782, %v8973
        %v8986 = vor.u32 %v8984, %v8985
        %v8987 = vshll.u32 920167782, %v8972
        %v8988 = vshrl.u32 1326507024, %v8973
        %v8989 = vor.u32 %v8987, %v8988
        %vm8990 = vcmp.lt.s32.totalorder %v8971, 1
        %vm8991 = vcmp.lt.s32.totalorder %v8971, 2
        %vm8992 = vcmp.lt.s32.totalorder %v8971, 3
        %vm8993 = vcmp.lt.s32.totalorder %v8971, 4
        %v8994 = vsel %vm8990, %v8974, %v8977
        %v8995 = vsel %vm8993, %v8983, 2102212464
        %v8996 = vsel %vm8992, %v8980, %v8995
        %v8997 = vsel %vm8991, %v8994, %v8996
        %v8998 = vsel %vm8990, %v8977, %v8980
        %v8999 = vsel %vm8993, %v8986, 920167782
        %v9000 = vsel %vm8992, %v8983, %v8999
        %v9001 = vsel %vm8991, %v8998, %v9000
        %v9002 = vsel %vm8990, %v8980, %v8983
        %v9003 = vsel %vm8993, %v8989, 1326507024
        %v9004 = vsel %vm8992, %v8986, %v9003
        %v9005 = vsel %vm8991, %v9002, %v9004
        %v9006 = vshll.u32 %v8966, 8
        %v9007 = vmul.u32.u64.compose %v9006, %v9005
        %v9008 = vextract.low.u32 %v9007
        %v9009 = vextract.high.u32 %v9007
        %v9010 = vmul.u32.u64.compose %v9006, %v9001
        %v9011 = vextract.low.u32 %v9010
        %v9012 = vextract.high.u32 %v9010
        %v9013 = vmul.u32 %v9006, %v8997
        %v9014 = vadd.s32 %v9009, %v9011
        %vm9015 = vc.u32 %v9009, %v9011
        %v9016 = vadd.s32 %v9012, 1
        %v9017 = vsel %vm9015, %v9016, %v9012
        %v9018 = vadd.s32 %v9013, %v9017
        %v9019 = vadd.s32 %v9018, 536870912
        %v9020 = vshrl.u32 %v9019, 30
        %v9021 = vshll.u32 %v9020, 30
        %v9022 = vsub.s32 %v9018, %v9021
        %vm9023 = vcmp.lt.s32.totalorder %v9022, 0
        %v9024 = vsub.s32 0, %v9022
        %v9025 = vsel %vm9023, %v9024, %v9022
        %v9026 = vclz %v9025
        %v9027 = vsub.s32 %v9026, 2
        %vm9028 = vcmp.gt.s32.totalorder 0, %v9027
        %v9029 = vsel %vm9028, 0, %v9027
        %v9030 = vsub.s32 32, %v9029
        %v9031 = vshll.u32 %v9022, %v9029
        %v9032 = vshrl.u32 %v9014, %v9030
        %v9033 = vor.u32 %v9031, %v9032
        %v9034 = vsub.s32 4294967266, %v9029
        %v9035 = vadd.s32 %v9034, 127
        %v9036 = vshll.u32 %v9035, 23
        %v9037 = vor.u32 4788187, %v9036
        %v9038 = vand.u32 2147483647, %v9037
        %v9040 = vcvt.s32.f32 %v9033
        %v9041 = vmul.f32 %v9040, %v9038
        %v9042 = vxor.u32 %v9041, 2147483648
        %v9043 = vsel %vm8960, %v9042, %v9041
        %v9044 = vsub.s32 4, %v9020
        %v9045 = vsel %vm8960, %v9044, %v9020
        %v9046 = vsel %vm8959, %v3744, %v9043
        %v9047 = vsel %vm8959, 0, %v9045
        %v9048 = vcosq.f32.pop %v9046
        %v9049 = vsinq.f32.pop %v9046
        %vm9050 = vweird.f32 %v3744
        %v9051 = vadd.s32 %v9047, 3
        %v9052 = vand.u32 %v9051, 3
        %vm9053 = vcmp.lt.s32.totalorder %v9052, 2
        %vm9054 = vcmp.eq.s32.totalorder %v9052, 0
        %v9055 = vxor.u32 %v9049, 2147483648
        %v9056 = vsel %vm9054, %v9048, %v9055
        %vm9057 = vcmp.eq.s32.totalorder %v9052, 2
        %v9058 = vxor.u32 %v9048, 2147483648
        %v9059 = vsel %vm9057, %v9058, %v9049
        %v9060 = vsel %vm9053, %v9056, %v9059
        %v9061 = vsel %vm9050, nan, %v9060
        %v9062 = vand.u32 2147483647, %v3745
        %vm9063 = vcmp.le.f32.partialorder %v9062, 0.7853982
        %vm9064 = vcmp.lt.s32.totalorder %v3745, 0
        %v9065 = vand.u32 %v3745, 2139095040
        %v9066 = vshrl.u32 %v9065, 23
        %v9067 = vsub.s32 %v9066, 127
        %v9068 = vand.u32 2147483647, %v3745
        %v9069 = vand.u32 %v9068, 8388607
        %v9070 = vor.u32 %v9069, 8388608
        %v9071 = vsub.s32 0, %v9070
        %v9072 = vadd.s32 %v9067, 1
        %vm9073 = vcmp.gt.s32.totalorder %v9072, 0
        %v9074 = vsel %vm9073, %v9072, 0
        %v9075 = vshrl.u32 %v9074, 5
        %v9076 = vand.u32 %v9074, 31
        %v9077 = vsub.s32 32, %v9076
        %v9078 = vshrl.u32 683565275, %v9077
        %v9079 = vshll.u32 683565275, %v9076
        %v9080 = vshrl.u32 2475754826, %v9077
        %v9081 = vor.u32 %v9079, %v9080
        %v9082 = vshll.u32 2475754826, %v9076
        %v9083 = vshrl.u32 2131351028, %v9077
        %v9084 = vor.u32 %v9082, %v9083
        %v9085 = vshll.u32 2131351028, %v9076
        %v9086 = vshrl.u32 2102212464, %v9077
        %v9087 = vor.u32 %v9085, %v9086
        %v9088 = vshll.u32 2102212464, %v9076
        %v9089 = vshrl.u32 920167782, %v9077
        %v9090 = vor.u32 %v9088, %v9089
        %v9091 = vshll.u32 920167782, %v9076
        %v9092 = vshrl.u32 1326507024, %v9077
        %v9093 = vor.u32 %v9091, %v9092
        %vm9094 = vcmp.lt.s32.totalorder %v9075, 1
        %vm9095 = vcmp.lt.s32.totalorder %v9075, 2
        %vm9096 = vcmp.lt.s32.totalorder %v9075, 3
        %vm9097 = vcmp.lt.s32.totalorder %v9075, 4
        %v9098 = vsel %vm9094, %v9078, %v9081
        %v9099 = vsel %vm9097, %v9087, 2102212464
        %v9100 = vsel %vm9096, %v9084, %v9099
        %v9101 = vsel %vm9095, %v9098, %v9100
        %v9102 = vsel %vm9094, %v9081, %v9084
        %v9103 = vsel %vm9097, %v9090, 920167782
        %v9104 = vsel %vm9096, %v9087, %v9103
        %v9105 = vsel %vm9095, %v9102, %v9104
        %v9106 = vsel %vm9094, %v9084, %v9087
        %v9107 = vsel %vm9097, %v9093, 1326507024
        %v9108 = vsel %vm9096, %v9090, %v9107
        %v9109 = vsel %vm9095, %v9106, %v9108
        %v9110 = vshll.u32 %v9070, 8
        %v9111 = vmul.u32.u64.compose %v9110, %v9109
        %v9112 = vextract.low.u32 %v9111
        %v9113 = vextract.high.u32 %v9111
        %v9114 = vmul.u32.u64.compose %v9110, %v9105
        %v9115 = vextract.low.u32 %v9114
        %v9116 = vextract.high.u32 %v9114
        %v9117 = vmul.u32 %v9110, %v9101
        %v9118 = vadd.s32 %v9113, %v9115
        %vm9119 = vc.u32 %v9113, %v9115
        %v9120 = vadd.s32 %v9116, 1
        %v9121 = vsel %vm9119, %v9120, %v9116
        %v9122 = vadd.s32 %v9117, %v9121
        %v9123 = vadd.s32 %v9122, 536870912
        %v9124 = vshrl.u32 %v9123, 30
        %v9125 = vshll.u32 %v9124, 30
        %v9126 = vsub.s32 %v9122, %v9125
        %vm9127 = vcmp.lt.s32.totalorder %v9126, 0
        %v9128 = vsub.s32 0, %v9126
        %v9129 = vsel %vm9127, %v9128, %v9126
        %v9130 = vclz %v9129
        %v9131 = vsub.s32 %v9130, 2
        %vm9132 = vcmp.gt.s32.totalorder 0, %v9131
        %v9133 = vsel %vm9132, 0, %v9131
        %v9134 = vsub.s32 32, %v9133
        %v9135 = vshll.u32 %v9126, %v9133
        %v9136 = vshrl.u32 %v9118, %v9134
        %v9137 = vor.u32 %v9135, %v9136
        %v9138 = vsub.s32 4294967266, %v9133
        %v9139 = vadd.s32 %v9138, 127
        %v9140 = vshll.u32 %v9139, 23
        %v9141 = vor.u32 4788187, %v9140
        %v9142 = vand.u32 2147483647, %v9141
        %v9144 = vcvt.s32.f32 %v9137
        %v9145 = vmul.f32 %v9144, %v9142
        %v9146 = vxor.u32 %v9145, 2147483648
        %v9147 = vsel %vm9064, %v9146, %v9145
        %v9148 = vsub.s32 4, %v9124
        %v9149 = vsel %vm9064, %v9148, %v9124
        %v9150 = vsel %vm9063, %v3745, %v9147
        %v9151 = vsel %vm9063, 0, %v9149
        %v9152 = vcosq.f32.pop %v9150
        %v9153 = vsinq.f32.pop %v9150
        %vm9154 = vweird.f32 %v3745
        %v9155 = vadd.s32 %v9151, 3
        %v9156 = vand.u32 %v9155, 3
        %vm9157 = vcmp.lt.s32.totalorder %v9156, 2
        %vm9158 = vcmp.eq.s32.totalorder %v9156, 0
        %v9159 = vxor.u32 %v9153, 2147483648
        %v9160 = vsel %vm9158, %v9152, %v9159
        %vm9161 = vcmp.eq.s32.totalorder %v9156, 2
        %v9162 = vxor.u32 %v9152, 2147483648
        %v9163 = vsel %vm9161, %v9162, %v9153
        %v9164 = vsel %vm9157, %v9160, %v9163
        %v9165 = vsel %vm9154, nan, %v9164
        %v9166 = vand.u32 2147483647, %v3746
        %vm9167 = vcmp.le.f32.partialorder %v9166, 0.7853982
        %vm9168 = vcmp.lt.s32.totalorder %v3746, 0
        %v9169 = vand.u32 %v3746, 2139095040
        %v9170 = vshrl.u32 %v9169, 23
        %v9171 = vsub.s32 %v9170, 127
        %v9172 = vand.u32 2147483647, %v3746
        %v9173 = vand.u32 %v9172, 8388607
        %v9174 = vor.u32 %v9173, 8388608
        %v9175 = vsub.s32 0, %v9174
        %v9176 = vadd.s32 %v9171, 1
        %vm9177 = vcmp.gt.s32.totalorder %v9176, 0
        %v9178 = vsel %vm9177, %v9176, 0
        %v9179 = vshrl.u32 %v9178, 5
        %v9180 = vand.u32 %v9178, 31
        %v9181 = vsub.s32 32, %v9180
        %v9182 = vshrl.u32 683565275, %v9181
        %v9183 = vshll.u32 683565275, %v9180
        %v9184 = vshrl.u32 2475754826, %v9181
        %v9185 = vor.u32 %v9183, %v9184
        %v9186 = vshll.u32 2475754826, %v9180
        %v9187 = vshrl.u32 2131351028, %v9181
        %v9188 = vor.u32 %v9186, %v9187
        %v9189 = vshll.u32 2131351028, %v9180
        %v9190 = vshrl.u32 2102212464, %v9181
        %v9191 = vor.u32 %v9189, %v9190
        %v9192 = vshll.u32 2102212464, %v9180
        %v9193 = vshrl.u32 920167782, %v9181
        %v9194 = vor.u32 %v9192, %v9193
        %v9195 = vshll.u32 920167782, %v9180
        %v9196 = vshrl.u32 1326507024, %v9181
        %v9197 = vor.u32 %v9195, %v9196
        %vm9198 = vcmp.lt.s32.totalorder %v9179, 1
        %vm9199 = vcmp.lt.s32.totalorder %v9179, 2
        %vm9200 = vcmp.lt.s32.totalorder %v9179, 3
        %vm9201 = vcmp.lt.s32.totalorder %v9179, 4
        %v9202 = vsel %vm9198, %v9182, %v9185
        %v9203 = vsel %vm9201, %v9191, 2102212464
        %v9204 = vsel %vm9200, %v9188, %v9203
        %v9205 = vsel %vm9199, %v9202, %v9204
        %v9206 = vsel %vm9198, %v9185, %v9188
        %v9207 = vsel %vm9201, %v9194, 920167782
        %v9208 = vsel %vm9200, %v9191, %v9207
        %v9209 = vsel %vm9199, %v9206, %v9208
        %v9210 = vsel %vm9198, %v9188, %v9191
        %v9211 = vsel %vm9201, %v9197, 1326507024
        %v9212 = vsel %vm9200, %v9194, %v9211
        %v9213 = vsel %vm9199, %v9210, %v9212
        %v9214 = vshll.u32 %v9174, 8
        %v9215 = vmul.u32.u64.compose %v9214, %v9213
        %v9216 = vextract.low.u32 %v9215
        %v9217 = vextract.high.u32 %v9215
        %v9218 = vmul.u32.u64.compose %v9214, %v9209
        %v9219 = vextract.low.u32 %v9218
        %v9220 = vextract.high.u32 %v9218
        %v9221 = vmul.u32 %v9214, %v9205
        %v9222 = vadd.s32 %v9217, %v9219
        %vm9223 = vc.u32 %v9217, %v9219
        %v9224 = vadd.s32 %v9220, 1
        %v9225 = vsel %vm9223, %v9224, %v9220
        %v9226 = vadd.s32 %v9221, %v9225
        %v9227 = vadd.s32 %v9226, 536870912
        %v9228 = vshrl.u32 %v9227, 30
        %v9229 = vshll.u32 %v9228, 30
        %v9230 = vsub.s32 %v9226, %v9229
        %vm9231 = vcmp.lt.s32.totalorder %v9230, 0
        %v9232 = vsub.s32 0, %v9230
        %v9233 = vsel %vm9231, %v9232, %v9230
        %v9234 = vclz %v9233
        %v9235 = vsub.s32 %v9234, 2
        %vm9236 = vcmp.gt.s32.totalorder 0, %v9235
        %v9237 = vsel %vm9236, 0, %v9235
        %v9238 = vsub.s32 32, %v9237
        %v9239 = vshll.u32 %v9230, %v9237
        %v9240 = vshrl.u32 %v9222, %v9238
        %v9241 = vor.u32 %v9239, %v9240
        %v9242 = vsub.s32 4294967266, %v9237
        %v9243 = vadd.s32 %v9242, 127
        %v9244 = vshll.u32 %v9243, 23
        %v9245 = vor.u32 4788187, %v9244
        %v9246 = vand.u32 2147483647, %v9245
        %v9248 = vcvt.s32.f32 %v9241
        %v9249 = vmul.f32 %v9248, %v9246
        %v9250 = vxor.u32 %v9249, 2147483648
        %v9251 = vsel %vm9168, %v9250, %v9249
        %v9252 = vsub.s32 4, %v9228
        %v9253 = vsel %vm9168, %v9252, %v9228
        %v9254 = vsel %vm9167, %v3746, %v9251
        %v9255 = vsel %vm9167, 0, %v9253
        %v9256 = vcosq.f32.pop %v9254
        %v9257 = vsinq.f32.pop %v9254
        %vm9258 = vweird.f32 %v3746
        %v9259 = vadd.s32 %v9255, 3
        %v9260 = vand.u32 %v9259, 3
        %vm9261 = vcmp.lt.s32.totalorder %v9260, 2
        %vm9262 = vcmp.eq.s32.totalorder %v9260, 0
        %v9263 = vxor.u32 %v9257, 2147483648
        %v9264 = vsel %vm9262, %v9256, %v9263
        %vm9265 = vcmp.eq.s32.totalorder %v9260, 2
        %v9266 = vxor.u32 %v9256, 2147483648
        %v9267 = vsel %vm9265, %v9266, %v9257
        %v9268 = vsel %vm9261, %v9264, %v9267
        %v9269 = vsel %vm9258, nan, %v9268
        %v9270 = vand.u32 2147483647, %v3747
        %vm9271 = vcmp.le.f32.partialorder %v9270, 0.7853982
        %vm9272 = vcmp.lt.s32.totalorder %v3747, 0
        %v9273 = vand.u32 %v3747, 2139095040
        %v9274 = vshrl.u32 %v9273, 23
        %v9275 = vsub.s32 %v9274, 127
        %v9276 = vand.u32 2147483647, %v3747
        %v9277 = vand.u32 %v9276, 8388607
        %v9278 = vor.u32 %v9277, 8388608
        %v9279 = vsub.s32 0, %v9278
        %v9280 = vadd.s32 %v9275, 1
        %vm9281 = vcmp.gt.s32.totalorder %v9280, 0
        %v9282 = vsel %vm9281, %v9280, 0
        %v9283 = vshrl.u32 %v9282, 5
        %v9284 = vand.u32 %v9282, 31
        %v9285 = vsub.s32 32, %v9284
        %v9286 = vshrl.u32 683565275, %v9285
        %v9287 = vshll.u32 683565275, %v9284
        %v9288 = vshrl.u32 2475754826, %v9285
        %v9289 = vor.u32 %v9287, %v9288
        %v9290 = vshll.u32 2475754826, %v9284
        %v9291 = vshrl.u32 2131351028, %v9285
        %v9292 = vor.u32 %v9290, %v9291
        %v9293 = vshll.u32 2131351028, %v9284
        %v9294 = vshrl.u32 2102212464, %v9285
        %v9295 = vor.u32 %v9293, %v9294
        %v9296 = vshll.u32 2102212464, %v9284
        %v9297 = vshrl.u32 920167782, %v9285
        %v9298 = vor.u32 %v9296, %v9297
        %v9299 = vshll.u32 920167782, %v9284
        %v9300 = vshrl.u32 1326507024, %v9285
        %v9301 = vor.u32 %v9299, %v9300
        %vm9302 = vcmp.lt.s32.totalorder %v9283, 1
        %vm9303 = vcmp.lt.s32.totalorder %v9283, 2
        %vm9304 = vcmp.lt.s32.totalorder %v9283, 3
        %vm9305 = vcmp.lt.s32.totalorder %v9283, 4
        %v9306 = vsel %vm9302, %v9286, %v9289
        %v9307 = vsel %vm9305, %v9295, 2102212464
        %v9308 = vsel %vm9304, %v9292, %v9307
        %v9309 = vsel %vm9303, %v9306, %v9308
        %v9310 = vsel %vm9302, %v9289, %v9292
        %v9311 = vsel %vm9305, %v9298, 920167782
        %v9312 = vsel %vm9304, %v9295, %v9311
        %v9313 = vsel %vm9303, %v9310, %v9312
        %v9314 = vsel %vm9302, %v9292, %v9295
        %v9315 = vsel %vm9305, %v9301, 1326507024
        %v9316 = vsel %vm9304, %v9298, %v9315
        %v9317 = vsel %vm9303, %v9314, %v9316
        %v9318 = vshll.u32 %v9278, 8
        %v9319 = vmul.u32.u64.compose %v9318, %v9317
        %v9320 = vextract.low.u32 %v9319
        %v9321 = vextract.high.u32 %v9319
        %v9322 = vmul.u32.u64.compose %v9318, %v9313
        %v9323 = vextract.low.u32 %v9322
        %v9324 = vextract.high.u32 %v9322
        %v9325 = vmul.u32 %v9318, %v9309
        %v9326 = vadd.s32 %v9321, %v9323
        %vm9327 = vc.u32 %v9321, %v9323
        %v9328 = vadd.s32 %v9324, 1
        %v9329 = vsel %vm9327, %v9328, %v9324
        %v9330 = vadd.s32 %v9325, %v9329
        %v9331 = vadd.s32 %v9330, 536870912
        %v9332 = vshrl.u32 %v9331, 30
        %v9333 = vshll.u32 %v9332, 30
        %v9334 = vsub.s32 %v9330, %v9333
        %vm9335 = vcmp.lt.s32.totalorder %v9334, 0
        %v9336 = vsub.s32 0, %v9334
        %v9337 = vsel %vm9335, %v9336, %v9334
        %v9338 = vclz %v9337
        %v9339 = vsub.s32 %v9338, 2
        %vm9340 = vcmp.gt.s32.totalorder 0, %v9339
        %v9341 = vsel %vm9340, 0, %v9339
        %v9342 = vsub.s32 32, %v9341
        %v9343 = vshll.u32 %v9334, %v9341
        %v9344 = vshrl.u32 %v9326, %v9342
        %v9345 = vor.u32 %v9343, %v9344
        %v9346 = vsub.s32 4294967266, %v9341
        %v9347 = vadd.s32 %v9346, 127
        %v9348 = vshll.u32 %v9347, 23
        %v9349 = vor.u32 4788187, %v9348
        %v9350 = vand.u32 2147483647, %v9349
        %v9352 = vcvt.s32.f32 %v9345
        %v9353 = vmul.f32 %v9352, %v9350
        %v9354 = vxor.u32 %v9353, 2147483648
        %v9355 = vsel %vm9272, %v9354, %v9353
        %v9356 = vsub.s32 4, %v9332
        %v9357 = vsel %vm9272, %v9356, %v9332
        %v9358 = vsel %vm9271, %v3747, %v9355
        %v9359 = vsel %vm9271, 0, %v9357
        %v9360 = vcosq.f32.pop %v9358
        %v9361 = vsinq.f32.pop %v9358
        %vm9362 = vweird.f32 %v3747
        %v9363 = vadd.s32 %v9359, 3
        %v9364 = vand.u32 %v9363, 3
        %vm9365 = vcmp.lt.s32.totalorder %v9364, 2
        %vm9366 = vcmp.eq.s32.totalorder %v9364, 0
        %v9367 = vxor.u32 %v9361, 2147483648
        %v9368 = vsel %vm9366, %v9360, %v9367
        %vm9369 = vcmp.eq.s32.totalorder %v9364, 2
        %v9370 = vxor.u32 %v9360, 2147483648
        %v9371 = vsel %vm9369, %v9370, %v9361
        %v9372 = vsel %vm9365, %v9368, %v9371
        %v9373 = vsel %vm9362, nan, %v9372
        %v9374 = vand.u32 2147483647, %v3748
        %vm9375 = vcmp.le.f32.partialorder %v9374, 0.7853982
        %vm9376 = vcmp.lt.s32.totalorder %v3748, 0
        %v9377 = vand.u32 %v3748, 2139095040
        %v9378 = vshrl.u32 %v9377, 23
        %v9379 = vsub.s32 %v9378, 127
        %v9380 = vand.u32 2147483647, %v3748
        %v9381 = vand.u32 %v9380, 8388607
        %v9382 = vor.u32 %v9381, 8388608
        %v9383 = vsub.s32 0, %v9382
        %v9384 = vadd.s32 %v9379, 1
        %vm9385 = vcmp.gt.s32.totalorder %v9384, 0
        %v9386 = vsel %vm9385, %v9384, 0
        %v9387 = vshrl.u32 %v9386, 5
        %v9388 = vand.u32 %v9386, 31
        %v9389 = vsub.s32 32, %v9388
        %v9390 = vshrl.u32 683565275, %v9389
        %v9391 = vshll.u32 683565275, %v9388
        %v9392 = vshrl.u32 2475754826, %v9389
        %v9393 = vor.u32 %v9391, %v9392
        %v9394 = vshll.u32 2475754826, %v9388
        %v9395 = vshrl.u32 2131351028, %v9389
        %v9396 = vor.u32 %v9394, %v9395
        %v9397 = vshll.u32 2131351028, %v9388
        %v9398 = vshrl.u32 2102212464, %v9389
        %v9399 = vor.u32 %v9397, %v9398
        %v9400 = vshll.u32 2102212464, %v9388
        %v9401 = vshrl.u32 920167782, %v9389
        %v9402 = vor.u32 %v9400, %v9401
        %v9403 = vshll.u32 920167782, %v9388
        %v9404 = vshrl.u32 1326507024, %v9389
        %v9405 = vor.u32 %v9403, %v9404
        %vm9406 = vcmp.lt.s32.totalorder %v9387, 1
        %vm9407 = vcmp.lt.s32.totalorder %v9387, 2
        %vm9408 = vcmp.lt.s32.totalorder %v9387, 3
        %vm9409 = vcmp.lt.s32.totalorder %v9387, 4
        %v9410 = vsel %vm9406, %v9390, %v9393
        %v9411 = vsel %vm9409, %v9399, 2102212464
        %v9412 = vsel %vm9408, %v9396, %v9411
        %v9413 = vsel %vm9407, %v9410, %v9412
        %v9414 = vsel %vm9406, %v9393, %v9396
        %v9415 = vsel %vm9409, %v9402, 920167782
        %v9416 = vsel %vm9408, %v9399, %v9415
        %v9417 = vsel %vm9407, %v9414, %v9416
        %v9418 = vsel %vm9406, %v9396, %v9399
        %v9419 = vsel %vm9409, %v9405, 1326507024
        %v9420 = vsel %vm9408, %v9402, %v9419
        %v9421 = vsel %vm9407, %v9418, %v9420
        %v9422 = vshll.u32 %v9382, 8
        %v9423 = vmul.u32.u64.compose %v9422, %v9421
        %v9424 = vextract.low.u32 %v9423
        %v9425 = vextract.high.u32 %v9423
        %v9426 = vmul.u32.u64.compose %v9422, %v9417
        %v9427 = vextract.low.u32 %v9426
        %v9428 = vextract.high.u32 %v9426
        %v9429 = vmul.u32 %v9422, %v9413
        %v9430 = vadd.s32 %v9425, %v9427
        %vm9431 = vc.u32 %v9425, %v9427
        %v9432 = vadd.s32 %v9428, 1
        %v9433 = vsel %vm9431, %v9432, %v9428
        %v9434 = vadd.s32 %v9429, %v9433
        %v9435 = vadd.s32 %v9434, 536870912
        %v9436 = vshrl.u32 %v9435, 30
        %v9437 = vshll.u32 %v9436, 30
        %v9438 = vsub.s32 %v9434, %v9437
        %vm9439 = vcmp.lt.s32.totalorder %v9438, 0
        %v9440 = vsub.s32 0, %v9438
        %v9441 = vsel %vm9439, %v9440, %v9438
        %v9442 = vclz %v9441
        %v9443 = vsub.s32 %v9442, 2
        %vm9444 = vcmp.gt.s32.totalorder 0, %v9443
        %v9445 = vsel %vm9444, 0, %v9443
        %v9446 = vsub.s32 32, %v9445
        %v9447 = vshll.u32 %v9438, %v9445
        %v9448 = vshrl.u32 %v9430, %v9446
        %v9449 = vor.u32 %v9447, %v9448
        %v9450 = vsub.s32 4294967266, %v9445
        %v9451 = vadd.s32 %v9450, 127
        %v9452 = vshll.u32 %v9451, 23
        %v9453 = vor.u32 4788187, %v9452
        %v9454 = vand.u32 2147483647, %v9453
        %v9456 = vcvt.s32.f32 %v9449
        %v9457 = vmul.f32 %v9456, %v9454
        %v9458 = vxor.u32 %v9457, 2147483648
        %v9459 = vsel %vm9376, %v9458, %v9457
        %v9460 = vsub.s32 4, %v9436
        %v9461 = vsel %vm9376, %v9460, %v9436
        %v9462 = vsel %vm9375, %v3748, %v9459
        %v9463 = vsel %vm9375, 0, %v9461
        %v9464 = vcosq.f32.pop %v9462
        %v9465 = vsinq.f32.pop %v9462
        %vm9466 = vweird.f32 %v3748
        %v9467 = vadd.s32 %v9463, 3
        %v9468 = vand.u32 %v9467, 3
        %vm9469 = vcmp.lt.s32.totalorder %v9468, 2
        %vm9470 = vcmp.eq.s32.totalorder %v9468, 0
        %v9471 = vxor.u32 %v9465, 2147483648
        %v9472 = vsel %vm9470, %v9464, %v9471
        %vm9473 = vcmp.eq.s32.totalorder %v9468, 2
        %v9474 = vxor.u32 %v9464, 2147483648
        %v9475 = vsel %vm9473, %v9474, %v9465
        %v9476 = vsel %vm9469, %v9472, %v9475
        %v9477 = vsel %vm9466, nan, %v9476
        %v9478 = vand.u32 2147483647, %v3749
        %vm9479 = vcmp.le.f32.partialorder %v9478, 0.7853982
        %vm9480 = vcmp.lt.s32.totalorder %v3749, 0
        %v9481 = vand.u32 %v3749, 2139095040
        %v9482 = vshrl.u32 %v9481, 23
        %v9483 = vsub.s32 %v9482, 127
        %v9484 = vand.u32 2147483647, %v3749
        %v9485 = vand.u32 %v9484, 8388607
        %v9486 = vor.u32 %v9485, 8388608
        %v9487 = vsub.s32 0, %v9486
        %v9488 = vadd.s32 %v9483, 1
        %vm9489 = vcmp.gt.s32.totalorder %v9488, 0
        %v9490 = vsel %vm9489, %v9488, 0
        %v9491 = vshrl.u32 %v9490, 5
        %v9492 = vand.u32 %v9490, 31
        %v9493 = vsub.s32 32, %v9492
        %v9494 = vshrl.u32 683565275, %v9493
        %v9495 = vshll.u32 683565275, %v9492
        %v9496 = vshrl.u32 2475754826, %v9493
        %v9497 = vor.u32 %v9495, %v9496
        %v9498 = vshll.u32 2475754826, %v9492
        %v9499 = vshrl.u32 2131351028, %v9493
        %v9500 = vor.u32 %v9498, %v9499
        %v9501 = vshll.u32 2131351028, %v9492
        %v9502 = vshrl.u32 2102212464, %v9493
        %v9503 = vor.u32 %v9501, %v9502
        %v9504 = vshll.u32 2102212464, %v9492
        %v9505 = vshrl.u32 920167782, %v9493
        %v9506 = vor.u32 %v9504, %v9505
        %v9507 = vshll.u32 920167782, %v9492
        %v9508 = vshrl.u32 1326507024, %v9493
        %v9509 = vor.u32 %v9507, %v9508
        %vm9510 = vcmp.lt.s32.totalorder %v9491, 1
        %vm9511 = vcmp.lt.s32.totalorder %v9491, 2
        %vm9512 = vcmp.lt.s32.totalorder %v9491, 3
        %vm9513 = vcmp.lt.s32.totalorder %v9491, 4
        %v9514 = vsel %vm9510, %v9494, %v9497
        %v9515 = vsel %vm9513, %v9503, 2102212464
        %v9516 = vsel %vm9512, %v9500, %v9515
        %v9517 = vsel %vm9511, %v9514, %v9516
        %v9518 = vsel %vm9510, %v9497, %v9500
        %v9519 = vsel %vm9513, %v9506, 920167782
        %v9520 = vsel %vm9512, %v9503, %v9519
        %v9521 = vsel %vm9511, %v9518, %v9520
        %v9522 = vsel %vm9510, %v9500, %v9503
        %v9523 = vsel %vm9513, %v9509, 1326507024
        %v9524 = vsel %vm9512, %v9506, %v9523
        %v9525 = vsel %vm9511, %v9522, %v9524
        %v9526 = vshll.u32 %v9486, 8
        %v9527 = vmul.u32.u64.compose %v9526, %v9525
        %v9528 = vextract.low.u32 %v9527
        %v9529 = vextract.high.u32 %v9527
        %v9530 = vmul.u32.u64.compose %v9526, %v9521
        %v9531 = vextract.low.u32 %v9530
        %v9532 = vextract.high.u32 %v9530
        %v9533 = vmul.u32 %v9526, %v9517
        %v9534 = vadd.s32 %v9529, %v9531
        %vm9535 = vc.u32 %v9529, %v9531
        %v9536 = vadd.s32 %v9532, 1
        %v9537 = vsel %vm9535, %v9536, %v9532
        %v9538 = vadd.s32 %v9533, %v9537
        %v9539 = vadd.s32 %v9538, 536870912
        %v9540 = vshrl.u32 %v9539, 30
        %v9541 = vshll.u32 %v9540, 30
        %v9542 = vsub.s32 %v9538, %v9541
        %vm9543 = vcmp.lt.s32.totalorder %v9542, 0
        %v9544 = vsub.s32 0, %v9542
        %v9545 = vsel %vm9543, %v9544, %v9542
        %v9546 = vclz %v9545
        %v9547 = vsub.s32 %v9546, 2
        %vm9548 = vcmp.gt.s32.totalorder 0, %v9547
        %v9549 = vsel %vm9548, 0, %v9547
        %v9550 = vsub.s32 32, %v9549
        %v9551 = vshll.u32 %v9542, %v9549
        %v9552 = vshrl.u32 %v9534, %v9550
        %v9553 = vor.u32 %v9551, %v9552
        %v9554 = vsub.s32 4294967266, %v9549
        %v9555 = vadd.s32 %v9554, 127
        %v9556 = vshll.u32 %v9555, 23
        %v9557 = vor.u32 4788187, %v9556
        %v9558 = vand.u32 2147483647, %v9557
        %v9560 = vcvt.s32.f32 %v9553
        %v9561 = vmul.f32 %v9560, %v9558
        %v9562 = vxor.u32 %v9561, 2147483648
        %v9563 = vsel %vm9480, %v9562, %v9561
        %v9564 = vsub.s32 4, %v9540
        %v9565 = vsel %vm9480, %v9564, %v9540
        %v9566 = vsel %vm9479, %v3749, %v9563
        %v9567 = vsel %vm9479, 0, %v9565
        %v9568 = vcosq.f32.pop %v9566
        %v9569 = vsinq.f32.pop %v9566
        %vm9570 = vweird.f32 %v3749
        %v9571 = vadd.s32 %v9567, 3
        %v9572 = vand.u32 %v9571, 3
        %vm9573 = vcmp.lt.s32.totalorder %v9572, 2
        %vm9574 = vcmp.eq.s32.totalorder %v9572, 0
        %v9575 = vxor.u32 %v9569, 2147483648
        %v9576 = vsel %vm9574, %v9568, %v9575
        %vm9577 = vcmp.eq.s32.totalorder %v9572, 2
        %v9578 = vxor.u32 %v9568, 2147483648
        %v9579 = vsel %vm9577, %v9578, %v9569
        %v9580 = vsel %vm9573, %v9576, %v9579
        %v9581 = vsel %vm9570, nan, %v9580
        %v9582 = vand.u32 2147483647, %v3750
        %vm9583 = vcmp.le.f32.partialorder %v9582, 0.7853982
        %vm9584 = vcmp.lt.s32.totalorder %v3750, 0
        %v9585 = vand.u32 %v3750, 2139095040
        %v9586 = vshrl.u32 %v9585, 23
        %v9587 = vsub.s32 %v9586, 127
        %v9588 = vand.u32 2147483647, %v3750
        %v9589 = vand.u32 %v9588, 8388607
        %v9590 = vor.u32 %v9589, 8388608
        %v9591 = vsub.s32 0, %v9590
        %v9592 = vadd.s32 %v9587, 1
        %vm9593 = vcmp.gt.s32.totalorder %v9592, 0
        %v9594 = vsel %vm9593, %v9592, 0
        %v9595 = vshrl.u32 %v9594, 5
        %v9596 = vand.u32 %v9594, 31
        %v9597 = vsub.s32 32, %v9596
        %v9598 = vshrl.u32 683565275, %v9597
        %v9599 = vshll.u32 683565275, %v9596
        %v9600 = vshrl.u32 2475754826, %v9597
        %v9601 = vor.u32 %v9599, %v9600
        %v9602 = vshll.u32 2475754826, %v9596
        %v9603 = vshrl.u32 2131351028, %v9597
        %v9604 = vor.u32 %v9602, %v9603
        %v9605 = vshll.u32 2131351028, %v9596
        %v9606 = vshrl.u32 2102212464, %v9597
        %v9607 = vor.u32 %v9605, %v9606
        %v9608 = vshll.u32 2102212464, %v9596
        %v9609 = vshrl.u32 920167782, %v9597
        %v9610 = vor.u32 %v9608, %v9609
        %v9611 = vshll.u32 920167782, %v9596
        %v9612 = vshrl.u32 1326507024, %v9597
        %v9613 = vor.u32 %v9611, %v9612
        %vm9614 = vcmp.lt.s32.totalorder %v9595, 1
        %vm9615 = vcmp.lt.s32.totalorder %v9595, 2
        %vm9616 = vcmp.lt.s32.totalorder %v9595, 3
        %vm9617 = vcmp.lt.s32.totalorder %v9595, 4
        %v9618 = vsel %vm9614, %v9598, %v9601
        %v9619 = vsel %vm9617, %v9607, 2102212464
        %v9620 = vsel %vm9616, %v9604, %v9619
        %v9621 = vsel %vm9615, %v9618, %v9620
        %v9622 = vsel %vm9614, %v9601, %v9604
        %v9623 = vsel %vm9617, %v9610, 920167782
        %v9624 = vsel %vm9616, %v9607, %v9623
        %v9625 = vsel %vm9615, %v9622, %v9624
        %v9626 = vsel %vm9614, %v9604, %v9607
        %v9627 = vsel %vm9617, %v9613, 1326507024
        %v9628 = vsel %vm9616, %v9610, %v9627
        %v9629 = vsel %vm9615, %v9626, %v9628
        %v9630 = vshll.u32 %v9590, 8
        %v9631 = vmul.u32.u64.compose %v9630, %v9629
        %v9632 = vextract.low.u32 %v9631
        %v9633 = vextract.high.u32 %v9631
        %v9634 = vmul.u32.u64.compose %v9630, %v9625
        %v9635 = vextract.low.u32 %v9634
        %v9636 = vextract.high.u32 %v9634
        %v9637 = vmul.u32 %v9630, %v9621
        %v9638 = vadd.s32 %v9633, %v9635
        %vm9639 = vc.u32 %v9633, %v9635
        %v9640 = vadd.s32 %v9636, 1
        %v9641 = vsel %vm9639, %v9640, %v9636
        %v9642 = vadd.s32 %v9637, %v9641
        %v9643 = vadd.s32 %v9642, 536870912
        %v9644 = vshrl.u32 %v9643, 30
        %v9645 = vshll.u32 %v9644, 30
        %v9646 = vsub.s32 %v9642, %v9645
        %vm9647 = vcmp.lt.s32.totalorder %v9646, 0
        %v9648 = vsub.s32 0, %v9646
        %v9649 = vsel %vm9647, %v9648, %v9646
        %v9650 = vclz %v9649
        %v9651 = vsub.s32 %v9650, 2
        %vm9652 = vcmp.gt.s32.totalorder 0, %v9651
        %v9653 = vsel %vm9652, 0, %v9651
        %v9654 = vsub.s32 32, %v9653
        %v9655 = vshll.u32 %v9646, %v9653
        %v9656 = vshrl.u32 %v9638, %v9654
        %v9657 = vor.u32 %v9655, %v9656
        %v9658 = vsub.s32 4294967266, %v9653
        %v9659 = vadd.s32 %v9658, 127
        %v9660 = vshll.u32 %v9659, 23
        %v9661 = vor.u32 4788187, %v9660
        %v9662 = vand.u32 2147483647, %v9661
        %v9664 = vcvt.s32.f32 %v9657
        %v9665 = vmul.f32 %v9664, %v9662
        %v9666 = vxor.u32 %v9665, 2147483648
        %v9667 = vsel %vm9584, %v9666, %v9665
        %v9668 = vsub.s32 4, %v9644
        %v9669 = vsel %vm9584, %v9668, %v9644
        %v9670 = vsel %vm9583, %v3750, %v9667
        %v9671 = vsel %vm9583, 0, %v9669
        %v9672 = vcosq.f32.pop %v9670
        %v9673 = vsinq.f32.pop %v9670
        %vm9674 = vweird.f32 %v3750
        %v9675 = vadd.s32 %v9671, 3
        %v9676 = vand.u32 %v9675, 3
        %vm9677 = vcmp.lt.s32.totalorder %v9676, 2
        %vm9678 = vcmp.eq.s32.totalorder %v9676, 0
        %v9679 = vxor.u32 %v9673, 2147483648
        %v9680 = vsel %vm9678, %v9672, %v9679
        %vm9681 = vcmp.eq.s32.totalorder %v9676, 2
        %v9682 = vxor.u32 %v9672, 2147483648
        %v9683 = vsel %vm9681, %v9682, %v9673
        %v9684 = vsel %vm9677, %v9680, %v9683
        %v9685 = vsel %vm9674, nan, %v9684
        %v9686 = vand.u32 2147483647, %v3751
        %vm9687 = vcmp.le.f32.partialorder %v9686, 0.7853982
        %vm9688 = vcmp.lt.s32.totalorder %v3751, 0
        %v9689 = vand.u32 %v3751, 2139095040
        %v9690 = vshrl.u32 %v9689, 23
        %v9691 = vsub.s32 %v9690, 127
        %v9692 = vand.u32 2147483647, %v3751
        %v9693 = vand.u32 %v9692, 8388607
        %v9694 = vor.u32 %v9693, 8388608
        %v9695 = vsub.s32 0, %v9694
        %v9696 = vadd.s32 %v9691, 1
        %vm9697 = vcmp.gt.s32.totalorder %v9696, 0
        %v9698 = vsel %vm9697, %v9696, 0
        %v9699 = vshrl.u32 %v9698, 5
        %v9700 = vand.u32 %v9698, 31
        %v9701 = vsub.s32 32, %v9700
        %v9702 = vshrl.u32 683565275, %v9701
        %v9703 = vshll.u32 683565275, %v9700
        %v9704 = vshrl.u32 2475754826, %v9701
        %v9705 = vor.u32 %v9703, %v9704
        %v9706 = vshll.u32 2475754826, %v9700
        %v9707 = vshrl.u32 2131351028, %v9701
        %v9708 = vor.u32 %v9706, %v9707
        %v9709 = vshll.u32 2131351028, %v9700
        %v9710 = vshrl.u32 2102212464, %v9701
        %v9711 = vor.u32 %v9709, %v9710
        %v9712 = vshll.u32 2102212464, %v9700
        %v9713 = vshrl.u32 920167782, %v9701
        %v9714 = vor.u32 %v9712, %v9713
        %v9715 = vshll.u32 920167782, %v9700
        %v9716 = vshrl.u32 1326507024, %v9701
        %v9717 = vor.u32 %v9715, %v9716
        %vm9718 = vcmp.lt.s32.totalorder %v9699, 1
        %vm9719 = vcmp.lt.s32.totalorder %v9699, 2
        %vm9720 = vcmp.lt.s32.totalorder %v9699, 3
        %vm9721 = vcmp.lt.s32.totalorder %v9699, 4
        %v9722 = vsel %vm9718, %v9702, %v9705
        %v9723 = vsel %vm9721, %v9711, 2102212464
        %v9724 = vsel %vm9720, %v9708, %v9723
        %v9725 = vsel %vm9719, %v9722, %v9724
        %v9726 = vsel %vm9718, %v9705, %v9708
        %v9727 = vsel %vm9721, %v9714, 920167782
        %v9728 = vsel %vm9720, %v9711, %v9727
        %v9729 = vsel %vm9719, %v9726, %v9728
        %v9730 = vsel %vm9718, %v9708, %v9711
        %v9731 = vsel %vm9721, %v9717, 1326507024
        %v9732 = vsel %vm9720, %v9714, %v9731
        %v9733 = vsel %vm9719, %v9730, %v9732
        %v9734 = vshll.u32 %v9694, 8
        %v9735 = vmul.u32.u64.compose %v9734, %v9733
        %v9736 = vextract.low.u32 %v9735
        %v9737 = vextract.high.u32 %v9735
        %v9738 = vmul.u32.u64.compose %v9734, %v9729
        %v9739 = vextract.low.u32 %v9738
        %v9740 = vextract.high.u32 %v9738
        %v9741 = vmul.u32 %v9734, %v9725
        %v9742 = vadd.s32 %v9737, %v9739
        %vm9743 = vc.u32 %v9737, %v9739
        %v9744 = vadd.s32 %v9740, 1
        %v9745 = vsel %vm9743, %v9744, %v9740
        %v9746 = vadd.s32 %v9741, %v9745
        %v9747 = vadd.s32 %v9746, 536870912
        %v9748 = vshrl.u32 %v9747, 30
        %v9749 = vshll.u32 %v9748, 30
        %v9750 = vsub.s32 %v9746, %v9749
        %vm9751 = vcmp.lt.s32.totalorder %v9750, 0
        %v9752 = vsub.s32 0, %v9750
        %v9753 = vsel %vm9751, %v9752, %v9750
        %v9754 = vclz %v9753
        %v9755 = vsub.s32 %v9754, 2
        %vm9756 = vcmp.gt.s32.totalorder 0, %v9755
        %v9757 = vsel %vm9756, 0, %v9755
        %v9758 = vsub.s32 32, %v9757
        %v9759 = vshll.u32 %v9750, %v9757
        %v9760 = vshrl.u32 %v9742, %v9758
        %v9761 = vor.u32 %v9759, %v9760
        %v9762 = vsub.s32 4294967266, %v9757
        %v9763 = vadd.s32 %v9762, 127
        %v9764 = vshll.u32 %v9763, 23
        %v9765 = vor.u32 4788187, %v9764
        %v9766 = vand.u32 2147483647, %v9765
        %v9768 = vcvt.s32.f32 %v9761
        %v9769 = vmul.f32 %v9768, %v9766
        %v9770 = vxor.u32 %v9769, 2147483648
        %v9771 = vsel %vm9688, %v9770, %v9769
        %v9772 = vsub.s32 4, %v9748
        %v9773 = vsel %vm9688, %v9772, %v9748
        %v9774 = vsel %vm9687, %v3751, %v9771
        %v9775 = vsel %vm9687, 0, %v9773
        %v9776 = vcosq.f32.pop %v9774
        %v9777 = vsinq.f32.pop %v9774
        %vm9778 = vweird.f32 %v3751
        %v9779 = vadd.s32 %v9775, 3
        %v9780 = vand.u32 %v9779, 3
        %vm9781 = vcmp.lt.s32.totalorder %v9780, 2
        %vm9782 = vcmp.eq.s32.totalorder %v9780, 0
        %v9783 = vxor.u32 %v9777, 2147483648
        %v9784 = vsel %vm9782, %v9776, %v9783
        %vm9785 = vcmp.eq.s32.totalorder %v9780, 2
        %v9786 = vxor.u32 %v9776, 2147483648
        %v9787 = vsel %vm9785, %v9786, %v9777
        %v9788 = vsel %vm9781, %v9784, %v9787
        %v9789 = vsel %vm9778, nan, %v9788
        %v9790 = vand.u32 2147483647, %v3752
        %vm9791 = vcmp.le.f32.partialorder %v9790, 0.7853982
        %vm9792 = vcmp.lt.s32.totalorder %v3752, 0
        %v9793 = vand.u32 %v3752, 2139095040
        %v9794 = vshrl.u32 %v9793, 23
        %v9795 = vsub.s32 %v9794, 127
        %v9796 = vand.u32 2147483647, %v3752
        %v9797 = vand.u32 %v9796, 8388607
        %v9798 = vor.u32 %v9797, 8388608
        %v9799 = vsub.s32 0, %v9798
        %v9800 = vadd.s32 %v9795, 1
        %vm9801 = vcmp.gt.s32.totalorder %v9800, 0
        %v9802 = vsel %vm9801, %v9800, 0
        %v9803 = vshrl.u32 %v9802, 5
        %v9804 = vand.u32 %v9802, 31
        %v9805 = vsub.s32 32, %v9804
        %v9806 = vshrl.u32 683565275, %v9805
        %v9807 = vshll.u32 683565275, %v9804
        %v9808 = vshrl.u32 2475754826, %v9805
        %v9809 = vor.u32 %v9807, %v9808
        %v9810 = vshll.u32 2475754826, %v9804
        %v9811 = vshrl.u32 2131351028, %v9805
        %v9812 = vor.u32 %v9810, %v9811
        %v9813 = vshll.u32 2131351028, %v9804
        %v9814 = vshrl.u32 2102212464, %v9805
        %v9815 = vor.u32 %v9813, %v9814
        %v9816 = vshll.u32 2102212464, %v9804
        %v9817 = vshrl.u32 920167782, %v9805
        %v9818 = vor.u32 %v9816, %v9817
        %v9819 = vshll.u32 920167782, %v9804
        %v9820 = vshrl.u32 1326507024, %v9805
        %v9821 = vor.u32 %v9819, %v9820
        %vm9822 = vcmp.lt.s32.totalorder %v9803, 1
        %vm9823 = vcmp.lt.s32.totalorder %v9803, 2
        %vm9824 = vcmp.lt.s32.totalorder %v9803, 3
        %vm9825 = vcmp.lt.s32.totalorder %v9803, 4
        %v9826 = vsel %vm9822, %v9806, %v9809
        %v9827 = vsel %vm9825, %v9815, 2102212464
        %v9828 = vsel %vm9824, %v9812, %v9827
        %v9829 = vsel %vm9823, %v9826, %v9828
        %v9830 = vsel %vm9822, %v9809, %v9812
        %v9831 = vsel %vm9825, %v9818, 920167782
        %v9832 = vsel %vm9824, %v9815, %v9831
        %v9833 = vsel %vm9823, %v9830, %v9832
        %v9834 = vsel %vm9822, %v9812, %v9815
        %v9835 = vsel %vm9825, %v9821, 1326507024
        %v9836 = vsel %vm9824, %v9818, %v9835
        %v9837 = vsel %vm9823, %v9834, %v9836
        %v9838 = vshll.u32 %v9798, 8
        %v9839 = vmul.u32.u64.compose %v9838, %v9837
        %v9840 = vextract.low.u32 %v9839
        %v9841 = vextract.high.u32 %v9839
        %v9842 = vmul.u32.u64.compose %v9838, %v9833
        %v9843 = vextract.low.u32 %v9842
        %v9844 = vextract.high.u32 %v9842
        %v9845 = vmul.u32 %v9838, %v9829
        %v9846 = vadd.s32 %v9841, %v9843
        %vm9847 = vc.u32 %v9841, %v9843
        %v9848 = vadd.s32 %v9844, 1
        %v9849 = vsel %vm9847, %v9848, %v9844
        %v9850 = vadd.s32 %v9845, %v9849
        %v9851 = vadd.s32 %v9850, 536870912
        %v9852 = vshrl.u32 %v9851, 30
        %v9853 = vshll.u32 %v9852, 30
        %v9854 = vsub.s32 %v9850, %v9853
        %vm9855 = vcmp.lt.s32.totalorder %v9854, 0
        %v9856 = vsub.s32 0, %v9854
        %v9857 = vsel %vm9855, %v9856, %v9854
        %v9858 = vclz %v9857
        %v9859 = vsub.s32 %v9858, 2
        %vm9860 = vcmp.gt.s32.totalorder 0, %v9859
        %v9861 = vsel %vm9860, 0, %v9859
        %v9862 = vsub.s32 32, %v9861
        %v9863 = vshll.u32 %v9854, %v9861
        %v9864 = vshrl.u32 %v9846, %v9862
        %v9865 = vor.u32 %v9863, %v9864
        %v9866 = vsub.s32 4294967266, %v9861
        %v9867 = vadd.s32 %v9866, 127
        %v9868 = vshll.u32 %v9867, 23
        %v9869 = vor.u32 4788187, %v9868
        %v9870 = vand.u32 2147483647, %v9869
        %v9872 = vcvt.s32.f32 %v9865
        %v9873 = vmul.f32 %v9872, %v9870
        %v9874 = vxor.u32 %v9873, 2147483648
        %v9875 = vsel %vm9792, %v9874, %v9873
        %v9876 = vsub.s32 4, %v9852
        %v9877 = vsel %vm9792, %v9876, %v9852
        %v9878 = vsel %vm9791, %v3752, %v9875
        %v9879 = vsel %vm9791, 0, %v9877
        %v9880 = vcosq.f32.pop %v9878
        %v9881 = vsinq.f32.pop %v9878
        %vm9882 = vweird.f32 %v3752
        %v9883 = vadd.s32 %v9879, 3
        %v9884 = vand.u32 %v9883, 3
        %vm9885 = vcmp.lt.s32.totalorder %v9884, 2
        %vm9886 = vcmp.eq.s32.totalorder %v9884, 0
        %v9887 = vxor.u32 %v9881, 2147483648
        %v9888 = vsel %vm9886, %v9880, %v9887
        %vm9889 = vcmp.eq.s32.totalorder %v9884, 2
        %v9890 = vxor.u32 %v9880, 2147483648
        %v9891 = vsel %vm9889, %v9890, %v9881
        %v9892 = vsel %vm9885, %v9888, %v9891
        %v9893 = vsel %vm9882, nan, %v9892
        %v9894 = vand.u32 2147483647, %v3753
        %vm9895 = vcmp.le.f32.partialorder %v9894, 0.7853982
        %vm9896 = vcmp.lt.s32.totalorder %v3753, 0
        %v9897 = vand.u32 %v3753, 2139095040
        %v9898 = vshrl.u32 %v9897, 23
        %v9899 = vsub.s32 %v9898, 127
        %v9900 = vand.u32 2147483647, %v3753
        %v9901 = vand.u32 %v9900, 8388607
        %v9902 = vor.u32 %v9901, 8388608
        %v9903 = vsub.s32 0, %v9902
        %v9904 = vadd.s32 %v9899, 1
        %vm9905 = vcmp.gt.s32.totalorder %v9904, 0
        %v9906 = vsel %vm9905, %v9904, 0
        %v9907 = vshrl.u32 %v9906, 5
        %v9908 = vand.u32 %v9906, 31
        %v9909 = vsub.s32 32, %v9908
        %v9910 = vshrl.u32 683565275, %v9909
        %v9911 = vshll.u32 683565275, %v9908
        %v9912 = vshrl.u32 2475754826, %v9909
        %v9913 = vor.u32 %v9911, %v9912
        %v9914 = vshll.u32 2475754826, %v9908
        %v9915 = vshrl.u32 2131351028, %v9909
        %v9916 = vor.u32 %v9914, %v9915
        %v9917 = vshll.u32 2131351028, %v9908
        %v9918 = vshrl.u32 2102212464, %v9909
        %v9919 = vor.u32 %v9917, %v9918
        %v9920 = vshll.u32 2102212464, %v9908
        %v9921 = vshrl.u32 920167782, %v9909
        %v9922 = vor.u32 %v9920, %v9921
        %v9923 = vshll.u32 920167782, %v9908
        %v9924 = vshrl.u32 1326507024, %v9909
        %v9925 = vor.u32 %v9923, %v9924
        %vm9926 = vcmp.lt.s32.totalorder %v9907, 1
        %vm9927 = vcmp.lt.s32.totalorder %v9907, 2
        %vm9928 = vcmp.lt.s32.totalorder %v9907, 3
        %vm9929 = vcmp.lt.s32.totalorder %v9907, 4
        %v9930 = vsel %vm9926, %v9910, %v9913
        %v9931 = vsel %vm9929, %v9919, 2102212464
        %v9932 = vsel %vm9928, %v9916, %v9931
        %v9933 = vsel %vm9927, %v9930, %v9932
        %v9934 = vsel %vm9926, %v9913, %v9916
        %v9935 = vsel %vm9929, %v9922, 920167782
        %v9936 = vsel %vm9928, %v9919, %v9935
        %v9937 = vsel %vm9927, %v9934, %v9936
        %v9938 = vsel %vm9926, %v9916, %v9919
        %v9939 = vsel %vm9929, %v9925, 1326507024
        %v9940 = vsel %vm9928, %v9922, %v9939
        %v9941 = vsel %vm9927, %v9938, %v9940
        %v9942 = vshll.u32 %v9902, 8
        %v9943 = vmul.u32.u64.compose %v9942, %v9941
        %v9944 = vextract.low.u32 %v9943
        %v9945 = vextract.high.u32 %v9943
        %v9946 = vmul.u32.u64.compose %v9942, %v9937
        %v9947 = vextract.low.u32 %v9946
        %v9948 = vextract.high.u32 %v9946
        %v9949 = vmul.u32 %v9942, %v9933
        %v9950 = vadd.s32 %v9945, %v9947
        %vm9951 = vc.u32 %v9945, %v9947
        %v9952 = vadd.s32 %v9948, 1
        %v9953 = vsel %vm9951, %v9952, %v9948
        %v9954 = vadd.s32 %v9949, %v9953
        %v9955 = vadd.s32 %v9954, 536870912
        %v9956 = vshrl.u32 %v9955, 30
        %v9957 = vshll.u32 %v9956, 30
        %v9958 = vsub.s32 %v9954, %v9957
        %vm9959 = vcmp.lt.s32.totalorder %v9958, 0
        %v9960 = vsub.s32 0, %v9958
        %v9961 = vsel %vm9959, %v9960, %v9958
        %v9962 = vclz %v9961
        %v9963 = vsub.s32 %v9962, 2
        %vm9964 = vcmp.gt.s32.totalorder 0, %v9963
        %v9965 = vsel %vm9964, 0, %v9963
        %v9966 = vsub.s32 32, %v9965
        %v9967 = vshll.u32 %v9958, %v9965
        %v9968 = vshrl.u32 %v9950, %v9966
        %v9969 = vor.u32 %v9967, %v9968
        %v9970 = vsub.s32 4294967266, %v9965
        %v9971 = vadd.s32 %v9970, 127
        %v9972 = vshll.u32 %v9971, 23
        %v9973 = vor.u32 4788187, %v9972
        %v9974 = vand.u32 2147483647, %v9973
        %v9976 = vcvt.s32.f32 %v9969
        %v9977 = vmul.f32 %v9976, %v9974
        %v9978 = vxor.u32 %v9977, 2147483648
        %v9979 = vsel %vm9896, %v9978, %v9977
        %v9980 = vsub.s32 4, %v9956
        %v9981 = vsel %vm9896, %v9980, %v9956
        %v9982 = vsel %vm9895, %v3753, %v9979
        %v9983 = vsel %vm9895, 0, %v9981
        %v9984 = vcosq.f32.pop %v9982
        %v9985 = vsinq.f32.pop %v9982
        %vm9986 = vweird.f32 %v3753
        %v9987 = vadd.s32 %v9983, 3
        %v9988 = vand.u32 %v9987, 3
        %vm9989 = vcmp.lt.s32.totalorder %v9988, 2
        %vm9990 = vcmp.eq.s32.totalorder %v9988, 0
        %v9991 = vxor.u32 %v9985, 2147483648
        %v9992 = vsel %vm9990, %v9984, %v9991
        %vm9993 = vcmp.eq.s32.totalorder %v9988, 2
        %v9994 = vxor.u32 %v9984, 2147483648
        %v9995 = vsel %vm9993, %v9994, %v9985
        %v9996 = vsel %vm9989, %v9992, %v9995
        %v9997 = vsel %vm9986, nan, %v9996
        %v9998 = vand.u32 2147483647, %v3754
        %vm9999 = vcmp.le.f32.partialorder %v9998, 0.7853982
        %vm10000 = vcmp.lt.s32.totalorder %v3754, 0
        %v10001 = vand.u32 %v3754, 2139095040
        %v10002 = vshrl.u32 %v10001, 23
        %v10003 = vsub.s32 %v10002, 127
        %v10004 = vand.u32 2147483647, %v3754
        %v10005 = vand.u32 %v10004, 8388607
        %v10006 = vor.u32 %v10005, 8388608
        %v10007 = vsub.s32 0, %v10006
        %v10008 = vadd.s32 %v10003, 1
        %vm10009 = vcmp.gt.s32.totalorder %v10008, 0
        %v10010 = vsel %vm10009, %v10008, 0
        %v10011 = vshrl.u32 %v10010, 5
        %v10012 = vand.u32 %v10010, 31
        %v10013 = vsub.s32 32, %v10012
        %v10014 = vshrl.u32 683565275, %v10013
        %v10015 = vshll.u32 683565275, %v10012
        %v10016 = vshrl.u32 2475754826, %v10013
        %v10017 = vor.u32 %v10015, %v10016
        %v10018 = vshll.u32 2475754826, %v10012
        %v10019 = vshrl.u32 2131351028, %v10013
        %v10020 = vor.u32 %v10018, %v10019
        %v10021 = vshll.u32 2131351028, %v10012
        %v10022 = vshrl.u32 2102212464, %v10013
        %v10023 = vor.u32 %v10021, %v10022
        %v10024 = vshll.u32 2102212464, %v10012
        %v10025 = vshrl.u32 920167782, %v10013
        %v10026 = vor.u32 %v10024, %v10025
        %v10027 = vshll.u32 920167782, %v10012
        %v10028 = vshrl.u32 1326507024, %v10013
        %v10029 = vor.u32 %v10027, %v10028
        %vm10030 = vcmp.lt.s32.totalorder %v10011, 1
        %vm10031 = vcmp.lt.s32.totalorder %v10011, 2
        %vm10032 = vcmp.lt.s32.totalorder %v10011, 3
        %vm10033 = vcmp.lt.s32.totalorder %v10011, 4
        %v10034 = vsel %vm10030, %v10014, %v10017
        %v10035 = vsel %vm10033, %v10023, 2102212464
        %v10036 = vsel %vm10032, %v10020, %v10035
        %v10037 = vsel %vm10031, %v10034, %v10036
        %v10038 = vsel %vm10030, %v10017, %v10020
        %v10039 = vsel %vm10033, %v10026, 920167782
        %v10040 = vsel %vm10032, %v10023, %v10039
        %v10041 = vsel %vm10031, %v10038, %v10040
        %v10042 = vsel %vm10030, %v10020, %v10023
        %v10043 = vsel %vm10033, %v10029, 1326507024
        %v10044 = vsel %vm10032, %v10026, %v10043
        %v10045 = vsel %vm10031, %v10042, %v10044
        %v10046 = vshll.u32 %v10006, 8
        %v10047 = vmul.u32.u64.compose %v10046, %v10045
        %v10048 = vextract.low.u32 %v10047
        %v10049 = vextract.high.u32 %v10047
        %v10050 = vmul.u32.u64.compose %v10046, %v10041
        %v10051 = vextract.low.u32 %v10050
        %v10052 = vextract.high.u32 %v10050
        %v10053 = vmul.u32 %v10046, %v10037
        %v10054 = vadd.s32 %v10049, %v10051
        %vm10055 = vc.u32 %v10049, %v10051
        %v10056 = vadd.s32 %v10052, 1
        %v10057 = vsel %vm10055, %v10056, %v10052
        %v10058 = vadd.s32 %v10053, %v10057
        %v10059 = vadd.s32 %v10058, 536870912
        %v10060 = vshrl.u32 %v10059, 30
        %v10061 = vshll.u32 %v10060, 30
        %v10062 = vsub.s32 %v10058, %v10061
        %vm10063 = vcmp.lt.s32.totalorder %v10062, 0
        %v10064 = vsub.s32 0, %v10062
        %v10065 = vsel %vm10063, %v10064, %v10062
        %v10066 = vclz %v10065
        %v10067 = vsub.s32 %v10066, 2
        %vm10068 = vcmp.gt.s32.totalorder 0, %v10067
        %v10069 = vsel %vm10068, 0, %v10067
        %v10070 = vsub.s32 32, %v10069
        %v10071 = vshll.u32 %v10062, %v10069
        %v10072 = vshrl.u32 %v10054, %v10070
        %v10073 = vor.u32 %v10071, %v10072
        %v10074 = vsub.s32 4294967266, %v10069
        %v10075 = vadd.s32 %v10074, 127
        %v10076 = vshll.u32 %v10075, 23
        %v10077 = vor.u32 4788187, %v10076
        %v10078 = vand.u32 2147483647, %v10077
        %v10080 = vcvt.s32.f32 %v10073
        %v10081 = vmul.f32 %v10080, %v10078
        %v10082 = vxor.u32 %v10081, 2147483648
        %v10083 = vsel %vm10000, %v10082, %v10081
        %v10084 = vsub.s32 4, %v10060
        %v10085 = vsel %vm10000, %v10084, %v10060
        %v10086 = vsel %vm9999, %v3754, %v10083
        %v10087 = vsel %vm9999, 0, %v10085
        %v10088 = vcosq.f32.pop %v10086
        %v10089 = vsinq.f32.pop %v10086
        %vm10090 = vweird.f32 %v3754
        %v10091 = vadd.s32 %v10087, 3
        %v10092 = vand.u32 %v10091, 3
        %vm10093 = vcmp.lt.s32.totalorder %v10092, 2
        %vm10094 = vcmp.eq.s32.totalorder %v10092, 0
        %v10095 = vxor.u32 %v10089, 2147483648
        %v10096 = vsel %vm10094, %v10088, %v10095
        %vm10097 = vcmp.eq.s32.totalorder %v10092, 2
        %v10098 = vxor.u32 %v10088, 2147483648
        %v10099 = vsel %vm10097, %v10098, %v10089
        %v10100 = vsel %vm10093, %v10096, %v10099
        %v10101 = vsel %vm10090, nan, %v10100
        %v10102 = vand.u32 2147483647, %v3755
        %vm10103 = vcmp.le.f32.partialorder %v10102, 0.7853982
        %vm10104 = vcmp.lt.s32.totalorder %v3755, 0
        %v10105 = vand.u32 %v3755, 2139095040
        %v10106 = vshrl.u32 %v10105, 23
        %v10107 = vsub.s32 %v10106, 127
        %v10108 = vand.u32 2147483647, %v3755
        %v10109 = vand.u32 %v10108, 8388607
        %v10110 = vor.u32 %v10109, 8388608
        %v10111 = vsub.s32 0, %v10110
        %v10112 = vadd.s32 %v10107, 1
        %vm10113 = vcmp.gt.s32.totalorder %v10112, 0
        %v10114 = vsel %vm10113, %v10112, 0
        %v10115 = vshrl.u32 %v10114, 5
        %v10116 = vand.u32 %v10114, 31
        %v10117 = vsub.s32 32, %v10116
        %v10118 = vshrl.u32 683565275, %v10117
        %v10119 = vshll.u32 683565275, %v10116
        %v10120 = vshrl.u32 2475754826, %v10117
        %v10121 = vor.u32 %v10119, %v10120
        %v10122 = vshll.u32 2475754826, %v10116
        %v10123 = vshrl.u32 2131351028, %v10117
        %v10124 = vor.u32 %v10122, %v10123
        %v10125 = vshll.u32 2131351028, %v10116
        %v10126 = vshrl.u32 2102212464, %v10117
        %v10127 = vor.u32 %v10125, %v10126
        %v10128 = vshll.u32 2102212464, %v10116
        %v10129 = vshrl.u32 920167782, %v10117
        %v10130 = vor.u32 %v10128, %v10129
        %v10131 = vshll.u32 920167782, %v10116
        %v10132 = vshrl.u32 1326507024, %v10117
        %v10133 = vor.u32 %v10131, %v10132
        %vm10134 = vcmp.lt.s32.totalorder %v10115, 1
        %vm10135 = vcmp.lt.s32.totalorder %v10115, 2
        %vm10136 = vcmp.lt.s32.totalorder %v10115, 3
        %vm10137 = vcmp.lt.s32.totalorder %v10115, 4
        %v10138 = vsel %vm10134, %v10118, %v10121
        %v10139 = vsel %vm10137, %v10127, 2102212464
        %v10140 = vsel %vm10136, %v10124, %v10139
        %v10141 = vsel %vm10135, %v10138, %v10140
        %v10142 = vsel %vm10134, %v10121, %v10124
        %v10143 = vsel %vm10137, %v10130, 920167782
        %v10144 = vsel %vm10136, %v10127, %v10143
        %v10145 = vsel %vm10135, %v10142, %v10144
        %v10146 = vsel %vm10134, %v10124, %v10127
        %v10147 = vsel %vm10137, %v10133, 1326507024
        %v10148 = vsel %vm10136, %v10130, %v10147
        %v10149 = vsel %vm10135, %v10146, %v10148
        %v10150 = vshll.u32 %v10110, 8
        %v10151 = vmul.u32.u64.compose %v10150, %v10149
        %v10152 = vextract.low.u32 %v10151
        %v10153 = vextract.high.u32 %v10151
        %v10154 = vmul.u32.u64.compose %v10150, %v10145
        %v10155 = vextract.low.u32 %v10154
        %v10156 = vextract.high.u32 %v10154
        %v10157 = vmul.u32 %v10150, %v10141
        %v10158 = vadd.s32 %v10153, %v10155
        %vm10159 = vc.u32 %v10153, %v10155
        %v10160 = vadd.s32 %v10156, 1
        %v10161 = vsel %vm10159, %v10160, %v10156
        %v10162 = vadd.s32 %v10157, %v10161
        %v10163 = vadd.s32 %v10162, 536870912
        %v10164 = vshrl.u32 %v10163, 30
        %v10165 = vshll.u32 %v10164, 30
        %v10166 = vsub.s32 %v10162, %v10165
        %vm10167 = vcmp.lt.s32.totalorder %v10166, 0
        %v10168 = vsub.s32 0, %v10166
        %v10169 = vsel %vm10167, %v10168, %v10166
        %v10170 = vclz %v10169
        %v10171 = vsub.s32 %v10170, 2
        %vm10172 = vcmp.gt.s32.totalorder 0, %v10171
        %v10173 = vsel %vm10172, 0, %v10171
        %v10174 = vsub.s32 32, %v10173
        %v10175 = vshll.u32 %v10166, %v10173
        %v10176 = vshrl.u32 %v10158, %v10174
        %v10177 = vor.u32 %v10175, %v10176
        %v10178 = vsub.s32 4294967266, %v10173
        %v10179 = vadd.s32 %v10178, 127
        %v10180 = vshll.u32 %v10179, 23
        %v10181 = vor.u32 4788187, %v10180
        %v10182 = vand.u32 2147483647, %v10181
        %v10184 = vcvt.s32.f32 %v10177
        %v10185 = vmul.f32 %v10184, %v10182
        %v10186 = vxor.u32 %v10185, 2147483648
        %v10187 = vsel %vm10104, %v10186, %v10185
        %v10188 = vsub.s32 4, %v10164
        %v10189 = vsel %vm10104, %v10188, %v10164
        %v10190 = vsel %vm10103, %v3755, %v10187
        %v10191 = vsel %vm10103, 0, %v10189
        %v10192 = vcosq.f32.pop %v10190
        %v10193 = vsinq.f32.pop %v10190
        %vm10194 = vweird.f32 %v3755
        %v10195 = vadd.s32 %v10191, 3
        %v10196 = vand.u32 %v10195, 3
        %vm10197 = vcmp.lt.s32.totalorder %v10196, 2
        %vm10198 = vcmp.eq.s32.totalorder %v10196, 0
        %v10199 = vxor.u32 %v10193, 2147483648
        %v10200 = vsel %vm10198, %v10192, %v10199
        %vm10201 = vcmp.eq.s32.totalorder %v10196, 2
        %v10202 = vxor.u32 %v10192, 2147483648
        %v10203 = vsel %vm10201, %v10202, %v10193
        %v10204 = vsel %vm10197, %v10200, %v10203
        %v10205 = vsel %vm10194, nan, %v10204
        %v10206 = vand.u32 2147483647, %v3756
        %vm10207 = vcmp.le.f32.partialorder %v10206, 0.7853982
        %vm10208 = vcmp.lt.s32.totalorder %v3756, 0
        %v10209 = vand.u32 %v3756, 2139095040
        %v10210 = vshrl.u32 %v10209, 23
        %v10211 = vsub.s32 %v10210, 127
        %v10212 = vand.u32 2147483647, %v3756
        %v10213 = vand.u32 %v10212, 8388607
        %v10214 = vor.u32 %v10213, 8388608
        %v10215 = vsub.s32 0, %v10214
        %v10216 = vadd.s32 %v10211, 1
        %vm10217 = vcmp.gt.s32.totalorder %v10216, 0
        %v10218 = vsel %vm10217, %v10216, 0
        %v10219 = vshrl.u32 %v10218, 5
        %v10220 = vand.u32 %v10218, 31
        %v10221 = vsub.s32 32, %v10220
        %v10222 = vshrl.u32 683565275, %v10221
        %v10223 = vshll.u32 683565275, %v10220
        %v10224 = vshrl.u32 2475754826, %v10221
        %v10225 = vor.u32 %v10223, %v10224
        %v10226 = vshll.u32 2475754826, %v10220
        %v10227 = vshrl.u32 2131351028, %v10221
        %v10228 = vor.u32 %v10226, %v10227
        %v10229 = vshll.u32 2131351028, %v10220
        %v10230 = vshrl.u32 2102212464, %v10221
        %v10231 = vor.u32 %v10229, %v10230
        %v10232 = vshll.u32 2102212464, %v10220
        %v10233 = vshrl.u32 920167782, %v10221
        %v10234 = vor.u32 %v10232, %v10233
        %v10235 = vshll.u32 920167782, %v10220
        %v10236 = vshrl.u32 1326507024, %v10221
        %v10237 = vor.u32 %v10235, %v10236
        %vm10238 = vcmp.lt.s32.totalorder %v10219, 1
        %vm10239 = vcmp.lt.s32.totalorder %v10219, 2
        %vm10240 = vcmp.lt.s32.totalorder %v10219, 3
        %vm10241 = vcmp.lt.s32.totalorder %v10219, 4
        %v10242 = vsel %vm10238, %v10222, %v10225
        %v10243 = vsel %vm10241, %v10231, 2102212464
        %v10244 = vsel %vm10240, %v10228, %v10243
        %v10245 = vsel %vm10239, %v10242, %v10244
        %v10246 = vsel %vm10238, %v10225, %v10228
        %v10247 = vsel %vm10241, %v10234, 920167782
        %v10248 = vsel %vm10240, %v10231, %v10247
        %v10249 = vsel %vm10239, %v10246, %v10248
        %v10250 = vsel %vm10238, %v10228, %v10231
        %v10251 = vsel %vm10241, %v10237, 1326507024
        %v10252 = vsel %vm10240, %v10234, %v10251
        %v10253 = vsel %vm10239, %v10250, %v10252
        %v10254 = vshll.u32 %v10214, 8
        %v10255 = vmul.u32.u64.compose %v10254, %v10253
        %v10256 = vextract.low.u32 %v10255
        %v10257 = vextract.high.u32 %v10255
        %v10258 = vmul.u32.u64.compose %v10254, %v10249
        %v10259 = vextract.low.u32 %v10258
        %v10260 = vextract.high.u32 %v10258
        %v10261 = vmul.u32 %v10254, %v10245
        %v10262 = vadd.s32 %v10257, %v10259
        %vm10263 = vc.u32 %v10257, %v10259
        %v10264 = vadd.s32 %v10260, 1
        %v10265 = vsel %vm10263, %v10264, %v10260
        %v10266 = vadd.s32 %v10261, %v10265
        %v10267 = vadd.s32 %v10266, 536870912
        %v10268 = vshrl.u32 %v10267, 30
        %v10269 = vshll.u32 %v10268, 30
        %v10270 = vsub.s32 %v10266, %v10269
        %vm10271 = vcmp.lt.s32.totalorder %v10270, 0
        %v10272 = vsub.s32 0, %v10270
        %v10273 = vsel %vm10271, %v10272, %v10270
        %v10274 = vclz %v10273
        %v10275 = vsub.s32 %v10274, 2
        %vm10276 = vcmp.gt.s32.totalorder 0, %v10275
        %v10277 = vsel %vm10276, 0, %v10275
        %v10278 = vsub.s32 32, %v10277
        %v10279 = vshll.u32 %v10270, %v10277
        %v10280 = vshrl.u32 %v10262, %v10278
        %v10281 = vor.u32 %v10279, %v10280
        %v10282 = vsub.s32 4294967266, %v10277
        %v10283 = vadd.s32 %v10282, 127
        %v10284 = vshll.u32 %v10283, 23
        %v10285 = vor.u32 4788187, %v10284
        %v10286 = vand.u32 2147483647, %v10285
        %v10288 = vcvt.s32.f32 %v10281
        %v10289 = vmul.f32 %v10288, %v10286
        %v10290 = vxor.u32 %v10289, 2147483648
        %v10291 = vsel %vm10208, %v10290, %v10289
        %v10292 = vsub.s32 4, %v10268
        %v10293 = vsel %vm10208, %v10292, %v10268
        %v10294 = vsel %vm10207, %v3756, %v10291
        %v10295 = vsel %vm10207, 0, %v10293
        %v10296 = vcosq.f32.pop %v10294
        %v10297 = vsinq.f32.pop %v10294
        %vm10298 = vweird.f32 %v3756
        %v10299 = vadd.s32 %v10295, 3
        %v10300 = vand.u32 %v10299, 3
        %vm10301 = vcmp.lt.s32.totalorder %v10300, 2
        %vm10302 = vcmp.eq.s32.totalorder %v10300, 0
        %v10303 = vxor.u32 %v10297, 2147483648
        %v10304 = vsel %vm10302, %v10296, %v10303
        %vm10305 = vcmp.eq.s32.totalorder %v10300, 2
        %v10306 = vxor.u32 %v10296, 2147483648
        %v10307 = vsel %vm10305, %v10306, %v10297
        %v10308 = vsel %vm10301, %v10304, %v10307
        %v10309 = vsel %vm10298, nan, %v10308
        %v10310 = vand.u32 2147483647, %v3757
        %vm10311 = vcmp.le.f32.partialorder %v10310, 0.7853982
        %vm10312 = vcmp.lt.s32.totalorder %v3757, 0
        %v10313 = vand.u32 %v3757, 2139095040
        %v10314 = vshrl.u32 %v10313, 23
        %v10315 = vsub.s32 %v10314, 127
        %v10316 = vand.u32 2147483647, %v3757
        %v10317 = vand.u32 %v10316, 8388607
        %v10318 = vor.u32 %v10317, 8388608
        %v10319 = vsub.s32 0, %v10318
        %v10320 = vadd.s32 %v10315, 1
        %vm10321 = vcmp.gt.s32.totalorder %v10320, 0
        %v10322 = vsel %vm10321, %v10320, 0
        %v10323 = vshrl.u32 %v10322, 5
        %v10324 = vand.u32 %v10322, 31
        %v10325 = vsub.s32 32, %v10324
        %v10326 = vshrl.u32 683565275, %v10325
        %v10327 = vshll.u32 683565275, %v10324
        %v10328 = vshrl.u32 2475754826, %v10325
        %v10329 = vor.u32 %v10327, %v10328
        %v10330 = vshll.u32 2475754826, %v10324
        %v10331 = vshrl.u32 2131351028, %v10325
        %v10332 = vor.u32 %v10330, %v10331
        %v10333 = vshll.u32 2131351028, %v10324
        %v10334 = vshrl.u32 2102212464, %v10325
        %v10335 = vor.u32 %v10333, %v10334
        %v10336 = vshll.u32 2102212464, %v10324
        %v10337 = vshrl.u32 920167782, %v10325
        %v10338 = vor.u32 %v10336, %v10337
        %v10339 = vshll.u32 920167782, %v10324
        %v10340 = vshrl.u32 1326507024, %v10325
        %v10341 = vor.u32 %v10339, %v10340
        %vm10342 = vcmp.lt.s32.totalorder %v10323, 1
        %vm10343 = vcmp.lt.s32.totalorder %v10323, 2
        %vm10344 = vcmp.lt.s32.totalorder %v10323, 3
        %vm10345 = vcmp.lt.s32.totalorder %v10323, 4
        %v10346 = vsel %vm10342, %v10326, %v10329
        %v10347 = vsel %vm10345, %v10335, 2102212464
        %v10348 = vsel %vm10344, %v10332, %v10347
        %v10349 = vsel %vm10343, %v10346, %v10348
        %v10350 = vsel %vm10342, %v10329, %v10332
        %v10351 = vsel %vm10345, %v10338, 920167782
        %v10352 = vsel %vm10344, %v10335, %v10351
        %v10353 = vsel %vm10343, %v10350, %v10352
        %v10354 = vsel %vm10342, %v10332, %v10335
        %v10355 = vsel %vm10345, %v10341, 1326507024
        %v10356 = vsel %vm10344, %v10338, %v10355
        %v10357 = vsel %vm10343, %v10354, %v10356
        %v10358 = vshll.u32 %v10318, 8
        %v10359 = vmul.u32.u64.compose %v10358, %v10357
        %v10360 = vextract.low.u32 %v10359
        %v10361 = vextract.high.u32 %v10359
        %v10362 = vmul.u32.u64.compose %v10358, %v10353
        %v10363 = vextract.low.u32 %v10362
        %v10364 = vextract.high.u32 %v10362
        %v10365 = vmul.u32 %v10358, %v10349
        %v10366 = vadd.s32 %v10361, %v10363
        %vm10367 = vc.u32 %v10361, %v10363
        %v10368 = vadd.s32 %v10364, 1
        %v10369 = vsel %vm10367, %v10368, %v10364
        %v10370 = vadd.s32 %v10365, %v10369
        %v10371 = vadd.s32 %v10370, 536870912
        %v10372 = vshrl.u32 %v10371, 30
        %v10373 = vshll.u32 %v10372, 30
        %v10374 = vsub.s32 %v10370, %v10373
        %vm10375 = vcmp.lt.s32.totalorder %v10374, 0
        %v10376 = vsub.s32 0, %v10374
        %v10377 = vsel %vm10375, %v10376, %v10374
        %v10378 = vclz %v10377
        %v10379 = vsub.s32 %v10378, 2
        %vm10380 = vcmp.gt.s32.totalorder 0, %v10379
        %v10381 = vsel %vm10380, 0, %v10379
        %v10382 = vsub.s32 32, %v10381
        %v10383 = vshll.u32 %v10374, %v10381
        %v10384 = vshrl.u32 %v10366, %v10382
        %v10385 = vor.u32 %v10383, %v10384
        %v10386 = vsub.s32 4294967266, %v10381
        %v10387 = vadd.s32 %v10386, 127
        %v10388 = vshll.u32 %v10387, 23
        %v10389 = vor.u32 4788187, %v10388
        %v10390 = vand.u32 2147483647, %v10389
        %v10392 = vcvt.s32.f32 %v10385
        %v10393 = vmul.f32 %v10392, %v10390
        %v10394 = vxor.u32 %v10393, 2147483648
        %v10395 = vsel %vm10312, %v10394, %v10393
        %v10396 = vsub.s32 4, %v10372
        %v10397 = vsel %vm10312, %v10396, %v10372
        %v10398 = vsel %vm10311, %v3757, %v10395
        %v10399 = vsel %vm10311, 0, %v10397
        %v10400 = vcosq.f32.pop %v10398
        %v10401 = vsinq.f32.pop %v10398
        %vm10402 = vweird.f32 %v3757
        %v10403 = vadd.s32 %v10399, 3
        %v10404 = vand.u32 %v10403, 3
        %vm10405 = vcmp.lt.s32.totalorder %v10404, 2
        %vm10406 = vcmp.eq.s32.totalorder %v10404, 0
        %v10407 = vxor.u32 %v10401, 2147483648
        %v10408 = vsel %vm10406, %v10400, %v10407
        %vm10409 = vcmp.eq.s32.totalorder %v10404, 2
        %v10410 = vxor.u32 %v10400, 2147483648
        %v10411 = vsel %vm10409, %v10410, %v10401
        %v10412 = vsel %vm10405, %v10408, %v10411
        %v10413 = vsel %vm10402, nan, %v10412
        %10414 = vst [vmem:[%s191] sm:$0xff] %v3861
        %10415 = vst [vmem:[%s191 + $0x8] sm:$0xff] %v3965
        %10416 = vst [vmem:[%s191 + $0x10] sm:$0xff] %v4069
        %10417 = vst [vmem:[%s191 + $0x18] sm:$0xff] %v4173
        %10418 = vst [vmem:[%s191 + $0x20] sm:$0xff] %v4277
        %10419 = vst [vmem:[%s191 + $0x28] sm:$0xff] %v4381
        %10420 = vst [vmem:[%s191 + $0x30] sm:$0xff] %v4485
        %10421 = vst [vmem:[%s191 + $0x38] sm:$0xff] %v4589
        %10422 = vst [vmem:[%s191 + $0x40] sm:$0xff] %v4693
        %10423 = vst [vmem:[%s191 + $0x48] sm:$0xff] %v4797
        %10424 = vst [vmem:[%s191 + $0x50] sm:$0xff] %v4901
        %10425 = vst [vmem:[%s191 + $0x58] sm:$0xff] %v5005
        %10426 = vst [vmem:[%s191 + $0x60] sm:$0xff] %v5109
        %10427 = vst [vmem:[%s191 + $0x68] sm:$0xff] %v5213
        %10428 = vst [vmem:[%s191 + $0x70] sm:$0xff] %v5317
        %10429 = vst [vmem:[%s191 + $0x78] sm:$0xff] %v5421
        %10430 = vst [vmem:[%s191 + $0x80] sm:$0xff] %v5525
        %10431 = vst [vmem:[%s191 + $0x88] sm:$0xff] %v5629
        %10432 = vst [vmem:[%s191 + $0x90] sm:$0xff] %v5733
        %10433 = vst [vmem:[%s191 + $0x98] sm:$0xff] %v5837
        %10434 = vst [vmem:[%s191 + $0xa0] sm:$0xff] %v5941
        %10435 = vst [vmem:[%s191 + $0xa8] sm:$0xff] %v6045
        %10436 = vst [vmem:[%s191 + $0xb0] sm:$0xff] %v6149
        %10437 = vst [vmem:[%s191 + $0xb8] sm:$0xff] %v6253
        %10438 = vst [vmem:[%s191 + $0xc0] sm:$0xff] %v6357
        %10439 = vst [vmem:[%s191 + $0xc8] sm:$0xff] %v6461
        %10440 = vst [vmem:[%s191 + $0xd0] sm:$0xff] %v6565
        %10441 = vst [vmem:[%s191 + $0xd8] sm:$0xff] %v6669
        %10442 = vst [vmem:[%s191 + $0xe0] sm:$0xff] %v6773
        %10443 = vst [vmem:[%s191 + $0xe8] sm:$0xff] %v6877
        %10444 = vst [vmem:[%s191 + $0xf0] sm:$0xff] %v6981
        %10445 = vst [vmem:[%s191 + $0xf8] sm:$0xff] %v7085
        %10446 = vst [vmem:[%s191 + $0x100] sm:$0xff] %v7189
        %10447 = vst [vmem:[%s191 + $0x108] sm:$0xff] %v7293
        %10448 = vst [vmem:[%s191 + $0x110] sm:$0xff] %v7397
        %10449 = vst [vmem:[%s191 + $0x118] sm:$0xff] %v7501
        %10450 = vst [vmem:[%s191 + $0x120] sm:$0xff] %v7605
        %10451 = vst [vmem:[%s191 + $0x128] sm:$0xff] %v7709
        %10452 = vst [vmem:[%s191 + $0x130] sm:$0xff] %v7813
        %10453 = vst [vmem:[%s191 + $0x138] sm:$0xff] %v7917
        %10454 = vst [vmem:[%s191 + $0x140] sm:$0xff] %v8021
        %10455 = vst [vmem:[%s191 + $0x148] sm:$0xff] %v8125
        %10456 = vst [vmem:[%s191 + $0x150] sm:$0xff] %v8229
        %10457 = vst [vmem:[%s191 + $0x158] sm:$0xff] %v8333
        %10458 = vst [vmem:[%s191 + $0x160] sm:$0xff] %v8437
        %10459 = vst [vmem:[%s191 + $0x168] sm:$0xff] %v8541
        %10460 = vst [vmem:[%s191 + $0x170] sm:$0xff] %v8645
        %10461 = vst [vmem:[%s191 + $0x178] sm:$0xff] %v8749
        %10462 = vst [vmem:[%s191 + $0x180] sm:$0xff] %v8853
        %10463 = vst [vmem:[%s191 + $0x188] sm:$0xff] %v8957
        %10464 = vst [vmem:[%s191 + $0x190] sm:$0xff] %v9061
        %10465 = vst [vmem:[%s191 + $0x198] sm:$0xff] %v9165
        %10466 = vst [vmem:[%s191 + $0x1a0] sm:$0xff] %v9269
        %10467 = vst [vmem:[%s191 + $0x1a8] sm:$0xff] %v9373
        %10468 = vst [vmem:[%s191 + $0x1b0] sm:$0xff] %v9477
        %10469 = vst [vmem:[%s191 + $0x1b8] sm:$0xff] %v9581
        %10470 = vst [vmem:[%s191 + $0x1c0] sm:$0xff] %v9685
        %10471 = vst [vmem:[%s191 + $0x1c8] sm:$0xff] %v9789
        %10472 = vst [vmem:[%s191 + $0x1d0] sm:$0xff] %v9893
        %10473 = vst [vmem:[%s191 + $0x1d8] sm:$0xff] %v9997
        %10474 = vst [vmem:[%s191 + $0x1e0] sm:$0xff] %v10101
        %10475 = vst [vmem:[%s191 + $0x1e8] sm:$0xff] %v10205
        %10476 = vst [vmem:[%s191 + $0x1f0] sm:$0xff] %v10309
        %10477 = vst [vmem:[%s191 + $0x1f8] sm:$0xff] %v10413
        %s10478 = sand.u32 %s115, 1
        %s10479 = scalar_lea.sflag [#allocation3], %s10478
        %s10480 = sand.u32 %s115, 1
        %s10481 = smul.addr %s10480, 512
        %s10482 = scalar_lea.vmem [#allocation2], %s10481
        // Predicated region
        $region37: #{tpu_custom_call.1} parent=35 // pred_check
          %p10483 = pneg %p125
        $region38: #{tpu_custom_call.1} parent=35 // pred_check_branch
          %10485 = sbr.rel (%p10483) target = $region40
        $region39: #{tpu_custom_call.1} parent=35 // pred_region
          %s10486 = smul.u32 64, %s18
          %s10488 = ssub.s32 8192, 8192
          %10489 = vsyncadd %s10479, %s10488
          %s10490 = smul.addr %s10486, 128
          %s10491 = scalar_lea.hbm %s4, %s10490
          %s10492 = sshll.u32 %s10482, 4
          %s10493 = int_to_ptr.vmem [resolvable:$true] %s10492
          %10498 = dma.vmem_to_hbm [thread:$0]  %s10493, 8192, %s10491, %s10479, 128, 128, 8
        $region40: #{tpu_custom_call.1} parent=35 // pred_fallthru
          _
      $region36: #{tpu_custom_call.1} parent=5 // pred_fallthru
        _
      %p10499 = scmp.le.s32.totalorder 2, %s13
      // Predicated region
      $region41: #{tpu_custom_call.1} parent=5 // pred_check
        %p10500 = pneg %p10499
      $region42: #{tpu_custom_call.1} parent=5 // pred_check_branch
        %10502 = sbr.rel (%p10500) target = $region44
      $region43: #{tpu_custom_call.1} parent=5 // pred_region
        %s10503 = ssub.s32 %s13, 2
        // Predicated region
        $region45: #{tpu_custom_call.1} parent=43 // pred_check
          %p10504 = pneg %p131
        $region46: #{tpu_custom_call.1} parent=43 // pred_check_branch
          %10506 = sbr.rel (%p10504) target = $region48
        $region47: #{tpu_custom_call.1} parent=43 // pred_region
          %s10507 = sand.u32 %s116, 1
          %s10508 = scalar_lea.sflag [#allocation3], %s10507
          %s10509 = sand.u32 %s116, 1
          %s10510 = smul.addr %s10509, 512
          %s10511 = scalar_lea.vmem [#allocation2], %s10510
          %10512 = dma.done %s10508, 8192
        $region48: #{tpu_custom_call.1} parent=43 // pred_fallthru
          _
      $region44: #{tpu_custom_call.1} parent=5 // pred_fallthru
        _
    $region6: #{tpu_custom_call.1} parent=1 // loop_footer
      %s17 = sadd.s32 1, %s13
    $region7: #{tpu_custom_call.1} parent=1 // loop_footer_branch
      %12 = sbr.rel target = $region3
    $region8: #{tpu_custom_call.1} parent=1 // loop_exit
      _
    %10513 = vsyncpa [#allocation3], 1
    %s10514 = scalar_lea.sflag [#allocation3], 1
    %10515 = vsyncpa %s10514, 1

</llo_original>
